<compile_context>
chip_gen: v7x
topology: tpu7x:2x2x1
jax: 0.10.0
libtpu: 0.0.40
codegen_flags: <defaults>
</compile_context>

<pallas_src>
import jax
import jax.numpy as jnp
from jax import lax
from jax.experimental import pallas as pl
from jax.experimental.pallas import tpu as pltpu

# ---- small synthetic instantiation of SequenceModel ----
VOCAB = 1000        # num_of_ngrams (small synthetic vocab)
VOCAB_PAD = 1024    # padded to a multiple of 128 lanes (no masked tail tile)
EMB = 32            # embedding_dim
HIDDEN = 32         # LSTM hidden_size -> bidirectional feature dim 64
OUT = 21            # output_size
EPS = 1e-5

B = 8               # batch
T = 16              # sequence length
TB = T * B
H = HIDDEN
G = 4 * H           # gates per direction (i, f, g, o)
D2 = 2 * H          # bidirectional feature dim / merged state width
G2 = 2 * G          # merged (fwd+bwd) gate width = 256

# Merged gate-group order: [f | i | o | g], each group = [fwd H | bwd H].
# With this order f*c, i*g and o*tanh(c) all use matching lane offsets.
_GATE_ORDER = (1, 0, 3, 2)   # positions of f, i, o, g in PyTorch's [i, f, g, o]


def _full_spec(shape):
    # grid=(1,): whole array is a single VMEM block.
    return pl.BlockSpec(shape, lambda i: (0,) * len(shape))


# ----------------------------------------------------------------------------
# Fused forward kernel.
# ----------------------------------------------------------------------------
def _fused_forward_kernel(ids_ref, tab0_ref, b0_ref, whh0_ref,
                          wih1_ref, b1_ref, whh1_ref,
                          w1_ref, bb1_ref, g1_ref, be1_ref,
                          w2_ref, bb2_ref, g2_ref, be2_ref,
                          wf_ref, bf_ref,
                          o_ref,
                          seq0_ref, zx_ref):
    f32 = jnp.float32

    # ---- fused embedding gather + layer-0 input projection (bf16 MXU) ----
    ids = ids_ref[...]                                               # (TB, 1) int32, time-major
    lane_ids = lax.broadcasted_iota(jnp.int32, (TB, VOCAB_PAD), 1)
    onehot = jnp.where(lane_ids == ids, 1.0, 0.0).astype(jnp.bfloat16)   # (TB, 1024)
    # padding_idx=0: fused-table row 0 (= 0 @ W_ih0) is zero, so id 0 contributes
    # only the bias — identical to nn.Embedding(padding_idx=0) + LSTM projection.
    zx_ref[...] = jnp.dot(onehot, tab0_ref[...],
                          preferred_element_type=f32) + b0_ref[...]      # (TB, 2G)

    # Lane mask: inside every 2H-wide gate group, first H lanes = fwd direction,
    # last H lanes = bwd direction.
    fwd_mask = (lax.broadcasted_iota(jnp.int32, (B, G2), 1) % D2) < H

    def merged_lstm(whh_ref, write_seq):
        """One bidirectional LSTM layer as a single merged recurrence.

        State h, c: (B, 2H) = [fwd | bwd].  At step s the fwd half consumes
        time s and the bwd half consumes time T-1-s of the hoisted input
        projection staged in zx_ref (TB, 2G).
        """
        whh = whh_ref[...]                                   # (2H, 2G) block-diagonal
        h = jnp.zeros((B, D2), f32)
        c = jnp.zeros((B, D2), f32)
        acc = jnp.zeros((B, D2), f32)
        for s in range(T):                                   # static unroll (T = 16)
            z_f = zx_ref[s * B:(s + 1) * B, :]               # time s
            z_b = zx_ref[(T - 1 - s) * B:(T - s) * B, :]     # time T-1-s
            z = jnp.where(fwd_mask, z_f, z_b) + jnp.dot(
                h, whh, preferred_element_type=f32)          # (B, 2G)
            f_g = jax.nn.sigmoid(z[:, 0 * D2:1 * D2])
            i_g = jax.nn.sigmoid(z[:, 1 * D2:2 * D2])
            o_g = jax.nn.sigmoid(z[:, 2 * D2:3 * D2])
            g_g = jnp.tanh(z[:, 3 * D2:4 * D2])
            c = f_g * c + i_g * g_g
            h = o_g * jnp.tanh(c)
            if write_seq:
                # Scatter the two direction halves back into true time order
                # (off the critical recurrence path).
                seq0_ref[s * B:(s + 1) * B, 0:H] = h[:, 0:H]
                seq0_ref[(T - 1 - s) * B:(T - s) * B, H:D2] = h[:, H:D2]
            else:
                acc = acc + h     # sum_t [h_f(t) | h_b(t)]; order-independent
        return acc

    # Layer 0: recurrence; bidirectional sequence -> seq0_ref (TB, 2H), time order.
    merged_lstm(whh0_ref, True)

    # Layer 1: hoisted input projection reuses zx_ref, then accumulate the time-sum.
    zx_ref[...] = jnp.dot(seq0_ref[...].astype(jnp.bfloat16), wih1_ref[...],
                          preferred_element_type=f32) + b1_ref[...]
    acc = merged_lstm(whh1_ref, False)

    # Time-mean pool:  out.sum(1) / x.shape[1]
    hh = acc * (1.0 / T)                                     # (B, 2H)

    # Head: 2 x [Linear, BatchNorm1d (batch stats), Dropout(identity), ReLU]
    # TODO(synk): Dropout(0.2) treated as identity (deterministic inference);
    # BN running statistics are neither used nor updated (single forward pass).
    for w_ref, b_ref, gm_ref, bt_ref in ((w1_ref, bb1_ref, g1_ref, be1_ref),
                                         (w2_ref, bb2_ref, g2_ref, be2_ref)):
        hh = jnp.dot(hh, w_ref[...], preferred_element_type=f32) + b_ref[...]
        mu = jnp.mean(hh, axis=0, keepdims=True)
        var = jnp.mean((hh - mu) ** 2, axis=0, keepdims=True)    # biased var (BN train)
        hh = (hh - mu) * lax.rsqrt(var + EPS) * gm_ref[...] + bt_ref[...]
        hh = jnp.maximum(hh, 0.0)

    # Final Linear + softmax(dim=1) — exact division so rows sum to 1.
    logits = jnp.dot(hh, wf_ref[...], preferred_element_type=f32) + bf_ref[...]
    m = jnp.max(logits, axis=1, keepdims=True)
    e = jnp.exp(logits - m)
    o_ref[...] = e / jnp.sum(e, axis=1, keepdims=True)


# ----------------------------------------------------------------------------
# Weight packing: merged gate columns + block-diagonal recurrent weights.
# ----------------------------------------------------------------------------
def _merge_gate_cols(a_f, a_b):
    """Per-direction [i|f|g|o] (rows, 4H) -> merged (rows, 8H) laid out as
    [f_f f_b | i_f i_b | o_f o_b | g_f g_b]."""
    parts = []
    for k in _GATE_ORDER:
        parts.append(a_f[:, k * H:(k + 1) * H])
        parts.append(a_b[:, k * H:(k + 1) * H])
    return jnp.concatenate(parts, axis=1)


def _block_diag_whh(whh_f, whh_b):
    """(H, 4H) x 2 -> (2H, 8H) block-diagonal recurrent weight in merged layout."""
    z = jnp.zeros((H, H), jnp.float32)
    cols = []
    for k in _GATE_ORDER:
        top = jnp.concatenate([whh_f[:, k * H:(k + 1) * H], z], axis=1)   # rows: h_f
        bot = jnp.concatenate([z, whh_b[:, k * H:(k + 1) * H]], axis=1)   # rows: h_b
        cols.append(jnp.concatenate([top, bot], axis=0))
    return jnp.concatenate(cols, axis=1)


def init_params(key):
    """PyTorch-style uniform init, packed into the fused-kernel layout."""
    keys = iter(jax.random.split(key, 64))
    s = 1.0 / float(HIDDEN ** 0.5)

    emb_table = jax.random.normal(next(keys), (VOCAB, EMB), jnp.float32)
    emb_table = emb_table.at[0].set(0.0)                       # padding_idx = 0

    def lstm_dir(din):
        w_ih = jax.random.uniform(next(keys), (din, G), minval=-s, maxval=s)
        w_hh = jax.random.uniform(next(keys), (H, G), minval=-s, maxval=s)
        b_ih = jax.random.uniform(next(keys), (1, G), minval=-s, maxval=s)
        b_hh = jax.random.uniform(next(keys), (1, G), minval=-s, maxval=s)
        return w_ih, w_hh, b_ih + b_hh                         # fold b_ih + b_hh

    w_ih0f, w_hh0f, b0f = lstm_dir(EMB)                        # layer 0 fwd
    w_ih0b, w_hh0b, b0b = lstm_dir(EMB)                        # layer 0 bwd
    w_ih1f, w_hh1f, b1f = lstm_dir(D2)                         # layer 1 fwd
    w_ih1b, w_hh1b, b1b = lstm_dir(D2)                         # layer 1 bwd

    # Fold embedding into the layer-0 input projection; pad vocab -> 1024; bf16.
    wih0 = _merge_gate_cols(w_ih0f, w_ih0b)                    # (EMB, 2G)
    fused0 = emb_table @ wih0                                  # (VOCAB, 2G)
    fused0 = jnp.pad(fused0, ((0, VOCAB_PAD - VOCAB), (0, 0))).astype(jnp.bfloat16)

    lstm = {
        "tab0": fused0,                                               # (1024, 2G) bf16
        "b0": _merge_gate_cols(b0f, b0b),                             # (1, 2G) f32
        "whh0": _block_diag_whh(w_hh0f, w_hh0b),                      # (2H, 2G) f32
        "wih1": _merge_gate_cols(w_ih1f, w_ih1b).astype(jnp.bfloat16),  # (2H, 2G) bf16
        "b1": _merge_gate_cols(b1f, b1b),                             # (1, 2G) f32
        "whh1": _block_diag_whh(w_hh1f, w_hh1b),                      # (2H, 2G) f32
    }

    sl = 1.0 / float(D2 ** 0.5)
    head = {}
    for r in (1, 2):
        head[f"r{r}_w"] = jax.random.uniform(next(keys), (D2, D2), minval=-sl, maxval=sl)
        head[f"r{r}_b"] = jax.random.uniform(next(keys), (1, D2), minval=-sl, maxval=sl)
        head[f"r{r}_gamma"] = jnp.ones((1, D2), jnp.float32)
        head[f"r{r}_beta"] = jnp.zeros((1, D2), jnp.float32)
    head["lin_w"] = jax.random.uniform(next(keys), (D2, OUT), minval=-sl, maxval=sl)
    head["lin_b"] = jax.random.uniform(next(keys), (1, OUT), minval=-sl, maxval=sl)

    return {"lstm": lstm, "head": head}


# ----------------------------------------------------------------------------
# Public forward: one fused pallas_call.
# ----------------------------------------------------------------------------
@jax.jit
def sequence_model_forward(x, params):
    # x: (B, T) int32 token ids (batch_first, like the PyTorch module).
    ids_tm = jnp.transpose(x, (1, 0)).reshape(TB, 1).astype(jnp.int32)  # time-major ids

    ls = params["lstm"]
    hd = params["head"]
    args = [ids_tm,
            ls["tab0"], ls["b0"], ls["whh0"],
            ls["wih1"], ls["b1"], ls["whh1"],
            hd["r1_w"], hd["r1_b"], hd["r1_gamma"], hd["r1_beta"],
            hd["r2_w"], hd["r2_b"], hd["r2_gamma"], hd["r2_beta"],
            hd["lin_w"], hd["lin_b"]]

    return pl.pallas_call(
        _fused_forward_kernel,
        grid=(1,),
        out_shape=jax.ShapeDtypeStruct((B, OUT), jnp.float32),
        in_specs=[_full_spec(a.shape) for a in args],
        out_specs=_full_spec((B, OUT)),
        scratch_shapes=[pltpu.VMEM((TB, D2), jnp.float32),   # layer-0 bi-dir sequence
                        pltpu.VMEM((TB, G2), jnp.float32)],  # hoisted input projections
        compiler_params=pltpu.CompilerParams(
            dimension_semantics=("arbitrary",),
            vmem_limit_bytes=8 * 1024 * 1024),
        cost_estimate=pl.CostEstimate(
            flops=80_000_000,            # dominated by the (128,1024)x(1024,256) gather
            transcendentals=90_000,      # sigmoid/tanh over 32 unrolled merged steps
            bytes_accessed=800_000),
    )(*args)


if __name__ == "__main__":
    key = jax.random.PRNGKey(0)
    k_param, k_tok = jax.random.split(key)

    params = init_params(k_param)
    x = jax.random.randint(k_tok, (B, T), minval=1, maxval=VOCAB, dtype=jnp.int32)

    out = sequence_model_forward(x, params)
    out = jax.block_until_ready(out)

    assert out.shape == (B, OUT)
    assert bool(jnp.all(jnp.isfinite(out)))
    # exact softmax division -> rows sum to 1 to f32 precision
    assert bool(jnp.allclose(jnp.sum(out, axis=1), 1.0, atol=1e-4))
    print("KERNEL_OK")
</pallas_src>

<mosaic_0001>
module attributes {stable_mosaic.version = 11 : i64} {
  func.func @_fused_forward_kernel(%arg0: i32, %arg1: memref<128x1xi32, #tpu.memory_space<vmem>>, %arg2: memref<1024x256xbf16, #tpu.memory_space<vmem>>, %arg3: memref<1x256xf32, #tpu.memory_space<vmem>>, %arg4: memref<64x256xf32, #tpu.memory_space<vmem>>, %arg5: memref<64x256xbf16, #tpu.memory_space<vmem>>, %arg6: memref<1x256xf32, #tpu.memory_space<vmem>>, %arg7: memref<64x256xf32, #tpu.memory_space<vmem>>, %arg8: memref<64x64xf32, #tpu.memory_space<vmem>>, %arg9: memref<1x64xf32, #tpu.memory_space<vmem>>, %arg10: memref<1x64xf32, #tpu.memory_space<vmem>>, %arg11: memref<1x64xf32, #tpu.memory_space<vmem>>, %arg12: memref<64x64xf32, #tpu.memory_space<vmem>>, %arg13: memref<1x64xf32, #tpu.memory_space<vmem>>, %arg14: memref<1x64xf32, #tpu.memory_space<vmem>>, %arg15: memref<1x64xf32, #tpu.memory_space<vmem>>, %arg16: memref<64x21xf32, #tpu.memory_space<vmem>>, %arg17: memref<1x21xf32, #tpu.memory_space<vmem>>, %arg18: memref<8x21xf32, #tpu.memory_space<vmem>>, %arg19: memref<128x64xf32, #tpu.memory_space<vmem>>, %arg20: memref<128x256xf32, #tpu.memory_space<vmem>>) attributes {dimension_semantics = [#tpu.dimension_semantics<arbitrary>], iteration_bounds = array<i64: 1>, scalar_prefetch = 0 : i64, scratch_operands = 2 : i64, tpu.core_type = #tpu.core_type<tc>, window_params = [{pipeline_mode = #tpu.pipeline_mode<synchronous>, transform_indices = @transform_0, window_bounds = array<i64: 128, 1>}, {pipeline_mode = #tpu.pipeline_mode<synchronous>, transform_indices = @transform_1, window_bounds = array<i64: 1024, 256>}, {pipeline_mode = #tpu.pipeline_mode<synchronous>, transform_indices = @transform_2, window_bounds = array<i64: 1, 256>}, {pipeline_mode = #tpu.pipeline_mode<synchronous>, transform_indices = @transform_3, window_bounds = array<i64: 64, 256>}, {pipeline_mode = #tpu.pipeline_mode<synchronous>, transform_indices = @transform_4, window_bounds = array<i64: 64, 256>}, {pipeline_mode = #tpu.pipeline_mode<synchronous>, transform_indices = @transform_5, window_bounds = array<i64: 1, 256>}, {pipeline_mode = #tpu.pipeline_mode<synchronous>, transform_indices = @transform_6, window_bounds = array<i64: 64, 256>}, {pipeline_mode = #tpu.pipeline_mode<synchronous>, transform_indices = @transform_7, window_bounds = array<i64: 64, 64>}, {pipeline_mode = #tpu.pipeline_mode<synchronous>, transform_indices = @transform_8, window_bounds = array<i64: 1, 64>}, {pipeline_mode = #tpu.pipeline_mode<synchronous>, transform_indices = @transform_9, window_bounds = array<i64: 1, 64>}, {pipeline_mode = #tpu.pipeline_mode<synchronous>, transform_indices = @transform_10, window_bounds = array<i64: 1, 64>}, {pipeline_mode = #tpu.pipeline_mode<synchronous>, transform_indices = @transform_11, window_bounds = array<i64: 64, 64>}, {pipeline_mode = #tpu.pipeline_mode<synchronous>, transform_indices = @transform_12, window_bounds = array<i64: 1, 64>}, {pipeline_mode = #tpu.pipeline_mode<synchronous>, transform_indices = @transform_13, window_bounds = array<i64: 1, 64>}, {pipeline_mode = #tpu.pipeline_mode<synchronous>, transform_indices = @transform_14, window_bounds = array<i64: 1, 64>}, {pipeline_mode = #tpu.pipeline_mode<synchronous>, transform_indices = @transform_15, window_bounds = array<i64: 64, 21>}, {pipeline_mode = #tpu.pipeline_mode<synchronous>, transform_indices = @transform_16, window_bounds = array<i64: 1, 21>}, {pipeline_mode = #tpu.pipeline_mode<synchronous>, transform_indices = @transform_17, window_bounds = array<i64: 8, 21>}]} {
    %c0 = arith.constant 0 : index
    %c0_0 = arith.constant 0 : index
    %0 = vector.load %arg1[%c0, %c0_0] : memref<128x1xi32, #tpu.memory_space<vmem>>, vector<128x1xi32>
    %1 = tpu.iota {dimensions = array<i32: 1>} : vector<128x1024xi32>
    %2 = vector.broadcast %0 : vector<128x1xi32> to vector<128x1024xi32>
    %3 = arith.cmpi eq, %1, %2 : vector<128x1024xi32>
    %cst = arith.constant 1.000000e+00 : f32
    %cst_1 = arith.constant 0.000000e+00 : f32
    %4 = vector.broadcast %cst : f32 to vector<128x1024xf32>
    %5 = vector.broadcast %cst_1 : f32 to vector<128x1024xf32>
    %6 = arith.select %3, %4, %5 : vector<128x1024xi1>, vector<128x1024xf32>
    %7 = arith.truncf %6 : vector<128x1024xf32> to vector<128x1024xbf16>
    %c0_2 = arith.constant 0 : index
    %c0_3 = arith.constant 0 : index
    %8 = vector.load %arg2[%c0_2, %c0_3] : memref<1024x256xbf16, #tpu.memory_space<vmem>>, vector<1024x256xbf16>
    %cst_4 = arith.constant dense<0.000000e+00> : vector<128x256xf32>
    %9 = tpu.matmul %7, %8, %cst_4 {dimension_numbers = #tpu.dot_dimension_numbers<[1], [0], [0], [1], [0, 0, 1, 1], [], []>} : vector<128x1024xbf16>, vector<1024x256xbf16>, vector<128x256xf32> -> vector<128x256xf32>
    %c0_5 = arith.constant 0 : index
    %c0_6 = arith.constant 0 : index
    %10 = vector.load %arg3[%c0_5, %c0_6] : memref<1x256xf32, #tpu.memory_space<vmem>>, vector<1x256xf32>
    %11 = vector.broadcast %10 : vector<1x256xf32> to vector<128x256xf32>
    %12 = arith.addf %9, %11 : vector<128x256xf32>
    %c0_7 = arith.constant 0 : index
    %c0_8 = arith.constant 0 : index
    %13 = vector.load %arg20[%c0_7, %c0_8] : memref<128x256xf32, #tpu.memory_space<vmem>>, vector<128x256xf32>
    tpu.vector_store %arg20[%c0_7, %c0_8], %12 {strides = array<i32>} : memref<128x256xf32, #tpu.memory_space<vmem>>, vector<128x256xf32>,
    %14 = tpu.iota {dimensions = array<i32: 1>} : vector<8x256xi32>
    %c64_i32 = arith.constant 64 : i32
    %c0_i32 = arith.constant 0 : i32
    %15 = arith.cmpi eq, %c64_i32, %c0_i32 : i32
    %c1_i32 = arith.constant 1 : i32
    %16 = arith.select %15, %c1_i32, %c64_i32 : i32
    %17 = vector.broadcast %16 : i32 to vector<8x256xi32>
    %18 = arith.remsi %14, %17 : vector<8x256xi32>
    %c0_i32_9 = arith.constant 0 : i32
    %19 = vector.broadcast %c0_i32_9 : i32 to vector<8x256xi32>
    %20 = arith.cmpi ne, %18, %19 : vector<8x256xi32>
    %c0_i32_10 = arith.constant 0 : i32
    %21 = vector.broadcast %c0_i32_10 : i32 to vector<8x256xi32>
    %22 = arith.cmpi slt, %18, %21 : vector<8x256xi32>
    %c0_i32_11 = arith.constant 0 : i32
    %23 = arith.cmpi slt, %16, %c0_i32_11 : i32
    %24 = vector.broadcast %23 : i1 to vector<8x256xi1>
    %25 = vector.broadcast %24 : vector<8x256xi1> to vector<8x256xi1>
    %26 = arith.xori %22, %25 : vector<8x256xi1>
    %27 = arith.andi %26, %20 : vector<8x256xi1>
    %28 = vector.broadcast %16 : i32 to vector<8x256xi32>
    %29 = arith.addi %18, %28 : vector<8x256xi32>
    %30 = arith.select %27, %29, %18 : vector<8x256xi1>, vector<8x256xi32>
    %c32_i32 = arith.constant 32 : i32
    %31 = vector.broadcast %c32_i32 : i32 to vector<8x256xi32>
    %32 = arith.cmpi slt, %30, %31 : vector<8x256xi32>
    %c0_12 = arith.constant 0 : index
    %c0_13 = arith.constant 0 : index
    %33 = vector.load %arg4[%c0_12, %c0_13] : memref<64x256xf32, #tpu.memory_space<vmem>>, vector<64x256xf32>
    %cst_14 = arith.constant 0.000000e+00 : f32
    %34 = vector.broadcast %cst_14 : f32 to vector<8x64xf32>
    %cst_15 = arith.constant 0.000000e+00 : f32
    %35 = vector.broadcast %cst_15 : f32 to vector<8x64xf32>
    %c0_16 = arith.constant 0 : index
    %c0_17 = arith.constant 0 : index
    %36 = vector.load %arg20[%c0_16, %c0_17] : memref<128x256xf32, #tpu.memory_space<vmem>>, vector<8x256xf32>
    %c120 = arith.constant 120 : index
    %c0_18 = arith.constant 0 : index
    %37 = vector.load %arg20[%c120, %c0_18] : memref<128x256xf32, #tpu.memory_space<vmem>>, vector<8x256xf32>
    %38 = arith.select %32, %36, %37 : vector<8x256xi1>, vector<8x256xf32>
    %cst_19 = arith.constant dense<0.000000e+00> : vector<8x256xf32>
    %39 = tpu.matmul %34, %33, %cst_19 {dimension_numbers = #tpu.dot_dimension_numbers<[1], [0], [0], [1], [0, 0, 1, 1], [], []>} : vector<8x64xf32>, vector<64x256xf32>, vector<8x256xf32> -> vector<8x256xf32>
    %40 = arith.addf %38, %39 : vector<8x256xf32>
    %41 = vector.extract_strided_slice %40 {offsets = [0, 0], sizes = [8, 64], strides = [1, 1]} : vector<8x256xf32> to vector<8x64xf32>
    %42 = arith.negf %41 : vector<8x64xf32>
    %43 = math.exp %42 : vector<8x64xf32>
    %cst_20 = arith.constant 1.000000e+00 : f32
    %44 = vector.broadcast %cst_20 : f32 to vector<8x64xf32>
    %45 = arith.addf %44, %43 : vector<8x64xf32>
    %46 = arith.divf %44, %45 : vector<8x64xf32>
    %47 = vector.extract_strided_slice %40 {offsets = [0, 64], sizes = [8, 64], strides = [1, 1]} : vector<8x256xf32> to vector<8x64xf32>
    %48 = arith.negf %47 : vector<8x64xf32>
    %49 = math.exp %48 : vector<8x64xf32>
    %cst_21 = arith.constant 1.000000e+00 : f32
    %50 = vector.broadcast %cst_21 : f32 to vector<8x64xf32>
    %51 = arith.addf %50, %49 : vector<8x64xf32>
    %52 = arith.divf %50, %51 : vector<8x64xf32>
    %53 = vector.extract_strided_slice %40 {offsets = [0, 128], sizes = [8, 64], strides = [1, 1]} : vector<8x256xf32> to vector<8x64xf32>
    %54 = arith.negf %53 : vector<8x64xf32>
    %55 = math.exp %54 : vector<8x64xf32>
    %cst_22 = arith.constant 1.000000e+00 : f32
    %56 = vector.broadcast %cst_22 : f32 to vector<8x64xf32>
    %57 = arith.addf %56, %55 : vector<8x64xf32>
    %58 = arith.divf %56, %57 : vector<8x64xf32>
    %59 = vector.extract_strided_slice %40 {offsets = [0, 192], sizes = [8, 64], strides = [1, 1]} : vector<8x256xf32> to vector<8x64xf32>
    %60 = math.tanh %59 : vector<8x64xf32>
    %61 = arith.mulf %46, %35 : vector<8x64xf32>
    %62 = arith.mulf %52, %60 : vector<8x64xf32>
    %63 = arith.addf %61, %62 : vector<8x64xf32>
    %64 = math.tanh %63 : vector<8x64xf32>
    %65 = arith.mulf %58, %64 : vector<8x64xf32>
    %66 = vector.extract_strided_slice %65 {offsets = [0, 0], sizes = [8, 32], strides = [1, 1]} : vector<8x64xf32> to vector<8x32xf32>
    %c0_23 = arith.constant 0 : index
    %c0_24 = arith.constant 0 : index
    %67 = vector.load %arg19[%c0_23, %c0_24] : memref<128x64xf32, #tpu.memory_space<vmem>>, vector<8x32xf32>
    tpu.vector_store %arg19[%c0_23, %c0_24], %66 {strides = array<i32>} : memref<128x64xf32, #tpu.memory_space<vmem>>, vector<8x32xf32>,
    %68 = vector.extract_strided_slice %65 {offsets = [0, 32], sizes = [8, 32], strides = [1, 1]} : vector<8x64xf32> to vector<8x32xf32>
    %c120_25 = arith.constant 120 : index
    %c32 = arith.constant 32 : index
    %69 = vector.load %arg19[%c120_25, %c32] : memref<128x64xf32, #tpu.memory_space<vmem>>, vector<8x32xf32>
    tpu.vector_store %arg19[%c120_25, %c32], %68 {strides = array<i32>} : memref<128x64xf32, #tpu.memory_space<vmem>>, vector<8x32xf32>,
    %c8 = arith.constant 8 : index
    %c0_26 = arith.constant 0 : index
    %70 = vector.load %arg20[%c8, %c0_26] : memref<128x256xf32, #tpu.memory_space<vmem>>, vector<8x256xf32>
    %c112 = arith.constant 112 : index
    %c0_27 = arith.constant 0 : index
    %71 = vector.load %arg20[%c112, %c0_27] : memref<128x256xf32, #tpu.memory_space<vmem>>, vector<8x256xf32>
    %72 = arith.select %32, %70, %71 : vector<8x256xi1>, vector<8x256xf32>
    %cst_28 = arith.constant dense<0.000000e+00> : vector<8x256xf32>
    %73 = tpu.matmul %65, %33, %cst_28 {dimension_numbers = #tpu.dot_dimension_numbers<[1], [0], [0], [1], [0, 0, 1, 1], [], []>} : vector<8x64xf32>, vector<64x256xf32>, vector<8x256xf32> -> vector<8x256xf32>
    %74 = arith.addf %72, %73 : vector<8x256xf32>
    %75 = vector.extract_strided_slice %74 {offsets = [0, 0], sizes = [8, 64], strides = [1, 1]} : vector<8x256xf32> to vector<8x64xf32>
    %76 = arith.negf %75 : vector<8x64xf32>
    %77 = math.exp %76 : vector<8x64xf32>
    %cst_29 = arith.constant 1.000000e+00 : f32
    %78 = vector.broadcast %cst_29 : f32 to vector<8x64xf32>
    %79 = arith.addf %78, %77 : vector<8x64xf32>
    %80 = arith.divf %78, %79 : vector<8x64xf32>
    %81 = vector.extract_strided_slice %74 {offsets = [0, 64], sizes = [8, 64], strides = [1, 1]} : vector<8x256xf32> to vector<8x64xf32>
    %82 = arith.negf %81 : vector<8x64xf32>
    %83 = math.exp %82 : vector<8x64xf32>
    %cst_30 = arith.constant 1.000000e+00 : f32
    %84 = vector.broadcast %cst_30 : f32 to vector<8x64xf32>
    %85 = arith.addf %84, %83 : vector<8x64xf32>
    %86 = arith.divf %84, %85 : vector<8x64xf32>
    %87 = vector.extract_strided_slice %74 {offsets = [0, 128], sizes = [8, 64], strides = [1, 1]} : vector<8x256xf32> to vector<8x64xf32>
    %88 = arith.negf %87 : vector<8x64xf32>
    %89 = math.exp %88 : vector<8x64xf32>
    %cst_31 = arith.constant 1.000000e+00 : f32
    %90 = vector.broadcast %cst_31 : f32 to vector<8x64xf32>
    %91 = arith.addf %90, %89 : vector<8x64xf32>
    %92 = arith.divf %90, %91 : vector<8x64xf32>
    %93 = vector.extract_strided_slice %74 {offsets = [0, 192], sizes = [8, 64], strides = [1, 1]} : vector<8x256xf32> to vector<8x64xf32>
    %94 = math.tanh %93 : vector<8x64xf32>
    %95 = arith.mulf %80, %63 : vector<8x64xf32>
    %96 = arith.mulf %86, %94 : vector<8x64xf32>
    %97 = arith.addf %95, %96 : vector<8x64xf32>
    %98 = math.tanh %97 : vector<8x64xf32>
    %99 = arith.mulf %92, %98 : vector<8x64xf32>
    %100 = vector.extract_strided_slice %99 {offsets = [0, 0], sizes = [8, 32], strides = [1, 1]} : vector<8x64xf32> to vector<8x32xf32>
    %c8_32 = arith.constant 8 : index
    %c0_33 = arith.constant 0 : index
    %101 = vector.load %arg19[%c8_32, %c0_33] : memref<128x64xf32, #tpu.memory_space<vmem>>, vector<8x32xf32>
    tpu.vector_store %arg19[%c8_32, %c0_33], %100 {strides = array<i32>} : memref<128x64xf32, #tpu.memory_space<vmem>>, vector<8x32xf32>,
    %102 = vector.extract_strided_slice %99 {offsets = [0, 32], sizes = [8, 32], strides = [1, 1]} : vector<8x64xf32> to vector<8x32xf32>
    %c112_34 = arith.constant 112 : index
    %c32_35 = arith.constant 32 : index
    %103 = vector.load %arg19[%c112_34, %c32_35] : memref<128x64xf32, #tpu.memory_space<vmem>>, vector<8x32xf32>
    tpu.vector_store %arg19[%c112_34, %c32_35], %102 {strides = array<i32>} : memref<128x64xf32, #tpu.memory_space<vmem>>, vector<8x32xf32>,
    %c16 = arith.constant 16 : index
    %c0_36 = arith.constant 0 : index
    %104 = vector.load %arg20[%c16, %c0_36] : memref<128x256xf32, #tpu.memory_space<vmem>>, vector<8x256xf32>
    %c104 = arith.constant 104 : index
    %c0_37 = arith.constant 0 : index
    %105 = vector.load %arg20[%c104, %c0_37] : memref<128x256xf32, #tpu.memory_space<vmem>>, vector<8x256xf32>
    %106 = arith.select %32, %104, %105 : vector<8x256xi1>, vector<8x256xf32>
    %cst_38 = arith.constant dense<0.000000e+00> : vector<8x256xf32>
    %107 = tpu.matmul %99, %33, %cst_38 {dimension_numbers = #tpu.dot_dimension_numbers<[1], [0], [0], [1], [0, 0, 1, 1], [], []>} : vector<8x64xf32>, vector<64x256xf32>, vector<8x256xf32> -> vector<8x256xf32>
    %108 = arith.addf %106, %107 : vector<8x256xf32>
    %109 = vector.extract_strided_slice %108 {offsets = [0, 0], sizes = [8, 64], strides = [1, 1]} : vector<8x256xf32> to vector<8x64xf32>
    %110 = arith.negf %109 : vector<8x64xf32>
    %111 = math.exp %110 : vector<8x64xf32>
    %cst_39 = arith.constant 1.000000e+00 : f32
    %112 = vector.broadcast %cst_39 : f32 to vector<8x64xf32>
    %113 = arith.addf %112, %111 : vector<8x64xf32>
    %114 = arith.divf %112, %113 : vector<8x64xf32>
    %115 = vector.extract_strided_slice %108 {offsets = [0, 64], sizes = [8, 64], strides = [1, 1]} : vector<8x256xf32> to vector<8x64xf32>
    %116 = arith.negf %115 : vector<8x64xf32>
    %117 = math.exp %116 : vector<8x64xf32>
    %cst_40 = arith.constant 1.000000e+00 : f32
    %118 = vector.broadcast %cst_40 : f32 to vector<8x64xf32>
    %119 = arith.addf %118, %117 : vector<8x64xf32>
    %120 = arith.divf %118, %119 : vector<8x64xf32>
    %121 = vector.extract_strided_slice %108 {offsets = [0, 128], sizes = [8, 64], strides = [1, 1]} : vector<8x256xf32> to vector<8x64xf32>
    %122 = arith.negf %121 : vector<8x64xf32>
    %123 = math.exp %122 : vector<8x64xf32>
    %cst_41 = arith.constant 1.000000e+00 : f32
    %124 = vector.broadcast %cst_41 : f32 to vector<8x64xf32>
    %125 = arith.addf %124, %123 : vector<8x64xf32>
    %126 = arith.divf %124, %125 : vector<8x64xf32>
    %127 = vector.extract_strided_slice %108 {offsets = [0, 192], sizes = [8, 64], strides = [1, 1]} : vector<8x256xf32> to vector<8x64xf32>
    %128 = math.tanh %127 : vector<8x64xf32>
    %129 = arith.mulf %114, %97 : vector<8x64xf32>
    %130 = arith.mulf %120, %128 : vector<8x64xf32>
    %131 = arith.addf %129, %130 : vector<8x64xf32>
    %132 = math.tanh %131 : vector<8x64xf32>
    %133 = arith.mulf %126, %132 : vector<8x64xf32>
    %134 = vector.extract_strided_slice %133 {offsets = [0, 0], sizes = [8, 32], strides = [1, 1]} : vector<8x64xf32> to vector<8x32xf32>
    %c16_42 = arith.constant 16 : index
    %c0_43 = arith.constant 0 : index
    %135 = vector.load %arg19[%c16_42, %c0_43] : memref<128x64xf32, #tpu.memory_space<vmem>>, vector<8x32xf32>
    tpu.vector_store %arg19[%c16_42, %c0_43], %134 {strides = array<i32>} : memref<128x64xf32, #tpu.memory_space<vmem>>, vector<8x32xf32>,
    %136 = vector.extract_strided_slice %133 {offsets = [0, 32], sizes = [8, 32], strides = [1, 1]} : vector<8x64xf32> to vector<8x32xf32>
    %c104_44 = arith.constant 104 : index
    %c32_45 = arith.constant 32 : index
    %137 = vector.load %arg19[%c104_44, %c32_45] : memref<128x64xf32, #tpu.memory_space<vmem>>, vector<8x32xf32>
    tpu.vector_store %arg19[%c104_44, %c32_45], %136 {strides = array<i32>} : memref<128x64xf32, #tpu.memory_space<vmem>>, vector<8x32xf32>,
    %c24 = arith.constant 24 : index
    %c0_46 = arith.constant 0 : index
    %138 = vector.load %arg20[%c24, %c0_46] : memref<128x256xf32, #tpu.memory_space<vmem>>, vector<8x256xf32>
    %c96 = arith.constant 96 : index
    %c0_47 = arith.constant 0 : index
    %139 = vector.load %arg20[%c96, %c0_47] : memref<128x256xf32, #tpu.memory_space<vmem>>, vector<8x256xf32>
    %140 = arith.select %32, %138, %139 : vector<8x256xi1>, vector<8x256xf32>
    %cst_48 = arith.constant dense<0.000000e+00> : vector<8x256xf32>
    %141 = tpu.matmul %133, %33, %cst_48 {dimension_numbers = #tpu.dot_dimension_numbers<[1], [0], [0], [1], [0, 0, 1, 1], [], []>} : vector<8x64xf32>, vector<64x256xf32>, vector<8x256xf32> -> vector<8x256xf32>
    %142 = arith.addf %140, %141 : vector<8x256xf32>
    %143 = vector.extract_strided_slice %142 {offsets = [0, 0], sizes = [8, 64], strides = [1, 1]} : vector<8x256xf32> to vector<8x64xf32>
    %144 = arith.negf %143 : vector<8x64xf32>
    %145 = math.exp %144 : vector<8x64xf32>
    %cst_49 = arith.constant 1.000000e+00 : f32
    %146 = vector.broadcast %cst_49 : f32 to vector<8x64xf32>
    %147 = arith.addf %146, %145 : vector<8x64xf32>
    %148 = arith.divf %146, %147 : vector<8x64xf32>
    %149 = vector.extract_strided_slice %142 {offsets = [0, 64], sizes = [8, 64], strides = [1, 1]} : vector<8x256xf32> to vector<8x64xf32>
    %150 = arith.negf %149 : vector<8x64xf32>
    %151 = math.exp %150 : vector<8x64xf32>
    %cst_50 = arith.constant 1.000000e+00 : f32
    %152 = vector.broadcast %cst_50 : f32 to vector<8x64xf32>
    %153 = arith.addf %152, %151 : vector<8x64xf32>
    %154 = arith.divf %152, %153 : vector<8x64xf32>
    %155 = vector.extract_strided_slice %142 {offsets = [0, 128], sizes = [8, 64], strides = [1, 1]} : vector<8x256xf32> to vector<8x64xf32>
    %156 = arith.negf %155 : vector<8x64xf32>
    %157 = math.exp %156 : vector<8x64xf32>
    %cst_51 = arith.constant 1.000000e+00 : f32
    %158 = vector.broadcast %cst_51 : f32 to vector<8x64xf32>
    %159 = arith.addf %158, %157 : vector<8x64xf32>
    %160 = arith.divf %158, %159 : vector<8x64xf32>
    %161 = vector.extract_strided_slice %142 {offsets = [0, 192], sizes = [8, 64], strides = [1, 1]} : vector<8x256xf32> to vector<8x64xf32>
    %162 = math.tanh %161 : vector<8x64xf32>
    %163 = arith.mulf %148, %131 : vector<8x64xf32>
    %164 = arith.mulf %154, %162 : vector<8x64xf32>
    %165 = arith.addf %163, %164 : vector<8x64xf32>
    %166 = math.tanh %165 : vector<8x64xf32>
    %167 = arith.mulf %160, %166 : vector<8x64xf32>
    %168 = vector.extract_strided_slice %167 {offsets = [0, 0], sizes = [8, 32], strides = [1, 1]} : vector<8x64xf32> to vector<8x32xf32>
    %c24_52 = arith.constant 24 : index
    %c0_53 = arith.constant 0 : index
    %169 = vector.load %arg19[%c24_52, %c0_53] : memref<128x64xf32, #tpu.memory_space<vmem>>, vector<8x32xf32>
    tpu.vector_store %arg19[%c24_52, %c0_53], %168 {strides = array<i32>} : memref<128x64xf32, #tpu.memory_space<vmem>>, vector<8x32xf32>,
    %170 = vector.extract_strided_slice %167 {offsets = [0, 32], sizes = [8, 32], strides = [1, 1]} : vector<8x64xf32> to vector<8x32xf32>
    %c96_54 = arith.constant 96 : index
    %c32_55 = arith.constant 32 : index
    %171 = vector.load %arg19[%c96_54, %c32_55] : memref<128x64xf32, #tpu.memory_space<vmem>>, vector<8x32xf32>
    tpu.vector_store %arg19[%c96_54, %c32_55], %170 {strides = array<i32>} : memref<128x64xf32, #tpu.memory_space<vmem>>, vector<8x32xf32>,
    %c32_56 = arith.constant 32 : index
    %c0_57 = arith.constant 0 : index
    %172 = vector.load %arg20[%c32_56, %c0_57] : memref<128x256xf32, #tpu.memory_space<vmem>>, vector<8x256xf32>
    %c88 = arith.constant 88 : index
    %c0_58 = arith.constant 0 : index
    %173 = vector.load %arg20[%c88, %c0_58] : memref<128x256xf32, #tpu.memory_space<vmem>>, vector<8x256xf32>
    %174 = arith.select %32, %172, %173 : vector<8x256xi1>, vector<8x256xf32>
    %cst_59 = arith.constant dense<0.000000e+00> : vector<8x256xf32>
    %175 = tpu.matmul %167, %33, %cst_59 {dimension_numbers = #tpu.dot_dimension_numbers<[1], [0], [0], [1], [0, 0, 1, 1], [], []>} : vector<8x64xf32>, vector<64x256xf32>, vector<8x256xf32> -> vector<8x256xf32>
    %176 = arith.addf %174, %175 : vector<8x256xf32>
    %177 = vector.extract_strided_slice %176 {offsets = [0, 0], sizes = [8, 64], strides = [1, 1]} : vector<8x256xf32> to vector<8x64xf32>
    %178 = arith.negf %177 : vector<8x64xf32>
    %179 = math.exp %178 : vector<8x64xf32>
    %cst_60 = arith.constant 1.000000e+00 : f32
    %180 = vector.broadcast %cst_60 : f32 to vector<8x64xf32>
    %181 = arith.addf %180, %179 : vector<8x64xf32>
    %182 = arith.divf %180, %181 : vector<8x64xf32>
    %183 = vector.extract_strided_slice %176 {offsets = [0, 64], sizes = [8, 64], strides = [1, 1]} : vector<8x256xf32> to vector<8x64xf32>
    %184 = arith.negf %183 : vector<8x64xf32>
    %185 = math.exp %184 : vector<8x64xf32>
    %cst_61 = arith.constant 1.000000e+00 : f32
    %186 = vector.broadcast %cst_61 : f32 to vector<8x64xf32>
    %187 = arith.addf %186, %185 : vector<8x64xf32>
    %188 = arith.divf %186, %187 : vector<8x64xf32>
    %189 = vector.extract_strided_slice %176 {offsets = [0, 128], sizes = [8, 64], strides = [1, 1]} : vector<8x256xf32> to vector<8x64xf32>
    %190 = arith.negf %189 : vector<8x64xf32>
    %191 = math.exp %190 : vector<8x64xf32>
    %cst_62 = arith.constant 1.000000e+00 : f32
    %192 = vector.broadcast %cst_62 : f32 to vector<8x64xf32>
    %193 = arith.addf %192, %191 : vector<8x64xf32>
    %194 = arith.divf %192, %193 : vector<8x64xf32>
    %195 = vector.extract_strided_slice %176 {offsets = [0, 192], sizes = [8, 64], strides = [1, 1]} : vector<8x256xf32> to vector<8x64xf32>
    %196 = math.tanh %195 : vector<8x64xf32>
    %197 = arith.mulf %182, %165 : vector<8x64xf32>
    %198 = arith.mulf %188, %196 : vector<8x64xf32>
    %199 = arith.addf %197, %198 : vector<8x64xf32>
    %200 = math.tanh %199 : vector<8x64xf32>
    %201 = arith.mulf %194, %200 : vector<8x64xf32>
    %202 = vector.extract_strided_slice %201 {offsets = [0, 0], sizes = [8, 32], strides = [1, 1]} : vector<8x64xf32> to vector<8x32xf32>
    %c32_63 = arith.constant 32 : index
    %c0_64 = arith.constant 0 : index
    %203 = vector.load %arg19[%c32_63, %c0_64] : memref<128x64xf32, #tpu.memory_space<vmem>>, vector<8x32xf32>
    tpu.vector_store %arg19[%c32_63, %c0_64], %202 {strides = array<i32>} : memref<128x64xf32, #tpu.memory_space<vmem>>, vector<8x32xf32>,
    %204 = vector.extract_strided_slice %201 {offsets = [0, 32], sizes = [8, 32], strides = [1, 1]} : vector<8x64xf32> to vector<8x32xf32>
    %c88_65 = arith.constant 88 : index
    %c32_66 = arith.constant 32 : index
    %205 = vector.load %arg19[%c88_65, %c32_66] : memref<128x64xf32, #tpu.memory_space<vmem>>, vector<8x32xf32>
    tpu.vector_store %arg19[%c88_65, %c32_66], %204 {strides = array<i32>} : memref<128x64xf32, #tpu.memory_space<vmem>>, vector<8x32xf32>,
    %c40 = arith.constant 40 : index
    %c0_67 = arith.constant 0 : index
    %206 = vector.load %arg20[%c40, %c0_67] : memref<128x256xf32, #tpu.memory_space<vmem>>, vector<8x256xf32>
    %c80 = arith.constant 80 : index
    %c0_68 = arith.constant 0 : index
    %207 = vector.load %arg20[%c80, %c0_68] : memref<128x256xf32, #tpu.memory_space<vmem>>, vector<8x256xf32>
    %208 = arith.select %32, %206, %207 : vector<8x256xi1>, vector<8x256xf32>
    %cst_69 = arith.constant dense<0.000000e+00> : vector<8x256xf32>
    %209 = tpu.matmul %201, %33, %cst_69 {dimension_numbers = #tpu.dot_dimension_numbers<[1], [0], [0], [1], [0, 0, 1, 1], [], []>} : vector<8x64xf32>, vector<64x256xf32>, vector<8x256xf32> -> vector<8x256xf32>
    %210 = arith.addf %208, %209 : vector<8x256xf32>
    %211 = vector.extract_strided_slice %210 {offsets = [0, 0], sizes = [8, 64], strides = [1, 1]} : vector<8x256xf32> to vector<8x64xf32>
    %212 = arith.negf %211 : vector<8x64xf32>
    %213 = math.exp %212 : vector<8x64xf32>
    %cst_70 = arith.constant 1.000000e+00 : f32
    %214 = vector.broadcast %cst_70 : f32 to vector<8x64xf32>
    %215 = arith.addf %214, %213 : vector<8x64xf32>
    %216 = arith.divf %214, %215 : vector<8x64xf32>
    %217 = vector.extract_strided_slice %210 {offsets = [0, 64], sizes = [8, 64], strides = [1, 1]} : vector<8x256xf32> to vector<8x64xf32>
    %218 = arith.negf %217 : vector<8x64xf32>
    %219 = math.exp %218 : vector<8x64xf32>
    %cst_71 = arith.constant 1.000000e+00 : f32
    %220 = vector.broadcast %cst_71 : f32 to vector<8x64xf32>
    %221 = arith.addf %220, %219 : vector<8x64xf32>
    %222 = arith.divf %220, %221 : vector<8x64xf32>
    %223 = vector.extract_strided_slice %210 {offsets = [0, 128], sizes = [8, 64], strides = [1, 1]} : vector<8x256xf32> to vector<8x64xf32>
    %224 = arith.negf %223 : vector<8x64xf32>
    %225 = math.exp %224 : vector<8x64xf32>
    %cst_72 = arith.constant 1.000000e+00 : f32
    %226 = vector.broadcast %cst_72 : f32 to vector<8x64xf32>
    %227 = arith.addf %226, %225 : vector<8x64xf32>
    %228 = arith.divf %226, %227 : vector<8x64xf32>
    %229 = vector.extract_strided_slice %210 {offsets = [0, 192], sizes = [8, 64], strides = [1, 1]} : vector<8x256xf32> to vector<8x64xf32>
    %230 = math.tanh %229 : vector<8x64xf32>
    %231 = arith.mulf %216, %199 : vector<8x64xf32>
    %232 = arith.mulf %222, %230 : vector<8x64xf32>
    %233 = arith.addf %231, %232 : vector<8x64xf32>
    %234 = math.tanh %233 : vector<8x64xf32>
    %235 = arith.mulf %228, %234 : vector<8x64xf32>
    %236 = vector.extract_strided_slice %235 {offsets = [0, 0], sizes = [8, 32], strides = [1, 1]} : vector<8x64xf32> to vector<8x32xf32>
    %c40_73 = arith.constant 40 : index
    %c0_74 = arith.constant 0 : index
    %237 = vector.load %arg19[%c40_73, %c0_74] : memref<128x64xf32, #tpu.memory_space<vmem>>, vector<8x32xf32>
    tpu.vector_store %arg19[%c40_73, %c0_74], %236 {strides = array<i32>} : memref<128x64xf32, #tpu.memory_space<vmem>>, vector<8x32xf32>,
    %238 = vector.extract_strided_slice %235 {offsets = [0, 32], sizes = [8, 32], strides = [1, 1]} : vector<8x64xf32> to vector<8x32xf32>
    %c80_75 = arith.constant 80 : index
    %c32_76 = arith.constant 32 : index
    %239 = vector.load %arg19[%c80_75, %c32_76] : memref<128x64xf32, #tpu.memory_space<vmem>>, vector<8x32xf32>
    tpu.vector_store %arg19[%c80_75, %c32_76], %238 {strides = array<i32>} : memref<128x64xf32, #tpu.memory_space<vmem>>, vector<8x32xf32>,
    %c48 = arith.constant 48 : index
    %c0_77 = arith.constant 0 : index
    %240 = vector.load %arg20[%c48, %c0_77] : memref<128x256xf32, #tpu.memory_space<vmem>>, vector<8x256xf32>
    %c72 = arith.constant 72 : index
    %c0_78 = arith.constant 0 : index
    %241 = vector.load %arg20[%c72, %c0_78] : memref<128x256xf32, #tpu.memory_space<vmem>>, vector<8x256xf32>
    %242 = arith.select %32, %240, %241 : vector<8x256xi1>, vector<8x256xf32>
    %cst_79 = arith.constant dense<0.000000e+00> : vector<8x256xf32>
    %243 = tpu.matmul %235, %33, %cst_79 {dimension_numbers = #tpu.dot_dimension_numbers<[1], [0], [0], [1], [0, 0, 1, 1], [], []>} : vector<8x64xf32>, vector<64x256xf32>, vector<8x256xf32> -> vector<8x256xf32>
    %244 = arith.addf %242, %243 : vector<8x256xf32>
    %245 = vector.extract_strided_slice %244 {offsets = [0, 0], sizes = [8, 64], strides = [1, 1]} : vector<8x256xf32> to vector<8x64xf32>
    %246 = arith.negf %245 : vector<8x64xf32>
    %247 = math.exp %246 : vector<8x64xf32>
    %cst_80 = arith.constant 1.000000e+00 : f32
    %248 = vector.broadcast %cst_80 : f32 to vector<8x64xf32>
    %249 = arith.addf %248, %247 : vector<8x64xf32>
    %250 = arith.divf %248, %249 : vector<8x64xf32>
    %251 = vector.extract_strided_slice %244 {offsets = [0, 64], sizes = [8, 64], strides = [1, 1]} : vector<8x256xf32> to vector<8x64xf32>
    %252 = arith.negf %251 : vector<8x64xf32>
    %253 = math.exp %252 : vector<8x64xf32>
    %cst_81 = arith.constant 1.000000e+00 : f32
    %254 = vector.broadcast %cst_81 : f32 to vector<8x64xf32>
    %255 = arith.addf %254, %253 : vector<8x64xf32>
    %256 = arith.divf %254, %255 : vector<8x64xf32>
    %257 = vector.extract_strided_slice %244 {offsets = [0, 128], sizes = [8, 64], strides = [1, 1]} : vector<8x256xf32> to vector<8x64xf32>
    %258 = arith.negf %257 : vector<8x64xf32>
    %259 = math.exp %258 : vector<8x64xf32>
    %cst_82 = arith.constant 1.000000e+00 : f32
    %260 = vector.broadcast %cst_82 : f32 to vector<8x64xf32>
    %261 = arith.addf %260, %259 : vector<8x64xf32>
    %262 = arith.divf %260, %261 : vector<8x64xf32>
    %263 = vector.extract_strided_slice %244 {offsets = [0, 192], sizes = [8, 64], strides = [1, 1]} : vector<8x256xf32> to vector<8x64xf32>
    %264 = math.tanh %263 : vector<8x64xf32>
    %265 = arith.mulf %250, %233 : vector<8x64xf32>
    %266 = arith.mulf %256, %264 : vector<8x64xf32>
    %267 = arith.addf %265, %266 : vector<8x64xf32>
    %268 = math.tanh %267 : vector<8x64xf32>
    %269 = arith.mulf %262, %268 : vector<8x64xf32>
    %270 = vector.extract_strided_slice %269 {offsets = [0, 0], sizes = [8, 32], strides = [1, 1]} : vector<8x64xf32> to vector<8x32xf32>
    %c48_83 = arith.constant 48 : index
    %c0_84 = arith.constant 0 : index
    %271 = vector.load %arg19[%c48_83, %c0_84] : memref<128x64xf32, #tpu.memory_space<vmem>>, vector<8x32xf32>
    tpu.vector_store %arg19[%c48_83, %c0_84], %270 {strides = array<i32>} : memref<128x64xf32, #tpu.memory_space<vmem>>, vector<8x32xf32>,
    %272 = vector.extract_strided_slice %269 {offsets = [0, 32], sizes = [8, 32], strides = [1, 1]} : vector<8x64xf32> to vector<8x32xf32>
    %c72_85 = arith.constant 72 : index
    %c32_86 = arith.constant 32 : index
    %273 = vector.load %arg19[%c72_85, %c32_86] : memref<128x64xf32, #tpu.memory_space<vmem>>, vector<8x32xf32>
    tpu.vector_store %arg19[%c72_85, %c32_86], %272 {strides = array<i32>} : memref<128x64xf32, #tpu.memory_space<vmem>>, vector<8x32xf32>,
    %c56 = arith.constant 56 : index
    %c0_87 = arith.constant 0 : index
    %274 = vector.load %arg20[%c56, %c0_87] : memref<128x256xf32, #tpu.memory_space<vmem>>, vector<8x256xf32>
    %c64 = arith.constant 64 : index
    %c0_88 = arith.constant 0 : index
    %275 = vector.load %arg20[%c64, %c0_88] : memref<128x256xf32, #tpu.memory_space<vmem>>, vector<8x256xf32>
    %276 = arith.select %32, %274, %275 : vector<8x256xi1>, vector<8x256xf32>
    %cst_89 = arith.constant dense<0.000000e+00> : vector<8x256xf32>
    %277 = tpu.matmul %269, %33, %cst_89 {dimension_numbers = #tpu.dot_dimension_numbers<[1], [0], [0], [1], [0, 0, 1, 1], [], []>} : vector<8x64xf32>, vector<64x256xf32>, vector<8x256xf32> -> vector<8x256xf32>
    %278 = arith.addf %276, %277 : vector<8x256xf32>
    %279 = vector.extract_strided_slice %278 {offsets = [0, 0], sizes = [8, 64], strides = [1, 1]} : vector<8x256xf32> to vector<8x64xf32>
    %280 = arith.negf %279 : vector<8x64xf32>
    %281 = math.exp %280 : vector<8x64xf32>
    %cst_90 = arith.constant 1.000000e+00 : f32
    %282 = vector.broadcast %cst_90 : f32 to vector<8x64xf32>
    %283 = arith.addf %282, %281 : vector<8x64xf32>
    %284 = arith.divf %282, %283 : vector<8x64xf32>
    %285 = vector.extract_strided_slice %278 {offsets = [0, 64], sizes = [8, 64], strides = [1, 1]} : vector<8x256xf32> to vector<8x64xf32>
    %286 = arith.negf %285 : vector<8x64xf32>
    %287 = math.exp %286 : vector<8x64xf32>
    %cst_91 = arith.constant 1.000000e+00 : f32
    %288 = vector.broadcast %cst_91 : f32 to vector<8x64xf32>
    %289 = arith.addf %288, %287 : vector<8x64xf32>
    %290 = arith.divf %288, %289 : vector<8x64xf32>
    %291 = vector.extract_strided_slice %278 {offsets = [0, 128], sizes = [8, 64], strides = [1, 1]} : vector<8x256xf32> to vector<8x64xf32>
    %292 = arith.negf %291 : vector<8x64xf32>
    %293 = math.exp %292 : vector<8x64xf32>
    %cst_92 = arith.constant 1.000000e+00 : f32
    %294 = vector.broadcast %cst_92 : f32 to vector<8x64xf32>
    %295 = arith.addf %294, %293 : vector<8x64xf32>
    %296 = arith.divf %294, %295 : vector<8x64xf32>
    %297 = vector.extract_strided_slice %278 {offsets = [0, 192], sizes = [8, 64], strides = [1, 1]} : vector<8x256xf32> to vector<8x64xf32>
    %298 = math.tanh %297 : vector<8x64xf32>
    %299 = arith.mulf %284, %267 : vector<8x64xf32>
    %300 = arith.mulf %290, %298 : vector<8x64xf32>
    %301 = arith.addf %299, %300 : vector<8x64xf32>
    %302 = math.tanh %301 : vector<8x64xf32>
    %303 = arith.mulf %296, %302 : vector<8x64xf32>
    %304 = vector.extract_strided_slice %303 {offsets = [0, 0], sizes = [8, 32], strides = [1, 1]} : vector<8x64xf32> to vector<8x32xf32>
    %c56_93 = arith.constant 56 : index
    %c0_94 = arith.constant 0 : index
    %305 = vector.load %arg19[%c56_93, %c0_94] : memref<128x64xf32, #tpu.memory_space<vmem>>, vector<8x32xf32>
    tpu.vector_store %arg19[%c56_93, %c0_94], %304 {strides = array<i32>} : memref<128x64xf32, #tpu.memory_space<vmem>>, vector<8x32xf32>,
    %306 = vector.extract_strided_slice %303 {offsets = [0, 32], sizes = [8, 32], strides = [1, 1]} : vector<8x64xf32> to vector<8x32xf32>
    %c64_95 = arith.constant 64 : index
    %c32_96 = arith.constant 32 : index
    %307 = vector.load %arg19[%c64_95, %c32_96] : memref<128x64xf32, #tpu.memory_space<vmem>>, vector<8x32xf32>
    tpu.vector_store %arg19[%c64_95, %c32_96], %306 {strides = array<i32>} : memref<128x64xf32, #tpu.memory_space<vmem>>, vector<8x32xf32>,
    %c64_97 = arith.constant 64 : index
    %c0_98 = arith.constant 0 : index
    %308 = vector.load %arg20[%c64_97, %c0_98] : memref<128x256xf32, #tpu.memory_space<vmem>>, vector<8x256xf32>
    %c56_99 = arith.constant 56 : index
    %c0_100 = arith.constant 0 : index
    %309 = vector.load %arg20[%c56_99, %c0_100] : memref<128x256xf32, #tpu.memory_space<vmem>>, vector<8x256xf32>
    %310 = arith.select %32, %308, %309 : vector<8x256xi1>, vector<8x256xf32>
    %cst_101 = arith.constant dense<0.000000e+00> : vector<8x256xf32>
    %311 = tpu.matmul %303, %33, %cst_101 {dimension_numbers = #tpu.dot_dimension_numbers<[1], [0], [0], [1], [0, 0, 1, 1], [], []>} : vector<8x64xf32>, vector<64x256xf32>, vector<8x256xf32> -> vector<8x256xf32>
    %312 = arith.addf %310, %311 : vector<8x256xf32>
    %313 = vector.extract_strided_slice %312 {offsets = [0, 0], sizes = [8, 64], strides = [1, 1]} : vector<8x256xf32> to vector<8x64xf32>
    %314 = arith.negf %313 : vector<8x64xf32>
    %315 = math.exp %314 : vector<8x64xf32>
    %cst_102 = arith.constant 1.000000e+00 : f32
    %316 = vector.broadcast %cst_102 : f32 to vector<8x64xf32>
    %317 = arith.addf %316, %315 : vector<8x64xf32>
    %318 = arith.divf %316, %317 : vector<8x64xf32>
    %319 = vector.extract_strided_slice %312 {offsets = [0, 64], sizes = [8, 64], strides = [1, 1]} : vector<8x256xf32> to vector<8x64xf32>
    %320 = arith.negf %319 : vector<8x64xf32>
    %321 = math.exp %320 : vector<8x64xf32>
    %cst_103 = arith.constant 1.000000e+00 : f32
    %322 = vector.broadcast %cst_103 : f32 to vector<8x64xf32>
    %323 = arith.addf %322, %321 : vector<8x64xf32>
    %324 = arith.divf %322, %323 : vector<8x64xf32>
    %325 = vector.extract_strided_slice %312 {offsets = [0, 128], sizes = [8, 64], strides = [1, 1]} : vector<8x256xf32> to vector<8x64xf32>
    %326 = arith.negf %325 : vector<8x64xf32>
    %327 = math.exp %326 : vector<8x64xf32>
    %cst_104 = arith.constant 1.000000e+00 : f32
    %328 = vector.broadcast %cst_104 : f32 to vector<8x64xf32>
    %329 = arith.addf %328, %327 : vector<8x64xf32>
    %330 = arith.divf %328, %329 : vector<8x64xf32>
    %331 = vector.extract_strided_slice %312 {offsets = [0, 192], sizes = [8, 64], strides = [1, 1]} : vector<8x256xf32> to vector<8x64xf32>
    %332 = math.tanh %331 : vector<8x64xf32>
    %333 = arith.mulf %318, %301 : vector<8x64xf32>
    %334 = arith.mulf %324, %332 : vector<8x64xf32>
    %335 = arith.addf %333, %334 : vector<8x64xf32>
    %336 = math.tanh %335 : vector<8x64xf32>
    %337 = arith.mulf %330, %336 : vector<8x64xf32>
    %338 = vector.extract_strided_slice %337 {offsets = [0, 0], sizes = [8, 32], strides = [1, 1]} : vector<8x64xf32> to vector<8x32xf32>
    %c64_105 = arith.constant 64 : index
    %c0_106 = arith.constant 0 : index
    %339 = vector.load %arg19[%c64_105, %c0_106] : memref<128x64xf32, #tpu.memory_space<vmem>>, vector<8x32xf32>
    tpu.vector_store %arg19[%c64_105, %c0_106], %338 {strides = array<i32>} : memref<128x64xf32, #tpu.memory_space<vmem>>, vector<8x32xf32>,
    %340 = vector.extract_strided_slice %337 {offsets = [0, 32], sizes = [8, 32], strides = [1, 1]} : vector<8x64xf32> to vector<8x32xf32>
    %c56_107 = arith.constant 56 : index
    %c32_108 = arith.constant 32 : index
    %341 = vector.load %arg19[%c56_107, %c32_108] : memref<128x64xf32, #tpu.memory_space<vmem>>, vector<8x32xf32>
    tpu.vector_store %arg19[%c56_107, %c32_108], %340 {strides = array<i32>} : memref<128x64xf32, #tpu.memory_space<vmem>>, vector<8x32xf32>,
    %c72_109 = arith.constant 72 : index
    %c0_110 = arith.constant 0 : index
    %342 = vector.load %arg20[%c72_109, %c0_110] : memref<128x256xf32, #tpu.memory_space<vmem>>, vector<8x256xf32>
    %c48_111 = arith.constant 48 : index
    %c0_112 = arith.constant 0 : index
    %343 = vector.load %arg20[%c48_111, %c0_112] : memref<128x256xf32, #tpu.memory_space<vmem>>, vector<8x256xf32>
    %344 = arith.select %32, %342, %343 : vector<8x256xi1>, vector<8x256xf32>
    %cst_113 = arith.constant dense<0.000000e+00> : vector<8x256xf32>
    %345 = tpu.matmul %337, %33, %cst_113 {dimension_numbers = #tpu.dot_dimension_numbers<[1], [0], [0], [1], [0, 0, 1, 1], [], []>} : vector<8x64xf32>, vector<64x256xf32>, vector<8x256xf32> -> vector<8x256xf32>
    %346 = arith.addf %344, %345 : vector<8x256xf32>
    %347 = vector.extract_strided_slice %346 {offsets = [0, 0], sizes = [8, 64], strides = [1, 1]} : vector<8x256xf32> to vector<8x64xf32>
    %348 = arith.negf %347 : vector<8x64xf32>
    %349 = math.exp %348 : vector<8x64xf32>
    %cst_114 = arith.constant 1.000000e+00 : f32
    %350 = vector.broadcast %cst_114 : f32 to vector<8x64xf32>
    %351 = arith.addf %350, %349 : vector<8x64xf32>
    %352 = arith.divf %350, %351 : vector<8x64xf32>
    %353 = vector.extract_strided_slice %346 {offsets = [0, 64], sizes = [8, 64], strides = [1, 1]} : vector<8x256xf32> to vector<8x64xf32>
    %354 = arith.negf %353 : vector<8x64xf32>
    %355 = math.exp %354 : vector<8x64xf32>
    %cst_115 = arith.constant 1.000000e+00 : f32
    %356 = vector.broadcast %cst_115 : f32 to vector<8x64xf32>
    %357 = arith.addf %356, %355 : vector<8x64xf32>
    %358 = arith.divf %356, %357 : vector<8x64xf32>
    %359 = vector.extract_strided_slice %346 {offsets = [0, 128], sizes = [8, 64], strides = [1, 1]} : vector<8x256xf32> to vector<8x64xf32>
    %360 = arith.negf %359 : vector<8x64xf32>
    %361 = math.exp %360 : vector<8x64xf32>
    %cst_116 = arith.constant 1.000000e+00 : f32
    %362 = vector.broadcast %cst_116 : f32 to vector<8x64xf32>
    %363 = arith.addf %362, %361 : vector<8x64xf32>
    %364 = arith.divf %362, %363 : vector<8x64xf32>
    %365 = vector.extract_strided_slice %346 {offsets = [0, 192], sizes = [8, 64], strides = [1, 1]} : vector<8x256xf32> to vector<8x64xf32>
    %366 = math.tanh %365 : vector<8x64xf32>
    %367 = arith.mulf %352, %335 : vector<8x64xf32>
    %368 = arith.mulf %358, %366 : vector<8x64xf32>
    %369 = arith.addf %367, %368 : vector<8x64xf32>
    %370 = math.tanh %369 : vector<8x64xf32>
    %371 = arith.mulf %364, %370 : vector<8x64xf32>
    %372 = vector.extract_strided_slice %371 {offsets = [0, 0], sizes = [8, 32], strides = [1, 1]} : vector<8x64xf32> to vector<8x32xf32>
    %c72_117 = arith.constant 72 : index
    %c0_118 = arith.constant 0 : index
    %373 = vector.load %arg19[%c72_117, %c0_118] : memref<128x64xf32, #tpu.memory_space<vmem>>, vector<8x32xf32>
    tpu.vector_store %arg19[%c72_117, %c0_118], %372 {strides = array<i32>} : memref<128x64xf32, #tpu.memory_space<vmem>>, vector<8x32xf32>,
    %374 = vector.extract_strided_slice %371 {offsets = [0, 32], sizes = [8, 32], strides = [1, 1]} : vector<8x64xf32> to vector<8x32xf32>
    %c48_119 = arith.constant 48 : index
    %c32_120 = arith.constant 32 : index
    %375 = vector.load %arg19[%c48_119, %c32_120] : memref<128x64xf32, #tpu.memory_space<vmem>>, vector<8x32xf32>
    tpu.vector_store %arg19[%c48_119, %c32_120], %374 {strides = array<i32>} : memref<128x64xf32, #tpu.memory_space<vmem>>, vector<8x32xf32>,
    %c80_121 = arith.constant 80 : index
    %c0_122 = arith.constant 0 : index
    %376 = vector.load %arg20[%c80_121, %c0_122] : memref<128x256xf32, #tpu.memory_space<vmem>>, vector<8x256xf32>
    %c40_123 = arith.constant 40 : index
    %c0_124 = arith.constant 0 : index
    %377 = vector.load %arg20[%c40_123, %c0_124] : memref<128x256xf32, #tpu.memory_space<vmem>>, vector<8x256xf32>
    %378 = arith.select %32, %376, %377 : vector<8x256xi1>, vector<8x256xf32>
    %cst_125 = arith.constant dense<0.000000e+00> : vector<8x256xf32>
    %379 = tpu.matmul %371, %33, %cst_125 {dimension_numbers = #tpu.dot_dimension_numbers<[1], [0], [0], [1], [0, 0, 1, 1], [], []>} : vector<8x64xf32>, vector<64x256xf32>, vector<8x256xf32> -> vector<8x256xf32>
    %380 = arith.addf %378, %379 : vector<8x256xf32>
    %381 = vector.extract_strided_slice %380 {offsets = [0, 0], sizes = [8, 64], strides = [1, 1]} : vector<8x256xf32> to vector<8x64xf32>
    %382 = arith.negf %381 : vector<8x64xf32>
    %383 = math.exp %382 : vector<8x64xf32>
    %cst_126 = arith.constant 1.000000e+00 : f32
    %384 = vector.broadcast %cst_126 : f32 to vector<8x64xf32>
    %385 = arith.addf %384, %383 : vector<8x64xf32>
    %386 = arith.divf %384, %385 : vector<8x64xf32>
    %387 = vector.extract_strided_slice %380 {offsets = [0, 64], sizes = [8, 64], strides = [1, 1]} : vector<8x256xf32> to vector<8x64xf32>
    %388 = arith.negf %387 : vector<8x64xf32>
    %389 = math.exp %388 : vector<8x64xf32>
    %cst_127 = arith.constant 1.000000e+00 : f32
    %390 = vector.broadcast %cst_127 : f32 to vector<8x64xf32>
    %391 = arith.addf %390, %389 : vector<8x64xf32>
    %392 = arith.divf %390, %391 : vector<8x64xf32>
    %393 = vector.extract_strided_slice %380 {offsets = [0, 128], sizes = [8, 64], strides = [1, 1]} : vector<8x256xf32> to vector<8x64xf32>
    %394 = arith.negf %393 : vector<8x64xf32>
    %395 = math.exp %394 : vector<8x64xf32>
    %cst_128 = arith.constant 1.000000e+00 : f32
    %396 = vector.broadcast %cst_128 : f32 to vector<8x64xf32>
    %397 = arith.addf %396, %395 : vector<8x64xf32>
    %398 = arith.divf %396, %397 : vector<8x64xf32>
    %399 = vector.extract_strided_slice %380 {offsets = [0, 192], sizes = [8, 64], strides = [1, 1]} : vector<8x256xf32> to vector<8x64xf32>
    %400 = math.tanh %399 : vector<8x64xf32>
    %401 = arith.mulf %386, %369 : vector<8x64xf32>
    %402 = arith.mulf %392, %400 : vector<8x64xf32>
    %403 = arith.addf %401, %402 : vector<8x64xf32>
    %404 = math.tanh %403 : vector<8x64xf32>
    %405 = arith.mulf %398, %404 : vector<8x64xf32>
    %406 = vector.extract_strided_slice %405 {offsets = [0, 0], sizes = [8, 32], strides = [1, 1]} : vector<8x64xf32> to vector<8x32xf32>
    %c80_129 = arith.constant 80 : index
    %c0_130 = arith.constant 0 : index
    %407 = vector.load %arg19[%c80_129, %c0_130] : memref<128x64xf32, #tpu.memory_space<vmem>>, vector<8x32xf32>
    tpu.vector_store %arg19[%c80_129, %c0_130], %406 {strides = array<i32>} : memref<128x64xf32, #tpu.memory_space<vmem>>, vector<8x32xf32>,
    %408 = vector.extract_strided_slice %405 {offsets = [0, 32], sizes = [8, 32], strides = [1, 1]} : vector<8x64xf32> to vector<8x32xf32>
    %c40_131 = arith.constant 40 : index
    %c32_132 = arith.constant 32 : index
    %409 = vector.load %arg19[%c40_131, %c32_132] : memref<128x64xf32, #tpu.memory_space<vmem>>, vector<8x32xf32>
    tpu.vector_store %arg19[%c40_131, %c32_132], %408 {strides = array<i32>} : memref<128x64xf32, #tpu.memory_space<vmem>>, vector<8x32xf32>,
    %c88_133 = arith.constant 88 : index
    %c0_134 = arith.constant 0 : index
    %410 = vector.load %arg20[%c88_133, %c0_134] : memref<128x256xf32, #tpu.memory_space<vmem>>, vector<8x256xf32>
    %c32_135 = arith.constant 32 : index
    %c0_136 = arith.constant 0 : index
    %411 = vector.load %arg20[%c32_135, %c0_136] : memref<128x256xf32, #tpu.memory_space<vmem>>, vector<8x256xf32>
    %412 = arith.select %32, %410, %411 : vector<8x256xi1>, vector<8x256xf32>
    %cst_137 = arith.constant dense<0.000000e+00> : vector<8x256xf32>
    %413 = tpu.matmul %405, %33, %cst_137 {dimension_numbers = #tpu.dot_dimension_numbers<[1], [0], [0], [1], [0, 0, 1, 1], [], []>} : vector<8x64xf32>, vector<64x256xf32>, vector<8x256xf32> -> vector<8x256xf32>
    %414 = arith.addf %412, %413 : vector<8x256xf32>
    %415 = vector.extract_strided_slice %414 {offsets = [0, 0], sizes = [8, 64], strides = [1, 1]} : vector<8x256xf32> to vector<8x64xf32>
    %416 = arith.negf %415 : vector<8x64xf32>
    %417 = math.exp %416 : vector<8x64xf32>
    %cst_138 = arith.constant 1.000000e+00 : f32
    %418 = vector.broadcast %cst_138 : f32 to vector<8x64xf32>
    %419 = arith.addf %418, %417 : vector<8x64xf32>
    %420 = arith.divf %418, %419 : vector<8x64xf32>
    %421 = vector.extract_strided_slice %414 {offsets = [0, 64], sizes = [8, 64], strides = [1, 1]} : vector<8x256xf32> to vector<8x64xf32>
    %422 = arith.negf %421 : vector<8x64xf32>
    %423 = math.exp %422 : vector<8x64xf32>
    %cst_139 = arith.constant 1.000000e+00 : f32
    %424 = vector.broadcast %cst_139 : f32 to vector<8x64xf32>
    %425 = arith.addf %424, %423 : vector<8x64xf32>
    %426 = arith.divf %424, %425 : vector<8x64xf32>
    %427 = vector.extract_strided_slice %414 {offsets = [0, 128], sizes = [8, 64], strides = [1, 1]} : vector<8x256xf32> to vector<8x64xf32>
    %428 = arith.negf %427 : vector<8x64xf32>
    %429 = math.exp %428 : vector<8x64xf32>
    %cst_140 = arith.constant 1.000000e+00 : f32
    %430 = vector.broadcast %cst_140 : f32 to vector<8x64xf32>
    %431 = arith.addf %430, %429 : vector<8x64xf32>
    %432 = arith.divf %430, %431 : vector<8x64xf32>
    %433 = vector.extract_strided_slice %414 {offsets = [0, 192], sizes = [8, 64], strides = [1, 1]} : vector<8x256xf32> to vector<8x64xf32>
    %434 = math.tanh %433 : vector<8x64xf32>
    %435 = arith.mulf %420, %403 : vector<8x64xf32>
    %436 = arith.mulf %426, %434 : vector<8x64xf32>
    %437 = arith.addf %435, %436 : vector<8x64xf32>
    %438 = math.tanh %437 : vector<8x64xf32>
    %439 = arith.mulf %432, %438 : vector<8x64xf32>
    %440 = vector.extract_strided_slice %439 {offsets = [0, 0], sizes = [8, 32], strides = [1, 1]} : vector<8x64xf32> to vector<8x32xf32>
    %c88_141 = arith.constant 88 : index
    %c0_142 = arith.constant 0 : index
    %441 = vector.load %arg19[%c88_141, %c0_142] : memref<128x64xf32, #tpu.memory_space<vmem>>, vector<8x32xf32>
    tpu.vector_store %arg19[%c88_141, %c0_142], %440 {strides = array<i32>} : memref<128x64xf32, #tpu.memory_space<vmem>>, vector<8x32xf32>,
    %442 = vector.extract_strided_slice %439 {offsets = [0, 32], sizes = [8, 32], strides = [1, 1]} : vector<8x64xf32> to vector<8x32xf32>
    %c32_143 = arith.constant 32 : index
    %c32_144 = arith.constant 32 : index
    %443 = vector.load %arg19[%c32_143, %c32_144] : memref<128x64xf32, #tpu.memory_space<vmem>>, vector<8x32xf32>
    tpu.vector_store %arg19[%c32_143, %c32_144], %442 {strides = array<i32>} : memref<128x64xf32, #tpu.memory_space<vmem>>, vector<8x32xf32>,
    %c96_145 = arith.constant 96 : index
    %c0_146 = arith.constant 0 : index
    %444 = vector.load %arg20[%c96_145, %c0_146] : memref<128x256xf32, #tpu.memory_space<vmem>>, vector<8x256xf32>
    %c24_147 = arith.constant 24 : index
    %c0_148 = arith.constant 0 : index
    %445 = vector.load %arg20[%c24_147, %c0_148] : memref<128x256xf32, #tpu.memory_space<vmem>>, vector<8x256xf32>
    %446 = arith.select %32, %444, %445 : vector<8x256xi1>, vector<8x256xf32>
    %cst_149 = arith.constant dense<0.000000e+00> : vector<8x256xf32>
    %447 = tpu.matmul %439, %33, %cst_149 {dimension_numbers = #tpu.dot_dimension_numbers<[1], [0], [0], [1], [0, 0, 1, 1], [], []>} : vector<8x64xf32>, vector<64x256xf32>, vector<8x256xf32> -> vector<8x256xf32>
    %448 = arith.addf %446, %447 : vector<8x256xf32>
    %449 = vector.extract_strided_slice %448 {offsets = [0, 0], sizes = [8, 64], strides = [1, 1]} : vector<8x256xf32> to vector<8x64xf32>
    %450 = arith.negf %449 : vector<8x64xf32>
    %451 = math.exp %450 : vector<8x64xf32>
    %cst_150 = arith.constant 1.000000e+00 : f32
    %452 = vector.broadcast %cst_150 : f32 to vector<8x64xf32>
    %453 = arith.addf %452, %451 : vector<8x64xf32>
    %454 = arith.divf %452, %453 : vector<8x64xf32>
    %455 = vector.extract_strided_slice %448 {offsets = [0, 64], sizes = [8, 64], strides = [1, 1]} : vector<8x256xf32> to vector<8x64xf32>
    %456 = arith.negf %455 : vector<8x64xf32>
    %457 = math.exp %456 : vector<8x64xf32>
    %cst_151 = arith.constant 1.000000e+00 : f32
    %458 = vector.broadcast %cst_151 : f32 to vector<8x64xf32>
    %459 = arith.addf %458, %457 : vector<8x64xf32>
    %460 = arith.divf %458, %459 : vector<8x64xf32>
    %461 = vector.extract_strided_slice %448 {offsets = [0, 128], sizes = [8, 64], strides = [1, 1]} : vector<8x256xf32> to vector<8x64xf32>
    %462 = arith.negf %461 : vector<8x64xf32>
    %463 = math.exp %462 : vector<8x64xf32>
    %cst_152 = arith.constant 1.000000e+00 : f32
    %464 = vector.broadcast %cst_152 : f32 to vector<8x64xf32>
    %465 = arith.addf %464, %463 : vector<8x64xf32>
    %466 = arith.divf %464, %465 : vector<8x64xf32>
    %467 = vector.extract_strided_slice %448 {offsets = [0, 192], sizes = [8, 64], strides = [1, 1]} : vector<8x256xf32> to vector<8x64xf32>
    %468 = math.tanh %467 : vector<8x64xf32>
    %469 = arith.mulf %454, %437 : vector<8x64xf32>
    %470 = arith.mulf %460, %468 : vector<8x64xf32>
    %471 = arith.addf %469, %470 : vector<8x64xf32>
    %472 = math.tanh %471 : vector<8x64xf32>
    %473 = arith.mulf %466, %472 : vector<8x64xf32>
    %474 = vector.extract_strided_slice %473 {offsets = [0, 0], sizes = [8, 32], strides = [1, 1]} : vector<8x64xf32> to vector<8x32xf32>
    %c96_153 = arith.constant 96 : index
    %c0_154 = arith.constant 0 : index
    %475 = vector.load %arg19[%c96_153, %c0_154] : memref<128x64xf32, #tpu.memory_space<vmem>>, vector<8x32xf32>
    tpu.vector_store %arg19[%c96_153, %c0_154], %474 {strides = array<i32>} : memref<128x64xf32, #tpu.memory_space<vmem>>, vector<8x32xf32>,
    %476 = vector.extract_strided_slice %473 {offsets = [0, 32], sizes = [8, 32], strides = [1, 1]} : vector<8x64xf32> to vector<8x32xf32>
    %c24_155 = arith.constant 24 : index
    %c32_156 = arith.constant 32 : index
    %477 = vector.load %arg19[%c24_155, %c32_156] : memref<128x64xf32, #tpu.memory_space<vmem>>, vector<8x32xf32>
    tpu.vector_store %arg19[%c24_155, %c32_156], %476 {strides = array<i32>} : memref<128x64xf32, #tpu.memory_space<vmem>>, vector<8x32xf32>,
    %c104_157 = arith.constant 104 : index
    %c0_158 = arith.constant 0 : index
    %478 = vector.load %arg20[%c104_157, %c0_158] : memref<128x256xf32, #tpu.memory_space<vmem>>, vector<8x256xf32>
    %c16_159 = arith.constant 16 : index
    %c0_160 = arith.constant 0 : index
    %479 = vector.load %arg20[%c16_159, %c0_160] : memref<128x256xf32, #tpu.memory_space<vmem>>, vector<8x256xf32>
    %480 = arith.select %32, %478, %479 : vector<8x256xi1>, vector<8x256xf32>
    %cst_161 = arith.constant dense<0.000000e+00> : vector<8x256xf32>
    %481 = tpu.matmul %473, %33, %cst_161 {dimension_numbers = #tpu.dot_dimension_numbers<[1], [0], [0], [1], [0, 0, 1, 1], [], []>} : vector<8x64xf32>, vector<64x256xf32>, vector<8x256xf32> -> vector<8x256xf32>
    %482 = arith.addf %480, %481 : vector<8x256xf32>
    %483 = vector.extract_strided_slice %482 {offsets = [0, 0], sizes = [8, 64], strides = [1, 1]} : vector<8x256xf32> to vector<8x64xf32>
    %484 = arith.negf %483 : vector<8x64xf32>
    %485 = math.exp %484 : vector<8x64xf32>
    %cst_162 = arith.constant 1.000000e+00 : f32
    %486 = vector.broadcast %cst_162 : f32 to vector<8x64xf32>
    %487 = arith.addf %486, %485 : vector<8x64xf32>
    %488 = arith.divf %486, %487 : vector<8x64xf32>
    %489 = vector.extract_strided_slice %482 {offsets = [0, 64], sizes = [8, 64], strides = [1, 1]} : vector<8x256xf32> to vector<8x64xf32>
    %490 = arith.negf %489 : vector<8x64xf32>
    %491 = math.exp %490 : vector<8x64xf32>
    %cst_163 = arith.constant 1.000000e+00 : f32
    %492 = vector.broadcast %cst_163 : f32 to vector<8x64xf32>
    %493 = arith.addf %492, %491 : vector<8x64xf32>
    %494 = arith.divf %492, %493 : vector<8x64xf32>
    %495 = vector.extract_strided_slice %482 {offsets = [0, 128], sizes = [8, 64], strides = [1, 1]} : vector<8x256xf32> to vector<8x64xf32>
    %496 = arith.negf %495 : vector<8x64xf32>
    %497 = math.exp %496 : vector<8x64xf32>
    %cst_164 = arith.constant 1.000000e+00 : f32
    %498 = vector.broadcast %cst_164 : f32 to vector<8x64xf32>
    %499 = arith.addf %498, %497 : vector<8x64xf32>
    %500 = arith.divf %498, %499 : vector<8x64xf32>
    %501 = vector.extract_strided_slice %482 {offsets = [0, 192], sizes = [8, 64], strides = [1, 1]} : vector<8x256xf32> to vector<8x64xf32>
    %502 = math.tanh %501 : vector<8x64xf32>
    %503 = arith.mulf %488, %471 : vector<8x64xf32>
    %504 = arith.mulf %494, %502 : vector<8x64xf32>
    %505 = arith.addf %503, %504 : vector<8x64xf32>
    %506 = math.tanh %505 : vector<8x64xf32>
    %507 = arith.mulf %500, %506 : vector<8x64xf32>
    %508 = vector.extract_strided_slice %507 {offsets = [0, 0], sizes = [8, 32], strides = [1, 1]} : vector<8x64xf32> to vector<8x32xf32>
    %c104_165 = arith.constant 104 : index
    %c0_166 = arith.constant 0 : index
    %509 = vector.load %arg19[%c104_165, %c0_166] : memref<128x64xf32, #tpu.memory_space<vmem>>, vector<8x32xf32>
    tpu.vector_store %arg19[%c104_165, %c0_166], %508 {strides = array<i32>} : memref<128x64xf32, #tpu.memory_space<vmem>>, vector<8x32xf32>,
    %510 = vector.extract_strided_slice %507 {offsets = [0, 32], sizes = [8, 32], strides = [1, 1]} : vector<8x64xf32> to vector<8x32xf32>
    %c16_167 = arith.constant 16 : index
    %c32_168 = arith.constant 32 : index
    %511 = vector.load %arg19[%c16_167, %c32_168] : memref<128x64xf32, #tpu.memory_space<vmem>>, vector<8x32xf32>
    tpu.vector_store %arg19[%c16_167, %c32_168], %510 {strides = array<i32>} : memref<128x64xf32, #tpu.memory_space<vmem>>, vector<8x32xf32>,
    %c112_169 = arith.constant 112 : index
    %c0_170 = arith.constant 0 : index
    %512 = vector.load %arg20[%c112_169, %c0_170] : memref<128x256xf32, #tpu.memory_space<vmem>>, vector<8x256xf32>
    %c8_171 = arith.constant 8 : index
    %c0_172 = arith.constant 0 : index
    %513 = vector.load %arg20[%c8_171, %c0_172] : memref<128x256xf32, #tpu.memory_space<vmem>>, vector<8x256xf32>
    %514 = arith.select %32, %512, %513 : vector<8x256xi1>, vector<8x256xf32>
    %cst_173 = arith.constant dense<0.000000e+00> : vector<8x256xf32>
    %515 = tpu.matmul %507, %33, %cst_173 {dimension_numbers = #tpu.dot_dimension_numbers<[1], [0], [0], [1], [0, 0, 1, 1], [], []>} : vector<8x64xf32>, vector<64x256xf32>, vector<8x256xf32> -> vector<8x256xf32>
    %516 = arith.addf %514, %515 : vector<8x256xf32>
    %517 = vector.extract_strided_slice %516 {offsets = [0, 0], sizes = [8, 64], strides = [1, 1]} : vector<8x256xf32> to vector<8x64xf32>
    %518 = arith.negf %517 : vector<8x64xf32>
    %519 = math.exp %518 : vector<8x64xf32>
    %cst_174 = arith.constant 1.000000e+00 : f32
    %520 = vector.broadcast %cst_174 : f32 to vector<8x64xf32>
    %521 = arith.addf %520, %519 : vector<8x64xf32>
    %522 = arith.divf %520, %521 : vector<8x64xf32>
    %523 = vector.extract_strided_slice %516 {offsets = [0, 64], sizes = [8, 64], strides = [1, 1]} : vector<8x256xf32> to vector<8x64xf32>
    %524 = arith.negf %523 : vector<8x64xf32>
    %525 = math.exp %524 : vector<8x64xf32>
    %cst_175 = arith.constant 1.000000e+00 : f32
    %526 = vector.broadcast %cst_175 : f32 to vector<8x64xf32>
    %527 = arith.addf %526, %525 : vector<8x64xf32>
    %528 = arith.divf %526, %527 : vector<8x64xf32>
    %529 = vector.extract_strided_slice %516 {offsets = [0, 128], sizes = [8, 64], strides = [1, 1]} : vector<8x256xf32> to vector<8x64xf32>
    %530 = arith.negf %529 : vector<8x64xf32>
    %531 = math.exp %530 : vector<8x64xf32>
    %cst_176 = arith.constant 1.000000e+00 : f32
    %532 = vector.broadcast %cst_176 : f32 to vector<8x64xf32>
    %533 = arith.addf %532, %531 : vector<8x64xf32>
    %534 = arith.divf %532, %533 : vector<8x64xf32>
    %535 = vector.extract_strided_slice %516 {offsets = [0, 192], sizes = [8, 64], strides = [1, 1]} : vector<8x256xf32> to vector<8x64xf32>
    %536 = math.tanh %535 : vector<8x64xf32>
    %537 = arith.mulf %522, %505 : vector<8x64xf32>
    %538 = arith.mulf %528, %536 : vector<8x64xf32>
    %539 = arith.addf %537, %538 : vector<8x64xf32>
    %540 = math.tanh %539 : vector<8x64xf32>
    %541 = arith.mulf %534, %540 : vector<8x64xf32>
    %542 = vector.extract_strided_slice %541 {offsets = [0, 0], sizes = [8, 32], strides = [1, 1]} : vector<8x64xf32> to vector<8x32xf32>
    %c112_177 = arith.constant 112 : index
    %c0_178 = arith.constant 0 : index
    %543 = vector.load %arg19[%c112_177, %c0_178] : memref<128x64xf32, #tpu.memory_space<vmem>>, vector<8x32xf32>
    tpu.vector_store %arg19[%c112_177, %c0_178], %542 {strides = array<i32>} : memref<128x64xf32, #tpu.memory_space<vmem>>, vector<8x32xf32>,
    %544 = vector.extract_strided_slice %541 {offsets = [0, 32], sizes = [8, 32], strides = [1, 1]} : vector<8x64xf32> to vector<8x32xf32>
    %c8_179 = arith.constant 8 : index
    %c32_180 = arith.constant 32 : index
    %545 = vector.load %arg19[%c8_179, %c32_180] : memref<128x64xf32, #tpu.memory_space<vmem>>, vector<8x32xf32>
    tpu.vector_store %arg19[%c8_179, %c32_180], %544 {strides = array<i32>} : memref<128x64xf32, #tpu.memory_space<vmem>>, vector<8x32xf32>,
    %c120_181 = arith.constant 120 : index
    %c0_182 = arith.constant 0 : index
    %546 = vector.load %arg20[%c120_181, %c0_182] : memref<128x256xf32, #tpu.memory_space<vmem>>, vector<8x256xf32>
    %c0_183 = arith.constant 0 : index
    %c0_184 = arith.constant 0 : index
    %547 = vector.load %arg20[%c0_183, %c0_184] : memref<128x256xf32, #tpu.memory_space<vmem>>, vector<8x256xf32>
    %548 = arith.select %32, %546, %547 : vector<8x256xi1>, vector<8x256xf32>
    %cst_185 = arith.constant dense<0.000000e+00> : vector<8x256xf32>
    %549 = tpu.matmul %541, %33, %cst_185 {dimension_numbers = #tpu.dot_dimension_numbers<[1], [0], [0], [1], [0, 0, 1, 1], [], []>} : vector<8x64xf32>, vector<64x256xf32>, vector<8x256xf32> -> vector<8x256xf32>
    %550 = arith.addf %548, %549 : vector<8x256xf32>
    %551 = vector.extract_strided_slice %550 {offsets = [0, 0], sizes = [8, 64], strides = [1, 1]} : vector<8x256xf32> to vector<8x64xf32>
    %552 = arith.negf %551 : vector<8x64xf32>
    %553 = math.exp %552 : vector<8x64xf32>
    %cst_186 = arith.constant 1.000000e+00 : f32
    %554 = vector.broadcast %cst_186 : f32 to vector<8x64xf32>
    %555 = arith.addf %554, %553 : vector<8x64xf32>
    %556 = arith.divf %554, %555 : vector<8x64xf32>
    %557 = vector.extract_strided_slice %550 {offsets = [0, 64], sizes = [8, 64], strides = [1, 1]} : vector<8x256xf32> to vector<8x64xf32>
    %558 = arith.negf %557 : vector<8x64xf32>
    %559 = math.exp %558 : vector<8x64xf32>
    %cst_187 = arith.constant 1.000000e+00 : f32
    %560 = vector.broadcast %cst_187 : f32 to vector<8x64xf32>
    %561 = arith.addf %560, %559 : vector<8x64xf32>
    %562 = arith.divf %560, %561 : vector<8x64xf32>
    %563 = vector.extract_strided_slice %550 {offsets = [0, 128], sizes = [8, 64], strides = [1, 1]} : vector<8x256xf32> to vector<8x64xf32>
    %564 = arith.negf %563 : vector<8x64xf32>
    %565 = math.exp %564 : vector<8x64xf32>
    %cst_188 = arith.constant 1.000000e+00 : f32
    %566 = vector.broadcast %cst_188 : f32 to vector<8x64xf32>
    %567 = arith.addf %566, %565 : vector<8x64xf32>
    %568 = arith.divf %566, %567 : vector<8x64xf32>
    %569 = vector.extract_strided_slice %550 {offsets = [0, 192], sizes = [8, 64], strides = [1, 1]} : vector<8x256xf32> to vector<8x64xf32>
    %570 = math.tanh %569 : vector<8x64xf32>
    %571 = arith.mulf %556, %539 : vector<8x64xf32>
    %572 = arith.mulf %562, %570 : vector<8x64xf32>
    %573 = arith.addf %571, %572 : vector<8x64xf32>
    %574 = math.tanh %573 : vector<8x64xf32>
    %575 = arith.mulf %568, %574 : vector<8x64xf32>
    %576 = vector.extract_strided_slice %575 {offsets = [0, 0], sizes = [8, 32], strides = [1, 1]} : vector<8x64xf32> to vector<8x32xf32>
    %c120_189 = arith.constant 120 : index
    %c0_190 = arith.constant 0 : index
    %577 = vector.load %arg19[%c120_189, %c0_190] : memref<128x64xf32, #tpu.memory_space<vmem>>, vector<8x32xf32>
    tpu.vector_store %arg19[%c120_189, %c0_190], %576 {strides = array<i32>} : memref<128x64xf32, #tpu.memory_space<vmem>>, vector<8x32xf32>,
    %578 = vector.extract_strided_slice %575 {offsets = [0, 32], sizes = [8, 32], strides = [1, 1]} : vector<8x64xf32> to vector<8x32xf32>
    %c0_191 = arith.constant 0 : index
    %c32_192 = arith.constant 32 : index
    %579 = vector.load %arg19[%c0_191, %c32_192] : memref<128x64xf32, #tpu.memory_space<vmem>>, vector<8x32xf32>
    tpu.vector_store %arg19[%c0_191, %c32_192], %578 {strides = array<i32>} : memref<128x64xf32, #tpu.memory_space<vmem>>, vector<8x32xf32>,
    %c0_193 = arith.constant 0 : index
    %c0_194 = arith.constant 0 : index
    %580 = vector.load %arg19[%c0_193, %c0_194] : memref<128x64xf32, #tpu.memory_space<vmem>>, vector<128x64xf32>
    %581 = arith.truncf %580 : vector<128x64xf32> to vector<128x64xbf16>
    %c0_195 = arith.constant 0 : index
    %c0_196 = arith.constant 0 : index
    %582 = vector.load %arg5[%c0_195, %c0_196] : memref<64x256xbf16, #tpu.memory_space<vmem>>, vector<64x256xbf16>
    %cst_197 = arith.constant dense<0.000000e+00> : vector<128x256xf32>
    %583 = tpu.matmul %581, %582, %cst_197 {dimension_numbers = #tpu.dot_dimension_numbers<[1], [0], [0], [1], [0, 0, 1, 1], [], []>} : vector<128x64xbf16>, vector<64x256xbf16>, vector<128x256xf32> -> vector<128x256xf32>
    %c0_198 = arith.constant 0 : index
    %c0_199 = arith.constant 0 : index
    %584 = vector.load %arg6[%c0_198, %c0_199] : memref<1x256xf32, #tpu.memory_space<vmem>>, vector<1x256xf32>
    %585 = vector.broadcast %584 : vector<1x256xf32> to vector<128x256xf32>
    %586 = arith.addf %583, %585 : vector<128x256xf32>
    %c0_200 = arith.constant 0 : index
    %c0_201 = arith.constant 0 : index
    %587 = vector.load %arg20[%c0_200, %c0_201] : memref<128x256xf32, #tpu.memory_space<vmem>>, vector<128x256xf32>
    tpu.vector_store %arg20[%c0_200, %c0_201], %586 {strides = array<i32>} : memref<128x256xf32, #tpu.memory_space<vmem>>, vector<128x256xf32>,
    %c0_202 = arith.constant 0 : index
    %c0_203 = arith.constant 0 : index
    %588 = vector.load %arg7[%c0_202, %c0_203] : memref<64x256xf32, #tpu.memory_space<vmem>>, vector<64x256xf32>
    %cst_204 = arith.constant 0.000000e+00 : f32
    %589 = vector.broadcast %cst_204 : f32 to vector<8x64xf32>
    %cst_205 = arith.constant 0.000000e+00 : f32
    %590 = vector.broadcast %cst_205 : f32 to vector<8x64xf32>
    %cst_206 = arith.constant 0.000000e+00 : f32
    %591 = vector.broadcast %cst_206 : f32 to vector<8x64xf32>
    %c0_207 = arith.constant 0 : index
    %c0_208 = arith.constant 0 : index
    %592 = vector.load %arg20[%c0_207, %c0_208] : memref<128x256xf32, #tpu.memory_space<vmem>>, vector<8x256xf32>
    %c120_209 = arith.constant 120 : index
    %c0_210 = arith.constant 0 : index
    %593 = vector.load %arg20[%c120_209, %c0_210] : memref<128x256xf32, #tpu.memory_space<vmem>>, vector<8x256xf32>
    %594 = arith.select %32, %592, %593 : vector<8x256xi1>, vector<8x256xf32>
    %cst_211 = arith.constant dense<0.000000e+00> : vector<8x256xf32>
    %595 = tpu.matmul %589, %588, %cst_211 {dimension_numbers = #tpu.dot_dimension_numbers<[1], [0], [0], [1], [0, 0, 1, 1], [], []>} : vector<8x64xf32>, vector<64x256xf32>, vector<8x256xf32> -> vector<8x256xf32>
    %596 = arith.addf %594, %595 : vector<8x256xf32>
    %597 = vector.extract_strided_slice %596 {offsets = [0, 0], sizes = [8, 64], strides = [1, 1]} : vector<8x256xf32> to vector<8x64xf32>
    %598 = arith.negf %597 : vector<8x64xf32>
    %599 = math.exp %598 : vector<8x64xf32>
    %cst_212 = arith.constant 1.000000e+00 : f32
    %600 = vector.broadcast %cst_212 : f32 to vector<8x64xf32>
    %601 = arith.addf %600, %599 : vector<8x64xf32>
    %602 = arith.divf %600, %601 : vector<8x64xf32>
    %603 = vector.extract_strided_slice %596 {offsets = [0, 64], sizes = [8, 64], strides = [1, 1]} : vector<8x256xf32> to vector<8x64xf32>
    %604 = arith.negf %603 : vector<8x64xf32>
    %605 = math.exp %604 : vector<8x64xf32>
    %cst_213 = arith.constant 1.000000e+00 : f32
    %606 = vector.broadcast %cst_213 : f32 to vector<8x64xf32>
    %607 = arith.addf %606, %605 : vector<8x64xf32>
    %608 = arith.divf %606, %607 : vector<8x64xf32>
    %609 = vector.extract_strided_slice %596 {offsets = [0, 128], sizes = [8, 64], strides = [1, 1]} : vector<8x256xf32> to vector<8x64xf32>
    %610 = arith.negf %609 : vector<8x64xf32>
    %611 = math.exp %610 : vector<8x64xf32>
    %cst_214 = arith.constant 1.000000e+00 : f32
    %612 = vector.broadcast %cst_214 : f32 to vector<8x64xf32>
    %613 = arith.addf %612, %611 : vector<8x64xf32>
    %614 = arith.divf %612, %613 : vector<8x64xf32>
    %615 = vector.extract_strided_slice %596 {offsets = [0, 192], sizes = [8, 64], strides = [1, 1]} : vector<8x256xf32> to vector<8x64xf32>
    %616 = math.tanh %615 : vector<8x64xf32>
    %617 = arith.mulf %602, %590 : vector<8x64xf32>
    %618 = arith.mulf %608, %616 : vector<8x64xf32>
    %619 = arith.addf %617, %618 : vector<8x64xf32>
    %620 = math.tanh %619 : vector<8x64xf32>
    %621 = arith.mulf %614, %620 : vector<8x64xf32>
    %622 = arith.addf %591, %621 : vector<8x64xf32>
    %c8_215 = arith.constant 8 : index
    %c0_216 = arith.constant 0 : index
    %623 = vector.load %arg20[%c8_215, %c0_216] : memref<128x256xf32, #tpu.memory_space<vmem>>, vector<8x256xf32>
    %c112_217 = arith.constant 112 : index
    %c0_218 = arith.constant 0 : index
    %624 = vector.load %arg20[%c112_217, %c0_218] : memref<128x256xf32, #tpu.memory_space<vmem>>, vector<8x256xf32>
    %625 = arith.select %32, %623, %624 : vector<8x256xi1>, vector<8x256xf32>
    %cst_219 = arith.constant dense<0.000000e+00> : vector<8x256xf32>
    %626 = tpu.matmul %621, %588, %cst_219 {dimension_numbers = #tpu.dot_dimension_numbers<[1], [0], [0], [1], [0, 0, 1, 1], [], []>} : vector<8x64xf32>, vector<64x256xf32>, vector<8x256xf32> -> vector<8x256xf32>
    %627 = arith.addf %625, %626 : vector<8x256xf32>
    %628 = vector.extract_strided_slice %627 {offsets = [0, 0], sizes = [8, 64], strides = [1, 1]} : vector<8x256xf32> to vector<8x64xf32>
    %629 = arith.negf %628 : vector<8x64xf32>
    %630 = math.exp %629 : vector<8x64xf32>
    %cst_220 = arith.constant 1.000000e+00 : f32
    %631 = vector.broadcast %cst_220 : f32 to vector<8x64xf32>
    %632 = arith.addf %631, %630 : vector<8x64xf32>
    %633 = arith.divf %631, %632 : vector<8x64xf32>
    %634 = vector.extract_strided_slice %627 {offsets = [0, 64], sizes = [8, 64], strides = [1, 1]} : vector<8x256xf32> to vector<8x64xf32>
    %635 = arith.negf %634 : vector<8x64xf32>
    %636 = math.exp %635 : vector<8x64xf32>
    %cst_221 = arith.constant 1.000000e+00 : f32
    %637 = vector.broadcast %cst_221 : f32 to vector<8x64xf32>
    %638 = arith.addf %637, %636 : vector<8x64xf32>
    %639 = arith.divf %637, %638 : vector<8x64xf32>
    %640 = vector.extract_strided_slice %627 {offsets = [0, 128], sizes = [8, 64], strides = [1, 1]} : vector<8x256xf32> to vector<8x64xf32>
    %641 = arith.negf %640 : vector<8x64xf32>
    %642 = math.exp %641 : vector<8x64xf32>
    %cst_222 = arith.constant 1.000000e+00 : f32
    %643 = vector.broadcast %cst_222 : f32 to vector<8x64xf32>
    %644 = arith.addf %643, %642 : vector<8x64xf32>
    %645 = arith.divf %643, %644 : vector<8x64xf32>
    %646 = vector.extract_strided_slice %627 {offsets = [0, 192], sizes = [8, 64], strides = [1, 1]} : vector<8x256xf32> to vector<8x64xf32>
    %647 = math.tanh %646 : vector<8x64xf32>
    %648 = arith.mulf %633, %619 : vector<8x64xf32>
    %649 = arith.mulf %639, %647 : vector<8x64xf32>
    %650 = arith.addf %648, %649 : vector<8x64xf32>
    %651 = math.tanh %650 : vector<8x64xf32>
    %652 = arith.mulf %645, %651 : vector<8x64xf32>
    %653 = arith.addf %622, %652 : vector<8x64xf32>
    %c16_223 = arith.constant 16 : index
    %c0_224 = arith.constant 0 : index
    %654 = vector.load %arg20[%c16_223, %c0_224] : memref<128x256xf32, #tpu.memory_space<vmem>>, vector<8x256xf32>
    %c104_225 = arith.constant 104 : index
    %c0_226 = arith.constant 0 : index
    %655 = vector.load %arg20[%c104_225, %c0_226] : memref<128x256xf32, #tpu.memory_space<vmem>>, vector<8x256xf32>
    %656 = arith.select %32, %654, %655 : vector<8x256xi1>, vector<8x256xf32>
    %cst_227 = arith.constant dense<0.000000e+00> : vector<8x256xf32>
    %657 = tpu.matmul %652, %588, %cst_227 {dimension_numbers = #tpu.dot_dimension_numbers<[1], [0], [0], [1], [0, 0, 1, 1], [], []>} : vector<8x64xf32>, vector<64x256xf32>, vector<8x256xf32> -> vector<8x256xf32>
    %658 = arith.addf %656, %657 : vector<8x256xf32>
    %659 = vector.extract_strided_slice %658 {offsets = [0, 0], sizes = [8, 64], strides = [1, 1]} : vector<8x256xf32> to vector<8x64xf32>
    %660 = arith.negf %659 : vector<8x64xf32>
    %661 = math.exp %660 : vector<8x64xf32>
    %cst_228 = arith.constant 1.000000e+00 : f32
    %662 = vector.broadcast %cst_228 : f32 to vector<8x64xf32>
    %663 = arith.addf %662, %661 : vector<8x64xf32>
    %664 = arith.divf %662, %663 : vector<8x64xf32>
    %665 = vector.extract_strided_slice %658 {offsets = [0, 64], sizes = [8, 64], strides = [1, 1]} : vector<8x256xf32> to vector<8x64xf32>
    %666 = arith.negf %665 : vector<8x64xf32>
    %667 = math.exp %666 : vector<8x64xf32>
    %cst_229 = arith.constant 1.000000e+00 : f32
    %668 = vector.broadcast %cst_229 : f32 to vector<8x64xf32>
    %669 = arith.addf %668, %667 : vector<8x64xf32>
    %670 = arith.divf %668, %669 : vector<8x64xf32>
    %671 = vector.extract_strided_slice %658 {offsets = [0, 128], sizes = [8, 64], strides = [1, 1]} : vector<8x256xf32> to vector<8x64xf32>
    %672 = arith.negf %671 : vector<8x64xf32>
    %673 = math.exp %672 : vector<8x64xf32>
    %cst_230 = arith.constant 1.000000e+00 : f32
    %674 = vector.broadcast %cst_230 : f32 to vector<8x64xf32>
    %675 = arith.addf %674, %673 : vector<8x64xf32>
    %676 = arith.divf %674, %675 : vector<8x64xf32>
    %677 = vector.extract_strided_slice %658 {offsets = [0, 192], sizes = [8, 64], strides = [1, 1]} : vector<8x256xf32> to vector<8x64xf32>
    %678 = math.tanh %677 : vector<8x64xf32>
    %679 = arith.mulf %664, %650 : vector<8x64xf32>
    %680 = arith.mulf %670, %678 : vector<8x64xf32>
    %681 = arith.addf %679, %680 : vector<8x64xf32>
    %682 = math.tanh %681 : vector<8x64xf32>
    %683 = arith.mulf %676, %682 : vector<8x64xf32>
    %684 = arith.addf %653, %683 : vector<8x64xf32>
    %c24_231 = arith.constant 24 : index
    %c0_232 = arith.constant 0 : index
    %685 = vector.load %arg20[%c24_231, %c0_232] : memref<128x256xf32, #tpu.memory_space<vmem>>, vector<8x256xf32>
    %c96_233 = arith.constant 96 : index
    %c0_234 = arith.constant 0 : index
    %686 = vector.load %arg20[%c96_233, %c0_234] : memref<128x256xf32, #tpu.memory_space<vmem>>, vector<8x256xf32>
    %687 = arith.select %32, %685, %686 : vector<8x256xi1>, vector<8x256xf32>
    %cst_235 = arith.constant dense<0.000000e+00> : vector<8x256xf32>
    %688 = tpu.matmul %683, %588, %cst_235 {dimension_numbers = #tpu.dot_dimension_numbers<[1], [0], [0], [1], [0, 0, 1, 1], [], []>} : vector<8x64xf32>, vector<64x256xf32>, vector<8x256xf32> -> vector<8x256xf32>
    %689 = arith.addf %687, %688 : vector<8x256xf32>
    %690 = vector.extract_strided_slice %689 {offsets = [0, 0], sizes = [8, 64], strides = [1, 1]} : vector<8x256xf32> to vector<8x64xf32>
    %691 = arith.negf %690 : vector<8x64xf32>
    %692 = math.exp %691 : vector<8x64xf32>
    %cst_236 = arith.constant 1.000000e+00 : f32
    %693 = vector.broadcast %cst_236 : f32 to vector<8x64xf32>
    %694 = arith.addf %693, %692 : vector<8x64xf32>
    %695 = arith.divf %693, %694 : vector<8x64xf32>
    %696 = vector.extract_strided_slice %689 {offsets = [0, 64], sizes = [8, 64], strides = [1, 1]} : vector<8x256xf32> to vector<8x64xf32>
    %697 = arith.negf %696 : vector<8x64xf32>
    %698 = math.exp %697 : vector<8x64xf32>
    %cst_237 = arith.constant 1.000000e+00 : f32
    %699 = vector.broadcast %cst_237 : f32 to vector<8x64xf32>
    %700 = arith.addf %699, %698 : vector<8x64xf32>
    %701 = arith.divf %699, %700 : vector<8x64xf32>
    %702 = vector.extract_strided_slice %689 {offsets = [0, 128], sizes = [8, 64], strides = [1, 1]} : vector<8x256xf32> to vector<8x64xf32>
    %703 = arith.negf %702 : vector<8x64xf32>
    %704 = math.exp %703 : vector<8x64xf32>
    %cst_238 = arith.constant 1.000000e+00 : f32
    %705 = vector.broadcast %cst_238 : f32 to vector<8x64xf32>
    %706 = arith.addf %705, %704 : vector<8x64xf32>
    %707 = arith.divf %705, %706 : vector<8x64xf32>
    %708 = vector.extract_strided_slice %689 {offsets = [0, 192], sizes = [8, 64], strides = [1, 1]} : vector<8x256xf32> to vector<8x64xf32>
    %709 = math.tanh %708 : vector<8x64xf32>
    %710 = arith.mulf %695, %681 : vector<8x64xf32>
    %711 = arith.mulf %701, %709 : vector<8x64xf32>
    %712 = arith.addf %710, %711 : vector<8x64xf32>
    %713 = math.tanh %712 : vector<8x64xf32>
    %714 = arith.mulf %707, %713 : vector<8x64xf32>
    %715 = arith.addf %684, %714 : vector<8x64xf32>
    %c32_239 = arith.constant 32 : index
    %c0_240 = arith.constant 0 : index
    %716 = vector.load %arg20[%c32_239, %c0_240] : memref<128x256xf32, #tpu.memory_space<vmem>>, vector<8x256xf32>
    %c88_241 = arith.constant 88 : index
    %c0_242 = arith.constant 0 : index
    %717 = vector.load %arg20[%c88_241, %c0_242] : memref<128x256xf32, #tpu.memory_space<vmem>>, vector<8x256xf32>
    %718 = arith.select %32, %716, %717 : vector<8x256xi1>, vector<8x256xf32>
    %cst_243 = arith.constant dense<0.000000e+00> : vector<8x256xf32>
    %719 = tpu.matmul %714, %588, %cst_243 {dimension_numbers = #tpu.dot_dimension_numbers<[1], [0], [0], [1], [0, 0, 1, 1], [], []>} : vector<8x64xf32>, vector<64x256xf32>, vector<8x256xf32> -> vector<8x256xf32>
    %720 = arith.addf %718, %719 : vector<8x256xf32>
    %721 = vector.extract_strided_slice %720 {offsets = [0, 0], sizes = [8, 64], strides = [1, 1]} : vector<8x256xf32> to vector<8x64xf32>
    %722 = arith.negf %721 : vector<8x64xf32>
    %723 = math.exp %722 : vector<8x64xf32>
    %cst_244 = arith.constant 1.000000e+00 : f32
    %724 = vector.broadcast %cst_244 : f32 to vector<8x64xf32>
    %725 = arith.addf %724, %723 : vector<8x64xf32>
    %726 = arith.divf %724, %725 : vector<8x64xf32>
    %727 = vector.extract_strided_slice %720 {offsets = [0, 64], sizes = [8, 64], strides = [1, 1]} : vector<8x256xf32> to vector<8x64xf32>
    %728 = arith.negf %727 : vector<8x64xf32>
    %729 = math.exp %728 : vector<8x64xf32>
    %cst_245 = arith.constant 1.000000e+00 : f32
    %730 = vector.broadcast %cst_245 : f32 to vector<8x64xf32>
    %731 = arith.addf %730, %729 : vector<8x64xf32>
    %732 = arith.divf %730, %731 : vector<8x64xf32>
    %733 = vector.extract_strided_slice %720 {offsets = [0, 128], sizes = [8, 64], strides = [1, 1]} : vector<8x256xf32> to vector<8x64xf32>
    %734 = arith.negf %733 : vector<8x64xf32>
    %735 = math.exp %734 : vector<8x64xf32>
    %cst_246 = arith.constant 1.000000e+00 : f32
    %736 = vector.broadcast %cst_246 : f32 to vector<8x64xf32>
    %737 = arith.addf %736, %735 : vector<8x64xf32>
    %738 = arith.divf %736, %737 : vector<8x64xf32>
    %739 = vector.extract_strided_slice %720 {offsets = [0, 192], sizes = [8, 64], strides = [1, 1]} : vector<8x256xf32> to vector<8x64xf32>
    %740 = math.tanh %739 : vector<8x64xf32>
    %741 = arith.mulf %726, %712 : vector<8x64xf32>
    %742 = arith.mulf %732, %740 : vector<8x64xf32>
    %743 = arith.addf %741, %742 : vector<8x64xf32>
    %744 = math.tanh %743 : vector<8x64xf32>
    %745 = arith.mulf %738, %744 : vector<8x64xf32>
    %746 = arith.addf %715, %745 : vector<8x64xf32>
    %c40_247 = arith.constant 40 : index
    %c0_248 = arith.constant 0 : index
    %747 = vector.load %arg20[%c40_247, %c0_248] : memref<128x256xf32, #tpu.memory_space<vmem>>, vector<8x256xf32>
    %c80_249 = arith.constant 80 : index
    %c0_250 = arith.constant 0 : index
    %748 = vector.load %arg20[%c80_249, %c0_250] : memref<128x256xf32, #tpu.memory_space<vmem>>, vector<8x256xf32>
    %749 = arith.select %32, %747, %748 : vector<8x256xi1>, vector<8x256xf32>
    %cst_251 = arith.constant dense<0.000000e+00> : vector<8x256xf32>
    %750 = tpu.matmul %745, %588, %cst_251 {dimension_numbers = #tpu.dot_dimension_numbers<[1], [0], [0], [1], [0, 0, 1, 1], [], []>} : vector<8x64xf32>, vector<64x256xf32>, vector<8x256xf32> -> vector<8x256xf32>
    %751 = arith.addf %749, %750 : vector<8x256xf32>
    %752 = vector.extract_strided_slice %751 {offsets = [0, 0], sizes = [8, 64], strides = [1, 1]} : vector<8x256xf32> to vector<8x64xf32>
    %753 = arith.negf %752 : vector<8x64xf32>
    %754 = math.exp %753 : vector<8x64xf32>
    %cst_252 = arith.constant 1.000000e+00 : f32
    %755 = vector.broadcast %cst_252 : f32 to vector<8x64xf32>
    %756 = arith.addf %755, %754 : vector<8x64xf32>
    %757 = arith.divf %755, %756 : vector<8x64xf32>
    %758 = vector.extract_strided_slice %751 {offsets = [0, 64], sizes = [8, 64], strides = [1, 1]} : vector<8x256xf32> to vector<8x64xf32>
    %759 = arith.negf %758 : vector<8x64xf32>
    %760 = math.exp %759 : vector<8x64xf32>
    %cst_253 = arith.constant 1.000000e+00 : f32
    %761 = vector.broadcast %cst_253 : f32 to vector<8x64xf32>
    %762 = arith.addf %761, %760 : vector<8x64xf32>
    %763 = arith.divf %761, %762 : vector<8x64xf32>
    %764 = vector.extract_strided_slice %751 {offsets = [0, 128], sizes = [8, 64], strides = [1, 1]} : vector<8x256xf32> to vector<8x64xf32>
    %765 = arith.negf %764 : vector<8x64xf32>
    %766 = math.exp %765 : vector<8x64xf32>
    %cst_254 = arith.constant 1.000000e+00 : f32
    %767 = vector.broadcast %cst_254 : f32 to vector<8x64xf32>
    %768 = arith.addf %767, %766 : vector<8x64xf32>
    %769 = arith.divf %767, %768 : vector<8x64xf32>
    %770 = vector.extract_strided_slice %751 {offsets = [0, 192], sizes = [8, 64], strides = [1, 1]} : vector<8x256xf32> to vector<8x64xf32>
    %771 = math.tanh %770 : vector<8x64xf32>
    %772 = arith.mulf %757, %743 : vector<8x64xf32>
    %773 = arith.mulf %763, %771 : vector<8x64xf32>
    %774 = arith.addf %772, %773 : vector<8x64xf32>
    %775 = math.tanh %774 : vector<8x64xf32>
    %776 = arith.mulf %769, %775 : vector<8x64xf32>
    %777 = arith.addf %746, %776 : vector<8x64xf32>
    %c48_255 = arith.constant 48 : index
    %c0_256 = arith.constant 0 : index
    %778 = vector.load %arg20[%c48_255, %c0_256] : memref<128x256xf32, #tpu.memory_space<vmem>>, vector<8x256xf32>
    %c72_257 = arith.constant 72 : index
    %c0_258 = arith.constant 0 : index
    %779 = vector.load %arg20[%c72_257, %c0_258] : memref<128x256xf32, #tpu.memory_space<vmem>>, vector<8x256xf32>
    %780 = arith.select %32, %778, %779 : vector<8x256xi1>, vector<8x256xf32>
    %cst_259 = arith.constant dense<0.000000e+00> : vector<8x256xf32>
    %781 = tpu.matmul %776, %588, %cst_259 {dimension_numbers = #tpu.dot_dimension_numbers<[1], [0], [0], [1], [0, 0, 1, 1], [], []>} : vector<8x64xf32>, vector<64x256xf32>, vector<8x256xf32> -> vector<8x256xf32>
    %782 = arith.addf %780, %781 : vector<8x256xf32>
    %783 = vector.extract_strided_slice %782 {offsets = [0, 0], sizes = [8, 64], strides = [1, 1]} : vector<8x256xf32> to vector<8x64xf32>
    %784 = arith.negf %783 : vector<8x64xf32>
    %785 = math.exp %784 : vector<8x64xf32>
    %cst_260 = arith.constant 1.000000e+00 : f32
    %786 = vector.broadcast %cst_260 : f32 to vector<8x64xf32>
    %787 = arith.addf %786, %785 : vector<8x64xf32>
    %788 = arith.divf %786, %787 : vector<8x64xf32>
    %789 = vector.extract_strided_slice %782 {offsets = [0, 64], sizes = [8, 64], strides = [1, 1]} : vector<8x256xf32> to vector<8x64xf32>
    %790 = arith.negf %789 : vector<8x64xf32>
    %791 = math.exp %790 : vector<8x64xf32>
    %cst_261 = arith.constant 1.000000e+00 : f32
    %792 = vector.broadcast %cst_261 : f32 to vector<8x64xf32>
    %793 = arith.addf %792, %791 : vector<8x64xf32>
    %794 = arith.divf %792, %793 : vector<8x64xf32>
    %795 = vector.extract_strided_slice %782 {offsets = [0, 128], sizes = [8, 64], strides = [1, 1]} : vector<8x256xf32> to vector<8x64xf32>
    %796 = arith.negf %795 : vector<8x64xf32>
    %797 = math.exp %796 : vector<8x64xf32>
    %cst_262 = arith.constant 1.000000e+00 : f32
    %798 = vector.broadcast %cst_262 : f32 to vector<8x64xf32>
    %799 = arith.addf %798, %797 : vector<8x64xf32>
    %800 = arith.divf %798, %799 : vector<8x64xf32>
    %801 = vector.extract_strided_slice %782 {offsets = [0, 192], sizes = [8, 64], strides = [1, 1]} : vector<8x256xf32> to vector<8x64xf32>
    %802 = math.tanh %801 : vector<8x64xf32>
    %803 = arith.mulf %788, %774 : vector<8x64xf32>
    %804 = arith.mulf %794, %802 : vector<8x64xf32>
    %805 = arith.addf %803, %804 : vector<8x64xf32>
    %806 = math.tanh %805 : vector<8x64xf32>
    %807 = arith.mulf %800, %806 : vector<8x64xf32>
    %808 = arith.addf %777, %807 : vector<8x64xf32>
    %c56_263 = arith.constant 56 : index
    %c0_264 = arith.constant 0 : index
    %809 = vector.load %arg20[%c56_263, %c0_264] : memref<128x256xf32, #tpu.memory_space<vmem>>, vector<8x256xf32>
    %c64_265 = arith.constant 64 : index
    %c0_266 = arith.constant 0 : index
    %810 = vector.load %arg20[%c64_265, %c0_266] : memref<128x256xf32, #tpu.memory_space<vmem>>, vector<8x256xf32>
    %811 = arith.select %32, %809, %810 : vector<8x256xi1>, vector<8x256xf32>
    %cst_267 = arith.constant dense<0.000000e+00> : vector<8x256xf32>
    %812 = tpu.matmul %807, %588, %cst_267 {dimension_numbers = #tpu.dot_dimension_numbers<[1], [0], [0], [1], [0, 0, 1, 1], [], []>} : vector<8x64xf32>, vector<64x256xf32>, vector<8x256xf32> -> vector<8x256xf32>
    %813 = arith.addf %811, %812 : vector<8x256xf32>
    %814 = vector.extract_strided_slice %813 {offsets = [0, 0], sizes = [8, 64], strides = [1, 1]} : vector<8x256xf32> to vector<8x64xf32>
    %815 = arith.negf %814 : vector<8x64xf32>
    %816 = math.exp %815 : vector<8x64xf32>
    %cst_268 = arith.constant 1.000000e+00 : f32
    %817 = vector.broadcast %cst_268 : f32 to vector<8x64xf32>
    %818 = arith.addf %817, %816 : vector<8x64xf32>
    %819 = arith.divf %817, %818 : vector<8x64xf32>
    %820 = vector.extract_strided_slice %813 {offsets = [0, 64], sizes = [8, 64], strides = [1, 1]} : vector<8x256xf32> to vector<8x64xf32>
    %821 = arith.negf %820 : vector<8x64xf32>
    %822 = math.exp %821 : vector<8x64xf32>
    %cst_269 = arith.constant 1.000000e+00 : f32
    %823 = vector.broadcast %cst_269 : f32 to vector<8x64xf32>
    %824 = arith.addf %823, %822 : vector<8x64xf32>
    %825 = arith.divf %823, %824 : vector<8x64xf32>
    %826 = vector.extract_strided_slice %813 {offsets = [0, 128], sizes = [8, 64], strides = [1, 1]} : vector<8x256xf32> to vector<8x64xf32>
    %827 = arith.negf %826 : vector<8x64xf32>
    %828 = math.exp %827 : vector<8x64xf32>
    %cst_270 = arith.constant 1.000000e+00 : f32
    %829 = vector.broadcast %cst_270 : f32 to vector<8x64xf32>
    %830 = arith.addf %829, %828 : vector<8x64xf32>
    %831 = arith.divf %829, %830 : vector<8x64xf32>
    %832 = vector.extract_strided_slice %813 {offsets = [0, 192], sizes = [8, 64], strides = [1, 1]} : vector<8x256xf32> to vector<8x64xf32>
    %833 = math.tanh %832 : vector<8x64xf32>
    %834 = arith.mulf %819, %805 : vector<8x64xf32>
    %835 = arith.mulf %825, %833 : vector<8x64xf32>
    %836 = arith.addf %834, %835 : vector<8x64xf32>
    %837 = math.tanh %836 : vector<8x64xf32>
    %838 = arith.mulf %831, %837 : vector<8x64xf32>
    %839 = arith.addf %808, %838 : vector<8x64xf32>
    %c64_271 = arith.constant 64 : index
    %c0_272 = arith.constant 0 : index
    %840 = vector.load %arg20[%c64_271, %c0_272] : memref<128x256xf32, #tpu.memory_space<vmem>>, vector<8x256xf32>
    %c56_273 = arith.constant 56 : index
    %c0_274 = arith.constant 0 : index
    %841 = vector.load %arg20[%c56_273, %c0_274] : memref<128x256xf32, #tpu.memory_space<vmem>>, vector<8x256xf32>
    %842 = arith.select %32, %840, %841 : vector<8x256xi1>, vector<8x256xf32>
    %cst_275 = arith.constant dense<0.000000e+00> : vector<8x256xf32>
    %843 = tpu.matmul %838, %588, %cst_275 {dimension_numbers = #tpu.dot_dimension_numbers<[1], [0], [0], [1], [0, 0, 1, 1], [], []>} : vector<8x64xf32>, vector<64x256xf32>, vector<8x256xf32> -> vector<8x256xf32>
    %844 = arith.addf %842, %843 : vector<8x256xf32>
    %845 = vector.extract_strided_slice %844 {offsets = [0, 0], sizes = [8, 64], strides = [1, 1]} : vector<8x256xf32> to vector<8x64xf32>
    %846 = arith.negf %845 : vector<8x64xf32>
    %847 = math.exp %846 : vector<8x64xf32>
    %cst_276 = arith.constant 1.000000e+00 : f32
    %848 = vector.broadcast %cst_276 : f32 to vector<8x64xf32>
    %849 = arith.addf %848, %847 : vector<8x64xf32>
    %850 = arith.divf %848, %849 : vector<8x64xf32>
    %851 = vector.extract_strided_slice %844 {offsets = [0, 64], sizes = [8, 64], strides = [1, 1]} : vector<8x256xf32> to vector<8x64xf32>
    %852 = arith.negf %851 : vector<8x64xf32>
    %853 = math.exp %852 : vector<8x64xf32>
    %cst_277 = arith.constant 1.000000e+00 : f32
    %854 = vector.broadcast %cst_277 : f32 to vector<8x64xf32>
    %855 = arith.addf %854, %853 : vector<8x64xf32>
    %856 = arith.divf %854, %855 : vector<8x64xf32>
    %857 = vector.extract_strided_slice %844 {offsets = [0, 128], sizes = [8, 64], strides = [1, 1]} : vector<8x256xf32> to vector<8x64xf32>
    %858 = arith.negf %857 : vector<8x64xf32>
    %859 = math.exp %858 : vector<8x64xf32>
    %cst_278 = arith.constant 1.000000e+00 : f32
    %860 = vector.broadcast %cst_278 : f32 to vector<8x64xf32>
    %861 = arith.addf %860, %859 : vector<8x64xf32>
    %862 = arith.divf %860, %861 : vector<8x64xf32>
    %863 = vector.extract_strided_slice %844 {offsets = [0, 192], sizes = [8, 64], strides = [1, 1]} : vector<8x256xf32> to vector<8x64xf32>
    %864 = math.tanh %863 : vector<8x64xf32>
    %865 = arith.mulf %850, %836 : vector<8x64xf32>
    %866 = arith.mulf %856, %864 : vector<8x64xf32>
    %867 = arith.addf %865, %866 : vector<8x64xf32>
    %868 = math.tanh %867 : vector<8x64xf32>
    %869 = arith.mulf %862, %868 : vector<8x64xf32>
    %870 = arith.addf %839, %869 : vector<8x64xf32>
    %c72_279 = arith.constant 72 : index
    %c0_280 = arith.constant 0 : index
    %871 = vector.load %arg20[%c72_279, %c0_280] : memref<128x256xf32, #tpu.memory_space<vmem>>, vector<8x256xf32>
    %c48_281 = arith.constant 48 : index
    %c0_282 = arith.constant 0 : index
    %872 = vector.load %arg20[%c48_281, %c0_282] : memref<128x256xf32, #tpu.memory_space<vmem>>, vector<8x256xf32>
    %873 = arith.select %32, %871, %872 : vector<8x256xi1>, vector<8x256xf32>
    %cst_283 = arith.constant dense<0.000000e+00> : vector<8x256xf32>
    %874 = tpu.matmul %869, %588, %cst_283 {dimension_numbers = #tpu.dot_dimension_numbers<[1], [0], [0], [1], [0, 0, 1, 1], [], []>} : vector<8x64xf32>, vector<64x256xf32>, vector<8x256xf32> -> vector<8x256xf32>
    %875 = arith.addf %873, %874 : vector<8x256xf32>
    %876 = vector.extract_strided_slice %875 {offsets = [0, 0], sizes = [8, 64], strides = [1, 1]} : vector<8x256xf32> to vector<8x64xf32>
    %877 = arith.negf %876 : vector<8x64xf32>
    %878 = math.exp %877 : vector<8x64xf32>
    %cst_284 = arith.constant 1.000000e+00 : f32
    %879 = vector.broadcast %cst_284 : f32 to vector<8x64xf32>
    %880 = arith.addf %879, %878 : vector<8x64xf32>
    %881 = arith.divf %879, %880 : vector<8x64xf32>
    %882 = vector.extract_strided_slice %875 {offsets = [0, 64], sizes = [8, 64], strides = [1, 1]} : vector<8x256xf32> to vector<8x64xf32>
    %883 = arith.negf %882 : vector<8x64xf32>
    %884 = math.exp %883 : vector<8x64xf32>
    %cst_285 = arith.constant 1.000000e+00 : f32
    %885 = vector.broadcast %cst_285 : f32 to vector<8x64xf32>
    %886 = arith.addf %885, %884 : vector<8x64xf32>
    %887 = arith.divf %885, %886 : vector<8x64xf32>
    %888 = vector.extract_strided_slice %875 {offsets = [0, 128], sizes = [8, 64], strides = [1, 1]} : vector<8x256xf32> to vector<8x64xf32>
    %889 = arith.negf %888 : vector<8x64xf32>
    %890 = math.exp %889 : vector<8x64xf32>
    %cst_286 = arith.constant 1.000000e+00 : f32
    %891 = vector.broadcast %cst_286 : f32 to vector<8x64xf32>
    %892 = arith.addf %891, %890 : vector<8x64xf32>
    %893 = arith.divf %891, %892 : vector<8x64xf32>
    %894 = vector.extract_strided_slice %875 {offsets = [0, 192], sizes = [8, 64], strides = [1, 1]} : vector<8x256xf32> to vector<8x64xf32>
    %895 = math.tanh %894 : vector<8x64xf32>
    %896 = arith.mulf %881, %867 : vector<8x64xf32>
    %897 = arith.mulf %887, %895 : vector<8x64xf32>
    %898 = arith.addf %896, %897 : vector<8x64xf32>
    %899 = math.tanh %898 : vector<8x64xf32>
    %900 = arith.mulf %893, %899 : vector<8x64xf32>
    %901 = arith.addf %870, %900 : vector<8x64xf32>
    %c80_287 = arith.constant 80 : index
    %c0_288 = arith.constant 0 : index
    %902 = vector.load %arg20[%c80_287, %c0_288] : memref<128x256xf32, #tpu.memory_space<vmem>>, vector<8x256xf32>
    %c40_289 = arith.constant 40 : index
    %c0_290 = arith.constant 0 : index
    %903 = vector.load %arg20[%c40_289, %c0_290] : memref<128x256xf32, #tpu.memory_space<vmem>>, vector<8x256xf32>
    %904 = arith.select %32, %902, %903 : vector<8x256xi1>, vector<8x256xf32>
    %cst_291 = arith.constant dense<0.000000e+00> : vector<8x256xf32>
    %905 = tpu.matmul %900, %588, %cst_291 {dimension_numbers = #tpu.dot_dimension_numbers<[1], [0], [0], [1], [0, 0, 1, 1], [], []>} : vector<8x64xf32>, vector<64x256xf32>, vector<8x256xf32> -> vector<8x256xf32>
    %906 = arith.addf %904, %905 : vector<8x256xf32>
    %907 = vector.extract_strided_slice %906 {offsets = [0, 0], sizes = [8, 64], strides = [1, 1]} : vector<8x256xf32> to vector<8x64xf32>
    %908 = arith.negf %907 : vector<8x64xf32>
    %909 = math.exp %908 : vector<8x64xf32>
    %cst_292 = arith.constant 1.000000e+00 : f32
    %910 = vector.broadcast %cst_292 : f32 to vector<8x64xf32>
    %911 = arith.addf %910, %909 : vector<8x64xf32>
    %912 = arith.divf %910, %911 : vector<8x64xf32>
    %913 = vector.extract_strided_slice %906 {offsets = [0, 64], sizes = [8, 64], strides = [1, 1]} : vector<8x256xf32> to vector<8x64xf32>
    %914 = arith.negf %913 : vector<8x64xf32>
    %915 = math.exp %914 : vector<8x64xf32>
    %cst_293 = arith.constant 1.000000e+00 : f32
    %916 = vector.broadcast %cst_293 : f32 to vector<8x64xf32>
    %917 = arith.addf %916, %915 : vector<8x64xf32>
    %918 = arith.divf %916, %917 : vector<8x64xf32>
    %919 = vector.extract_strided_slice %906 {offsets = [0, 128], sizes = [8, 64], strides = [1, 1]} : vector<8x256xf32> to vector<8x64xf32>
    %920 = arith.negf %919 : vector<8x64xf32>
    %921 = math.exp %920 : vector<8x64xf32>
    %cst_294 = arith.constant 1.000000e+00 : f32
    %922 = vector.broadcast %cst_294 : f32 to vector<8x64xf32>
    %923 = arith.addf %922, %921 : vector<8x64xf32>
    %924 = arith.divf %922, %923 : vector<8x64xf32>
    %925 = vector.extract_strided_slice %906 {offsets = [0, 192], sizes = [8, 64], strides = [1, 1]} : vector<8x256xf32> to vector<8x64xf32>
    %926 = math.tanh %925 : vector<8x64xf32>
    %927 = arith.mulf %912, %898 : vector<8x64xf32>
    %928 = arith.mulf %918, %926 : vector<8x64xf32>
    %929 = arith.addf %927, %928 : vector<8x64xf32>
    %930 = math.tanh %929 : vector<8x64xf32>
    %931 = arith.mulf %924, %930 : vector<8x64xf32>
    %932 = arith.addf %901, %931 : vector<8x64xf32>
    %c88_295 = arith.constant 88 : index
    %c0_296 = arith.constant 0 : index
    %933 = vector.load %arg20[%c88_295, %c0_296] : memref<128x256xf32, #tpu.memory_space<vmem>>, vector<8x256xf32>
    %c32_297 = arith.constant 32 : index
    %c0_298 = arith.constant 0 : index
    %934 = vector.load %arg20[%c32_297, %c0_298] : memref<128x256xf32, #tpu.memory_space<vmem>>, vector<8x256xf32>
    %935 = arith.select %32, %933, %934 : vector<8x256xi1>, vector<8x256xf32>
    %cst_299 = arith.constant dense<0.000000e+00> : vector<8x256xf32>
    %936 = tpu.matmul %931, %588, %cst_299 {dimension_numbers = #tpu.dot_dimension_numbers<[1], [0], [0], [1], [0, 0, 1, 1], [], []>} : vector<8x64xf32>, vector<64x256xf32>, vector<8x256xf32> -> vector<8x256xf32>
    %937 = arith.addf %935, %936 : vector<8x256xf32>
    %938 = vector.extract_strided_slice %937 {offsets = [0, 0], sizes = [8, 64], strides = [1, 1]} : vector<8x256xf32> to vector<8x64xf32>
    %939 = arith.negf %938 : vector<8x64xf32>
    %940 = math.exp %939 : vector<8x64xf32>
    %cst_300 = arith.constant 1.000000e+00 : f32
    %941 = vector.broadcast %cst_300 : f32 to vector<8x64xf32>
    %942 = arith.addf %941, %940 : vector<8x64xf32>
    %943 = arith.divf %941, %942 : vector<8x64xf32>
    %944 = vector.extract_strided_slice %937 {offsets = [0, 64], sizes = [8, 64], strides = [1, 1]} : vector<8x256xf32> to vector<8x64xf32>
    %945 = arith.negf %944 : vector<8x64xf32>
    %946 = math.exp %945 : vector<8x64xf32>
    %cst_301 = arith.constant 1.000000e+00 : f32
    %947 = vector.broadcast %cst_301 : f32 to vector<8x64xf32>
    %948 = arith.addf %947, %946 : vector<8x64xf32>
    %949 = arith.divf %947, %948 : vector<8x64xf32>
    %950 = vector.extract_strided_slice %937 {offsets = [0, 128], sizes = [8, 64], strides = [1, 1]} : vector<8x256xf32> to vector<8x64xf32>
    %951 = arith.negf %950 : vector<8x64xf32>
    %952 = math.exp %951 : vector<8x64xf32>
    %cst_302 = arith.constant 1.000000e+00 : f32
    %953 = vector.broadcast %cst_302 : f32 to vector<8x64xf32>
    %954 = arith.addf %953, %952 : vector<8x64xf32>
    %955 = arith.divf %953, %954 : vector<8x64xf32>
    %956 = vector.extract_strided_slice %937 {offsets = [0, 192], sizes = [8, 64], strides = [1, 1]} : vector<8x256xf32> to vector<8x64xf32>
    %957 = math.tanh %956 : vector<8x64xf32>
    %958 = arith.mulf %943, %929 : vector<8x64xf32>
    %959 = arith.mulf %949, %957 : vector<8x64xf32>
    %960 = arith.addf %958, %959 : vector<8x64xf32>
    %961 = math.tanh %960 : vector<8x64xf32>
    %962 = arith.mulf %955, %961 : vector<8x64xf32>
    %963 = arith.addf %932, %962 : vector<8x64xf32>
    %c96_303 = arith.constant 96 : index
    %c0_304 = arith.constant 0 : index
    %964 = vector.load %arg20[%c96_303, %c0_304] : memref<128x256xf32, #tpu.memory_space<vmem>>, vector<8x256xf32>
    %c24_305 = arith.constant 24 : index
    %c0_306 = arith.constant 0 : index
    %965 = vector.load %arg20[%c24_305, %c0_306] : memref<128x256xf32, #tpu.memory_space<vmem>>, vector<8x256xf32>
    %966 = arith.select %32, %964, %965 : vector<8x256xi1>, vector<8x256xf32>
    %cst_307 = arith.constant dense<0.000000e+00> : vector<8x256xf32>
    %967 = tpu.matmul %962, %588, %cst_307 {dimension_numbers = #tpu.dot_dimension_numbers<[1], [0], [0], [1], [0, 0, 1, 1], [], []>} : vector<8x64xf32>, vector<64x256xf32>, vector<8x256xf32> -> vector<8x256xf32>
    %968 = arith.addf %966, %967 : vector<8x256xf32>
    %969 = vector.extract_strided_slice %968 {offsets = [0, 0], sizes = [8, 64], strides = [1, 1]} : vector<8x256xf32> to vector<8x64xf32>
    %970 = arith.negf %969 : vector<8x64xf32>
    %971 = math.exp %970 : vector<8x64xf32>
    %cst_308 = arith.constant 1.000000e+00 : f32
    %972 = vector.broadcast %cst_308 : f32 to vector<8x64xf32>
    %973 = arith.addf %972, %971 : vector<8x64xf32>
    %974 = arith.divf %972, %973 : vector<8x64xf32>
    %975 = vector.extract_strided_slice %968 {offsets = [0, 64], sizes = [8, 64], strides = [1, 1]} : vector<8x256xf32> to vector<8x64xf32>
    %976 = arith.negf %975 : vector<8x64xf32>
    %977 = math.exp %976 : vector<8x64xf32>
    %cst_309 = arith.constant 1.000000e+00 : f32
    %978 = vector.broadcast %cst_309 : f32 to vector<8x64xf32>
    %979 = arith.addf %978, %977 : vector<8x64xf32>
    %980 = arith.divf %978, %979 : vector<8x64xf32>
    %981 = vector.extract_strided_slice %968 {offsets = [0, 128], sizes = [8, 64], strides = [1, 1]} : vector<8x256xf32> to vector<8x64xf32>
    %982 = arith.negf %981 : vector<8x64xf32>
    %983 = math.exp %982 : vector<8x64xf32>
    %cst_310 = arith.constant 1.000000e+00 : f32
    %984 = vector.broadcast %cst_310 : f32 to vector<8x64xf32>
    %985 = arith.addf %984, %983 : vector<8x64xf32>
    %986 = arith.divf %984, %985 : vector<8x64xf32>
    %987 = vector.extract_strided_slice %968 {offsets = [0, 192], sizes = [8, 64], strides = [1, 1]} : vector<8x256xf32> to vector<8x64xf32>
    %988 = math.tanh %987 : vector<8x64xf32>
    %989 = arith.mulf %974, %960 : vector<8x64xf32>
    %990 = arith.mulf %980, %988 : vector<8x64xf32>
    %991 = arith.addf %989, %990 : vector<8x64xf32>
    %992 = math.tanh %991 : vector<8x64xf32>
    %993 = arith.mulf %986, %992 : vector<8x64xf32>
    %994 = arith.addf %963, %993 : vector<8x64xf32>
    %c104_311 = arith.constant 104 : index
    %c0_312 = arith.constant 0 : index
    %995 = vector.load %arg20[%c104_311, %c0_312] : memref<128x256xf32, #tpu.memory_space<vmem>>, vector<8x256xf32>
    %c16_313 = arith.constant 16 : index
    %c0_314 = arith.constant 0 : index
    %996 = vector.load %arg20[%c16_313, %c0_314] : memref<128x256xf32, #tpu.memory_space<vmem>>, vector<8x256xf32>
    %997 = arith.select %32, %995, %996 : vector<8x256xi1>, vector<8x256xf32>
    %cst_315 = arith.constant dense<0.000000e+00> : vector<8x256xf32>
    %998 = tpu.matmul %993, %588, %cst_315 {dimension_numbers = #tpu.dot_dimension_numbers<[1], [0], [0], [1], [0, 0, 1, 1], [], []>} : vector<8x64xf32>, vector<64x256xf32>, vector<8x256xf32> -> vector<8x256xf32>
    %999 = arith.addf %997, %998 : vector<8x256xf32>
    %1000 = vector.extract_strided_slice %999 {offsets = [0, 0], sizes = [8, 64], strides = [1, 1]} : vector<8x256xf32> to vector<8x64xf32>
    %1001 = arith.negf %1000 : vector<8x64xf32>
    %1002 = math.exp %1001 : vector<8x64xf32>
    %cst_316 = arith.constant 1.000000e+00 : f32
    %1003 = vector.broadcast %cst_316 : f32 to vector<8x64xf32>
    %1004 = arith.addf %1003, %1002 : vector<8x64xf32>
    %1005 = arith.divf %1003, %1004 : vector<8x64xf32>
    %1006 = vector.extract_strided_slice %999 {offsets = [0, 64], sizes = [8, 64], strides = [1, 1]} : vector<8x256xf32> to vector<8x64xf32>
    %1007 = arith.negf %1006 : vector<8x64xf32>
    %1008 = math.exp %1007 : vector<8x64xf32>
    %cst_317 = arith.constant 1.000000e+00 : f32
    %1009 = vector.broadcast %cst_317 : f32 to vector<8x64xf32>
    %1010 = arith.addf %1009, %1008 : vector<8x64xf32>
    %1011 = arith.divf %1009, %1010 : vector<8x64xf32>
    %1012 = vector.extract_strided_slice %999 {offsets = [0, 128], sizes = [8, 64], strides = [1, 1]} : vector<8x256xf32> to vector<8x64xf32>
    %1013 = arith.negf %1012 : vector<8x64xf32>
    %1014 = math.exp %1013 : vector<8x64xf32>
    %cst_318 = arith.constant 1.000000e+00 : f32
    %1015 = vector.broadcast %cst_318 : f32 to vector<8x64xf32>
    %1016 = arith.addf %1015, %1014 : vector<8x64xf32>
    %1017 = arith.divf %1015, %1016 : vector<8x64xf32>
    %1018 = vector.extract_strided_slice %999 {offsets = [0, 192], sizes = [8, 64], strides = [1, 1]} : vector<8x256xf32> to vector<8x64xf32>
    %1019 = math.tanh %1018 : vector<8x64xf32>
    %1020 = arith.mulf %1005, %991 : vector<8x64xf32>
    %1021 = arith.mulf %1011, %1019 : vector<8x64xf32>
    %1022 = arith.addf %1020, %1021 : vector<8x64xf32>
    %1023 = math.tanh %1022 : vector<8x64xf32>
    %1024 = arith.mulf %1017, %1023 : vector<8x64xf32>
    %1025 = arith.addf %994, %1024 : vector<8x64xf32>
    %c112_319 = arith.constant 112 : index
    %c0_320 = arith.constant 0 : index
    %1026 = vector.load %arg20[%c112_319, %c0_320] : memref<128x256xf32, #tpu.memory_space<vmem>>, vector<8x256xf32>
    %c8_321 = arith.constant 8 : index
    %c0_322 = arith.constant 0 : index
    %1027 = vector.load %arg20[%c8_321, %c0_322] : memref<128x256xf32, #tpu.memory_space<vmem>>, vector<8x256xf32>
    %1028 = arith.select %32, %1026, %1027 : vector<8x256xi1>, vector<8x256xf32>
    %cst_323 = arith.constant dense<0.000000e+00> : vector<8x256xf32>
    %1029 = tpu.matmul %1024, %588, %cst_323 {dimension_numbers = #tpu.dot_dimension_numbers<[1], [0], [0], [1], [0, 0, 1, 1], [], []>} : vector<8x64xf32>, vector<64x256xf32>, vector<8x256xf32> -> vector<8x256xf32>
    %1030 = arith.addf %1028, %1029 : vector<8x256xf32>
    %1031 = vector.extract_strided_slice %1030 {offsets = [0, 0], sizes = [8, 64], strides = [1, 1]} : vector<8x256xf32> to vector<8x64xf32>
    %1032 = arith.negf %1031 : vector<8x64xf32>
    %1033 = math.exp %1032 : vector<8x64xf32>
    %cst_324 = arith.constant 1.000000e+00 : f32
    %1034 = vector.broadcast %cst_324 : f32 to vector<8x64xf32>
    %1035 = arith.addf %1034, %1033 : vector<8x64xf32>
    %1036 = arith.divf %1034, %1035 : vector<8x64xf32>
    %1037 = vector.extract_strided_slice %1030 {offsets = [0, 64], sizes = [8, 64], strides = [1, 1]} : vector<8x256xf32> to vector<8x64xf32>
    %1038 = arith.negf %1037 : vector<8x64xf32>
    %1039 = math.exp %1038 : vector<8x64xf32>
    %cst_325 = arith.constant 1.000000e+00 : f32
    %1040 = vector.broadcast %cst_325 : f32 to vector<8x64xf32>
    %1041 = arith.addf %1040, %1039 : vector<8x64xf32>
    %1042 = arith.divf %1040, %1041 : vector<8x64xf32>
    %1043 = vector.extract_strided_slice %1030 {offsets = [0, 128], sizes = [8, 64], strides = [1, 1]} : vector<8x256xf32> to vector<8x64xf32>
    %1044 = arith.negf %1043 : vector<8x64xf32>
    %1045 = math.exp %1044 : vector<8x64xf32>
    %cst_326 = arith.constant 1.000000e+00 : f32
    %1046 = vector.broadcast %cst_326 : f32 to vector<8x64xf32>
    %1047 = arith.addf %1046, %1045 : vector<8x64xf32>
    %1048 = arith.divf %1046, %1047 : vector<8x64xf32>
    %1049 = vector.extract_strided_slice %1030 {offsets = [0, 192], sizes = [8, 64], strides = [1, 1]} : vector<8x256xf32> to vector<8x64xf32>
    %1050 = math.tanh %1049 : vector<8x64xf32>
    %1051 = arith.mulf %1036, %1022 : vector<8x64xf32>
    %1052 = arith.mulf %1042, %1050 : vector<8x64xf32>
    %1053 = arith.addf %1051, %1052 : vector<8x64xf32>
    %1054 = math.tanh %1053 : vector<8x64xf32>
    %1055 = arith.mulf %1048, %1054 : vector<8x64xf32>
    %1056 = arith.addf %1025, %1055 : vector<8x64xf32>
    %c120_327 = arith.constant 120 : index
    %c0_328 = arith.constant 0 : index
    %1057 = vector.load %arg20[%c120_327, %c0_328] : memref<128x256xf32, #tpu.memory_space<vmem>>, vector<8x256xf32>
    %c0_329 = arith.constant 0 : index
    %c0_330 = arith.constant 0 : index
    %1058 = vector.load %arg20[%c0_329, %c0_330] : memref<128x256xf32, #tpu.memory_space<vmem>>, vector<8x256xf32>
    %1059 = arith.select %32, %1057, %1058 : vector<8x256xi1>, vector<8x256xf32>
    %cst_331 = arith.constant dense<0.000000e+00> : vector<8x256xf32>
    %1060 = tpu.matmul %1055, %588, %cst_331 {dimension_numbers = #tpu.dot_dimension_numbers<[1], [0], [0], [1], [0, 0, 1, 1], [], []>} : vector<8x64xf32>, vector<64x256xf32>, vector<8x256xf32> -> vector<8x256xf32>
    %1061 = arith.addf %1059, %1060 : vector<8x256xf32>
    %1062 = vector.extract_strided_slice %1061 {offsets = [0, 0], sizes = [8, 64], strides = [1, 1]} : vector<8x256xf32> to vector<8x64xf32>
    %1063 = arith.negf %1062 : vector<8x64xf32>
    %1064 = math.exp %1063 : vector<8x64xf32>
    %cst_332 = arith.constant 1.000000e+00 : f32
    %1065 = vector.broadcast %cst_332 : f32 to vector<8x64xf32>
    %1066 = arith.addf %1065, %1064 : vector<8x64xf32>
    %1067 = arith.divf %1065, %1066 : vector<8x64xf32>
    %1068 = vector.extract_strided_slice %1061 {offsets = [0, 64], sizes = [8, 64], strides = [1, 1]} : vector<8x256xf32> to vector<8x64xf32>
    %1069 = arith.negf %1068 : vector<8x64xf32>
    %1070 = math.exp %1069 : vector<8x64xf32>
    %cst_333 = arith.constant 1.000000e+00 : f32
    %1071 = vector.broadcast %cst_333 : f32 to vector<8x64xf32>
    %1072 = arith.addf %1071, %1070 : vector<8x64xf32>
    %1073 = arith.divf %1071, %1072 : vector<8x64xf32>
    %1074 = vector.extract_strided_slice %1061 {offsets = [0, 128], sizes = [8, 64], strides = [1, 1]} : vector<8x256xf32> to vector<8x64xf32>
    %1075 = arith.negf %1074 : vector<8x64xf32>
    %1076 = math.exp %1075 : vector<8x64xf32>
    %cst_334 = arith.constant 1.000000e+00 : f32
    %1077 = vector.broadcast %cst_334 : f32 to vector<8x64xf32>
    %1078 = arith.addf %1077, %1076 : vector<8x64xf32>
    %1079 = arith.divf %1077, %1078 : vector<8x64xf32>
    %1080 = vector.extract_strided_slice %1061 {offsets = [0, 192], sizes = [8, 64], strides = [1, 1]} : vector<8x256xf32> to vector<8x64xf32>
    %1081 = math.tanh %1080 : vector<8x64xf32>
    %1082 = arith.mulf %1067, %1053 : vector<8x64xf32>
    %1083 = arith.mulf %1073, %1081 : vector<8x64xf32>
    %1084 = arith.addf %1082, %1083 : vector<8x64xf32>
    %1085 = math.tanh %1084 : vector<8x64xf32>
    %1086 = arith.mulf %1079, %1085 : vector<8x64xf32>
    %1087 = arith.addf %1056, %1086 : vector<8x64xf32>
    %cst_335 = arith.constant 6.250000e-02 : f32
    %1088 = vector.broadcast %cst_335 : f32 to vector<8x64xf32>
    %1089 = arith.mulf %1087, %1088 : vector<8x64xf32>
    %c0_336 = arith.constant 0 : index
    %c0_337 = arith.constant 0 : index
    %1090 = vector.load %arg8[%c0_336, %c0_337] : memref<64x64xf32, #tpu.memory_space<vmem>>, vector<64x64xf32>
    %cst_338 = arith.constant dense<0.000000e+00> : vector<8x64xf32>
    %1091 = tpu.matmul %1089, %1090, %cst_338 {dimension_numbers = #tpu.dot_dimension_numbers<[1], [0], [0], [1], [0, 0, 1, 1], [], []>} : vector<8x64xf32>, vector<64x64xf32>, vector<8x64xf32> -> vector<8x64xf32>
    %c0_339 = arith.constant 0 : index
    %c0_340 = arith.constant 0 : index
    %1092 = vector.load %arg9[%c0_339, %c0_340] : memref<1x64xf32, #tpu.memory_space<vmem>>, vector<1x64xf32>
    %1093 = vector.broadcast %1092 : vector<1x64xf32> to vector<8x64xf32>
    %1094 = arith.addf %1091, %1093 : vector<8x64xf32>
    %cst_341 = arith.constant dense<0.000000e+00> : vector<64xf32>
    %1095 = vector.multi_reduction <add>, %1094, %cst_341 [0] : vector<8x64xf32> to vector<64xf32>
    %1096 = vector.shape_cast %1095 : vector<64xf32> to vector<1x64xf32>
    %cst_342 = arith.constant 8.000000e+00 : f32
    %1097 = vector.broadcast %cst_342 : f32 to vector<1x64xf32>
    %1098 = arith.divf %1096, %1097 : vector<1x64xf32>
    %1099 = vector.broadcast %1098 : vector<1x64xf32> to vector<8x64xf32>
    %1100 = arith.subf %1094, %1099 : vector<8x64xf32>
    %1101 = arith.mulf %1100, %1100 : vector<8x64xf32>
    %cst_343 = arith.constant dense<0.000000e+00> : vector<64xf32>
    %1102 = vector.multi_reduction <add>, %1101, %cst_343 [0] : vector<8x64xf32> to vector<64xf32>
    %1103 = vector.shape_cast %1102 : vector<64xf32> to vector<1x64xf32>
    %cst_344 = arith.constant 8.000000e+00 : f32
    %1104 = vector.broadcast %cst_344 : f32 to vector<1x64xf32>
    %1105 = arith.divf %1103, %1104 : vector<1x64xf32>
    %1106 = vector.broadcast %1098 : vector<1x64xf32> to vector<8x64xf32>
    %1107 = arith.subf %1094, %1106 : vector<8x64xf32>
    %cst_345 = arith.constant 9.99999974E-6 : f32
    %1108 = vector.broadcast %cst_345 : f32 to vector<1x64xf32>
    %1109 = arith.addf %1105, %1108 : vector<1x64xf32>
    %1110 = math.rsqrt %1109 : vector<1x64xf32>
    %1111 = vector.broadcast %1110 : vector<1x64xf32> to vector<8x64xf32>
    %1112 = arith.mulf %1107, %1111 : vector<8x64xf32>
    %c0_346 = arith.constant 0 : index
    %c0_347 = arith.constant 0 : index
    %1113 = vector.load %arg10[%c0_346, %c0_347] : memref<1x64xf32, #tpu.memory_space<vmem>>, vector<1x64xf32>
    %1114 = vector.broadcast %1113 : vector<1x64xf32> to vector<8x64xf32>
    %1115 = arith.mulf %1112, %1114 : vector<8x64xf32>
    %c0_348 = arith.constant 0 : index
    %c0_349 = arith.constant 0 : index
    %1116 = vector.load %arg11[%c0_348, %c0_349] : memref<1x64xf32, #tpu.memory_space<vmem>>, vector<1x64xf32>
    %1117 = vector.broadcast %1116 : vector<1x64xf32> to vector<8x64xf32>
    %1118 = arith.addf %1115, %1117 : vector<8x64xf32>
    %cst_350 = arith.constant 0.000000e+00 : f32
    %1119 = vector.broadcast %cst_350 : f32 to vector<8x64xf32>
    %1120 = arith.maximumf %1118, %1119 : vector<8x64xf32>
    %c0_351 = arith.constant 0 : index
    %c0_352 = arith.constant 0 : index
    %1121 = vector.load %arg12[%c0_351, %c0_352] : memref<64x64xf32, #tpu.memory_space<vmem>>, vector<64x64xf32>
    %cst_353 = arith.constant dense<0.000000e+00> : vector<8x64xf32>
    %1122 = tpu.matmul %1120, %1121, %cst_353 {dimension_numbers = #tpu.dot_dimension_numbers<[1], [0], [0], [1], [0, 0, 1, 1], [], []>} : vector<8x64xf32>, vector<64x64xf32>, vector<8x64xf32> -> vector<8x64xf32>
    %c0_354 = arith.constant 0 : index
    %c0_355 = arith.constant 0 : index
    %1123 = vector.load %arg13[%c0_354, %c0_355] : memref<1x64xf32, #tpu.memory_space<vmem>>, vector<1x64xf32>
    %1124 = vector.broadcast %1123 : vector<1x64xf32> to vector<8x64xf32>
    %1125 = arith.addf %1122, %1124 : vector<8x64xf32>
    %cst_356 = arith.constant dense<0.000000e+00> : vector<64xf32>
    %1126 = vector.multi_reduction <add>, %1125, %cst_356 [0] : vector<8x64xf32> to vector<64xf32>
    %1127 = vector.shape_cast %1126 : vector<64xf32> to vector<1x64xf32>
    %cst_357 = arith.constant 8.000000e+00 : f32
    %1128 = vector.broadcast %cst_357 : f32 to vector<1x64xf32>
    %1129 = arith.divf %1127, %1128 : vector<1x64xf32>
    %1130 = vector.broadcast %1129 : vector<1x64xf32> to vector<8x64xf32>
    %1131 = arith.subf %1125, %1130 : vector<8x64xf32>
    %1132 = arith.mulf %1131, %1131 : vector<8x64xf32>
    %cst_358 = arith.constant dense<0.000000e+00> : vector<64xf32>
    %1133 = vector.multi_reduction <add>, %1132, %cst_358 [0] : vector<8x64xf32> to vector<64xf32>
    %1134 = vector.shape_cast %1133 : vector<64xf32> to vector<1x64xf32>
    %cst_359 = arith.constant 8.000000e+00 : f32
    %1135 = vector.broadcast %cst_359 : f32 to vector<1x64xf32>
    %1136 = arith.divf %1134, %1135 : vector<1x64xf32>
    %1137 = vector.broadcast %1129 : vector<1x64xf32> to vector<8x64xf32>
    %1138 = arith.subf %1125, %1137 : vector<8x64xf32>
    %cst_360 = arith.constant 9.99999974E-6 : f32
    %1139 = vector.broadcast %cst_360 : f32 to vector<1x64xf32>
    %1140 = arith.addf %1136, %1139 : vector<1x64xf32>
    %1141 = math.rsqrt %1140 : vector<1x64xf32>
    %1142 = vector.broadcast %1141 : vector<1x64xf32> to vector<8x64xf32>
    %1143 = arith.mulf %1138, %1142 : vector<8x64xf32>
    %c0_361 = arith.constant 0 : index
    %c0_362 = arith.constant 0 : index
    %1144 = vector.load %arg14[%c0_361, %c0_362] : memref<1x64xf32, #tpu.memory_space<vmem>>, vector<1x64xf32>
    %1145 = vector.broadcast %1144 : vector<1x64xf32> to vector<8x64xf32>
    %1146 = arith.mulf %1143, %1145 : vector<8x64xf32>
    %c0_363 = arith.constant 0 : index
    %c0_364 = arith.constant 0 : index
    %1147 = vector.load %arg15[%c0_363, %c0_364] : memref<1x64xf32, #tpu.memory_space<vmem>>, vector<1x64xf32>
    %1148 = vector.broadcast %1147 : vector<1x64xf32> to vector<8x64xf32>
    %1149 = arith.addf %1146, %1148 : vector<8x64xf32>
    %cst_365 = arith.constant 0.000000e+00 : f32
    %1150 = vector.broadcast %cst_365 : f32 to vector<8x64xf32>
    %1151 = arith.maximumf %1149, %1150 : vector<8x64xf32>
    %c0_366 = arith.constant 0 : index
    %c0_367 = arith.constant 0 : index
    %1152 = vector.load %arg16[%c0_366, %c0_367] : memref<64x21xf32, #tpu.memory_space<vmem>>, vector<64x21xf32>
    %cst_368 = arith.constant dense<0.000000e+00> : vector<8x21xf32>
    %1153 = tpu.matmul %1151, %1152, %cst_368 {dimension_numbers = #tpu.dot_dimension_numbers<[1], [0], [0], [1], [0, 0, 1, 1], [], []>} : vector<8x64xf32>, vector<64x21xf32>, vector<8x21xf32> -> vector<8x21xf32>
    %c0_369 = arith.constant 0 : index
    %c0_370 = arith.constant 0 : index
    %1154 = vector.load %arg17[%c0_369, %c0_370] : memref<1x21xf32, #tpu.memory_space<vmem>>, vector<1x21xf32>
    %1155 = vector.broadcast %1154 : vector<1x21xf32> to vector<8x21xf32>
    %1156 = arith.addf %1153, %1155 : vector<8x21xf32>
    %cst_371 = arith.constant dense<0xFF800000> : vector<8xf32>
    %1157 = vector.multi_reduction <maximumf>, %1156, %cst_371 [1] : vector<8x21xf32> to vector<8xf32>
    %1158 = vector.shape_cast %1157 : vector<8xf32> to vector<8x1xf32>
    %1159 = vector.broadcast %1158 : vector<8x1xf32> to vector<8x21xf32>
    %1160 = arith.subf %1156, %1159 : vector<8x21xf32>
    %1161 = math.exp %1160 : vector<8x21xf32>
    %cst_372 = arith.constant dense<0.000000e+00> : vector<8xf32>
    %1162 = vector.multi_reduction <add>, %1161, %cst_372 [1] : vector<8x21xf32> to vector<8xf32>
    %1163 = vector.shape_cast %1162 : vector<8xf32> to vector<8x1xf32>
    %1164 = vector.broadcast %1163 : vector<8x1xf32> to vector<8x21xf32>
    %1165 = arith.divf %1161, %1164 : vector<8x21xf32>
    %c0_373 = arith.constant 0 : index
    %c0_374 = arith.constant 0 : index
    %1166 = vector.load %arg18[%c0_373, %c0_374] : memref<8x21xf32, #tpu.memory_space<vmem>>, vector<8x21xf32>
    tpu.vector_store %arg18[%c0_373, %c0_374], %1165 {strides = array<i32>} : memref<8x21xf32, #tpu.memory_space<vmem>>, vector<8x21xf32>,
    return
  }
  func.func @transform_0(%arg0: i32) -> (i32, i32) {
    %c0_i32 = arith.constant 0 : i32
    %c0_i32_0 = arith.constant 0 : i32
    %c0_i32_1 = arith.constant 0 : i32
    return %c0_i32, %c0_i32_0 : i32, i32
  }
  func.func @transform_1(%arg0: i32) -> (i32, i32) {
    %c0_i32 = arith.constant 0 : i32
    %c0_i32_0 = arith.constant 0 : i32
    %c0_i32_1 = arith.constant 0 : i32
    return %c0_i32, %c0_i32_0 : i32, i32
  }
  func.func @transform_2(%arg0: i32) -> (i32, i32) {
    %c0_i32 = arith.constant 0 : i32
    %c0_i32_0 = arith.constant 0 : i32
    %c0_i32_1 = arith.constant 0 : i32
    return %c0_i32, %c0_i32_0 : i32, i32
  }
  func.func @transform_3(%arg0: i32) -> (i32, i32) {
    %c0_i32 = arith.constant 0 : i32
    %c0_i32_0 = arith.constant 0 : i32
    %c0_i32_1 = arith.constant 0 : i32
    return %c0_i32, %c0_i32_0 : i32, i32
  }
  func.func @transform_4(%arg0: i32) -> (i32, i32) {
    %c0_i32 = arith.constant 0 : i32
    %c0_i32_0 = arith.constant 0 : i32
    %c0_i32_1 = arith.constant 0 : i32
    return %c0_i32, %c0_i32_0 : i32, i32
  }
  func.func @transform_5(%arg0: i32) -> (i32, i32) {
    %c0_i32 = arith.constant 0 : i32
    %c0_i32_0 = arith.constant 0 : i32
    %c0_i32_1 = arith.constant 0 : i32
    return %c0_i32, %c0_i32_0 : i32, i32
  }
  func.func @transform_6(%arg0: i32) -> (i32, i32) {
    %c0_i32 = arith.constant 0 : i32
    %c0_i32_0 = arith.constant 0 : i32
    %c0_i32_1 = arith.constant 0 : i32
    return %c0_i32, %c0_i32_0 : i32, i32
  }
  func.func @transform_7(%arg0: i32) -> (i32, i32) {
    %c0_i32 = arith.constant 0 : i32
    %c0_i32_0 = arith.constant 0 : i32
    %c0_i32_1 = arith.constant 0 : i32
    return %c0_i32, %c0_i32_0 : i32, i32
  }
  func.func @transform_8(%arg0: i32) -> (i32, i32) {
    %c0_i32 = arith.constant 0 : i32
    %c0_i32_0 = arith.constant 0 : i32
    %c0_i32_1 = arith.constant 0 : i32
    return %c0_i32, %c0_i32_0 : i32, i32
  }
  func.func @transform_9(%arg0: i32) -> (i32, i32) {
    %c0_i32 = arith.constant 0 : i32
    %c0_i32_0 = arith.constant 0 : i32
    %c0_i32_1 = arith.constant 0 : i32
    return %c0_i32, %c0_i32_0 : i32, i32
  }
  func.func @transform_10(%arg0: i32) -> (i32, i32) {
    %c0_i32 = arith.constant 0 : i32
    %c0_i32_0 = arith.constant 0 : i32
    %c0_i32_1 = arith.constant 0 : i32
    return %c0_i32, %c0_i32_0 : i32, i32
  }
  func.func @transform_11(%arg0: i32) -> (i32, i32) {
    %c0_i32 = arith.constant 0 : i32
    %c0_i32_0 = arith.constant 0 : i32
    %c0_i32_1 = arith.constant 0 : i32
    return %c0_i32, %c0_i32_0 : i32, i32
  }
  func.func @transform_12(%arg0: i32) -> (i32, i32) {
    %c0_i32 = arith.constant 0 : i32
    %c0_i32_0 = arith.constant 0 : i32
    %c0_i32_1 = arith.constant 0 : i32
    return %c0_i32, %c0_i32_0 : i32, i32
  }
  func.func @transform_13(%arg0: i32) -> (i32, i32) {
    %c0_i32 = arith.constant 0 : i32
    %c0_i32_0 = arith.constant 0 : i32
    %c0_i32_1 = arith.constant 0 : i32
    return %c0_i32, %c0_i32_0 : i32, i32
  }
  func.func @transform_14(%arg0: i32) -> (i32, i32) {
    %c0_i32 = arith.constant 0 : i32
    %c0_i32_0 = arith.constant 0 : i32
    %c0_i32_1 = arith.constant 0 : i32
    return %c0_i32, %c0_i32_0 : i32, i32
  }
  func.func @transform_15(%arg0: i32) -> (i32, i32) {
    %c0_i32 = arith.constant 0 : i32
    %c0_i32_0 = arith.constant 0 : i32
    %c0_i32_1 = arith.constant 0 : i32
    return %c0_i32, %c0_i32_0 : i32, i32
  }
  func.func @transform_16(%arg0: i32) -> (i32, i32) {
    %c0_i32 = arith.constant 0 : i32
    %c0_i32_0 = arith.constant 0 : i32
    %c0_i32_1 = arith.constant 0 : i32
    return %c0_i32, %c0_i32_0 : i32, i32
  }
  func.func @transform_17(%arg0: i32) -> (i32, i32) {
    %c0_i32 = arith.constant 0 : i32
    %c0_i32_0 = arith.constant 0 : i32
    %c0_i32_1 = arith.constant 0 : i32
    return %c0_i32, %c0_i32_0 : i32, i32
  }
}

</mosaic_0001>

<llo_original>
// kernel: sequence_model_forward.1
$region0: #{sequence_model_forward.1}
  #allocation0 [shape = 'u32[]', space=smem, size = 0x4, offset = 0x4, fixed_abs, tag = 'smem constant byte address 0x4 - core index']
  #allocation1 [shape = 'u32[144,128]{1,0:T(1,128)}', space=vmem, size = 0x12000, scoped, tag = 'internal scratch']
  #allocation2 [shape = 'f32[128,64]{1,0:T(8,128)}', space=vmem, size = 0x10000, scoped, tag = 'scratch operand']
  #allocation3 [shape = 'f32[128,256]{1,0:T(8,128)}', space=vmem, size = 0x20000, scoped, tag = 'scratch operand']
  %s0 = inlined_call_operand.vmem [shape: s32[128,1], index: 0, kind: input, shape index: {}]
  %s1 = inlined_call_operand.hbm [shape: bf16[1024,256], index: 1, kind: input, shape index: {}]
  %s2 = inlined_call_operand.vmem [shape: f32[1,256], index: 2, kind: input, shape index: {}]
  %s3 = inlined_call_operand.vmem [shape: f32[64,256], index: 3, kind: input, shape index: {}]
  %s4 = inlined_call_operand.hbm [shape: bf16[64,256], index: 4, kind: input, shape index: {}]
  %s5 = inlined_call_operand.hbm [shape: f32[1,256], index: 5, kind: input, shape index: {}]
  %s6 = inlined_call_operand.vmem [shape: f32[64,256], index: 6, kind: input, shape index: {}]
  %s7 = inlined_call_operand.hbm [shape: f32[64,64], index: 7, kind: input, shape index: {}]
  %s8 = inlined_call_operand.vmem [shape: f32[1,64], index: 8, kind: input, shape index: {}]
  %s9 = inlined_call_operand.vmem [shape: f32[1,64], index: 9, kind: input, shape index: {}]
  %s10 = inlined_call_operand.vmem [shape: f32[1,64], index: 10, kind: input, shape index: {}]
  %s11 = inlined_call_operand.hbm [shape: f32[64,64], index: 11, kind: input, shape index: {}]
  %s12 = inlined_call_operand.hbm [shape: f32[1,64], index: 12, kind: input, shape index: {}]
  %s13 = inlined_call_operand.hbm [shape: f32[1,64], index: 13, kind: input, shape index: {}]
  %s14 = inlined_call_operand.hbm [shape: f32[1,64], index: 14, kind: input, shape index: {}]
  %s15 = inlined_call_operand.vmem [shape: f32[64,21], index: 15, kind: input, shape index: {}]
  %s16 = inlined_call_operand.vmem [shape: f32[1,21], index: 16, kind: input, shape index: {}]
  %s17 = inlined_call_operand.hbm [shape: f32[8,21], index: 17, kind: output, shape index: {}]
  %s18 = sld [smem:[#allocation0]]
  $region110: #{sequence_model_forward.1} parent=0
    _
  %s20 = ssub.s32 1, %s18
  %s21 = scalar_select 0, %s20, %s18
  $region1: #{sequence_model_forward.1} parent=0
    #allocation4 [shape = 'u8[524288]{0}', space=vmem, size = 0x80000, scoped, tag = 'input window, operand 1, single buffered']
    #allocation5 [shape = 's32[1]{0}', space=sflag, size = 0x4, scoped, tag = 'scoped memory for sequence_model_forward.1']
    #allocation6 [shape = 's32[1]{0}', space=sflag, size = 0x4, scoped, tag = 'scoped memory for sequence_model_forward.1']
    #allocation7 [shape = 'u8[32768]{0}', space=vmem, size = 0x8000, scoped, tag = 'input window, operand 4, single buffered']
    #allocation8 [shape = 's32[1]{0}', space=sflag, size = 0x4, scoped, tag = 'scoped memory for sequence_model_forward.1']
    #allocation9 [shape = 'u8[1024]{0}', space=vmem, size = 0x400, scoped, tag = 'input window, operand 5, single buffered']
    #allocation10 [shape = 'u8[32768]{0}', space=vmem, size = 0x8000, scoped, tag = 'input window, operand 7, single buffered']
    #allocation11 [shape = 's32[1]{0}', space=sflag, size = 0x4, scoped, tag = 'scoped memory for sequence_model_forward.1']
    #allocation12 [shape = 'u8[32768]{0}', space=vmem, size = 0x8000, scoped, tag = 'input window, operand 11, single buffered']
    #allocation13 [shape = 'u8[512]{0}', space=vmem, size = 0x400, scoped, tag = 'input window, operand 12, single buffered']
    #allocation14 [shape = 's32[1]{0}', space=sflag, size = 0x4, scoped, tag = 'scoped memory for sequence_model_forward.1']
    #allocation15 [shape = 'u8[512]{0}', space=vmem, size = 0x400, scoped, tag = 'input window, operand 13, single buffered']
    #allocation16 [shape = 'u8[512]{0}', space=vmem, size = 0x400, scoped, tag = 'input window, operand 14, single buffered']
    #allocation17 [shape = 's32[1]{0}', space=sflag, size = 0x4, scoped, tag = 'scoped memory for sequence_model_forward.1']
    #allocation18 [shape = 'u8[4096]{0}', space=vmem, size = 0x1000, scoped, tag = 'output window, operand 0, single buffered']
    %22 = vsyncpa [#allocation5], 0
    %23 = vsyncpa [#allocation8], 0
    %24 = vsyncpa [#allocation11], 0
    %25 = vsyncpa [#allocation14], 0
    %26 = vsyncpa [#allocation17], 0
    %27 = vsyncpa [#allocation6], 0
    // Predicated region
    $region2: #{sequence_model_forward.1} parent=1 // pred_check
      _
    $region3: #{sequence_model_forward.1} parent=1 // pred_check_branch
      %29 = sbr.rel (0) target = $region5
    $region4: #{sequence_model_forward.1} parent=1 // pred_region
      _
    $region5: #{sequence_model_forward.1} parent=1 // pred_fallthru
      _
    // Predicated region
    $region6: #{sequence_model_forward.1} parent=1 // pred_check
      _
    $region7: #{sequence_model_forward.1} parent=1 // pred_check_branch
      %31 = sbr.rel (0) target = $region9
    $region8: #{sequence_model_forward.1} parent=1 // pred_region
      %s33 = ssub.s32 16384, 16384
      %34 = vsyncadd [#allocation5], %s33
      %s35 = sshll.u32 [#allocation4], 4
      %s36 = int_to_ptr.vmem [resolvable:$true] %s35
      %41 = dma.hbm_to_vmem [thread:$0]  %s1, 16384, %s36, [#allocation5], 128, 128, 8
    $region9: #{sequence_model_forward.1} parent=1 // pred_fallthru
      _
    // Predicated region
    $region10: #{sequence_model_forward.1} parent=1 // pred_check
      _
    $region11: #{sequence_model_forward.1} parent=1 // pred_check_branch
      %43 = sbr.rel (0) target = $region13
    $region12: #{sequence_model_forward.1} parent=1 // pred_region
      _
    $region13: #{sequence_model_forward.1} parent=1 // pred_fallthru
      _
    // Predicated region
    $region14: #{sequence_model_forward.1} parent=1 // pred_check
      _
    $region15: #{sequence_model_forward.1} parent=1 // pred_check_branch
      %45 = sbr.rel (0) target = $region17
    $region16: #{sequence_model_forward.1} parent=1 // pred_region
      _
    $region17: #{sequence_model_forward.1} parent=1 // pred_fallthru
      _
    // Predicated region
    $region18: #{sequence_model_forward.1} parent=1 // pred_check
      _
    $region19: #{sequence_model_forward.1} parent=1 // pred_check_branch
      %47 = sbr.rel (0) target = $region21
    $region20: #{sequence_model_forward.1} parent=1 // pred_region
      %s49 = ssub.s32 1024, 1024
      %50 = vsyncadd [#allocation8], %s49
      %s51 = sshll.u32 [#allocation7], 4
      %s52 = int_to_ptr.vmem [resolvable:$true] %s51
      %57 = dma.hbm_to_vmem [thread:$0]  %s4, 1024, %s52, [#allocation8], 128, 128, 8
    $region21: #{sequence_model_forward.1} parent=1 // pred_fallthru
      _
    // Predicated region
    $region22: #{sequence_model_forward.1} parent=1 // pred_check
      _
    $region23: #{sequence_model_forward.1} parent=1 // pred_check_branch
      %59 = sbr.rel (0) target = $region25
    $region24: #{sequence_model_forward.1} parent=1 // pred_region
      %s61 = ssub.s32 32, 32
      %62 = vsyncadd [#allocation8], %s61
      %s64 = sshll.u32 [#allocation9], 4
      %s65 = int_to_ptr.vmem [resolvable:$true] %s64
      %67 = dma.hbm_to_vmem [thread:$0]  %s5, 32, %s65, [#allocation8]
    $region25: #{sequence_model_forward.1} parent=1 // pred_fallthru
      _
    // Predicated region
    $region26: #{sequence_model_forward.1} parent=1 // pred_check
      _
    $region27: #{sequence_model_forward.1} parent=1 // pred_check_branch
      %69 = sbr.rel (0) target = $region29
    $region28: #{sequence_model_forward.1} parent=1 // pred_region
      _
    $region29: #{sequence_model_forward.1} parent=1 // pred_fallthru
      _
    // Predicated region
    $region30: #{sequence_model_forward.1} parent=1 // pred_check
      _
    $region31: #{sequence_model_forward.1} parent=1 // pred_check_branch
      %71 = sbr.rel (0) target = $region33
    $region32: #{sequence_model_forward.1} parent=1 // pred_region
      %s73 = ssub.s32 1024, 1024
      %74 = vsyncadd [#allocation11], %s73
      %s75 = sshll.u32 [#allocation10], 4
      %s76 = int_to_ptr.vmem [resolvable:$true] %s75
      %81 = dma.hbm_to_vmem [thread:$0]  %s7, 1024, %s76, [#allocation11], 128, 128, 8
    $region33: #{sequence_model_forward.1} parent=1 // pred_fallthru
      _
    // Predicated region
    $region34: #{sequence_model_forward.1} parent=1 // pred_check
      _
    $region35: #{sequence_model_forward.1} parent=1 // pred_check_branch
      %83 = sbr.rel (0) target = $region37
    $region36: #{sequence_model_forward.1} parent=1 // pred_region
      _
    $region37: #{sequence_model_forward.1} parent=1 // pred_fallthru
      _
    // Predicated region
    $region38: #{sequence_model_forward.1} parent=1 // pred_check
      _
    $region39: #{sequence_model_forward.1} parent=1 // pred_check_branch
      %85 = sbr.rel (0) target = $region41
    $region40: #{sequence_model_forward.1} parent=1 // pred_region
      _
    $region41: #{sequence_model_forward.1} parent=1 // pred_fallthru
      _
    // Predicated region
    $region42: #{sequence_model_forward.1} parent=1 // pred_check
      _
    $region43: #{sequence_model_forward.1} parent=1 // pred_check_branch
      %87 = sbr.rel (0) target = $region45
    $region44: #{sequence_model_forward.1} parent=1 // pred_region
      _
    $region45: #{sequence_model_forward.1} parent=1 // pred_fallthru
      _
    // Predicated region
    $region46: #{sequence_model_forward.1} parent=1 // pred_check
      _
    $region47: #{sequence_model_forward.1} parent=1 // pred_check_branch
      %89 = sbr.rel (0) target = $region49
    $region48: #{sequence_model_forward.1} parent=1 // pred_region
      %s91 = ssub.s32 1024, 1024
      %92 = vsyncadd [#allocation11], %s91
      %s93 = sshll.u32 [#allocation12], 4
      %s94 = int_to_ptr.vmem [resolvable:$true] %s93
      %99 = dma.hbm_to_vmem [thread:$0]  %s11, 1024, %s94, [#allocation11], 128, 128, 8
    $region49: #{sequence_model_forward.1} parent=1 // pred_fallthru
      _
    // Predicated region
    $region50: #{sequence_model_forward.1} parent=1 // pred_check
      _
    $region51: #{sequence_model_forward.1} parent=1 // pred_check_branch
      %101 = sbr.rel (0) target = $region53
    $region52: #{sequence_model_forward.1} parent=1 // pred_region
      %s103 = ssub.s32 16, 16
      %104 = vsyncadd [#allocation14], %s103
      %s106 = sshll.u32 [#allocation13], 4
      %s107 = int_to_ptr.vmem [resolvable:$true] %s106
      %109 = dma.hbm_to_vmem [thread:$0]  %s12, 16, %s107, [#allocation14]
    $region53: #{sequence_model_forward.1} parent=1 // pred_fallthru
      _
    // Predicated region
    $region54: #{sequence_model_forward.1} parent=1 // pred_check
      _
    $region55: #{sequence_model_forward.1} parent=1 // pred_check_branch
      %111 = sbr.rel (0) target = $region57
    $region56: #{sequence_model_forward.1} parent=1 // pred_region
      %s113 = ssub.s32 16, 16
      %114 = vsyncadd [#allocation14], %s113
      %s116 = sshll.u32 [#allocation15], 4
      %s117 = int_to_ptr.vmem [resolvable:$true] %s116
      %119 = dma.hbm_to_vmem [thread:$0]  %s13, 16, %s117, [#allocation14]
    $region57: #{sequence_model_forward.1} parent=1 // pred_fallthru
      _
    // Predicated region
    $region58: #{sequence_model_forward.1} parent=1 // pred_check
      _
    $region59: #{sequence_model_forward.1} parent=1 // pred_check_branch
      %121 = sbr.rel (0) target = $region61
    $region60: #{sequence_model_forward.1} parent=1 // pred_region
      %s123 = ssub.s32 16, 16
      %124 = vsyncadd [#allocation17], %s123
      %s126 = sshll.u32 [#allocation16], 4
      %s127 = int_to_ptr.vmem [resolvable:$true] %s126
      %129 = dma.hbm_to_vmem [thread:$0]  %s14, 16, %s127, [#allocation17]
    $region61: #{sequence_model_forward.1} parent=1 // pred_fallthru
      _
    // Predicated region
    $region62: #{sequence_model_forward.1} parent=1 // pred_check
      _
    $region63: #{sequence_model_forward.1} parent=1 // pred_check_branch
      %131 = sbr.rel (0) target = $region65
    $region64: #{sequence_model_forward.1} parent=1 // pred_region
      _
    $region65: #{sequence_model_forward.1} parent=1 // pred_fallthru
      _
    // Predicated region
    $region66: #{sequence_model_forward.1} parent=1 // pred_check
      _
    $region67: #{sequence_model_forward.1} parent=1 // pred_check_branch
      %133 = sbr.rel (0) target = $region69
    $region68: #{sequence_model_forward.1} parent=1 // pred_region
      _
    $region69: #{sequence_model_forward.1} parent=1 // pred_fallthru
      _
    // Predicated region
    $region70: #{sequence_model_forward.1} parent=1 // pred_check
      _
    $region71: #{sequence_model_forward.1} parent=1 // pred_check_branch
      %135 = sbr.rel (0) target = $region73
    $region72: #{sequence_model_forward.1} parent=1 // pred_region
      %136 = dma.done [#allocation5], 16384
    $region73: #{sequence_model_forward.1} parent=1 // pred_fallthru
      _
    // Predicated region
    $region74: #{sequence_model_forward.1} parent=1 // pred_check
      _
    $region75: #{sequence_model_forward.1} parent=1 // pred_check_branch
      %138 = sbr.rel (0) target = $region77
    $region76: #{sequence_model_forward.1} parent=1 // pred_region
      %139 = dma.done [#allocation8], 1024
    $region77: #{sequence_model_forward.1} parent=1 // pred_fallthru
      _
    // Predicated region
    $region78: #{sequence_model_forward.1} parent=1 // pred_check
      _
    $region79: #{sequence_model_forward.1} parent=1 // pred_check_branch
      %141 = sbr.rel (0) target = $region81
    $region80: #{sequence_model_forward.1} parent=1 // pred_region
      %142 = dma.done [#allocation8], 32
    $region81: #{sequence_model_forward.1} parent=1 // pred_fallthru
      _
    // Predicated region
    $region82: #{sequence_model_forward.1} parent=1 // pred_check
      _
    $region83: #{sequence_model_forward.1} parent=1 // pred_check_branch
      %144 = sbr.rel (0) target = $region85
    $region84: #{sequence_model_forward.1} parent=1 // pred_region
      %145 = dma.done [#allocation11], 1024
    $region85: #{sequence_model_forward.1} parent=1 // pred_fallthru
      _
    // Predicated region
    $region86: #{sequence_model_forward.1} parent=1 // pred_check
      _
    $region87: #{sequence_model_forward.1} parent=1 // pred_check_branch
      %147 = sbr.rel (0) target = $region89
    $region88: #{sequence_model_forward.1} parent=1 // pred_region
      %148 = dma.done [#allocation11], 1024
    $region89: #{sequence_model_forward.1} parent=1 // pred_fallthru
      _
    // Predicated region
    $region90: #{sequence_model_forward.1} parent=1 // pred_check
      _
    $region91: #{sequence_model_forward.1} parent=1 // pred_check_branch
      %150 = sbr.rel (0) target = $region93
    $region92: #{sequence_model_forward.1} parent=1 // pred_region
      %151 = dma.done [#allocation14], 16
    $region93: #{sequence_model_forward.1} parent=1 // pred_fallthru
      _
    // Predicated region
    $region94: #{sequence_model_forward.1} parent=1 // pred_check
      _
    $region95: #{sequence_model_forward.1} parent=1 // pred_check_branch
      %153 = sbr.rel (0) target = $region97
    $region96: #{sequence_model_forward.1} parent=1 // pred_region
      %154 = dma.done [#allocation14], 16
    $region97: #{sequence_model_forward.1} parent=1 // pred_fallthru
      _
    // Predicated region
    $region98: #{sequence_model_forward.1} parent=1 // pred_check
      _
    $region99: #{sequence_model_forward.1} parent=1 // pred_check_branch
      %156 = sbr.rel (0) target = $region101
    $region100: #{sequence_model_forward.1} parent=1 // pred_region
      %157 = dma.done [#allocation17], 16
    $region101: #{sequence_model_forward.1} parent=1 // pred_fallthru
      _
    %v159 = vld [vmem:[%s0] sm:$0xff]
    %v160 = vld [vmem:[%s0 + $0x8] sm:$0xff]
    %v161 = vld [vmem:[%s0 + $0x10] sm:$0xff]
    %v162 = vld [vmem:[%s0 + $0x18] sm:$0xff]
    %v163 = vld [vmem:[%s0 + $0x20] sm:$0xff]
    %v164 = vld [vmem:[%s0 + $0x28] sm:$0xff]
    %v165 = vld [vmem:[%s0 + $0x30] sm:$0xff]
    %v166 = vld [vmem:[%s0 + $0x38] sm:$0xff]
    %v167 = vld [vmem:[%s0 + $0x40] sm:$0xff]
    %v168 = vld [vmem:[%s0 + $0x48] sm:$0xff]
    %v169 = vld [vmem:[%s0 + $0x50] sm:$0xff]
    %v170 = vld [vmem:[%s0 + $0x58] sm:$0xff]
    %v171 = vld [vmem:[%s0 + $0x60] sm:$0xff]
    %v172 = vld [vmem:[%s0 + $0x68] sm:$0xff]
    %v173 = vld [vmem:[%s0 + $0x70] sm:$0xff]
    %v174 = vld [vmem:[%s0 + $0x78] sm:$0xff]
    %v175 = vlaneseq
    %v176 = vand.u32 %v175, 127
    %v177 = vadd.s32 %v176, 128
    %v178 = vadd.s32 %v176, 256
    %v179 = vadd.s32 %v176, 384
    %v180 = vadd.s32 %v176, 512
    %v181 = vadd.s32 %v176, 640
    %v182 = vadd.s32 %v176, 768
    %v183 = vadd.s32 %v176, 896
    %184 = vset.pattern.permute.xlu0 0
    %185 = vperm.xlu0 %184, %v159
    %v186 = vpop.permute.xlu0 %185
    %187 = vset.pattern.permute.xlu0 0
    %188 = vperm.xlu0 %187, %v160
    %v189 = vpop.permute.xlu0 %188
    %190 = vset.pattern.permute.xlu0 0
    %191 = vperm.xlu0 %190, %v161
    %v192 = vpop.permute.xlu0 %191
    %193 = vset.pattern.permute.xlu0 0
    %194 = vperm.xlu0 %193, %v162
    %v195 = vpop.permute.xlu0 %194
    %196 = vset.pattern.permute.xlu0 0
    %197 = vperm.xlu0 %196, %v163
    %v198 = vpop.permute.xlu0 %197
    %199 = vset.pattern.permute.xlu0 0
    %200 = vperm.xlu0 %199, %v164
    %v201 = vpop.permute.xlu0 %200
    %202 = vset.pattern.permute.xlu0 0
    %203 = vperm.xlu0 %202, %v165
    %v204 = vpop.permute.xlu0 %203
    %205 = vset.pattern.permute.xlu0 0
    %206 = vperm.xlu0 %205, %v166
    %v207 = vpop.permute.xlu0 %206
    %208 = vset.pattern.permute.xlu0 0
    %209 = vperm.xlu0 %208, %v167
    %v210 = vpop.permute.xlu0 %209
    %211 = vset.pattern.permute.xlu0 0
    %212 = vperm.xlu0 %211, %v168
    %v213 = vpop.permute.xlu0 %212
    %214 = vset.pattern.permute.xlu0 0
    %215 = vperm.xlu0 %214, %v169
    %v216 = vpop.permute.xlu0 %215
    %217 = vset.pattern.permute.xlu0 0
    %218 = vperm.xlu0 %217, %v170
    %v219 = vpop.permute.xlu0 %218
    %220 = vset.pattern.permute.xlu0 0
    %221 = vperm.xlu0 %220, %v171
    %v222 = vpop.permute.xlu0 %221
    %223 = vset.pattern.permute.xlu0 0
    %224 = vperm.xlu0 %223, %v172
    %v225 = vpop.permute.xlu0 %224
    %226 = vset.pattern.permute.xlu0 0
    %227 = vperm.xlu0 %226, %v173
    %v228 = vpop.permute.xlu0 %227
    %229 = vset.pattern.permute.xlu0 0
    %230 = vperm.xlu0 %229, %v174
    %v231 = vpop.permute.xlu0 %230
    %vm232 = vcmp.eq.s32.totalorder %v176, %v186
    %vm233 = vcmp.eq.s32.totalorder %v177, %v186
    %vm234 = vcmp.eq.s32.totalorder %v178, %v186
    %vm235 = vcmp.eq.s32.totalorder %v179, %v186
    %vm236 = vcmp.eq.s32.totalorder %v180, %v186
    %vm237 = vcmp.eq.s32.totalorder %v181, %v186
    %vm238 = vcmp.eq.s32.totalorder %v182, %v186
    %vm239 = vcmp.eq.s32.totalorder %v183, %v186
    %vm240 = vcmp.eq.s32.totalorder %v176, %v189
    %vm241 = vcmp.eq.s32.totalorder %v177, %v189
    %vm242 = vcmp.eq.s32.totalorder %v178, %v189
    %vm243 = vcmp.eq.s32.totalorder %v179, %v189
    %vm244 = vcmp.eq.s32.totalorder %v180, %v189
    %vm245 = vcmp.eq.s32.totalorder %v181, %v189
    %vm246 = vcmp.eq.s32.totalorder %v182, %v189
    %vm247 = vcmp.eq.s32.totalorder %v183, %v189
    %vm248 = vcmp.eq.s32.totalorder %v176, %v192
    %vm249 = vcmp.eq.s32.totalorder %v177, %v192
    %vm250 = vcmp.eq.s32.totalorder %v178, %v192
    %vm251 = vcmp.eq.s32.totalorder %v179, %v192
    %vm252 = vcmp.eq.s32.totalorder %v180, %v192
    %vm253 = vcmp.eq.s32.totalorder %v181, %v192
    %vm254 = vcmp.eq.s32.totalorder %v182, %v192
    %vm255 = vcmp.eq.s32.totalorder %v183, %v192
    %vm256 = vcmp.eq.s32.totalorder %v176, %v195
    %vm257 = vcmp.eq.s32.totalorder %v177, %v195
    %vm258 = vcmp.eq.s32.totalorder %v178, %v195
    %vm259 = vcmp.eq.s32.totalorder %v179, %v195
    %vm260 = vcmp.eq.s32.totalorder %v180, %v195
    %vm261 = vcmp.eq.s32.totalorder %v181, %v195
    %vm262 = vcmp.eq.s32.totalorder %v182, %v195
    %vm263 = vcmp.eq.s32.totalorder %v183, %v195
    %vm264 = vcmp.eq.s32.totalorder %v176, %v198
    %vm265 = vcmp.eq.s32.totalorder %v177, %v198
    %vm266 = vcmp.eq.s32.totalorder %v178, %v198
    %vm267 = vcmp.eq.s32.totalorder %v179, %v198
    %vm268 = vcmp.eq.s32.totalorder %v180, %v198
    %vm269 = vcmp.eq.s32.totalorder %v181, %v198
    %vm270 = vcmp.eq.s32.totalorder %v182, %v198
    %vm271 = vcmp.eq.s32.totalorder %v183, %v198
    %vm272 = vcmp.eq.s32.totalorder %v176, %v201
    %vm273 = vcmp.eq.s32.totalorder %v177, %v201
    %vm274 = vcmp.eq.s32.totalorder %v178, %v201
    %vm275 = vcmp.eq.s32.totalorder %v179, %v201
    %vm276 = vcmp.eq.s32.totalorder %v180, %v201
    %vm277 = vcmp.eq.s32.totalorder %v181, %v201
    %vm278 = vcmp.eq.s32.totalorder %v182, %v201
    %vm279 = vcmp.eq.s32.totalorder %v183, %v201
    %vm280 = vcmp.eq.s32.totalorder %v176, %v204
    %vm281 = vcmp.eq.s32.totalorder %v177, %v204
    %vm282 = vcmp.eq.s32.totalorder %v178, %v204
    %vm283 = vcmp.eq.s32.totalorder %v179, %v204
    %vm284 = vcmp.eq.s32.totalorder %v180, %v204
    %vm285 = vcmp.eq.s32.totalorder %v181, %v204
    %vm286 = vcmp.eq.s32.totalorder %v182, %v204
    %vm287 = vcmp.eq.s32.totalorder %v183, %v204
    %vm288 = vcmp.eq.s32.totalorder %v176, %v207
    %vm289 = vcmp.eq.s32.totalorder %v177, %v207
    %vm290 = vcmp.eq.s32.totalorder %v178, %v207
    %vm291 = vcmp.eq.s32.totalorder %v179, %v207
    %vm292 = vcmp.eq.s32.totalorder %v180, %v207
    %vm293 = vcmp.eq.s32.totalorder %v181, %v207
    %vm294 = vcmp.eq.s32.totalorder %v182, %v207
    %vm295 = vcmp.eq.s32.totalorder %v183, %v207
    %vm296 = vcmp.eq.s32.totalorder %v176, %v210
    %vm297 = vcmp.eq.s32.totalorder %v177, %v210
    %vm298 = vcmp.eq.s32.totalorder %v178, %v210
    %vm299 = vcmp.eq.s32.totalorder %v179, %v210
    %vm300 = vcmp.eq.s32.totalorder %v180, %v210
    %vm301 = vcmp.eq.s32.totalorder %v181, %v210
    %vm302 = vcmp.eq.s32.totalorder %v182, %v210
    %vm303 = vcmp.eq.s32.totalorder %v183, %v210
    %vm304 = vcmp.eq.s32.totalorder %v176, %v213
    %vm305 = vcmp.eq.s32.totalorder %v177, %v213
    %vm306 = vcmp.eq.s32.totalorder %v178, %v213
    %vm307 = vcmp.eq.s32.totalorder %v179, %v213
    %vm308 = vcmp.eq.s32.totalorder %v180, %v213
    %vm309 = vcmp.eq.s32.totalorder %v181, %v213
    %vm310 = vcmp.eq.s32.totalorder %v182, %v213
    %vm311 = vcmp.eq.s32.totalorder %v183, %v213
    %vm312 = vcmp.eq.s32.totalorder %v176, %v216
    %vm313 = vcmp.eq.s32.totalorder %v177, %v216
    %vm314 = vcmp.eq.s32.totalorder %v178, %v216
    %vm315 = vcmp.eq.s32.totalorder %v179, %v216
    %vm316 = vcmp.eq.s32.totalorder %v180, %v216
    %vm317 = vcmp.eq.s32.totalorder %v181, %v216
    %vm318 = vcmp.eq.s32.totalorder %v182, %v216
    %vm319 = vcmp.eq.s32.totalorder %v183, %v216
    %vm320 = vcmp.eq.s32.totalorder %v176, %v219
    %vm321 = vcmp.eq.s32.totalorder %v177, %v219
    %vm322 = vcmp.eq.s32.totalorder %v178, %v219
    %vm323 = vcmp.eq.s32.totalorder %v179, %v219
    %vm324 = vcmp.eq.s32.totalorder %v180, %v219
    %vm325 = vcmp.eq.s32.totalorder %v181, %v219
    %vm326 = vcmp.eq.s32.totalorder %v182, %v219
    %vm327 = vcmp.eq.s32.totalorder %v183, %v219
    %vm328 = vcmp.eq.s32.totalorder %v176, %v222
    %vm329 = vcmp.eq.s32.totalorder %v177, %v222
    %vm330 = vcmp.eq.s32.totalorder %v178, %v222
    %vm331 = vcmp.eq.s32.totalorder %v179, %v222
    %vm332 = vcmp.eq.s32.totalorder %v180, %v222
    %vm333 = vcmp.eq.s32.totalorder %v181, %v222
    %vm334 = vcmp.eq.s32.totalorder %v182, %v222
    %vm335 = vcmp.eq.s32.totalorder %v183, %v222
    %vm336 = vcmp.eq.s32.totalorder %v176, %v225
    %vm337 = vcmp.eq.s32.totalorder %v177, %v225
    %vm338 = vcmp.eq.s32.totalorder %v178, %v225
    %vm339 = vcmp.eq.s32.totalorder %v179, %v225
    %vm340 = vcmp.eq.s32.totalorder %v180, %v225
    %vm341 = vcmp.eq.s32.totalorder %v181, %v225
    %vm342 = vcmp.eq.s32.totalorder %v182, %v225
    %vm343 = vcmp.eq.s32.totalorder %v183, %v225
    %vm344 = vcmp.eq.s32.totalorder %v176, %v228
    %vm345 = vcmp.eq.s32.totalorder %v177, %v228
    %vm346 = vcmp.eq.s32.totalorder %v178, %v228
    %vm347 = vcmp.eq.s32.totalorder %v179, %v228
    %vm348 = vcmp.eq.s32.totalorder %v180, %v228
    %vm349 = vcmp.eq.s32.totalorder %v181, %v228
    %vm350 = vcmp.eq.s32.totalorder %v182, %v228
    %vm351 = vcmp.eq.s32.totalorder %v183, %v228
    %vm352 = vcmp.eq.s32.totalorder %v176, %v231
    %vm353 = vcmp.eq.s32.totalorder %v177, %v231
    %vm354 = vcmp.eq.s32.totalorder %v178, %v231
    %vm355 = vcmp.eq.s32.totalorder %v179, %v231
    %vm356 = vcmp.eq.s32.totalorder %v180, %v231
    %vm357 = vcmp.eq.s32.totalorder %v181, %v231
    %vm358 = vcmp.eq.s32.totalorder %v182, %v231
    %vm359 = vcmp.eq.s32.totalorder %v183, %v231
    %v360 = vsel %vm232, 1.0, 0.0
    %v361 = vsel %vm233, 1.0, 0.0
    %v362 = vsel %vm234, 1.0, 0.0
    %v363 = vsel %vm235, 1.0, 0.0
    %v364 = vsel %vm236, 1.0, 0.0
    %v365 = vsel %vm237, 1.0, 0.0
    %v366 = vsel %vm238, 1.0, 0.0
    %v367 = vsel %vm239, 1.0, 0.0
    %v368 = vsel %vm240, 1.0, 0.0
    %v369 = vsel %vm241, 1.0, 0.0
    %v370 = vsel %vm242, 1.0, 0.0
    %v371 = vsel %vm243, 1.0, 0.0
    %v372 = vsel %vm244, 1.0, 0.0
    %v373 = vsel %vm245, 1.0, 0.0
    %v374 = vsel %vm246, 1.0, 0.0
    %v375 = vsel %vm247, 1.0, 0.0
    %v376 = vsel %vm248, 1.0, 0.0
    %v377 = vsel %vm249, 1.0, 0.0
    %v378 = vsel %vm250, 1.0, 0.0
    %v379 = vsel %vm251, 1.0, 0.0
    %v380 = vsel %vm252, 1.0, 0.0
    %v381 = vsel %vm253, 1.0, 0.0
    %v382 = vsel %vm254, 1.0, 0.0
    %v383 = vsel %vm255, 1.0, 0.0
    %v384 = vsel %vm256, 1.0, 0.0
    %v385 = vsel %vm257, 1.0, 0.0
    %v386 = vsel %vm258, 1.0, 0.0
    %v387 = vsel %vm259, 1.0, 0.0
    %v388 = vsel %vm260, 1.0, 0.0
    %v389 = vsel %vm261, 1.0, 0.0
    %v390 = vsel %vm262, 1.0, 0.0
    %v391 = vsel %vm263, 1.0, 0.0
    %v392 = vsel %vm264, 1.0, 0.0
    %v393 = vsel %vm265, 1.0, 0.0
    %v394 = vsel %vm266, 1.0, 0.0
    %v395 = vsel %vm267, 1.0, 0.0
    %v396 = vsel %vm268, 1.0, 0.0
    %v397 = vsel %vm269, 1.0, 0.0
    %v398 = vsel %vm270, 1.0, 0.0
    %v399 = vsel %vm271, 1.0, 0.0
    %v400 = vsel %vm272, 1.0, 0.0
    %v401 = vsel %vm273, 1.0, 0.0
    %v402 = vsel %vm274, 1.0, 0.0
    %v403 = vsel %vm275, 1.0, 0.0
    %v404 = vsel %vm276, 1.0, 0.0
    %v405 = vsel %vm277, 1.0, 0.0
    %v406 = vsel %vm278, 1.0, 0.0
    %v407 = vsel %vm279, 1.0, 0.0
    %v408 = vsel %vm280, 1.0, 0.0
    %v409 = vsel %vm281, 1.0, 0.0
    %v410 = vsel %vm282, 1.0, 0.0
    %v411 = vsel %vm283, 1.0, 0.0
    %v412 = vsel %vm284, 1.0, 0.0
    %v413 = vsel %vm285, 1.0, 0.0
    %v414 = vsel %vm286, 1.0, 0.0
    %v415 = vsel %vm287, 1.0, 0.0
    %v416 = vsel %vm288, 1.0, 0.0
    %v417 = vsel %vm289, 1.0, 0.0
    %v418 = vsel %vm290, 1.0, 0.0
    %v419 = vsel %vm291, 1.0, 0.0
    %v420 = vsel %vm292, 1.0, 0.0
    %v421 = vsel %vm293, 1.0, 0.0
    %v422 = vsel %vm294, 1.0, 0.0
    %v423 = vsel %vm295, 1.0, 0.0
    %v424 = vsel %vm296, 1.0, 0.0
    %v425 = vsel %vm297, 1.0, 0.0
    %v426 = vsel %vm298, 1.0, 0.0
    %v427 = vsel %vm299, 1.0, 0.0
    %v428 = vsel %vm300, 1.0, 0.0
    %v429 = vsel %vm301, 1.0, 0.0
    %v430 = vsel %vm302, 1.0, 0.0
    %v431 = vsel %vm303, 1.0, 0.0
    %v432 = vsel %vm304, 1.0, 0.0
    %v433 = vsel %vm305, 1.0, 0.0
    %v434 = vsel %vm306, 1.0, 0.0
    %v435 = vsel %vm307, 1.0, 0.0
    %v436 = vsel %vm308, 1.0, 0.0
    %v437 = vsel %vm309, 1.0, 0.0
    %v438 = vsel %vm310, 1.0, 0.0
    %v439 = vsel %vm311, 1.0, 0.0
    %v440 = vsel %vm312, 1.0, 0.0
    %v441 = vsel %vm313, 1.0, 0.0
    %v442 = vsel %vm314, 1.0, 0.0
    %v443 = vsel %vm315, 1.0, 0.0
    %v444 = vsel %vm316, 1.0, 0.0
    %v445 = vsel %vm317, 1.0, 0.0
    %v446 = vsel %vm318, 1.0, 0.0
    %v447 = vsel %vm319, 1.0, 0.0
    %v448 = vsel %vm320, 1.0, 0.0
    %v449 = vsel %vm321, 1.0, 0.0
    %v450 = vsel %vm322, 1.0, 0.0
    %v451 = vsel %vm323, 1.0, 0.0
    %v452 = vsel %vm324, 1.0, 0.0
    %v453 = vsel %vm325, 1.0, 0.0
    %v454 = vsel %vm326, 1.0, 0.0
    %v455 = vsel %vm327, 1.0, 0.0
    %v456 = vsel %vm328, 1.0, 0.0
    %v457 = vsel %vm329, 1.0, 0.0
    %v458 = vsel %vm330, 1.0, 0.0
    %v459 = vsel %vm331, 1.0, 0.0
    %v460 = vsel %vm332, 1.0, 0.0
    %v461 = vsel %vm333, 1.0, 0.0
    %v462 = vsel %vm334, 1.0, 0.0
    %v463 = vsel %vm335, 1.0, 0.0
    %v464 = vsel %vm336, 1.0, 0.0
    %v465 = vsel %vm337, 1.0, 0.0
    %v466 = vsel %vm338, 1.0, 0.0
    %v467 = vsel %vm339, 1.0, 0.0
    %v468 = vsel %vm340, 1.0, 0.0
    %v469 = vsel %vm341, 1.0, 0.0
    %v470 = vsel %vm342, 1.0, 0.0
    %v471 = vsel %vm343, 1.0, 0.0
    %v472 = vsel %vm344, 1.0, 0.0
    %v473 = vsel %vm345, 1.0, 0.0
    %v474 = vsel %vm346, 1.0, 0.0
    %v475 = vsel %vm347, 1.0, 0.0
    %v476 = vsel %vm348, 1.0, 0.0
    %v477 = vsel %vm349, 1.0, 0.0
    %v478 = vsel %vm350, 1.0, 0.0
    %v479 = vsel %vm351, 1.0, 0.0
    %v480 = vsel %vm352, 1.0, 0.0
    %v481 = vsel %vm353, 1.0, 0.0
    %v482 = vsel %vm354, 1.0, 0.0
    %v483 = vsel %vm355, 1.0, 0.0
    %v484 = vsel %vm356, 1.0, 0.0
    %v485 = vsel %vm357, 1.0, 0.0
    %v486 = vsel %vm358, 1.0, 0.0
    %v487 = vsel %vm359, 1.0, 0.0
    %v488 = vpack.c.bf16 %v368, %v360
    %v489 = vpack.c.bf16 %v369, %v361
    %v490 = vpack.c.bf16 %v370, %v362
    %v491 = vpack.c.bf16 %v371, %v363
    %v492 = vpack.c.bf16 %v372, %v364
    %v493 = vpack.c.bf16 %v373, %v365
    %v494 = vpack.c.bf16 %v374, %v366
    %v495 = vpack.c.bf16 %v375, %v367
    %v496 = vpack.c.bf16 %v384, %v376
    %v497 = vpack.c.bf16 %v385, %v377
    %v498 = vpack.c.bf16 %v386, %v378
    %v499 = vpack.c.bf16 %v387, %v379
    %v500 = vpack.c.bf16 %v388, %v380
    %v501 = vpack.c.bf16 %v389, %v381
    %v502 = vpack.c.bf16 %v390, %v382
    %v503 = vpack.c.bf16 %v391, %v383
    %v504 = vpack.c.bf16 %v400, %v392
    %v505 = vpack.c.bf16 %v401, %v393
    %v506 = vpack.c.bf16 %v402, %v394
    %v507 = vpack.c.bf16 %v403, %v395
    %v508 = vpack.c.bf16 %v404, %v396
    %v509 = vpack.c.bf16 %v405, %v397
    %v510 = vpack.c.bf16 %v406, %v398
    %v511 = vpack.c.bf16 %v407, %v399
    %v512 = vpack.c.bf16 %v416, %v408
    %v513 = vpack.c.bf16 %v417, %v409
    %v514 = vpack.c.bf16 %v418, %v410
    %v515 = vpack.c.bf16 %v419, %v411
    %v516 = vpack.c.bf16 %v420, %v412
    %v517 = vpack.c.bf16 %v421, %v413
    %v518 = vpack.c.bf16 %v422, %v414
    %v519 = vpack.c.bf16 %v423, %v415
    %v520 = vpack.c.bf16 %v432, %v424
    %v521 = vpack.c.bf16 %v433, %v425
    %v522 = vpack.c.bf16 %v434, %v426
    %v523 = vpack.c.bf16 %v435, %v427
    %v524 = vpack.c.bf16 %v436, %v428
    %v525 = vpack.c.bf16 %v437, %v429
    %v526 = vpack.c.bf16 %v438, %v430
    %v527 = vpack.c.bf16 %v439, %v431
    %v528 = vpack.c.bf16 %v448, %v440
    %v529 = vpack.c.bf16 %v449, %v441
    %v530 = vpack.c.bf16 %v450, %v442
    %v531 = vpack.c.bf16 %v451, %v443
    %v532 = vpack.c.bf16 %v452, %v444
    %v533 = vpack.c.bf16 %v453, %v445
    %v534 = vpack.c.bf16 %v454, %v446
    %v535 = vpack.c.bf16 %v455, %v447
    %v536 = vpack.c.bf16 %v464, %v456
    %v537 = vpack.c.bf16 %v465, %v457
    %v538 = vpack.c.bf16 %v466, %v458
    %v539 = vpack.c.bf16 %v467, %v459
    %v540 = vpack.c.bf16 %v468, %v460
    %v541 = vpack.c.bf16 %v469, %v461
    %v542 = vpack.c.bf16 %v470, %v462
    %v543 = vpack.c.bf16 %v471, %v463
    %v544 = vpack.c.bf16 %v480, %v472
    %v545 = vpack.c.bf16 %v481, %v473
    %v546 = vpack.c.bf16 %v482, %v474
    %v547 = vpack.c.bf16 %v483, %v475
    %v548 = vpack.c.bf16 %v484, %v476
    %v549 = vpack.c.bf16 %v485, %v477
    %v550 = vpack.c.bf16 %v486, %v478
    %v551 = vpack.c.bf16 %v487, %v479
    %v552 = vld [vmem:[#allocation4] sm:$0xff]
    %v553 = vld [vmem:[#allocation4 + $0x8] sm:$0xff]
    %v554 = vld [vmem:[#allocation4 + $0x10] sm:$0xff]
    %v555 = vld [vmem:[#allocation4 + $0x18] sm:$0xff]
    %v556 = vld [vmem:[#allocation4 + $0x20] sm:$0xff]
    %v557 = vld [vmem:[#allocation4 + $0x28] sm:$0xff]
    %v558 = vld [vmem:[#allocation4 + $0x30] sm:$0xff]
    %v559 = vld [vmem:[#allocation4 + $0x38] sm:$0xff]
    %v560 = vld [vmem:[#allocation4 + $0x40] sm:$0xff]
    %v561 = vld [vmem:[#allocation4 + $0x48] sm:$0xff]
    %v562 = vld [vmem:[#allocation4 + $0x50] sm:$0xff]
    %v563 = vld [vmem:[#allocation4 + $0x58] sm:$0xff]
    %v564 = vld [vmem:[#allocation4 + $0x60] sm:$0xff]
    %v565 = vld [vmem:[#allocation4 + $0x68] sm:$0xff]
    %v566 = vld [vmem:[#allocation4 + $0x70] sm:$0xff]
    %v567 = vld [vmem:[#allocation4 + $0x78] sm:$0xff]
    %v568 = vld [vmem:[#allocation4 + $0x80] sm:$0xff]
    %v569 = vld [vmem:[#allocation4 + $0x88] sm:$0xff]
    %v570 = vld [vmem:[#allocation4 + $0x90] sm:$0xff]
    %v571 = vld [vmem:[#allocation4 + $0x98] sm:$0xff]
    %v572 = vld [vmem:[#allocation4 + $0xa0] sm:$0xff]
    %v573 = vld [vmem:[#allocation4 + $0xa8] sm:$0xff]
    %v574 = vld [vmem:[#allocation4 + $0xb0] sm:$0xff]
    %v575 = vld [vmem:[#allocation4 + $0xb8] sm:$0xff]
    %v576 = vld [vmem:[#allocation4 + $0xc0] sm:$0xff]
    %v577 = vld [vmem:[#allocation4 + $0xc8] sm:$0xff]
    %v578 = vld [vmem:[#allocation4 + $0xd0] sm:$0xff]
    %v579 = vld [vmem:[#allocation4 + $0xd8] sm:$0xff]
    %v580 = vld [vmem:[#allocation4 + $0xe0] sm:$0xff]
    %v581 = vld [vmem:[#allocation4 + $0xe8] sm:$0xff]
    %v582 = vld [vmem:[#allocation4 + $0xf0] sm:$0xff]
    %v583 = vld [vmem:[#allocation4 + $0xf8] sm:$0xff]
    %v584 = vld [vmem:[#allocation4 + $0x100] sm:$0xff]
    %v585 = vld [vmem:[#allocation4 + $0x108] sm:$0xff]
    %v586 = vld [vmem:[#allocation4 + $0x110] sm:$0xff]
    %v587 = vld [vmem:[#allocation4 + $0x118] sm:$0xff]
    %v588 = vld [vmem:[#allocation4 + $0x120] sm:$0xff]
    %v589 = vld [vmem:[#allocation4 + $0x128] sm:$0xff]
    %v590 = vld [vmem:[#allocation4 + $0x130] sm:$0xff]
    %v591 = vld [vmem:[#allocation4 + $0x138] sm:$0xff]
    %v592 = vld [vmem:[#allocation4 + $0x140] sm:$0xff]
    %v593 = vld [vmem:[#allocation4 + $0x148] sm:$0xff]
    %v594 = vld [vmem:[#allocation4 + $0x150] sm:$0xff]
    %v595 = vld [vmem:[#allocation4 + $0x158] sm:$0xff]
    %v596 = vld [vmem:[#allocation4 + $0x160] sm:$0xff]
    %v597 = vld [vmem:[#allocation4 + $0x168] sm:$0xff]
    %v598 = vld [vmem:[#allocation4 + $0x170] sm:$0xff]
    %v599 = vld [vmem:[#allocation4 + $0x178] sm:$0xff]
    %v600 = vld [vmem:[#allocation4 + $0x180] sm:$0xff]
    %v601 = vld [vmem:[#allocation4 + $0x188] sm:$0xff]
    %v602 = vld [vmem:[#allocation4 + $0x190] sm:$0xff]
    %v603 = vld [vmem:[#allocation4 + $0x198] sm:$0xff]
    %v604 = vld [vmem:[#allocation4 + $0x1a0] sm:$0xff]
    %v605 = vld [vmem:[#allocation4 + $0x1a8] sm:$0xff]
    %v606 = vld [vmem:[#allocation4 + $0x1b0] sm:$0xff]
    %v607 = vld [vmem:[#allocation4 + $0x1b8] sm:$0xff]
    %v608 = vld [vmem:[#allocation4 + $0x1c0] sm:$0xff]
    %v609 = vld [vmem:[#allocation4 + $0x1c8] sm:$0xff]
    %v610 = vld [vmem:[#allocation4 + $0x1d0] sm:$0xff]
    %v611 = vld [vmem:[#allocation4 + $0x1d8] sm:$0xff]
    %v612 = vld [vmem:[#allocation4 + $0x1e0] sm:$0xff]
    %v613 = vld [vmem:[#allocation4 + $0x1e8] sm:$0xff]
    %v614 = vld [vmem:[#allocation4 + $0x1f0] sm:$0xff]
    %v615 = vld [vmem:[#allocation4 + $0x1f8] sm:$0xff]
    %v616 = vld [vmem:[#allocation4 + $0x200] sm:$0xff]
    %v617 = vld [vmem:[#allocation4 + $0x208] sm:$0xff]
    %v618 = vld [vmem:[#allocation4 + $0x210] sm:$0xff]
    %v619 = vld [vmem:[#allocation4 + $0x218] sm:$0xff]
    %v620 = vld [vmem:[#allocation4 + $0x220] sm:$0xff]
    %v621 = vld [vmem:[#allocation4 + $0x228] sm:$0xff]
    %v622 = vld [vmem:[#allocation4 + $0x230] sm:$0xff]
    %v623 = vld [vmem:[#allocation4 + $0x238] sm:$0xff]
    %v624 = vld [vmem:[#allocation4 + $0x240] sm:$0xff]
    %v625 = vld [vmem:[#allocation4 + $0x248] sm:$0xff]
    %v626 = vld [vmem:[#allocation4 + $0x250] sm:$0xff]
    %v627 = vld [vmem:[#allocation4 + $0x258] sm:$0xff]
    %v628 = vld [vmem:[#allocation4 + $0x260] sm:$0xff]
    %v629 = vld [vmem:[#allocation4 + $0x268] sm:$0xff]
    %v630 = vld [vmem:[#allocation4 + $0x270] sm:$0xff]
    %v631 = vld [vmem:[#allocation4 + $0x278] sm:$0xff]
    %v632 = vld [vmem:[#allocation4 + $0x280] sm:$0xff]
    %v633 = vld [vmem:[#allocation4 + $0x288] sm:$0xff]
    %v634 = vld [vmem:[#allocation4 + $0x290] sm:$0xff]
    %v635 = vld [vmem:[#allocation4 + $0x298] sm:$0xff]
    %v636 = vld [vmem:[#allocation4 + $0x2a0] sm:$0xff]
    %v637 = vld [vmem:[#allocation4 + $0x2a8] sm:$0xff]
    %v638 = vld [vmem:[#allocation4 + $0x2b0] sm:$0xff]
    %v639 = vld [vmem:[#allocation4 + $0x2b8] sm:$0xff]
    %v640 = vld [vmem:[#allocation4 + $0x2c0] sm:$0xff]
    %v641 = vld [vmem:[#allocation4 + $0x2c8] sm:$0xff]
    %v642 = vld [vmem:[#allocation4 + $0x2d0] sm:$0xff]
    %v643 = vld [vmem:[#allocation4 + $0x2d8] sm:$0xff]
    %v644 = vld [vmem:[#allocation4 + $0x2e0] sm:$0xff]
    %v645 = vld [vmem:[#allocation4 + $0x2e8] sm:$0xff]
    %v646 = vld [vmem:[#allocation4 + $0x2f0] sm:$0xff]
    %v647 = vld [vmem:[#allocation4 + $0x2f8] sm:$0xff]
    %v648 = vld [vmem:[#allocation4 + $0x300] sm:$0xff]
    %v649 = vld [vmem:[#allocation4 + $0x308] sm:$0xff]
    %v650 = vld [vmem:[#allocation4 + $0x310] sm:$0xff]
    %v651 = vld [vmem:[#allocation4 + $0x318] sm:$0xff]
    %v652 = vld [vmem:[#allocation4 + $0x320] sm:$0xff]
    %v653 = vld [vmem:[#allocation4 + $0x328] sm:$0xff]
    %v654 = vld [vmem:[#allocation4 + $0x330] sm:$0xff]
    %v655 = vld [vmem:[#allocation4 + $0x338] sm:$0xff]
    %v656 = vld [vmem:[#allocation4 + $0x340] sm:$0xff]
    %v657 = vld [vmem:[#allocation4 + $0x348] sm:$0xff]
    %v658 = vld [vmem:[#allocation4 + $0x350] sm:$0xff]
    %v659 = vld [vmem:[#allocation4 + $0x358] sm:$0xff]
    %v660 = vld [vmem:[#allocation4 + $0x360] sm:$0xff]
    %v661 = vld [vmem:[#allocation4 + $0x368] sm:$0xff]
    %v662 = vld [vmem:[#allocation4 + $0x370] sm:$0xff]
    %v663 = vld [vmem:[#allocation4 + $0x378] sm:$0xff]
    %v664 = vld [vmem:[#allocation4 + $0x380] sm:$0xff]
    %v665 = vld [vmem:[#allocation4 + $0x388] sm:$0xff]
    %v666 = vld [vmem:[#allocation4 + $0x390] sm:$0xff]
    %v667 = vld [vmem:[#allocation4 + $0x398] sm:$0xff]
    %v668 = vld [vmem:[#allocation4 + $0x3a0] sm:$0xff]
    %v669 = vld [vmem:[#allocation4 + $0x3a8] sm:$0xff]
    %v670 = vld [vmem:[#allocation4 + $0x3b0] sm:$0xff]
    %v671 = vld [vmem:[#allocation4 + $0x3b8] sm:$0xff]
    %v672 = vld [vmem:[#allocation4 + $0x3c0] sm:$0xff]
    %v673 = vld [vmem:[#allocation4 + $0x3c8] sm:$0xff]
    %v674 = vld [vmem:[#allocation4 + $0x3d0] sm:$0xff]
    %v675 = vld [vmem:[#allocation4 + $0x3d8] sm:$0xff]
    %v676 = vld [vmem:[#allocation4 + $0x3e0] sm:$0xff]
    %v677 = vld [vmem:[#allocation4 + $0x3e8] sm:$0xff]
    %v678 = vld [vmem:[#allocation4 + $0x3f0] sm:$0xff]
    %v679 = vld [vmem:[#allocation4 + $0x3f8] sm:$0xff]
    %v680 = vld [vmem:[%s2] sm:$0x3]
    %v682 = vlaneseq
    %v683 = vshrl.u32 %v682, 7
    %v684 = vsub.s32 0, %v683
    %v685 = vrot.slane %v680, %v684
    %v686 = vlaneseq
    %v687 = vshrl.u32 %v686, 7
    %v688 = vsub.s32 1, %v687
    %v689 = vrot.slane %v680, %v688
    %v820 = vunpack.c.l.b16 %v552
    %v821 = vunpack.c.h.b16 %v552
    %v822 = vunpack.c.l.b16 %v553
    %v823 = vunpack.c.h.b16 %v553
    %v824 = vunpack.c.l.b16 %v554
    %v825 = vunpack.c.h.b16 %v554
    %v826 = vunpack.c.l.b16 %v555
    %v827 = vunpack.c.h.b16 %v555
    %v828 = vunpack.c.l.b16 %v556
    %v829 = vunpack.c.h.b16 %v556
    %v830 = vunpack.c.l.b16 %v557
    %v831 = vunpack.c.h.b16 %v557
    %v832 = vunpack.c.l.b16 %v558
    %v833 = vunpack.c.h.b16 %v558
    %v834 = vunpack.c.l.b16 %v559
    %v835 = vunpack.c.h.b16 %v559
    %v836 = vunpack.c.l.b16 %v560
    %v837 = vunpack.c.h.b16 %v560
    %v838 = vunpack.c.l.b16 %v561
    %v839 = vunpack.c.h.b16 %v561
    %v840 = vunpack.c.l.b16 %v562
    %v841 = vunpack.c.h.b16 %v562
    %v842 = vunpack.c.l.b16 %v563
    %v843 = vunpack.c.h.b16 %v563
    %v844 = vunpack.c.l.b16 %v564
    %v845 = vunpack.c.h.b16 %v564
    %v846 = vunpack.c.l.b16 %v565
    %v847 = vunpack.c.h.b16 %v565
    %v848 = vunpack.c.l.b16 %v566
    %v849 = vunpack.c.h.b16 %v566
    %v850 = vunpack.c.l.b16 %v567
    %v851 = vunpack.c.h.b16 %v567
    %v852 = vunpack.c.l.b16 %v568
    %v853 = vunpack.c.h.b16 %v568
    %v854 = vunpack.c.l.b16 %v569
    %v855 = vunpack.c.h.b16 %v569
    %v856 = vunpack.c.l.b16 %v570
    %v857 = vunpack.c.h.b16 %v570
    %v858 = vunpack.c.l.b16 %v571
    %v859 = vunpack.c.h.b16 %v571
    %v860 = vunpack.c.l.b16 %v572
    %v861 = vunpack.c.h.b16 %v572
    %v862 = vunpack.c.l.b16 %v573
    %v863 = vunpack.c.h.b16 %v573
    %v864 = vunpack.c.l.b16 %v574
    %v865 = vunpack.c.h.b16 %v574
    %v866 = vunpack.c.l.b16 %v575
    %v867 = vunpack.c.h.b16 %v575
    %v868 = vunpack.c.l.b16 %v576
    %v869 = vunpack.c.h.b16 %v576
    %v870 = vunpack.c.l.b16 %v577
    %v871 = vunpack.c.h.b16 %v577
    %v872 = vunpack.c.l.b16 %v578
    %v873 = vunpack.c.h.b16 %v578
    %v874 = vunpack.c.l.b16 %v579
    %v875 = vunpack.c.h.b16 %v579
    %v876 = vunpack.c.l.b16 %v580
    %v877 = vunpack.c.h.b16 %v580
    %v878 = vunpack.c.l.b16 %v581
    %v879 = vunpack.c.h.b16 %v581
    %v880 = vunpack.c.l.b16 %v582
    %v881 = vunpack.c.h.b16 %v582
    %v882 = vunpack.c.l.b16 %v583
    %v883 = vunpack.c.h.b16 %v583
    %v884 = vunpack.c.l.b16 %v584
    %v885 = vunpack.c.h.b16 %v584
    %v886 = vunpack.c.l.b16 %v585
    %v887 = vunpack.c.h.b16 %v585
    %v888 = vunpack.c.l.b16 %v586
    %v889 = vunpack.c.h.b16 %v586
    %v890 = vunpack.c.l.b16 %v587
    %v891 = vunpack.c.h.b16 %v587
    %v892 = vunpack.c.l.b16 %v588
    %v893 = vunpack.c.h.b16 %v588
    %v894 = vunpack.c.l.b16 %v589
    %v895 = vunpack.c.h.b16 %v589
    %v896 = vunpack.c.l.b16 %v590
    %v897 = vunpack.c.h.b16 %v590
    %v898 = vunpack.c.l.b16 %v591
    %v899 = vunpack.c.h.b16 %v591
    %v900 = vunpack.c.l.b16 %v592
    %v901 = vunpack.c.h.b16 %v592
    %v902 = vunpack.c.l.b16 %v593
    %v903 = vunpack.c.h.b16 %v593
    %v904 = vunpack.c.l.b16 %v594
    %v905 = vunpack.c.h.b16 %v594
    %v906 = vunpack.c.l.b16 %v595
    %v907 = vunpack.c.h.b16 %v595
    %v908 = vunpack.c.l.b16 %v596
    %v909 = vunpack.c.h.b16 %v596
    %v910 = vunpack.c.l.b16 %v597
    %v911 = vunpack.c.h.b16 %v597
    %v912 = vunpack.c.l.b16 %v598
    %v913 = vunpack.c.h.b16 %v598
    %v914 = vunpack.c.l.b16 %v599
    %v915 = vunpack.c.h.b16 %v599
    %v916 = vunpack.c.l.b16 %v600
    %v917 = vunpack.c.h.b16 %v600
    %v918 = vunpack.c.l.b16 %v601
    %v919 = vunpack.c.h.b16 %v601
    %v920 = vunpack.c.l.b16 %v602
    %v921 = vunpack.c.h.b16 %v602
    %v922 = vunpack.c.l.b16 %v603
    %v923 = vunpack.c.h.b16 %v603
    %v924 = vunpack.c.l.b16 %v604
    %v925 = vunpack.c.h.b16 %v604
    %v926 = vunpack.c.l.b16 %v605
    %v927 = vunpack.c.h.b16 %v605
    %v928 = vunpack.c.l.b16 %v606
    %v929 = vunpack.c.h.b16 %v606
    %v930 = vunpack.c.l.b16 %v607
    %v931 = vunpack.c.h.b16 %v607
    %v932 = vunpack.c.l.b16 %v608
    %v933 = vunpack.c.h.b16 %v608
    %v934 = vunpack.c.l.b16 %v609
    %v935 = vunpack.c.h.b16 %v609
    %v936 = vunpack.c.l.b16 %v610
    %v937 = vunpack.c.h.b16 %v610
    %v938 = vunpack.c.l.b16 %v611
    %v939 = vunpack.c.h.b16 %v611
    %v940 = vunpack.c.l.b16 %v612
    %v941 = vunpack.c.h.b16 %v612
    %v942 = vunpack.c.l.b16 %v613
    %v943 = vunpack.c.h.b16 %v613
    %v944 = vunpack.c.l.b16 %v614
    %v945 = vunpack.c.h.b16 %v614
    %v946 = vunpack.c.l.b16 %v615
    %v947 = vunpack.c.h.b16 %v615
    %v948 = vunpack.c.l.b16 %v616
    %v949 = vunpack.c.h.b16 %v616
    %v950 = vunpack.c.l.b16 %v617
    %v951 = vunpack.c.h.b16 %v617
    %v952 = vunpack.c.l.b16 %v618
    %v953 = vunpack.c.h.b16 %v618
    %v954 = vunpack.c.l.b16 %v619
    %v955 = vunpack.c.h.b16 %v619
    %v956 = vunpack.c.l.b16 %v620
    %v957 = vunpack.c.h.b16 %v620
    %v958 = vunpack.c.l.b16 %v621
    %v959 = vunpack.c.h.b16 %v621
    %v960 = vunpack.c.l.b16 %v622
    %v961 = vunpack.c.h.b16 %v622
    %v962 = vunpack.c.l.b16 %v623
    %v963 = vunpack.c.h.b16 %v623
    %v964 = vunpack.c.l.b16 %v624
    %v965 = vunpack.c.h.b16 %v624
    %v966 = vunpack.c.l.b16 %v625
    %v967 = vunpack.c.h.b16 %v625
    %v968 = vunpack.c.l.b16 %v626
    %v969 = vunpack.c.h.b16 %v626
    %v970 = vunpack.c.l.b16 %v627
    %v971 = vunpack.c.h.b16 %v627
    %v972 = vunpack.c.l.b16 %v628
    %v973 = vunpack.c.h.b16 %v628
    %v974 = vunpack.c.l.b16 %v629
    %v975 = vunpack.c.h.b16 %v629
    %v976 = vunpack.c.l.b16 %v630
    %v977 = vunpack.c.h.b16 %v630
    %v978 = vunpack.c.l.b16 %v631
    %v979 = vunpack.c.h.b16 %v631
    %v980 = vunpack.c.l.b16 %v632
    %v981 = vunpack.c.h.b16 %v632
    %v982 = vunpack.c.l.b16 %v633
    %v983 = vunpack.c.h.b16 %v633
    %v984 = vunpack.c.l.b16 %v634
    %v985 = vunpack.c.h.b16 %v634
    %v986 = vunpack.c.l.b16 %v635
    %v987 = vunpack.c.h.b16 %v635
    %v988 = vunpack.c.l.b16 %v636
    %v989 = vunpack.c.h.b16 %v636
    %v990 = vunpack.c.l.b16 %v637
    %v991 = vunpack.c.h.b16 %v637
    %v992 = vunpack.c.l.b16 %v638
    %v993 = vunpack.c.h.b16 %v638
    %v994 = vunpack.c.l.b16 %v639
    %v995 = vunpack.c.h.b16 %v639
    %v996 = vunpack.c.l.b16 %v640
    %v997 = vunpack.c.h.b16 %v640
    %v998 = vunpack.c.l.b16 %v641
    %v999 = vunpack.c.h.b16 %v641
    %v1000 = vunpack.c.l.b16 %v642
    %v1001 = vunpack.c.h.b16 %v642
    %v1002 = vunpack.c.l.b16 %v643
    %v1003 = vunpack.c.h.b16 %v643
    %v1004 = vunpack.c.l.b16 %v644
    %v1005 = vunpack.c.h.b16 %v644
    %v1006 = vunpack.c.l.b16 %v645
    %v1007 = vunpack.c.h.b16 %v645
    %v1008 = vunpack.c.l.b16 %v646
    %v1009 = vunpack.c.h.b16 %v646
    %v1010 = vunpack.c.l.b16 %v647
    %v1011 = vunpack.c.h.b16 %v647
    %v1012 = vunpack.c.l.b16 %v648
    %v1013 = vunpack.c.h.b16 %v648
    %v1014 = vunpack.c.l.b16 %v649
    %v1015 = vunpack.c.h.b16 %v649
    %v1016 = vunpack.c.l.b16 %v650
    %v1017 = vunpack.c.h.b16 %v650
    %v1018 = vunpack.c.l.b16 %v651
    %v1019 = vunpack.c.h.b16 %v651
    %v1020 = vunpack.c.l.b16 %v652
    %v1021 = vunpack.c.h.b16 %v652
    %v1022 = vunpack.c.l.b16 %v653
    %v1023 = vunpack.c.h.b16 %v653
    %v1024 = vunpack.c.l.b16 %v654
    %v1025 = vunpack.c.h.b16 %v654
    %v1026 = vunpack.c.l.b16 %v655
    %v1027 = vunpack.c.h.b16 %v655
    %v1028 = vunpack.c.l.b16 %v656
    %v1029 = vunpack.c.h.b16 %v656
    %v1030 = vunpack.c.l.b16 %v657
    %v1031 = vunpack.c.h.b16 %v657
    %v1032 = vunpack.c.l.b16 %v658
    %v1033 = vunpack.c.h.b16 %v658
    %v1034 = vunpack.c.l.b16 %v659
    %v1035 = vunpack.c.h.b16 %v659
    %v1036 = vunpack.c.l.b16 %v660
    %v1037 = vunpack.c.h.b16 %v660
    %v1038 = vunpack.c.l.b16 %v661
    %v1039 = vunpack.c.h.b16 %v661
    %v1040 = vunpack.c.l.b16 %v662
    %v1041 = vunpack.c.h.b16 %v662
    %v1042 = vunpack.c.l.b16 %v663
    %v1043 = vunpack.c.h.b16 %v663
    %v1044 = vunpack.c.l.b16 %v664
    %v1045 = vunpack.c.h.b16 %v664
    %v1046 = vunpack.c.l.b16 %v665
    %v1047 = vunpack.c.h.b16 %v665
    %v1048 = vunpack.c.l.b16 %v666
    %v1049 = vunpack.c.h.b16 %v666
    %v1050 = vunpack.c.l.b16 %v667
    %v1051 = vunpack.c.h.b16 %v667
    %v1052 = vunpack.c.l.b16 %v668
    %v1053 = vunpack.c.h.b16 %v668
    %v1054 = vunpack.c.l.b16 %v669
    %v1055 = vunpack.c.h.b16 %v669
    %v1056 = vunpack.c.l.b16 %v670
    %v1057 = vunpack.c.h.b16 %v670
    %v1058 = vunpack.c.l.b16 %v671
    %v1059 = vunpack.c.h.b16 %v671
    %v1060 = vunpack.c.l.b16 %v672
    %v1061 = vunpack.c.h.b16 %v672
    %v1062 = vunpack.c.l.b16 %v673
    %v1063 = vunpack.c.h.b16 %v673
    %v1064 = vunpack.c.l.b16 %v674
    %v1065 = vunpack.c.h.b16 %v674
    %v1066 = vunpack.c.l.b16 %v675
    %v1067 = vunpack.c.h.b16 %v675
    %v1068 = vunpack.c.l.b16 %v676
    %v1069 = vunpack.c.h.b16 %v676
    %v1070 = vunpack.c.l.b16 %v677
    %v1071 = vunpack.c.h.b16 %v677
    %v1072 = vunpack.c.l.b16 %v678
    %v1073 = vunpack.c.h.b16 %v678
    %v1074 = vunpack.c.l.b16 %v679
    %v1075 = vunpack.c.h.b16 %v679
    %v1076 = vpack.c.b16 %v822, %v820
    %v1077 = vpack.c.b16 %v823, %v821
    %v1078 = vpack.c.b16 %v826, %v824
    %v1079 = vpack.c.b16 %v827, %v825
    %v1080 = vpack.c.b16 %v830, %v828
    %v1081 = vpack.c.b16 %v831, %v829
    %v1082 = vpack.c.b16 %v834, %v832
    %v1083 = vpack.c.b16 %v835, %v833
    %v1084 = vpack.c.b16 %v838, %v836
    %v1085 = vpack.c.b16 %v839, %v837
    %v1086 = vpack.c.b16 %v842, %v840
    %v1087 = vpack.c.b16 %v843, %v841
    %v1088 = vpack.c.b16 %v846, %v844
    %v1089 = vpack.c.b16 %v847, %v845
    %v1090 = vpack.c.b16 %v850, %v848
    %v1091 = vpack.c.b16 %v851, %v849
    %v1092 = vpack.c.b16 %v854, %v852
    %v1093 = vpack.c.b16 %v855, %v853
    %v1094 = vpack.c.b16 %v858, %v856
    %v1095 = vpack.c.b16 %v859, %v857
    %v1096 = vpack.c.b16 %v862, %v860
    %v1097 = vpack.c.b16 %v863, %v861
    %v1098 = vpack.c.b16 %v866, %v864
    %v1099 = vpack.c.b16 %v867, %v865
    %v1100 = vpack.c.b16 %v870, %v868
    %v1101 = vpack.c.b16 %v871, %v869
    %v1102 = vpack.c.b16 %v874, %v872
    %v1103 = vpack.c.b16 %v875, %v873
    %v1104 = vpack.c.b16 %v878, %v876
    %v1105 = vpack.c.b16 %v879, %v877
    %v1106 = vpack.c.b16 %v882, %v880
    %v1107 = vpack.c.b16 %v883, %v881
    %v1108 = vpack.c.b16 %v886, %v884
    %v1109 = vpack.c.b16 %v887, %v885
    %v1110 = vpack.c.b16 %v890, %v888
    %v1111 = vpack.c.b16 %v891, %v889
    %v1112 = vpack.c.b16 %v894, %v892
    %v1113 = vpack.c.b16 %v895, %v893
    %v1114 = vpack.c.b16 %v898, %v896
    %v1115 = vpack.c.b16 %v899, %v897
    %v1116 = vpack.c.b16 %v902, %v900
    %v1117 = vpack.c.b16 %v903, %v901
    %v1118 = vpack.c.b16 %v906, %v904
    %v1119 = vpack.c.b16 %v907, %v905
    %v1120 = vpack.c.b16 %v910, %v908
    %v1121 = vpack.c.b16 %v911, %v909
    %v1122 = vpack.c.b16 %v914, %v912
    %v1123 = vpack.c.b16 %v915, %v913
    %v1124 = vpack.c.b16 %v918, %v916
    %v1125 = vpack.c.b16 %v919, %v917
    %v1126 = vpack.c.b16 %v922, %v920
    %v1127 = vpack.c.b16 %v923, %v921
    %v1128 = vpack.c.b16 %v926, %v924
    %v1129 = vpack.c.b16 %v927, %v925
    %v1130 = vpack.c.b16 %v930, %v928
    %v1131 = vpack.c.b16 %v931, %v929
    %v1132 = vpack.c.b16 %v934, %v932
    %v1133 = vpack.c.b16 %v935, %v933
    %v1134 = vpack.c.b16 %v938, %v936
    %v1135 = vpack.c.b16 %v939, %v937
    %v1136 = vpack.c.b16 %v942, %v940
    %v1137 = vpack.c.b16 %v943, %v941
    %v1138 = vpack.c.b16 %v946, %v944
    %v1139 = vpack.c.b16 %v947, %v945
    %v1140 = vpack.c.b16 %v950, %v948
    %v1141 = vpack.c.b16 %v951, %v949
    %v1142 = vpack.c.b16 %v954, %v952
    %v1143 = vpack.c.b16 %v955, %v953
    %v1144 = vpack.c.b16 %v958, %v956
    %v1145 = vpack.c.b16 %v959, %v957
    %v1146 = vpack.c.b16 %v962, %v960
    %v1147 = vpack.c.b16 %v963, %v961
    %v1148 = vpack.c.b16 %v966, %v964
    %v1149 = vpack.c.b16 %v967, %v965
    %v1150 = vpack.c.b16 %v970, %v968
    %v1151 = vpack.c.b16 %v971, %v969
    %v1152 = vpack.c.b16 %v974, %v972
    %v1153 = vpack.c.b16 %v975, %v973
    %v1154 = vpack.c.b16 %v978, %v976
    %v1155 = vpack.c.b16 %v979, %v977
    %v1156 = vpack.c.b16 %v982, %v980
    %v1157 = vpack.c.b16 %v983, %v981
    %v1158 = vpack.c.b16 %v986, %v984
    %v1159 = vpack.c.b16 %v987, %v985
    %v1160 = vpack.c.b16 %v990, %v988
    %v1161 = vpack.c.b16 %v991, %v989
    %v1162 = vpack.c.b16 %v994, %v992
    %v1163 = vpack.c.b16 %v995, %v993
    %v1164 = vpack.c.b16 %v998, %v996
    %v1165 = vpack.c.b16 %v999, %v997
    %v1166 = vpack.c.b16 %v1002, %v1000
    %v1167 = vpack.c.b16 %v1003, %v1001
    %v1168 = vpack.c.b16 %v1006, %v1004
    %v1169 = vpack.c.b16 %v1007, %v1005
    %v1170 = vpack.c.b16 %v1010, %v1008
    %v1171 = vpack.c.b16 %v1011, %v1009
    %v1172 = vpack.c.b16 %v1014, %v1012
    %v1173 = vpack.c.b16 %v1015, %v1013
    %v1174 = vpack.c.b16 %v1018, %v1016
    %v1175 = vpack.c.b16 %v1019, %v1017
    %v1176 = vpack.c.b16 %v1022, %v1020
    %v1177 = vpack.c.b16 %v1023, %v1021
    %v1178 = vpack.c.b16 %v1026, %v1024
    %v1179 = vpack.c.b16 %v1027, %v1025
    %v1180 = vpack.c.b16 %v1030, %v1028
    %v1181 = vpack.c.b16 %v1031, %v1029
    %v1182 = vpack.c.b16 %v1034, %v1032
    %v1183 = vpack.c.b16 %v1035, %v1033
    %v1184 = vpack.c.b16 %v1038, %v1036
    %v1185 = vpack.c.b16 %v1039, %v1037
    %v1186 = vpack.c.b16 %v1042, %v1040
    %v1187 = vpack.c.b16 %v1043, %v1041
    %v1188 = vpack.c.b16 %v1046, %v1044
    %v1189 = vpack.c.b16 %v1047, %v1045
    %v1190 = vpack.c.b16 %v1050, %v1048
    %v1191 = vpack.c.b16 %v1051, %v1049
    %v1192 = vpack.c.b16 %v1054, %v1052
    %v1193 = vpack.c.b16 %v1055, %v1053
    %v1194 = vpack.c.b16 %v1058, %v1056
    %v1195 = vpack.c.b16 %v1059, %v1057
    %v1196 = vpack.c.b16 %v1062, %v1060
    %v1197 = vpack.c.b16 %v1063, %v1061
    %v1198 = vpack.c.b16 %v1066, %v1064
    %v1199 = vpack.c.b16 %v1067, %v1065
    %v1200 = vpack.c.b16 %v1070, %v1068
    %v1201 = vpack.c.b16 %v1071, %v1069
    %v1202 = vpack.c.b16 %v1074, %v1072
    %v1203 = vpack.c.b16 %v1075, %v1073
    %1332 = vmatprep.subr.bf16.mxu0 %v1077
    %1333 = vmatpush1.bf16.msra.mxu0 %v1076
    %1334 = vmatprep.subr.bf16.mxu0 %v1079
    %1335 = vmatpush1.bf16.msra.mxu0 %v1078
    %1336 = vmatprep.subr.bf16.mxu0 %v1081
    %1337 = vmatpush1.bf16.msra.mxu0 %v1080
    %1338 = vmatprep.subr.bf16.mxu0 %v1083
    %1339 = vmatpush1.bf16.msra.mxu0 %v1082
    %1340 = vmatprep.subr.bf16.mxu0 %v1085
    %1341 = vmatpush1.bf16.msra.mxu0 %v1084
    %1342 = vmatprep.subr.bf16.mxu0 %v1087
    %1343 = vmatpush1.bf16.msra.mxu0 %v1086
    %1344 = vmatprep.subr.bf16.mxu0 %v1089
    %1345 = vmatpush1.bf16.msra.mxu0 %v1088
    %1346 = vmatprep.subr.bf16.mxu0 %v1091
    %1347 = vmatpush1.bf16.msra.mxu0 %v1090
    %1348 = vmatprep.subr.bf16.mxu0 %v1093
    %1349 = vmatpush1.bf16.msra.mxu0 %v1092
    %1350 = vmatprep.subr.bf16.mxu0 %v1095
    %1351 = vmatpush1.bf16.msra.mxu0 %v1094
    %1352 = vmatprep.subr.bf16.mxu0 %v1097
    %1353 = vmatpush1.bf16.msra.mxu0 %v1096
    %1354 = vmatprep.subr.bf16.mxu0 %v1099
    %1355 = vmatpush1.bf16.msra.mxu0 %v1098
    %1356 = vmatprep.subr.bf16.mxu0 %v1101
    %1357 = vmatpush1.bf16.msra.mxu0 %v1100
    %1358 = vmatprep.subr.bf16.mxu0 %v1103
    %1359 = vmatpush1.bf16.msra.mxu0 %v1102
    %1360 = vmatprep.subr.bf16.mxu0 %v1105
    %1361 = vmatpush1.bf16.msra.mxu0 %v1104
    %1362 = vmatprep.subr.bf16.mxu0 %v1107
    %1363 = vmatpush1.bf16.msra.mxu0 %v1106
    %1364 = vmatprep.mubr.bf16.mxu0 %v489
    %1365 = vmatmul.mubr.bf16.gmra.mrb[0].mxu0 %v488
    %v1366 = vpop.f32.mrb[0].mxu0
    %v1367 = vadd.f32 %v685, %v1366
    %v1368 = vpop.f32.mrb[0].mxu0
    %v1369 = vadd.f32 %v689, %v1368
    %v1370 = vpop.f32.mrb[0].mxu0
    %v1371 = vadd.f32 %v685, %v1370
    %v1372 = vpop.f32.mrb[0].mxu0
    %v1373 = vadd.f32 %v689, %v1372
    %1374 = vmatprep.mubr.bf16.mxu0 %v497
    %1375 = vmatmul.mubr.bf16.gmra.mrb[0].mxu0 %v496
    %v1376 = vpop.f32.mrb[0].mxu0
    %v1377 = vadd.f32 %v685, %v1376
    %v1378 = vpop.f32.mrb[0].mxu0
    %v1379 = vadd.f32 %v689, %v1378
    %v1380 = vpop.f32.mrb[0].mxu0
    %v1381 = vadd.f32 %v685, %v1380
    %v1382 = vpop.f32.mrb[0].mxu0
    %v1383 = vadd.f32 %v689, %v1382
    %1384 = vmatprep.mubr.bf16.mxu0 %v505
    %1385 = vmatmul.mubr.bf16.gmra.mrb[0].mxu0 %v504
    %v1386 = vpop.f32.mrb[0].mxu0
    %v1387 = vadd.f32 %v685, %v1386
    %v1388 = vpop.f32.mrb[0].mxu0
    %v1389 = vadd.f32 %v689, %v1388
    %v1390 = vpop.f32.mrb[0].mxu0
    %v1391 = vadd.f32 %v685, %v1390
    %v1392 = vpop.f32.mrb[0].mxu0
    %v1393 = vadd.f32 %v689, %v1392
    %1394 = vmatprep.mubr.bf16.mxu0 %v513
    %1395 = vmatmul.mubr.bf16.gmra.mrb[0].mxu0 %v512
    %v1396 = vpop.f32.mrb[0].mxu0
    %v1397 = vadd.f32 %v685, %v1396
    %v1398 = vpop.f32.mrb[0].mxu0
    %v1399 = vadd.f32 %v689, %v1398
    %v1400 = vpop.f32.mrb[0].mxu0
    %v1401 = vadd.f32 %v685, %v1400
    %v1402 = vpop.f32.mrb[0].mxu0
    %v1403 = vadd.f32 %v689, %v1402
    %1404 = vmatprep.mubr.bf16.mxu0 %v521
    %1405 = vmatmul.mubr.bf16.gmra.mrb[0].mxu0 %v520
    %v1406 = vpop.f32.mrb[0].mxu0
    %v1407 = vadd.f32 %v685, %v1406
    %v1408 = vpop.f32.mrb[0].mxu0
    %v1409 = vadd.f32 %v689, %v1408
    %v1410 = vpop.f32.mrb[0].mxu0
    %v1411 = vadd.f32 %v685, %v1410
    %v1412 = vpop.f32.mrb[0].mxu0
    %v1413 = vadd.f32 %v689, %v1412
    %1414 = vmatprep.mubr.bf16.mxu0 %v529
    %1415 = vmatmul.mubr.bf16.gmra.mrb[0].mxu0 %v528
    %v1416 = vpop.f32.mrb[0].mxu0
    %v1417 = vadd.f32 %v685, %v1416
    %v1418 = vpop.f32.mrb[0].mxu0
    %v1419 = vadd.f32 %v689, %v1418
    %v1420 = vpop.f32.mrb[0].mxu0
    %v1421 = vadd.f32 %v685, %v1420
    %v1422 = vpop.f32.mrb[0].mxu0
    %v1423 = vadd.f32 %v689, %v1422
    %1424 = vmatprep.mubr.bf16.mxu0 %v537
    %1425 = vmatmul.mubr.bf16.gmra.mrb[0].mxu0 %v536
    %v1426 = vpop.f32.mrb[0].mxu0
    %v1427 = vadd.f32 %v685, %v1426
    %v1428 = vpop.f32.mrb[0].mxu0
    %v1429 = vadd.f32 %v689, %v1428
    %v1430 = vpop.f32.mrb[0].mxu0
    %v1431 = vadd.f32 %v685, %v1430
    %v1432 = vpop.f32.mrb[0].mxu0
    %v1433 = vadd.f32 %v689, %v1432
    %1434 = vmatprep.mubr.bf16.mxu0 %v545
    %1435 = vmatmul.mubr.bf16.gmra.mrb[0].mxu0 %v544
    %v1436 = vpop.f32.mrb[0].mxu0
    %v1437 = vadd.f32 %v685, %v1436
    %v1438 = vpop.f32.mrb[0].mxu0
    %v1439 = vadd.f32 %v689, %v1438
    %v1440 = vpop.f32.mrb[0].mxu0
    %v1441 = vadd.f32 %v685, %v1440
    %v1442 = vpop.f32.mrb[0].mxu0
    %v1443 = vadd.f32 %v689, %v1442
    %1444 = vdwg.mxu0
    %1445 = vmatprep.subr.bf16.mxu0 %v1109
    %1446 = vmatpush1.bf16.msra.mxu0 %v1108
    %1447 = vmatprep.subr.bf16.mxu0 %v1111
    %1448 = vmatpush1.bf16.msra.mxu0 %v1110
    %1449 = vmatprep.subr.bf16.mxu0 %v1113
    %1450 = vmatpush1.bf16.msra.mxu0 %v1112
    %1451 = vmatprep.subr.bf16.mxu0 %v1115
    %1452 = vmatpush1.bf16.msra.mxu0 %v1114
    %1453 = vmatprep.subr.bf16.mxu0 %v1117
    %1454 = vmatpush1.bf16.msra.mxu0 %v1116
    %1455 = vmatprep.subr.bf16.mxu0 %v1119
    %1456 = vmatpush1.bf16.msra.mxu0 %v1118
    %1457 = vmatprep.subr.bf16.mxu0 %v1121
    %1458 = vmatpush1.bf16.msra.mxu0 %v1120
    %1459 = vmatprep.subr.bf16.mxu0 %v1123
    %1460 = vmatpush1.bf16.msra.mxu0 %v1122
    %1461 = vmatprep.subr.bf16.mxu0 %v1125
    %1462 = vmatpush1.bf16.msra.mxu0 %v1124
    %1463 = vmatprep.subr.bf16.mxu0 %v1127
    %1464 = vmatpush1.bf16.msra.mxu0 %v1126
    %1465 = vmatprep.subr.bf16.mxu0 %v1129
    %1466 = vmatpush1.bf16.msra.mxu0 %v1128
    %1467 = vmatprep.subr.bf16.mxu0 %v1131
    %1468 = vmatpush1.bf16.msra.mxu0 %v1130
    %1469 = vmatprep.subr.bf16.mxu0 %v1133
    %1470 = vmatpush1.bf16.msra.mxu0 %v1132
    %1471 = vmatprep.subr.bf16.mxu0 %v1135
    %1472 = vmatpush1.bf16.msra.mxu0 %v1134
    %1473 = vmatprep.subr.bf16.mxu0 %v1137
    %1474 = vmatpush1.bf16.msra.mxu0 %v1136
    %1475 = vmatprep.subr.bf16.mxu0 %v1139
    %1476 = vmatpush1.bf16.msra.mxu0 %v1138
    %1477 = vmatprep.mubr.bf16.mxu0 %v491
    %1478 = vmatmul.mubr.bf16.gmra.mrb[0].mxu0 %v490
    %v1479 = vpop.f32.mrb[0].mxu0
    %v1480 = vadd.f32 %v1367, %v1479
    %v1481 = vpop.f32.mrb[0].mxu0
    %v1482 = vadd.f32 %v1369, %v1481
    %v1483 = vpop.f32.mrb[0].mxu0
    %v1484 = vadd.f32 %v1371, %v1483
    %v1485 = vpop.f32.mrb[0].mxu0
    %v1486 = vadd.f32 %v1373, %v1485
    %1487 = vmatprep.mubr.bf16.mxu0 %v499
    %1488 = vmatmul.mubr.bf16.gmra.mrb[0].mxu0 %v498
    %v1489 = vpop.f32.mrb[0].mxu0
    %v1490 = vadd.f32 %v1377, %v1489
    %v1491 = vpop.f32.mrb[0].mxu0
    %v1492 = vadd.f32 %v1379, %v1491
    %v1493 = vpop.f32.mrb[0].mxu0
    %v1494 = vadd.f32 %v1381, %v1493
    %v1495 = vpop.f32.mrb[0].mxu0
    %v1496 = vadd.f32 %v1383, %v1495
    %1497 = vmatprep.mubr.bf16.mxu0 %v507
    %1498 = vmatmul.mubr.bf16.gmra.mrb[0].mxu0 %v506
    %v1499 = vpop.f32.mrb[0].mxu0
    %v1500 = vadd.f32 %v1387, %v1499
    %v1501 = vpop.f32.mrb[0].mxu0
    %v1502 = vadd.f32 %v1389, %v1501
    %v1503 = vpop.f32.mrb[0].mxu0
    %v1504 = vadd.f32 %v1391, %v1503
    %v1505 = vpop.f32.mrb[0].mxu0
    %v1506 = vadd.f32 %v1393, %v1505
    %1507 = vmatprep.mubr.bf16.mxu0 %v515
    %1508 = vmatmul.mubr.bf16.gmra.mrb[0].mxu0 %v514
    %v1509 = vpop.f32.mrb[0].mxu0
    %v1510 = vadd.f32 %v1397, %v1509
    %v1511 = vpop.f32.mrb[0].mxu0
    %v1512 = vadd.f32 %v1399, %v1511
    %v1513 = vpop.f32.mrb[0].mxu0
    %v1514 = vadd.f32 %v1401, %v1513
    %v1515 = vpop.f32.mrb[0].mxu0
    %v1516 = vadd.f32 %v1403, %v1515
    %1517 = vmatprep.mubr.bf16.mxu0 %v523
    %1518 = vmatmul.mubr.bf16.gmra.mrb[0].mxu0 %v522
    %v1519 = vpop.f32.mrb[0].mxu0
    %v1520 = vadd.f32 %v1407, %v1519
    %v1521 = vpop.f32.mrb[0].mxu0
    %v1522 = vadd.f32 %v1409, %v1521
    %v1523 = vpop.f32.mrb[0].mxu0
    %v1524 = vadd.f32 %v1411, %v1523
    %v1525 = vpop.f32.mrb[0].mxu0
    %v1526 = vadd.f32 %v1413, %v1525
    %1527 = vmatprep.mubr.bf16.mxu0 %v531
    %1528 = vmatmul.mubr.bf16.gmra.mrb[0].mxu0 %v530
    %v1529 = vpop.f32.mrb[0].mxu0
    %v1530 = vadd.f32 %v1417, %v1529
    %v1531 = vpop.f32.mrb[0].mxu0
    %v1532 = vadd.f32 %v1419, %v1531
    %v1533 = vpop.f32.mrb[0].mxu0
    %v1534 = vadd.f32 %v1421, %v1533
    %v1535 = vpop.f32.mrb[0].mxu0
    %v1536 = vadd.f32 %v1423, %v1535
    %1537 = vmatprep.mubr.bf16.mxu0 %v539
    %1538 = vmatmul.mubr.bf16.gmra.mrb[0].mxu0 %v538
    %v1539 = vpop.f32.mrb[0].mxu0
    %v1540 = vadd.f32 %v1427, %v1539
    %v1541 = vpop.f32.mrb[0].mxu0
    %v1542 = vadd.f32 %v1429, %v1541
    %v1543 = vpop.f32.mrb[0].mxu0
    %v1544 = vadd.f32 %v1431, %v1543
    %v1545 = vpop.f32.mrb[0].mxu0
    %v1546 = vadd.f32 %v1433, %v1545
    %1547 = vmatprep.mubr.bf16.mxu0 %v547
    %1548 = vmatmul.mubr.bf16.gmra.mrb[0].mxu0 %v546
    %v1549 = vpop.f32.mrb[0].mxu0
    %v1550 = vadd.f32 %v1437, %v1549
    %v1551 = vpop.f32.mrb[0].mxu0
    %v1552 = vadd.f32 %v1439, %v1551
    %v1553 = vpop.f32.mrb[0].mxu0
    %v1554 = vadd.f32 %v1441, %v1553
    %v1555 = vpop.f32.mrb[0].mxu0
    %v1556 = vadd.f32 %v1443, %v1555
    %1557 = vdwg.mxu0
    %1558 = vmatprep.subr.bf16.mxu0 %v1141
    %1559 = vmatpush1.bf16.msra.mxu0 %v1140
    %1560 = vmatprep.subr.bf16.mxu0 %v1143
    %1561 = vmatpush1.bf16.msra.mxu0 %v1142
    %1562 = vmatprep.subr.bf16.mxu0 %v1145
    %1563 = vmatpush1.bf16.msra.mxu0 %v1144
    %1564 = vmatprep.subr.bf16.mxu0 %v1147
    %1565 = vmatpush1.bf16.msra.mxu0 %v1146
    %1566 = vmatprep.subr.bf16.mxu0 %v1149
    %1567 = vmatpush1.bf16.msra.mxu0 %v1148
    %1568 = vmatprep.subr.bf16.mxu0 %v1151
    %1569 = vmatpush1.bf16.msra.mxu0 %v1150
    %1570 = vmatprep.subr.bf16.mxu0 %v1153
    %1571 = vmatpush1.bf16.msra.mxu0 %v1152
    %1572 = vmatprep.subr.bf16.mxu0 %v1155
    %1573 = vmatpush1.bf16.msra.mxu0 %v1154
    %1574 = vmatprep.subr.bf16.mxu0 %v1157
    %1575 = vmatpush1.bf16.msra.mxu0 %v1156
    %1576 = vmatprep.subr.bf16.mxu0 %v1159
    %1577 = vmatpush1.bf16.msra.mxu0 %v1158
    %1578 = vmatprep.subr.bf16.mxu0 %v1161
    %1579 = vmatpush1.bf16.msra.mxu0 %v1160
    %1580 = vmatprep.subr.bf16.mxu0 %v1163
    %1581 = vmatpush1.bf16.msra.mxu0 %v1162
    %1582 = vmatprep.subr.bf16.mxu0 %v1165
    %1583 = vmatpush1.bf16.msra.mxu0 %v1164
    %1584 = vmatprep.subr.bf16.mxu0 %v1167
    %1585 = vmatpush1.bf16.msra.mxu0 %v1166
    %1586 = vmatprep.subr.bf16.mxu0 %v1169
    %1587 = vmatpush1.bf16.msra.mxu0 %v1168
    %1588 = vmatprep.subr.bf16.mxu0 %v1171
    %1589 = vmatpush1.bf16.msra.mxu0 %v1170
    %1590 = vmatprep.mubr.bf16.mxu0 %v493
    %1591 = vmatmul.mubr.bf16.gmra.mrb[0].mxu0 %v492
    %v1592 = vpop.f32.mrb[0].mxu0
    %v1593 = vadd.f32 %v1480, %v1592
    %v1594 = vpop.f32.mrb[0].mxu0
    %v1595 = vadd.f32 %v1482, %v1594
    %v1596 = vpop.f32.mrb[0].mxu0
    %v1597 = vadd.f32 %v1484, %v1596
    %v1598 = vpop.f32.mrb[0].mxu0
    %v1599 = vadd.f32 %v1486, %v1598
    %1600 = vmatprep.mubr.bf16.mxu0 %v501
    %1601 = vmatmul.mubr.bf16.gmra.mrb[0].mxu0 %v500
    %v1602 = vpop.f32.mrb[0].mxu0
    %v1603 = vadd.f32 %v1490, %v1602
    %v1604 = vpop.f32.mrb[0].mxu0
    %v1605 = vadd.f32 %v1492, %v1604
    %v1606 = vpop.f32.mrb[0].mxu0
    %v1607 = vadd.f32 %v1494, %v1606
    %v1608 = vpop.f32.mrb[0].mxu0
    %v1609 = vadd.f32 %v1496, %v1608
    %1610 = vmatprep.mubr.bf16.mxu0 %v509
    %1611 = vmatmul.mubr.bf16.gmra.mrb[0].mxu0 %v508
    %v1612 = vpop.f32.mrb[0].mxu0
    %v1613 = vadd.f32 %v1500, %v1612
    %v1614 = vpop.f32.mrb[0].mxu0
    %v1615 = vadd.f32 %v1502, %v1614
    %v1616 = vpop.f32.mrb[0].mxu0
    %v1617 = vadd.f32 %v1504, %v1616
    %v1618 = vpop.f32.mrb[0].mxu0
    %v1619 = vadd.f32 %v1506, %v1618
    %1620 = vmatprep.mubr.bf16.mxu0 %v517
    %1621 = vmatmul.mubr.bf16.gmra.mrb[0].mxu0 %v516
    %v1622 = vpop.f32.mrb[0].mxu0
    %v1623 = vadd.f32 %v1510, %v1622
    %v1624 = vpop.f32.mrb[0].mxu0
    %v1625 = vadd.f32 %v1512, %v1624
    %v1626 = vpop.f32.mrb[0].mxu0
    %v1627 = vadd.f32 %v1514, %v1626
    %v1628 = vpop.f32.mrb[0].mxu0
    %v1629 = vadd.f32 %v1516, %v1628
    %1630 = vmatprep.mubr.bf16.mxu0 %v525
    %1631 = vmatmul.mubr.bf16.gmra.mrb[0].mxu0 %v524
    %v1632 = vpop.f32.mrb[0].mxu0
    %v1633 = vadd.f32 %v1520, %v1632
    %v1634 = vpop.f32.mrb[0].mxu0
    %v1635 = vadd.f32 %v1522, %v1634
    %v1636 = vpop.f32.mrb[0].mxu0
    %v1637 = vadd.f32 %v1524, %v1636
    %v1638 = vpop.f32.mrb[0].mxu0
    %v1639 = vadd.f32 %v1526, %v1638
    %1640 = vmatprep.mubr.bf16.mxu0 %v533
    %1641 = vmatmul.mubr.bf16.gmra.mrb[0].mxu0 %v532
    %v1642 = vpop.f32.mrb[0].mxu0
    %v1643 = vadd.f32 %v1530, %v1642
    %v1644 = vpop.f32.mrb[0].mxu0
    %v1645 = vadd.f32 %v1532, %v1644
    %v1646 = vpop.f32.mrb[0].mxu0
    %v1647 = vadd.f32 %v1534, %v1646
    %v1648 = vpop.f32.mrb[0].mxu0
    %v1649 = vadd.f32 %v1536, %v1648
    %1650 = vmatprep.mubr.bf16.mxu0 %v541
    %1651 = vmatmul.mubr.bf16.gmra.mrb[0].mxu0 %v540
    %v1652 = vpop.f32.mrb[0].mxu0
    %v1653 = vadd.f32 %v1540, %v1652
    %v1654 = vpop.f32.mrb[0].mxu0
    %v1655 = vadd.f32 %v1542, %v1654
    %v1656 = vpop.f32.mrb[0].mxu0
    %v1657 = vadd.f32 %v1544, %v1656
    %v1658 = vpop.f32.mrb[0].mxu0
    %v1659 = vadd.f32 %v1546, %v1658
    %1660 = vmatprep.mubr.bf16.mxu0 %v549
    %1661 = vmatmul.mubr.bf16.gmra.mrb[0].mxu0 %v548
    %v1662 = vpop.f32.mrb[0].mxu0
    %v1663 = vadd.f32 %v1550, %v1662
    %v1664 = vpop.f32.mrb[0].mxu0
    %v1665 = vadd.f32 %v1552, %v1664
    %v1666 = vpop.f32.mrb[0].mxu0
    %v1667 = vadd.f32 %v1554, %v1666
    %v1668 = vpop.f32.mrb[0].mxu0
    %v1669 = vadd.f32 %v1556, %v1668
    %1670 = vdwg.mxu0
    %1671 = vmatprep.subr.bf16.mxu0 %v1173
    %1672 = vmatpush1.bf16.msra.mxu0 %v1172
    %1673 = vmatprep.subr.bf16.mxu0 %v1175
    %1674 = vmatpush1.bf16.msra.mxu0 %v1174
    %1675 = vmatprep.subr.bf16.mxu0 %v1177
    %1676 = vmatpush1.bf16.msra.mxu0 %v1176
    %1677 = vmatprep.subr.bf16.mxu0 %v1179
    %1678 = vmatpush1.bf16.msra.mxu0 %v1178
    %1679 = vmatprep.subr.bf16.mxu0 %v1181
    %1680 = vmatpush1.bf16.msra.mxu0 %v1180
    %1681 = vmatprep.subr.bf16.mxu0 %v1183
    %1682 = vmatpush1.bf16.msra.mxu0 %v1182
    %1683 = vmatprep.subr.bf16.mxu0 %v1185
    %1684 = vmatpush1.bf16.msra.mxu0 %v1184
    %1685 = vmatprep.subr.bf16.mxu0 %v1187
    %1686 = vmatpush1.bf16.msra.mxu0 %v1186
    %1687 = vmatprep.subr.bf16.mxu0 %v1189
    %1688 = vmatpush1.bf16.msra.mxu0 %v1188
    %1689 = vmatprep.subr.bf16.mxu0 %v1191
    %1690 = vmatpush1.bf16.msra.mxu0 %v1190
    %1691 = vmatprep.subr.bf16.mxu0 %v1193
    %1692 = vmatpush1.bf16.msra.mxu0 %v1192
    %1693 = vmatprep.subr.bf16.mxu0 %v1195
    %1694 = vmatpush1.bf16.msra.mxu0 %v1194
    %1695 = vmatprep.subr.bf16.mxu0 %v1197
    %1696 = vmatpush1.bf16.msra.mxu0 %v1196
    %1697 = vmatprep.subr.bf16.mxu0 %v1199
    %1698 = vmatpush1.bf16.msra.mxu0 %v1198
    %1699 = vmatprep.subr.bf16.mxu0 %v1201
    %1700 = vmatpush1.bf16.msra.mxu0 %v1200
    %1701 = vmatprep.subr.bf16.mxu0 %v1203
    %1702 = vmatpush1.bf16.msra.mxu0 %v1202
    %1703 = vmatprep.mubr.bf16.mxu0 %v495
    %1704 = vmatmul.mubr.bf16.gmra.mrb[0].mxu0 %v494
    %v1705 = vpop.f32.mrb[0].mxu0
    %v1706 = vadd.f32 %v1593, %v1705
    %v1707 = vpop.f32.mrb[0].mxu0
    %v1708 = vadd.f32 %v1595, %v1707
    %v1709 = vpop.f32.mrb[0].mxu0
    %v1710 = vadd.f32 %v1597, %v1709
    %v1711 = vpop.f32.mrb[0].mxu0
    %v1712 = vadd.f32 %v1599, %v1711
    %1713 = vmatprep.mubr.bf16.mxu0 %v503
    %1714 = vmatmul.mubr.bf16.gmra.mrb[0].mxu0 %v502
    %v1715 = vpop.f32.mrb[0].mxu0
    %v1716 = vadd.f32 %v1603, %v1715
    %v1717 = vpop.f32.mrb[0].mxu0
    %v1718 = vadd.f32 %v1605, %v1717
    %v1719 = vpop.f32.mrb[0].mxu0
    %v1720 = vadd.f32 %v1607, %v1719
    %v1721 = vpop.f32.mrb[0].mxu0
    %v1722 = vadd.f32 %v1609, %v1721
    %1723 = vmatprep.mubr.bf16.mxu0 %v511
    %1724 = vmatmul.mubr.bf16.gmra.mrb[0].mxu0 %v510
    %v1725 = vpop.f32.mrb[0].mxu0
    %v1726 = vadd.f32 %v1613, %v1725
    %v1727 = vpop.f32.mrb[0].mxu0
    %v1728 = vadd.f32 %v1615, %v1727
    %v1729 = vpop.f32.mrb[0].mxu0
    %v1730 = vadd.f32 %v1617, %v1729
    %v1731 = vpop.f32.mrb[0].mxu0
    %v1732 = vadd.f32 %v1619, %v1731
    %1733 = vmatprep.mubr.bf16.mxu0 %v519
    %1734 = vmatmul.mubr.bf16.gmra.mrb[0].mxu0 %v518
    %v1735 = vpop.f32.mrb[0].mxu0
    %v1736 = vadd.f32 %v1623, %v1735
    %v1737 = vpop.f32.mrb[0].mxu0
    %v1738 = vadd.f32 %v1625, %v1737
    %v1739 = vpop.f32.mrb[0].mxu0
    %v1740 = vadd.f32 %v1627, %v1739
    %v1741 = vpop.f32.mrb[0].mxu0
    %v1742 = vadd.f32 %v1629, %v1741
    %1743 = vmatprep.mubr.bf16.mxu0 %v527
    %1744 = vmatmul.mubr.bf16.gmra.mrb[0].mxu0 %v526
    %v1745 = vpop.f32.mrb[0].mxu0
    %v1746 = vadd.f32 %v1633, %v1745
    %v1747 = vpop.f32.mrb[0].mxu0
    %v1748 = vadd.f32 %v1635, %v1747
    %v1749 = vpop.f32.mrb[0].mxu0
    %v1750 = vadd.f32 %v1637, %v1749
    %v1751 = vpop.f32.mrb[0].mxu0
    %v1752 = vadd.f32 %v1639, %v1751
    %1753 = vmatprep.mubr.bf16.mxu0 %v535
    %1754 = vmatmul.mubr.bf16.gmra.mrb[0].mxu0 %v534
    %v1755 = vpop.f32.mrb[0].mxu0
    %v1756 = vadd.f32 %v1643, %v1755
    %v1757 = vpop.f32.mrb[0].mxu0
    %v1758 = vadd.f32 %v1645, %v1757
    %v1759 = vpop.f32.mrb[0].mxu0
    %v1760 = vadd.f32 %v1647, %v1759
    %v1761 = vpop.f32.mrb[0].mxu0
    %v1762 = vadd.f32 %v1649, %v1761
    %1763 = vmatprep.mubr.bf16.mxu0 %v543
    %1764 = vmatmul.mubr.bf16.gmra.mrb[0].mxu0 %v542
    %v1765 = vpop.f32.mrb[0].mxu0
    %v1766 = vadd.f32 %v1653, %v1765
    %v1767 = vpop.f32.mrb[0].mxu0
    %v1768 = vadd.f32 %v1655, %v1767
    %v1769 = vpop.f32.mrb[0].mxu0
    %v1770 = vadd.f32 %v1657, %v1769
    %v1771 = vpop.f32.mrb[0].mxu0
    %v1772 = vadd.f32 %v1659, %v1771
    %1773 = vmatprep.mubr.bf16.mxu0 %v551
    %1774 = vmatmul.mubr.bf16.gmra.mrb[0].mxu0 %v550
    %v1775 = vpop.f32.mrb[0].mxu0
    %v1776 = vadd.f32 %v1663, %v1775
    %v1777 = vpop.f32.mrb[0].mxu0
    %v1778 = vadd.f32 %v1665, %v1777
    %v1779 = vpop.f32.mrb[0].mxu0
    %v1780 = vadd.f32 %v1667, %v1779
    %v1781 = vpop.f32.mrb[0].mxu0
    %v1782 = vadd.f32 %v1669, %v1781
    %1783 = vdwg.mxu0
    %1784 = vst [vmem:[#allocation3] sm:$0xff] %v1706
    %1785 = vst [vmem:[#allocation3 + $0x8] sm:$0xff] %v1708
    %1786 = vst [vmem:[#allocation3 + $0x10] sm:$0xff] %v1710
    %1787 = vst [vmem:[#allocation3 + $0x18] sm:$0xff] %v1712
    %1788 = vst [vmem:[#allocation3 + $0x20] sm:$0xff] %v1716
    %1789 = vst [vmem:[#allocation3 + $0x28] sm:$0xff] %v1718
    %1790 = vst [vmem:[#allocation3 + $0x30] sm:$0xff] %v1720
    %1791 = vst [vmem:[#allocation3 + $0x38] sm:$0xff] %v1722
    %1792 = vst [vmem:[#allocation3 + $0x40] sm:$0xff] %v1726
    %1793 = vst [vmem:[#allocation3 + $0x48] sm:$0xff] %v1728
    %1794 = vst [vmem:[#allocation3 + $0x50] sm:$0xff] %v1730
    %1795 = vst [vmem:[#allocation3 + $0x58] sm:$0xff] %v1732
    %1796 = vst [vmem:[#allocation3 + $0x60] sm:$0xff] %v1736
    %1797 = vst [vmem:[#allocation3 + $0x68] sm:$0xff] %v1738
    %1798 = vst [vmem:[#allocation3 + $0x70] sm:$0xff] %v1740
    %1799 = vst [vmem:[#allocation3 + $0x78] sm:$0xff] %v1742
    %1800 = vst [vmem:[#allocation3 + $0x80] sm:$0xff] %v1746
    %1801 = vst [vmem:[#allocation3 + $0x88] sm:$0xff] %v1748
    %1802 = vst [vmem:[#allocation3 + $0x90] sm:$0xff] %v1750
    %1803 = vst [vmem:[#allocation3 + $0x98] sm:$0xff] %v1752
    %1804 = vst [vmem:[#allocation3 + $0xa0] sm:$0xff] %v1756
    %1805 = vst [vmem:[#allocation3 + $0xa8] sm:$0xff] %v1758
    %1806 = vst [vmem:[#allocation3 + $0xb0] sm:$0xff] %v1760
    %1807 = vst [vmem:[#allocation3 + $0xb8] sm:$0xff] %v1762
    %1808 = vst [vmem:[#allocation3 + $0xc0] sm:$0xff] %v1766
    %1809 = vst [vmem:[#allocation3 + $0xc8] sm:$0xff] %v1768
    %1810 = vst [vmem:[#allocation3 + $0xd0] sm:$0xff] %v1770
    %1811 = vst [vmem:[#allocation3 + $0xd8] sm:$0xff] %v1772
    %1812 = vst [vmem:[#allocation3 + $0xe0] sm:$0xff] %v1776
    %1813 = vst [vmem:[#allocation3 + $0xe8] sm:$0xff] %v1778
    %1814 = vst [vmem:[#allocation3 + $0xf0] sm:$0xff] %v1780
    %1815 = vst [vmem:[#allocation3 + $0xf8] sm:$0xff] %v1782
    %vm1816 = vcmp.lt.s32.totalorder %v176, 0
    %v1817 = vsub.s32 0, %v176
    %v1818 = vsel %vm1816, %v1817, %v176
    %v1819 = vshrl.u32 %v1818, 6
    %v1820 = vand.u32 %v1818, 63
    %v1821 = vsub.s32 0, %v1820
    %v1822 = vsel %vm1816, %v1821, %v1820
    %vm1823 = vcmp.lt.s32.totalorder %v177, 0
    %v1824 = vsub.s32 0, %v177
    %v1825 = vsel %vm1823, %v1824, %v177
    %v1826 = vshrl.u32 %v1825, 6
    %v1827 = vand.u32 %v1825, 63
    %v1828 = vsub.s32 0, %v1827
    %v1829 = vsel %vm1823, %v1828, %v1827
    %vm1830 = vcmp.ne.s32.totalorder %v1822, 0
    %vm1831 = vcmp.ne.s32.totalorder %v1829, 0
    %vm1832 = vcmp.lt.s32.totalorder %v1822, 0
    %vm1833 = vcmp.lt.s32.totalorder %v1829, 0
    %vm1834 = vmand %vm1832, %vm1830
    %vm1835 = vmand %vm1833, %vm1831
    %v1836 = vadd.s32 %v1822, 64
    %v1837 = vadd.s32 %v1829, 64
    %v1838 = vsel %vm1834, %v1836, %v1822
    %v1839 = vsel %vm1835, %v1837, %v1829
    %vm1840 = vcmp.lt.s32.totalorder %v1838, 32
    %vm1841 = vcmp.lt.s32.totalorder %v1839, 32
    %v1842 = vld [vmem:[%s3] sm:$0xff]
    %v1843 = vld [vmem:[%s3 + $0x8] sm:$0xff]
    %v1844 = vld [vmem:[%s3 + $0x10] sm:$0xff]
    %v1845 = vld [vmem:[%s3 + $0x18] sm:$0xff]
    %v1846 = vld [vmem:[%s3 + $0x20] sm:$0xff]
    %v1847 = vld [vmem:[%s3 + $0x28] sm:$0xff]
    %v1848 = vld [vmem:[%s3 + $0x30] sm:$0xff]
    %v1849 = vld [vmem:[%s3 + $0x38] sm:$0xff]
    %v1850 = vld [vmem:[%s3 + $0x40] sm:$0xff]
    %v1851 = vld [vmem:[%s3 + $0x48] sm:$0xff]
    %v1852 = vld [vmem:[%s3 + $0x50] sm:$0xff]
    %v1853 = vld [vmem:[%s3 + $0x58] sm:$0xff]
    %v1854 = vld [vmem:[%s3 + $0x60] sm:$0xff]
    %v1855 = vld [vmem:[%s3 + $0x68] sm:$0xff]
    %v1856 = vld [vmem:[%s3 + $0x70] sm:$0xff]
    %v1857 = vld [vmem:[%s3 + $0x78] sm:$0xff]
    %v1858 = vld [vmem:[#allocation3] sm:$0xff]
    %v1859 = vld [vmem:[#allocation3 + $0x8] sm:$0xff]
    %v1860 = vld [vmem:[#allocation3 + $0xf0] sm:$0xff]
    %v1861 = vld [vmem:[#allocation3 + $0xf8] sm:$0xff]
    %v1862 = vsel %vm1840, %v1858, %v1860
    %v1863 = vsel %vm1841, %v1859, %v1861
    %vm1864 = vcmask 523264
    %v1866 = vsel %vm1864, 0.0, 0
    %1868 = vmatprep.subr.mxu0 %v1843
    %1869 = vmatpush1.msra.mxu0 %v1842
    %1870 = vmatprep.subr.mxu0 %v1845
    %1871 = vmatpush1.msra.mxu0 %v1844
    %1872 = vmatprep.subr.mxu0 %v1847
    %1873 = vmatpush1.msra.mxu0 %v1846
    %1874 = vmatprep.subr.mxu0 %v1849
    %1875 = vmatpush1.msra.mxu0 %v1848
    %1876 = vmatprep.subr.mxu0 %v1851
    %1877 = vmatpush1.msra.mxu0 %v1850
    %1878 = vmatprep.subr.mxu0 %v1853
    %1879 = vmatpush1.msra.mxu0 %v1852
    %1880 = vmatprep.subr.mxu0 %v1855
    %1881 = vmatpush1.msra.mxu0 %v1854
    %1882 = vmatprep.subr.mxu0 %v1857
    %1883 = vmatpush1.msra.mxu0 %v1856
    %1884 = vmatprep.subr.mxu0 0.0
    %1885 = vmatpush1.msra.mxu0 0.0
    %1886 = vmatprep.subr.mxu0 0.0
    %1887 = vmatpush1.msra.mxu0 0.0
    %1888 = vmatprep.subr.mxu0 0.0
    %1889 = vmatpush1.msra.mxu0 0.0
    %1890 = vmatprep.subr.mxu0 0.0
    %1891 = vmatpush1.msra.mxu0 0.0
    %1892 = vmatprep.subr.mxu0 0.0
    %1893 = vmatpush1.msra.mxu0 0.0
    %1894 = vmatprep.subr.mxu0 0.0
    %1895 = vmatpush1.msra.mxu0 0.0
    %1896 = vmatprep.subr.mxu0 0.0
    %1897 = vmatpush1.msra.mxu0 0.0
    %1898 = vmatprep.subr.mxu0 0.0
    %1899 = vmatpush1.msra.mxu0 0.0
    %1900 = vmatprep.subr.mxu0 0.0
    %1901 = vmatpush1.msra.mxu0 0.0
    %1902 = vmatprep.subr.mxu0 0.0
    %1903 = vmatpush1.msra.mxu0 0.0
    %1904 = vmatprep.subr.mxu0 0.0
    %1905 = vmatpush1.msra.mxu0 0.0
    %1906 = vmatprep.subr.mxu0 0.0
    %1907 = vmatpush1.msra.mxu0 0.0
    %1908 = vmatprep.subr.mxu0 0.0
    %1909 = vmatpush1.msra.mxu0 0.0
    %1910 = vmatprep.subr.mxu0 0.0
    %1911 = vmatpush1.msra.mxu0 0.0
    %1912 = vmatprep.subr.mxu0 0.0
    %1913 = vmatpush1.msra.mxu0 0.0
    %1914 = vmatprep.subr.mxu0 0.0
    %1915 = vmatpush1.msra.mxu0 0.0
    %1916 = vmatprep.subr.mxu0 0.0
    %1917 = vmatpush1.msra.mxu0 0.0
    %1918 = vmatprep.subr.mxu0 0.0
    %1919 = vmatpush1.msra.mxu0 0.0
    %1920 = vmatprep.subr.mxu0 0.0
    %1921 = vmatpush1.msra.mxu0 0.0
    %1922 = vmatprep.subr.mxu0 0.0
    %1923 = vmatpush1.msra.mxu0 0.0
    %1924 = vmatprep.subr.mxu0 0.0
    %1925 = vmatpush1.msra.mxu0 0.0
    %1926 = vmatprep.subr.mxu0 0.0
    %1927 = vmatpush1.msra.mxu0 0.0
    %1928 = vmatprep.subr.mxu0 0.0
    %1929 = vmatpush1.msra.mxu0 0.0
    %1930 = vmatprep.subr.mxu0 0.0
    %1931 = vmatpush1.msra.mxu0 0.0
    %1932 = vmatprep.mubr.f32.mxu0 0.0
    %1933 = vmatmul.mubr.f32.gmra.mrb[0].mxu0 %v1866
    %v1934 = vpop.f32.mrb[0].mxu0
    %v1935 = vadd.f32 0.0, %v1934
    %v1936 = vpop.f32.mrb[0].mxu0
    %v1937 = vadd.f32 0.0, %v1936
    %1938 = vdwg.mxu0
    %v1939 = vadd.f32 %v1862, %v1935
    %v1940 = vadd.f32 %v1863, %v1937
    %v1941 = vxor.u32 %v1939, 2147483648
    %v1942 = vmul.f32 %v1941, 1.442695
    %v1943 = vpow.pop %v1942
    %v1944 = vadd.f32 %v1943, 1.0
    %v1945 = vrcp.pop %v1944
    %v1946 = vmul.f32 1.0, %v1945
    %v1947 = vxor.u32 %v1940, 2147483648
    %v1948 = vmul.f32 %v1947, 1.442695
    %v1949 = vpow.pop %v1948
    %v1950 = vadd.f32 %v1949, 1.0
    %v1951 = vrcp.pop %v1950
    %v1952 = vmul.f32 1.0, %v1951
    %v1953 = vtanh.pop %v1940
    %v1954 = vmul.f32 %v1946, 0.0
    %v1955 = vmul.f32 %v1946, %v1953
    %1957 = vrot.lane.b32.xlu0 %v1955, 64
    %v1958 = vpop.permute.xlu0 %1957
    %v1960 = vadd.f32 %v1954, %v1958
    %v1961 = vtanh.pop %v1960
    %v1962 = vmul.f32 %v1952, %v1961
    %vm1963 = vcmask 261120
    %1964 = vst.msk [vmem:[#allocation2] sm:$0xff] %vm1963, %v1962
    %vm1965 = vcmask 523520
    %1966 = vst.msk [vmem:[#allocation2 + $0x78] sm:$0xff] %vm1965, %v1962
    %v1967 = vld [vmem:[#allocation3 + $0x10] sm:$0xff]
    %v1968 = vld [vmem:[#allocation3 + $0x18] sm:$0xff]
    %v1969 = vld [vmem:[#allocation3 + $0xe0] sm:$0xff]
    %v1970 = vld [vmem:[#allocation3 + $0xe8] sm:$0xff]
    %v1971 = vsel %vm1840, %v1967, %v1969
    %v1972 = vsel %vm1841, %v1968, %v1970
    %v1974 = vsel %vm1864, %v1962, 0
    %1976 = vmatprep.subr.mxu0 %v1843
    %1977 = vmatpush1.msra.mxu0 %v1842
    %1978 = vmatprep.subr.mxu0 %v1845
    %1979 = vmatpush1.msra.mxu0 %v1844
    %1980 = vmatprep.subr.mxu0 %v1847
    %1981 = vmatpush1.msra.mxu0 %v1846
    %1982 = vmatprep.subr.mxu0 %v1849
    %1983 = vmatpush1.msra.mxu0 %v1848
    %1984 = vmatprep.subr.mxu0 %v1851
    %1985 = vmatpush1.msra.mxu0 %v1850
    %1986 = vmatprep.subr.mxu0 %v1853
    %1987 = vmatpush1.msra.mxu0 %v1852
    %1988 = vmatprep.subr.mxu0 %v1855
    %1989 = vmatpush1.msra.mxu0 %v1854
    %1990 = vmatprep.subr.mxu0 %v1857
    %1991 = vmatpush1.msra.mxu0 %v1856
    %1992 = vmatprep.subr.mxu0 0.0
    %1993 = vmatpush1.msra.mxu0 0.0
    %1994 = vmatprep.subr.mxu0 0.0
    %1995 = vmatpush1.msra.mxu0 0.0
    %1996 = vmatprep.subr.mxu0 0.0
    %1997 = vmatpush1.msra.mxu0 0.0
    %1998 = vmatprep.subr.mxu0 0.0
    %1999 = vmatpush1.msra.mxu0 0.0
    %2000 = vmatprep.subr.mxu0 0.0
    %2001 = vmatpush1.msra.mxu0 0.0
    %2002 = vmatprep.subr.mxu0 0.0
    %2003 = vmatpush1.msra.mxu0 0.0
    %2004 = vmatprep.subr.mxu0 0.0
    %2005 = vmatpush1.msra.mxu0 0.0
    %2006 = vmatprep.subr.mxu0 0.0
    %2007 = vmatpush1.msra.mxu0 0.0
    %2008 = vmatprep.subr.mxu0 0.0
    %2009 = vmatpush1.msra.mxu0 0.0
    %2010 = vmatprep.subr.mxu0 0.0
    %2011 = vmatpush1.msra.mxu0 0.0
    %2012 = vmatprep.subr.mxu0 0.0
    %2013 = vmatpush1.msra.mxu0 0.0
    %2014 = vmatprep.subr.mxu0 0.0
    %2015 = vmatpush1.msra.mxu0 0.0
    %2016 = vmatprep.subr.mxu0 0.0
    %2017 = vmatpush1.msra.mxu0 0.0
    %2018 = vmatprep.subr.mxu0 0.0
    %2019 = vmatpush1.msra.mxu0 0.0
    %2020 = vmatprep.subr.mxu0 0.0
    %2021 = vmatpush1.msra.mxu0 0.0
    %2022 = vmatprep.subr.mxu0 0.0
    %2023 = vmatpush1.msra.mxu0 0.0
    %2024 = vmatprep.subr.mxu0 0.0
    %2025 = vmatpush1.msra.mxu0 0.0
    %2026 = vmatprep.subr.mxu0 0.0
    %2027 = vmatpush1.msra.mxu0 0.0
    %2028 = vmatprep.subr.mxu0 0.0
    %2029 = vmatpush1.msra.mxu0 0.0
    %2030 = vmatprep.subr.mxu0 0.0
    %2031 = vmatpush1.msra.mxu0 0.0
    %2032 = vmatprep.subr.mxu0 0.0
    %2033 = vmatpush1.msra.mxu0 0.0
    %2034 = vmatprep.subr.mxu0 0.0
    %2035 = vmatpush1.msra.mxu0 0.0
    %2036 = vmatprep.subr.mxu0 0.0
    %2037 = vmatpush1.msra.mxu0 0.0
    %2038 = vmatprep.subr.mxu0 0.0
    %2039 = vmatpush1.msra.mxu0 0.0
    %2040 = vmatprep.mubr.f32.mxu0 0.0
    %2041 = vmatmul.mubr.f32.gmra.mrb[0].mxu0 %v1974
    %v2042 = vpop.f32.mrb[0].mxu0
    %v2043 = vadd.f32 0.0, %v2042
    %v2044 = vpop.f32.mrb[0].mxu0
    %v2045 = vadd.f32 0.0, %v2044
    %2046 = vdwg.mxu0
    %v2047 = vadd.f32 %v1971, %v2043
    %v2048 = vadd.f32 %v1972, %v2045
    %v2049 = vxor.u32 %v2047, 2147483648
    %v2050 = vmul.f32 %v2049, 1.442695
    %v2051 = vpow.pop %v2050
    %v2052 = vadd.f32 %v2051, 1.0
    %v2053 = vrcp.pop %v2052
    %v2054 = vmul.f32 1.0, %v2053
    %v2055 = vxor.u32 %v2048, 2147483648
    %v2056 = vmul.f32 %v2055, 1.442695
    %v2057 = vpow.pop %v2056
    %v2058 = vadd.f32 %v2057, 1.0
    %v2059 = vrcp.pop %v2058
    %v2060 = vmul.f32 1.0, %v2059
    %v2061 = vtanh.pop %v2048
    %v2062 = vmul.f32 %v2054, %v1960
    %v2063 = vmul.f32 %v2054, %v2061
    %2065 = vrot.lane.b32.xlu0 %v2063, 64
    %v2066 = vpop.permute.xlu0 %2065
    %v2068 = vadd.f32 %v2062, %v2066
    %v2069 = vtanh.pop %v2068
    %v2070 = vmul.f32 %v2060, %v2069
    %2071 = vst.msk [vmem:[#allocation2 + $0x8] sm:$0xff] %vm1963, %v2070
    %2072 = vst.msk [vmem:[#allocation2 + $0x70] sm:$0xff] %vm1965, %v2070
    %v2073 = vld [vmem:[#allocation3 + $0x20] sm:$0xff]
    %v2074 = vld [vmem:[#allocation3 + $0x28] sm:$0xff]
    %v2075 = vld [vmem:[#allocation3 + $0xd0] sm:$0xff]
    %v2076 = vld [vmem:[#allocation3 + $0xd8] sm:$0xff]
    %v2077 = vsel %vm1840, %v2073, %v2075
    %v2078 = vsel %vm1841, %v2074, %v2076
    %v2080 = vsel %vm1864, %v2070, 0
    %2082 = vmatprep.subr.mxu0 %v1843
    %2083 = vmatpush1.msra.mxu0 %v1842
    %2084 = vmatprep.subr.mxu0 %v1845
    %2085 = vmatpush1.msra.mxu0 %v1844
    %2086 = vmatprep.subr.mxu0 %v1847
    %2087 = vmatpush1.msra.mxu0 %v1846
    %2088 = vmatprep.subr.mxu0 %v1849
    %2089 = vmatpush1.msra.mxu0 %v1848
    %2090 = vmatprep.subr.mxu0 %v1851
    %2091 = vmatpush1.msra.mxu0 %v1850
    %2092 = vmatprep.subr.mxu0 %v1853
    %2093 = vmatpush1.msra.mxu0 %v1852
    %2094 = vmatprep.subr.mxu0 %v1855
    %2095 = vmatpush1.msra.mxu0 %v1854
    %2096 = vmatprep.subr.mxu0 %v1857
    %2097 = vmatpush1.msra.mxu0 %v1856
    %2098 = vmatprep.subr.mxu0 0.0
    %2099 = vmatpush1.msra.mxu0 0.0
    %2100 = vmatprep.subr.mxu0 0.0
    %2101 = vmatpush1.msra.mxu0 0.0
    %2102 = vmatprep.subr.mxu0 0.0
    %2103 = vmatpush1.msra.mxu0 0.0
    %2104 = vmatprep.subr.mxu0 0.0
    %2105 = vmatpush1.msra.mxu0 0.0
    %2106 = vmatprep.subr.mxu0 0.0
    %2107 = vmatpush1.msra.mxu0 0.0
    %2108 = vmatprep.subr.mxu0 0.0
    %2109 = vmatpush1.msra.mxu0 0.0
    %2110 = vmatprep.subr.mxu0 0.0
    %2111 = vmatpush1.msra.mxu0 0.0
    %2112 = vmatprep.subr.mxu0 0.0
    %2113 = vmatpush1.msra.mxu0 0.0
    %2114 = vmatprep.subr.mxu0 0.0
    %2115 = vmatpush1.msra.mxu0 0.0
    %2116 = vmatprep.subr.mxu0 0.0
    %2117 = vmatpush1.msra.mxu0 0.0
    %2118 = vmatprep.subr.mxu0 0.0
    %2119 = vmatpush1.msra.mxu0 0.0
    %2120 = vmatprep.subr.mxu0 0.0
    %2121 = vmatpush1.msra.mxu0 0.0
    %2122 = vmatprep.subr.mxu0 0.0
    %2123 = vmatpush1.msra.mxu0 0.0
    %2124 = vmatprep.subr.mxu0 0.0
    %2125 = vmatpush1.msra.mxu0 0.0
    %2126 = vmatprep.subr.mxu0 0.0
    %2127 = vmatpush1.msra.mxu0 0.0
    %2128 = vmatprep.subr.mxu0 0.0
    %2129 = vmatpush1.msra.mxu0 0.0
    %2130 = vmatprep.subr.mxu0 0.0
    %2131 = vmatpush1.msra.mxu0 0.0
    %2132 = vmatprep.subr.mxu0 0.0
    %2133 = vmatpush1.msra.mxu0 0.0
    %2134 = vmatprep.subr.mxu0 0.0
    %2135 = vmatpush1.msra.mxu0 0.0
    %2136 = vmatprep.subr.mxu0 0.0
    %2137 = vmatpush1.msra.mxu0 0.0
    %2138 = vmatprep.subr.mxu0 0.0
    %2139 = vmatpush1.msra.mxu0 0.0
    %2140 = vmatprep.subr.mxu0 0.0
    %2141 = vmatpush1.msra.mxu0 0.0
    %2142 = vmatprep.subr.mxu0 0.0
    %2143 = vmatpush1.msra.mxu0 0.0
    %2144 = vmatprep.subr.mxu0 0.0
    %2145 = vmatpush1.msra.mxu0 0.0
    %2146 = vmatprep.mubr.f32.mxu0 0.0
    %2147 = vmatmul.mubr.f32.gmra.mrb[0].mxu0 %v2080
    %v2148 = vpop.f32.mrb[0].mxu0
    %v2149 = vadd.f32 0.0, %v2148
    %v2150 = vpop.f32.mrb[0].mxu0
    %v2151 = vadd.f32 0.0, %v2150
    %2152 = vdwg.mxu0
    %v2153 = vadd.f32 %v2077, %v2149
    %v2154 = vadd.f32 %v2078, %v2151
    %v2155 = vxor.u32 %v2153, 2147483648
    %v2156 = vmul.f32 %v2155, 1.442695
    %v2157 = vpow.pop %v2156
    %v2158 = vadd.f32 %v2157, 1.0
    %v2159 = vrcp.pop %v2158
    %v2160 = vmul.f32 1.0, %v2159
    %v2161 = vxor.u32 %v2154, 2147483648
    %v2162 = vmul.f32 %v2161, 1.442695
    %v2163 = vpow.pop %v2162
    %v2164 = vadd.f32 %v2163, 1.0
    %v2165 = vrcp.pop %v2164
    %v2166 = vmul.f32 1.0, %v2165
    %v2167 = vtanh.pop %v2154
    %v2168 = vmul.f32 %v2160, %v2068
    %v2169 = vmul.f32 %v2160, %v2167
    %2171 = vrot.lane.b32.xlu0 %v2169, 64
    %v2172 = vpop.permute.xlu0 %2171
    %v2174 = vadd.f32 %v2168, %v2172
    %v2175 = vtanh.pop %v2174
    %v2176 = vmul.f32 %v2166, %v2175
    %2177 = vst.msk [vmem:[#allocation2 + $0x10] sm:$0xff] %vm1963, %v2176
    %2178 = vst.msk [vmem:[#allocation2 + $0x68] sm:$0xff] %vm1965, %v2176
    %v2179 = vld [vmem:[#allocation3 + $0x30] sm:$0xff]
    %v2180 = vld [vmem:[#allocation3 + $0x38] sm:$0xff]
    %v2181 = vld [vmem:[#allocation3 + $0xc0] sm:$0xff]
    %v2182 = vld [vmem:[#allocation3 + $0xc8] sm:$0xff]
    %v2183 = vsel %vm1840, %v2179, %v2181
    %v2184 = vsel %vm1841, %v2180, %v2182
    %v2186 = vsel %vm1864, %v2176, 0
    %2188 = vmatprep.subr.mxu0 %v1843
    %2189 = vmatpush1.msra.mxu0 %v1842
    %2190 = vmatprep.subr.mxu0 %v1845
    %2191 = vmatpush1.msra.mxu0 %v1844
    %2192 = vmatprep.subr.mxu0 %v1847
    %2193 = vmatpush1.msra.mxu0 %v1846
    %2194 = vmatprep.subr.mxu0 %v1849
    %2195 = vmatpush1.msra.mxu0 %v1848
    %2196 = vmatprep.subr.mxu0 %v1851
    %2197 = vmatpush1.msra.mxu0 %v1850
    %2198 = vmatprep.subr.mxu0 %v1853
    %2199 = vmatpush1.msra.mxu0 %v1852
    %2200 = vmatprep.subr.mxu0 %v1855
    %2201 = vmatpush1.msra.mxu0 %v1854
    %2202 = vmatprep.subr.mxu0 %v1857
    %2203 = vmatpush1.msra.mxu0 %v1856
    %2204 = vmatprep.subr.mxu0 0.0
    %2205 = vmatpush1.msra.mxu0 0.0
    %2206 = vmatprep.subr.mxu0 0.0
    %2207 = vmatpush1.msra.mxu0 0.0
    %2208 = vmatprep.subr.mxu0 0.0
    %2209 = vmatpush1.msra.mxu0 0.0
    %2210 = vmatprep.subr.mxu0 0.0
    %2211 = vmatpush1.msra.mxu0 0.0
    %2212 = vmatprep.subr.mxu0 0.0
    %2213 = vmatpush1.msra.mxu0 0.0
    %2214 = vmatprep.subr.mxu0 0.0
    %2215 = vmatpush1.msra.mxu0 0.0
    %2216 = vmatprep.subr.mxu0 0.0
    %2217 = vmatpush1.msra.mxu0 0.0
    %2218 = vmatprep.subr.mxu0 0.0
    %2219 = vmatpush1.msra.mxu0 0.0
    %2220 = vmatprep.subr.mxu0 0.0
    %2221 = vmatpush1.msra.mxu0 0.0
    %2222 = vmatprep.subr.mxu0 0.0
    %2223 = vmatpush1.msra.mxu0 0.0
    %2224 = vmatprep.subr.mxu0 0.0
    %2225 = vmatpush1.msra.mxu0 0.0
    %2226 = vmatprep.subr.mxu0 0.0
    %2227 = vmatpush1.msra.mxu0 0.0
    %2228 = vmatprep.subr.mxu0 0.0
    %2229 = vmatpush1.msra.mxu0 0.0
    %2230 = vmatprep.subr.mxu0 0.0
    %2231 = vmatpush1.msra.mxu0 0.0
    %2232 = vmatprep.subr.mxu0 0.0
    %2233 = vmatpush1.msra.mxu0 0.0
    %2234 = vmatprep.subr.mxu0 0.0
    %2235 = vmatpush1.msra.mxu0 0.0
    %2236 = vmatprep.subr.mxu0 0.0
    %2237 = vmatpush1.msra.mxu0 0.0
    %2238 = vmatprep.subr.mxu0 0.0
    %2239 = vmatpush1.msra.mxu0 0.0
    %2240 = vmatprep.subr.mxu0 0.0
    %2241 = vmatpush1.msra.mxu0 0.0
    %2242 = vmatprep.subr.mxu0 0.0
    %2243 = vmatpush1.msra.mxu0 0.0
    %2244 = vmatprep.subr.mxu0 0.0
    %2245 = vmatpush1.msra.mxu0 0.0
    %2246 = vmatprep.subr.mxu0 0.0
    %2247 = vmatpush1.msra.mxu0 0.0
    %2248 = vmatprep.subr.mxu0 0.0
    %2249 = vmatpush1.msra.mxu0 0.0
    %2250 = vmatprep.subr.mxu0 0.0
    %2251 = vmatpush1.msra.mxu0 0.0
    %2252 = vmatprep.mubr.f32.mxu0 0.0
    %2253 = vmatmul.mubr.f32.gmra.mrb[0].mxu0 %v2186
    %v2254 = vpop.f32.mrb[0].mxu0
    %v2255 = vadd.f32 0.0, %v2254
    %v2256 = vpop.f32.mrb[0].mxu0
    %v2257 = vadd.f32 0.0, %v2256
    %2258 = vdwg.mxu0
    %v2259 = vadd.f32 %v2183, %v2255
    %v2260 = vadd.f32 %v2184, %v2257
    %v2261 = vxor.u32 %v2259, 2147483648
    %v2262 = vmul.f32 %v2261, 1.442695
    %v2263 = vpow.pop %v2262
    %v2264 = vadd.f32 %v2263, 1.0
    %v2265 = vrcp.pop %v2264
    %v2266 = vmul.f32 1.0, %v2265
    %v2267 = vxor.u32 %v2260, 2147483648
    %v2268 = vmul.f32 %v2267, 1.442695
    %v2269 = vpow.pop %v2268
    %v2270 = vadd.f32 %v2269, 1.0
    %v2271 = vrcp.pop %v2270
    %v2272 = vmul.f32 1.0, %v2271
    %v2273 = vtanh.pop %v2260
    %v2274 = vmul.f32 %v2266, %v2174
    %v2275 = vmul.f32 %v2266, %v2273
    %2277 = vrot.lane.b32.xlu0 %v2275, 64
    %v2278 = vpop.permute.xlu0 %2277
    %v2280 = vadd.f32 %v2274, %v2278
    %v2281 = vtanh.pop %v2280
    %v2282 = vmul.f32 %v2272, %v2281
    %2283 = vst.msk [vmem:[#allocation2 + $0x18] sm:$0xff] %vm1963, %v2282
    %2284 = vst.msk [vmem:[#allocation2 + $0x60] sm:$0xff] %vm1965, %v2282
    %v2285 = vld [vmem:[#allocation3 + $0x40] sm:$0xff]
    %v2286 = vld [vmem:[#allocation3 + $0x48] sm:$0xff]
    %v2287 = vld [vmem:[#allocation3 + $0xb0] sm:$0xff]
    %v2288 = vld [vmem:[#allocation3 + $0xb8] sm:$0xff]
    %v2289 = vsel %vm1840, %v2285, %v2287
    %v2290 = vsel %vm1841, %v2286, %v2288
    %v2292 = vsel %vm1864, %v2282, 0
    %2294 = vmatprep.subr.mxu0 %v1843
    %2295 = vmatpush1.msra.mxu0 %v1842
    %2296 = vmatprep.subr.mxu0 %v1845
    %2297 = vmatpush1.msra.mxu0 %v1844
    %2298 = vmatprep.subr.mxu0 %v1847
    %2299 = vmatpush1.msra.mxu0 %v1846
    %2300 = vmatprep.subr.mxu0 %v1849
    %2301 = vmatpush1.msra.mxu0 %v1848
    %2302 = vmatprep.subr.mxu0 %v1851
    %2303 = vmatpush1.msra.mxu0 %v1850
    %2304 = vmatprep.subr.mxu0 %v1853
    %2305 = vmatpush1.msra.mxu0 %v1852
    %2306 = vmatprep.subr.mxu0 %v1855
    %2307 = vmatpush1.msra.mxu0 %v1854
    %2308 = vmatprep.subr.mxu0 %v1857
    %2309 = vmatpush1.msra.mxu0 %v1856
    %2310 = vmatprep.subr.mxu0 0.0
    %2311 = vmatpush1.msra.mxu0 0.0
    %2312 = vmatprep.subr.mxu0 0.0
    %2313 = vmatpush1.msra.mxu0 0.0
    %2314 = vmatprep.subr.mxu0 0.0
    %2315 = vmatpush1.msra.mxu0 0.0
    %2316 = vmatprep.subr.mxu0 0.0
    %2317 = vmatpush1.msra.mxu0 0.0
    %2318 = vmatprep.subr.mxu0 0.0
    %2319 = vmatpush1.msra.mxu0 0.0
    %2320 = vmatprep.subr.mxu0 0.0
    %2321 = vmatpush1.msra.mxu0 0.0
    %2322 = vmatprep.subr.mxu0 0.0
    %2323 = vmatpush1.msra.mxu0 0.0
    %2324 = vmatprep.subr.mxu0 0.0
    %2325 = vmatpush1.msra.mxu0 0.0
    %2326 = vmatprep.subr.mxu0 0.0
    %2327 = vmatpush1.msra.mxu0 0.0
    %2328 = vmatprep.subr.mxu0 0.0
    %2329 = vmatpush1.msra.mxu0 0.0
    %2330 = vmatprep.subr.mxu0 0.0
    %2331 = vmatpush1.msra.mxu0 0.0
    %2332 = vmatprep.subr.mxu0 0.0
    %2333 = vmatpush1.msra.mxu0 0.0
    %2334 = vmatprep.subr.mxu0 0.0
    %2335 = vmatpush1.msra.mxu0 0.0
    %2336 = vmatprep.subr.mxu0 0.0
    %2337 = vmatpush1.msra.mxu0 0.0
    %2338 = vmatprep.subr.mxu0 0.0
    %2339 = vmatpush1.msra.mxu0 0.0
    %2340 = vmatprep.subr.mxu0 0.0
    %2341 = vmatpush1.msra.mxu0 0.0
    %2342 = vmatprep.subr.mxu0 0.0
    %2343 = vmatpush1.msra.mxu0 0.0
    %2344 = vmatprep.subr.mxu0 0.0
    %2345 = vmatpush1.msra.mxu0 0.0
    %2346 = vmatprep.subr.mxu0 0.0
    %2347 = vmatpush1.msra.mxu0 0.0
    %2348 = vmatprep.subr.mxu0 0.0
    %2349 = vmatpush1.msra.mxu0 0.0
    %2350 = vmatprep.subr.mxu0 0.0
    %2351 = vmatpush1.msra.mxu0 0.0
    %2352 = vmatprep.subr.mxu0 0.0
    %2353 = vmatpush1.msra.mxu0 0.0
    %2354 = vmatprep.subr.mxu0 0.0
    %2355 = vmatpush1.msra.mxu0 0.0
    %2356 = vmatprep.subr.mxu0 0.0
    %2357 = vmatpush1.msra.mxu0 0.0
    %2358 = vmatprep.mubr.f32.mxu0 0.0
    %2359 = vmatmul.mubr.f32.gmra.mrb[0].mxu0 %v2292
    %v2360 = vpop.f32.mrb[0].mxu0
    %v2361 = vadd.f32 0.0, %v2360
    %v2362 = vpop.f32.mrb[0].mxu0
    %v2363 = vadd.f32 0.0, %v2362
    %2364 = vdwg.mxu0
    %v2365 = vadd.f32 %v2289, %v2361
    %v2366 = vadd.f32 %v2290, %v2363
    %v2367 = vxor.u32 %v2365, 2147483648
    %v2368 = vmul.f32 %v2367, 1.442695
    %v2369 = vpow.pop %v2368
    %v2370 = vadd.f32 %v2369, 1.0
    %v2371 = vrcp.pop %v2370
    %v2372 = vmul.f32 1.0, %v2371
    %v2373 = vxor.u32 %v2366, 2147483648
    %v2374 = vmul.f32 %v2373, 1.442695
    %v2375 = vpow.pop %v2374
    %v2376 = vadd.f32 %v2375, 1.0
    %v2377 = vrcp.pop %v2376
    %v2378 = vmul.f32 1.0, %v2377
    %v2379 = vtanh.pop %v2366
    %v2380 = vmul.f32 %v2372, %v2280
    %v2381 = vmul.f32 %v2372, %v2379
    %2383 = vrot.lane.b32.xlu0 %v2381, 64
    %v2384 = vpop.permute.xlu0 %2383
    %v2386 = vadd.f32 %v2380, %v2384
    %v2387 = vtanh.pop %v2386
    %v2388 = vmul.f32 %v2378, %v2387
    %2389 = vst.msk [vmem:[#allocation2 + $0x20] sm:$0xff] %vm1963, %v2388
    %2390 = vst.msk [vmem:[#allocation2 + $0x58] sm:$0xff] %vm1965, %v2388
    %v2391 = vld [vmem:[#allocation3 + $0x50] sm:$0xff]
    %v2392 = vld [vmem:[#allocation3 + $0x58] sm:$0xff]
    %v2393 = vld [vmem:[#allocation3 + $0xa0] sm:$0xff]
    %v2394 = vld [vmem:[#allocation3 + $0xa8] sm:$0xff]
    %v2395 = vsel %vm1840, %v2391, %v2393
    %v2396 = vsel %vm1841, %v2392, %v2394
    %v2398 = vsel %vm1864, %v2388, 0
    %2400 = vmatprep.subr.mxu0 %v1843
    %2401 = vmatpush1.msra.mxu0 %v1842
    %2402 = vmatprep.subr.mxu0 %v1845
    %2403 = vmatpush1.msra.mxu0 %v1844
    %2404 = vmatprep.subr.mxu0 %v1847
    %2405 = vmatpush1.msra.mxu0 %v1846
    %2406 = vmatprep.subr.mxu0 %v1849
    %2407 = vmatpush1.msra.mxu0 %v1848
    %2408 = vmatprep.subr.mxu0 %v1851
    %2409 = vmatpush1.msra.mxu0 %v1850
    %2410 = vmatprep.subr.mxu0 %v1853
    %2411 = vmatpush1.msra.mxu0 %v1852
    %2412 = vmatprep.subr.mxu0 %v1855
    %2413 = vmatpush1.msra.mxu0 %v1854
    %2414 = vmatprep.subr.mxu0 %v1857
    %2415 = vmatpush1.msra.mxu0 %v1856
    %2416 = vmatprep.subr.mxu0 0.0
    %2417 = vmatpush1.msra.mxu0 0.0
    %2418 = vmatprep.subr.mxu0 0.0
    %2419 = vmatpush1.msra.mxu0 0.0
    %2420 = vmatprep.subr.mxu0 0.0
    %2421 = vmatpush1.msra.mxu0 0.0
    %2422 = vmatprep.subr.mxu0 0.0
    %2423 = vmatpush1.msra.mxu0 0.0
    %2424 = vmatprep.subr.mxu0 0.0
    %2425 = vmatpush1.msra.mxu0 0.0
    %2426 = vmatprep.subr.mxu0 0.0
    %2427 = vmatpush1.msra.mxu0 0.0
    %2428 = vmatprep.subr.mxu0 0.0
    %2429 = vmatpush1.msra.mxu0 0.0
    %2430 = vmatprep.subr.mxu0 0.0
    %2431 = vmatpush1.msra.mxu0 0.0
    %2432 = vmatprep.subr.mxu0 0.0
    %2433 = vmatpush1.msra.mxu0 0.0
    %2434 = vmatprep.subr.mxu0 0.0
    %2435 = vmatpush1.msra.mxu0 0.0
    %2436 = vmatprep.subr.mxu0 0.0
    %2437 = vmatpush1.msra.mxu0 0.0
    %2438 = vmatprep.subr.mxu0 0.0
    %2439 = vmatpush1.msra.mxu0 0.0
    %2440 = vmatprep.subr.mxu0 0.0
    %2441 = vmatpush1.msra.mxu0 0.0
    %2442 = vmatprep.subr.mxu0 0.0
    %2443 = vmatpush1.msra.mxu0 0.0
    %2444 = vmatprep.subr.mxu0 0.0
    %2445 = vmatpush1.msra.mxu0 0.0
    %2446 = vmatprep.subr.mxu0 0.0
    %2447 = vmatpush1.msra.mxu0 0.0
    %2448 = vmatprep.subr.mxu0 0.0
    %2449 = vmatpush1.msra.mxu0 0.0
    %2450 = vmatprep.subr.mxu0 0.0
    %2451 = vmatpush1.msra.mxu0 0.0
    %2452 = vmatprep.subr.mxu0 0.0
    %2453 = vmatpush1.msra.mxu0 0.0
    %2454 = vmatprep.subr.mxu0 0.0
    %2455 = vmatpush1.msra.mxu0 0.0
    %2456 = vmatprep.subr.mxu0 0.0
    %2457 = vmatpush1.msra.mxu0 0.0
    %2458 = vmatprep.subr.mxu0 0.0
    %2459 = vmatpush1.msra.mxu0 0.0
    %2460 = vmatprep.subr.mxu0 0.0
    %2461 = vmatpush1.msra.mxu0 0.0
    %2462 = vmatprep.subr.mxu0 0.0
    %2463 = vmatpush1.msra.mxu0 0.0
    %2464 = vmatprep.mubr.f32.mxu0 0.0
    %2465 = vmatmul.mubr.f32.gmra.mrb[0].mxu0 %v2398
    %v2466 = vpop.f32.mrb[0].mxu0
    %v2467 = vadd.f32 0.0, %v2466
    %v2468 = vpop.f32.mrb[0].mxu0
    %v2469 = vadd.f32 0.0, %v2468
    %2470 = vdwg.mxu0
    %v2471 = vadd.f32 %v2395, %v2467
    %v2472 = vadd.f32 %v2396, %v2469
    %v2473 = vxor.u32 %v2471, 2147483648
    %v2474 = vmul.f32 %v2473, 1.442695
    %v2475 = vpow.pop %v2474
    %v2476 = vadd.f32 %v2475, 1.0
    %v2477 = vrcp.pop %v2476
    %v2478 = vmul.f32 1.0, %v2477
    %v2479 = vxor.u32 %v2472, 2147483648
    %v2480 = vmul.f32 %v2479, 1.442695
    %v2481 = vpow.pop %v2480
    %v2482 = vadd.f32 %v2481, 1.0
    %v2483 = vrcp.pop %v2482
    %v2484 = vmul.f32 1.0, %v2483
    %v2485 = vtanh.pop %v2472
    %v2486 = vmul.f32 %v2478, %v2386
    %v2487 = vmul.f32 %v2478, %v2485
    %2489 = vrot.lane.b32.xlu0 %v2487, 64
    %v2490 = vpop.permute.xlu0 %2489
    %v2492 = vadd.f32 %v2486, %v2490
    %v2493 = vtanh.pop %v2492
    %v2494 = vmul.f32 %v2484, %v2493
    %2495 = vst.msk [vmem:[#allocation2 + $0x28] sm:$0xff] %vm1963, %v2494
    %2496 = vst.msk [vmem:[#allocation2 + $0x50] sm:$0xff] %vm1965, %v2494
    %v2497 = vld [vmem:[#allocation3 + $0x60] sm:$0xff]
    %v2498 = vld [vmem:[#allocation3 + $0x68] sm:$0xff]
    %v2499 = vld [vmem:[#allocation3 + $0x90] sm:$0xff]
    %v2500 = vld [vmem:[#allocation3 + $0x98] sm:$0xff]
    %v2501 = vsel %vm1840, %v2497, %v2499
    %v2502 = vsel %vm1841, %v2498, %v2500
    %v2504 = vsel %vm1864, %v2494, 0
    %2506 = vmatprep.subr.mxu0 %v1843
    %2507 = vmatpush1.msra.mxu0 %v1842
    %2508 = vmatprep.subr.mxu0 %v1845
    %2509 = vmatpush1.msra.mxu0 %v1844
    %2510 = vmatprep.subr.mxu0 %v1847
    %2511 = vmatpush1.msra.mxu0 %v1846
    %2512 = vmatprep.subr.mxu0 %v1849
    %2513 = vmatpush1.msra.mxu0 %v1848
    %2514 = vmatprep.subr.mxu0 %v1851
    %2515 = vmatpush1.msra.mxu0 %v1850
    %2516 = vmatprep.subr.mxu0 %v1853
    %2517 = vmatpush1.msra.mxu0 %v1852
    %2518 = vmatprep.subr.mxu0 %v1855
    %2519 = vmatpush1.msra.mxu0 %v1854
    %2520 = vmatprep.subr.mxu0 %v1857
    %2521 = vmatpush1.msra.mxu0 %v1856
    %2522 = vmatprep.subr.mxu0 0.0
    %2523 = vmatpush1.msra.mxu0 0.0
    %2524 = vmatprep.subr.mxu0 0.0
    %2525 = vmatpush1.msra.mxu0 0.0
    %2526 = vmatprep.subr.mxu0 0.0
    %2527 = vmatpush1.msra.mxu0 0.0
    %2528 = vmatprep.subr.mxu0 0.0
    %2529 = vmatpush1.msra.mxu0 0.0
    %2530 = vmatprep.subr.mxu0 0.0
    %2531 = vmatpush1.msra.mxu0 0.0
    %2532 = vmatprep.subr.mxu0 0.0
    %2533 = vmatpush1.msra.mxu0 0.0
    %2534 = vmatprep.subr.mxu0 0.0
    %2535 = vmatpush1.msra.mxu0 0.0
    %2536 = vmatprep.subr.mxu0 0.0
    %2537 = vmatpush1.msra.mxu0 0.0
    %2538 = vmatprep.subr.mxu0 0.0
    %2539 = vmatpush1.msra.mxu0 0.0
    %2540 = vmatprep.subr.mxu0 0.0
    %2541 = vmatpush1.msra.mxu0 0.0
    %2542 = vmatprep.subr.mxu0 0.0
    %2543 = vmatpush1.msra.mxu0 0.0
    %2544 = vmatprep.subr.mxu0 0.0
    %2545 = vmatpush1.msra.mxu0 0.0
    %2546 = vmatprep.subr.mxu0 0.0
    %2547 = vmatpush1.msra.mxu0 0.0
    %2548 = vmatprep.subr.mxu0 0.0
    %2549 = vmatpush1.msra.mxu0 0.0
    %2550 = vmatprep.subr.mxu0 0.0
    %2551 = vmatpush1.msra.mxu0 0.0
    %2552 = vmatprep.subr.mxu0 0.0
    %2553 = vmatpush1.msra.mxu0 0.0
    %2554 = vmatprep.subr.mxu0 0.0
    %2555 = vmatpush1.msra.mxu0 0.0
    %2556 = vmatprep.subr.mxu0 0.0
    %2557 = vmatpush1.msra.mxu0 0.0
    %2558 = vmatprep.subr.mxu0 0.0
    %2559 = vmatpush1.msra.mxu0 0.0
    %2560 = vmatprep.subr.mxu0 0.0
    %2561 = vmatpush1.msra.mxu0 0.0
    %2562 = vmatprep.subr.mxu0 0.0
    %2563 = vmatpush1.msra.mxu0 0.0
    %2564 = vmatprep.subr.mxu0 0.0
    %2565 = vmatpush1.msra.mxu0 0.0
    %2566 = vmatprep.subr.mxu0 0.0
    %2567 = vmatpush1.msra.mxu0 0.0
    %2568 = vmatprep.subr.mxu0 0.0
    %2569 = vmatpush1.msra.mxu0 0.0
    %2570 = vmatprep.mubr.f32.mxu0 0.0
    %2571 = vmatmul.mubr.f32.gmra.mrb[0].mxu0 %v2504
    %v2572 = vpop.f32.mrb[0].mxu0
    %v2573 = vadd.f32 0.0, %v2572
    %v2574 = vpop.f32.mrb[0].mxu0
    %v2575 = vadd.f32 0.0, %v2574
    %2576 = vdwg.mxu0
    %v2577 = vadd.f32 %v2501, %v2573
    %v2578 = vadd.f32 %v2502, %v2575
    %v2579 = vxor.u32 %v2577, 2147483648
    %v2580 = vmul.f32 %v2579, 1.442695
    %v2581 = vpow.pop %v2580
    %v2582 = vadd.f32 %v2581, 1.0
    %v2583 = vrcp.pop %v2582
    %v2584 = vmul.f32 1.0, %v2583
    %v2585 = vxor.u32 %v2578, 2147483648
    %v2586 = vmul.f32 %v2585, 1.442695
    %v2587 = vpow.pop %v2586
    %v2588 = vadd.f32 %v2587, 1.0
    %v2589 = vrcp.pop %v2588
    %v2590 = vmul.f32 1.0, %v2589
    %v2591 = vtanh.pop %v2578
    %v2592 = vmul.f32 %v2584, %v2492
    %v2593 = vmul.f32 %v2584, %v2591
    %2595 = vrot.lane.b32.xlu0 %v2593, 64
    %v2596 = vpop.permute.xlu0 %2595
    %v2598 = vadd.f32 %v2592, %v2596
    %v2599 = vtanh.pop %v2598
    %v2600 = vmul.f32 %v2590, %v2599
    %2601 = vst.msk [vmem:[#allocation2 + $0x30] sm:$0xff] %vm1963, %v2600
    %2602 = vst.msk [vmem:[#allocation2 + $0x48] sm:$0xff] %vm1965, %v2600
    %v2603 = vld [vmem:[#allocation3 + $0x70] sm:$0xff]
    %v2604 = vld [vmem:[#allocation3 + $0x78] sm:$0xff]
    %v2605 = vld [vmem:[#allocation3 + $0x80] sm:$0xff]
    %v2606 = vld [vmem:[#allocation3 + $0x88] sm:$0xff]
    %v2607 = vsel %vm1840, %v2603, %v2605
    %v2608 = vsel %vm1841, %v2604, %v2606
    %v2610 = vsel %vm1864, %v2600, 0
    %2612 = vmatprep.subr.mxu0 %v1843
    %2613 = vmatpush1.msra.mxu0 %v1842
    %2614 = vmatprep.subr.mxu0 %v1845
    %2615 = vmatpush1.msra.mxu0 %v1844
    %2616 = vmatprep.subr.mxu0 %v1847
    %2617 = vmatpush1.msra.mxu0 %v1846
    %2618 = vmatprep.subr.mxu0 %v1849
    %2619 = vmatpush1.msra.mxu0 %v1848
    %2620 = vmatprep.subr.mxu0 %v1851
    %2621 = vmatpush1.msra.mxu0 %v1850
    %2622 = vmatprep.subr.mxu0 %v1853
    %2623 = vmatpush1.msra.mxu0 %v1852
    %2624 = vmatprep.subr.mxu0 %v1855
    %2625 = vmatpush1.msra.mxu0 %v1854
    %2626 = vmatprep.subr.mxu0 %v1857
    %2627 = vmatpush1.msra.mxu0 %v1856
    %2628 = vmatprep.subr.mxu0 0.0
    %2629 = vmatpush1.msra.mxu0 0.0
    %2630 = vmatprep.subr.mxu0 0.0
    %2631 = vmatpush1.msra.mxu0 0.0
    %2632 = vmatprep.subr.mxu0 0.0
    %2633 = vmatpush1.msra.mxu0 0.0
    %2634 = vmatprep.subr.mxu0 0.0
    %2635 = vmatpush1.msra.mxu0 0.0
    %2636 = vmatprep.subr.mxu0 0.0
    %2637 = vmatpush1.msra.mxu0 0.0
    %2638 = vmatprep.subr.mxu0 0.0
    %2639 = vmatpush1.msra.mxu0 0.0
    %2640 = vmatprep.subr.mxu0 0.0
    %2641 = vmatpush1.msra.mxu0 0.0
    %2642 = vmatprep.subr.mxu0 0.0
    %2643 = vmatpush1.msra.mxu0 0.0
    %2644 = vmatprep.subr.mxu0 0.0
    %2645 = vmatpush1.msra.mxu0 0.0
    %2646 = vmatprep.subr.mxu0 0.0
    %2647 = vmatpush1.msra.mxu0 0.0
    %2648 = vmatprep.subr.mxu0 0.0
    %2649 = vmatpush1.msra.mxu0 0.0
    %2650 = vmatprep.subr.mxu0 0.0
    %2651 = vmatpush1.msra.mxu0 0.0
    %2652 = vmatprep.subr.mxu0 0.0
    %2653 = vmatpush1.msra.mxu0 0.0
    %2654 = vmatprep.subr.mxu0 0.0
    %2655 = vmatpush1.msra.mxu0 0.0
    %2656 = vmatprep.subr.mxu0 0.0
    %2657 = vmatpush1.msra.mxu0 0.0
    %2658 = vmatprep.subr.mxu0 0.0
    %2659 = vmatpush1.msra.mxu0 0.0
    %2660 = vmatprep.subr.mxu0 0.0
    %2661 = vmatpush1.msra.mxu0 0.0
    %2662 = vmatprep.subr.mxu0 0.0
    %2663 = vmatpush1.msra.mxu0 0.0
    %2664 = vmatprep.subr.mxu0 0.0
    %2665 = vmatpush1.msra.mxu0 0.0
    %2666 = vmatprep.subr.mxu0 0.0
    %2667 = vmatpush1.msra.mxu0 0.0
    %2668 = vmatprep.subr.mxu0 0.0
    %2669 = vmatpush1.msra.mxu0 0.0
    %2670 = vmatprep.subr.mxu0 0.0
    %2671 = vmatpush1.msra.mxu0 0.0
    %2672 = vmatprep.subr.mxu0 0.0
    %2673 = vmatpush1.msra.mxu0 0.0
    %2674 = vmatprep.subr.mxu0 0.0
    %2675 = vmatpush1.msra.mxu0 0.0
    %2676 = vmatprep.mubr.f32.mxu0 0.0
    %2677 = vmatmul.mubr.f32.gmra.mrb[0].mxu0 %v2610
    %v2678 = vpop.f32.mrb[0].mxu0
    %v2679 = vadd.f32 0.0, %v2678
    %v2680 = vpop.f32.mrb[0].mxu0
    %v2681 = vadd.f32 0.0, %v2680
    %2682 = vdwg.mxu0
    %v2683 = vadd.f32 %v2607, %v2679
    %v2684 = vadd.f32 %v2608, %v2681
    %v2685 = vxor.u32 %v2683, 2147483648
    %v2686 = vmul.f32 %v2685, 1.442695
    %v2687 = vpow.pop %v2686
    %v2688 = vadd.f32 %v2687, 1.0
    %v2689 = vrcp.pop %v2688
    %v2690 = vmul.f32 1.0, %v2689
    %v2691 = vxor.u32 %v2684, 2147483648
    %v2692 = vmul.f32 %v2691, 1.442695
    %v2693 = vpow.pop %v2692
    %v2694 = vadd.f32 %v2693, 1.0
    %v2695 = vrcp.pop %v2694
    %v2696 = vmul.f32 1.0, %v2695
    %v2697 = vtanh.pop %v2684
    %v2698 = vmul.f32 %v2690, %v2598
    %v2699 = vmul.f32 %v2690, %v2697
    %2701 = vrot.lane.b32.xlu0 %v2699, 64
    %v2702 = vpop.permute.xlu0 %2701
    %v2704 = vadd.f32 %v2698, %v2702
    %v2705 = vtanh.pop %v2704
    %v2706 = vmul.f32 %v2696, %v2705
    %2707 = vst.msk [vmem:[#allocation2 + $0x38] sm:$0xff] %vm1963, %v2706
    %2708 = vst.msk [vmem:[#allocation2 + $0x40] sm:$0xff] %vm1965, %v2706
    %v2709 = vld [vmem:[#allocation3 + $0x80] sm:$0xff]
    %v2710 = vld [vmem:[#allocation3 + $0x88] sm:$0xff]
    %v2711 = vld [vmem:[#allocation3 + $0x70] sm:$0xff]
    %v2712 = vld [vmem:[#allocation3 + $0x78] sm:$0xff]
    %v2713 = vsel %vm1840, %v2709, %v2711
    %v2714 = vsel %vm1841, %v2710, %v2712
    %v2716 = vsel %vm1864, %v2706, 0
    %2718 = vmatprep.subr.mxu0 %v1843
    %2719 = vmatpush1.msra.mxu0 %v1842
    %2720 = vmatprep.subr.mxu0 %v1845
    %2721 = vmatpush1.msra.mxu0 %v1844
    %2722 = vmatprep.subr.mxu0 %v1847
    %2723 = vmatpush1.msra.mxu0 %v1846
    %2724 = vmatprep.subr.mxu0 %v1849
    %2725 = vmatpush1.msra.mxu0 %v1848
    %2726 = vmatprep.subr.mxu0 %v1851
    %2727 = vmatpush1.msra.mxu0 %v1850
    %2728 = vmatprep.subr.mxu0 %v1853
    %2729 = vmatpush1.msra.mxu0 %v1852
    %2730 = vmatprep.subr.mxu0 %v1855
    %2731 = vmatpush1.msra.mxu0 %v1854
    %2732 = vmatprep.subr.mxu0 %v1857
    %2733 = vmatpush1.msra.mxu0 %v1856
    %2734 = vmatprep.subr.mxu0 0.0
    %2735 = vmatpush1.msra.mxu0 0.0
    %2736 = vmatprep.subr.mxu0 0.0
    %2737 = vmatpush1.msra.mxu0 0.0
    %2738 = vmatprep.subr.mxu0 0.0
    %2739 = vmatpush1.msra.mxu0 0.0
    %2740 = vmatprep.subr.mxu0 0.0
    %2741 = vmatpush1.msra.mxu0 0.0
    %2742 = vmatprep.subr.mxu0 0.0
    %2743 = vmatpush1.msra.mxu0 0.0
    %2744 = vmatprep.subr.mxu0 0.0
    %2745 = vmatpush1.msra.mxu0 0.0
    %2746 = vmatprep.subr.mxu0 0.0
    %2747 = vmatpush1.msra.mxu0 0.0
    %2748 = vmatprep.subr.mxu0 0.0
    %2749 = vmatpush1.msra.mxu0 0.0
    %2750 = vmatprep.subr.mxu0 0.0
    %2751 = vmatpush1.msra.mxu0 0.0
    %2752 = vmatprep.subr.mxu0 0.0
    %2753 = vmatpush1.msra.mxu0 0.0
    %2754 = vmatprep.subr.mxu0 0.0
    %2755 = vmatpush1.msra.mxu0 0.0
    %2756 = vmatprep.subr.mxu0 0.0
    %2757 = vmatpush1.msra.mxu0 0.0
    %2758 = vmatprep.subr.mxu0 0.0
    %2759 = vmatpush1.msra.mxu0 0.0
    %2760 = vmatprep.subr.mxu0 0.0
    %2761 = vmatpush1.msra.mxu0 0.0
    %2762 = vmatprep.subr.mxu0 0.0
    %2763 = vmatpush1.msra.mxu0 0.0
    %2764 = vmatprep.subr.mxu0 0.0
    %2765 = vmatpush1.msra.mxu0 0.0
    %2766 = vmatprep.subr.mxu0 0.0
    %2767 = vmatpush1.msra.mxu0 0.0
    %2768 = vmatprep.subr.mxu0 0.0
    %2769 = vmatpush1.msra.mxu0 0.0
    %2770 = vmatprep.subr.mxu0 0.0
    %2771 = vmatpush1.msra.mxu0 0.0
    %2772 = vmatprep.subr.mxu0 0.0
    %2773 = vmatpush1.msra.mxu0 0.0
    %2774 = vmatprep.subr.mxu0 0.0
    %2775 = vmatpush1.msra.mxu0 0.0
    %2776 = vmatprep.subr.mxu0 0.0
    %2777 = vmatpush1.msra.mxu0 0.0
    %2778 = vmatprep.subr.mxu0 0.0
    %2779 = vmatpush1.msra.mxu0 0.0
    %2780 = vmatprep.subr.mxu0 0.0
    %2781 = vmatpush1.msra.mxu0 0.0
    %2782 = vmatprep.mubr.f32.mxu0 0.0
    %2783 = vmatmul.mubr.f32.gmra.mrb[0].mxu0 %v2716
    %v2784 = vpop.f32.mrb[0].mxu0
    %v2785 = vadd.f32 0.0, %v2784
    %v2786 = vpop.f32.mrb[0].mxu0
    %v2787 = vadd.f32 0.0, %v2786
    %2788 = vdwg.mxu0
    %v2789 = vadd.f32 %v2713, %v2785
    %v2790 = vadd.f32 %v2714, %v2787
    %v2791 = vxor.u32 %v2789, 2147483648
    %v2792 = vmul.f32 %v2791, 1.442695
    %v2793 = vpow.pop %v2792
    %v2794 = vadd.f32 %v2793, 1.0
    %v2795 = vrcp.pop %v2794
    %v2796 = vmul.f32 1.0, %v2795
    %v2797 = vxor.u32 %v2790, 2147483648
    %v2798 = vmul.f32 %v2797, 1.442695
    %v2799 = vpow.pop %v2798
    %v2800 = vadd.f32 %v2799, 1.0
    %v2801 = vrcp.pop %v2800
    %v2802 = vmul.f32 1.0, %v2801
    %v2803 = vtanh.pop %v2790
    %v2804 = vmul.f32 %v2796, %v2704
    %v2805 = vmul.f32 %v2796, %v2803
    %2807 = vrot.lane.b32.xlu0 %v2805, 64
    %v2808 = vpop.permute.xlu0 %2807
    %v2810 = vadd.f32 %v2804, %v2808
    %v2811 = vtanh.pop %v2810
    %v2812 = vmul.f32 %v2802, %v2811
    %2813 = vst.msk [vmem:[#allocation2 + $0x40] sm:$0xff] %vm1963, %v2812
    %2814 = vst.msk [vmem:[#allocation2 + $0x38] sm:$0xff] %vm1965, %v2812
    %v2815 = vld [vmem:[#allocation3 + $0x90] sm:$0xff]
    %v2816 = vld [vmem:[#allocation3 + $0x98] sm:$0xff]
    %v2817 = vld [vmem:[#allocation3 + $0x60] sm:$0xff]
    %v2818 = vld [vmem:[#allocation3 + $0x68] sm:$0xff]
    %v2819 = vsel %vm1840, %v2815, %v2817
    %v2820 = vsel %vm1841, %v2816, %v2818
    %v2822 = vsel %vm1864, %v2812, 0
    %2824 = vmatprep.subr.mxu0 %v1843
    %2825 = vmatpush1.msra.mxu0 %v1842
    %2826 = vmatprep.subr.mxu0 %v1845
    %2827 = vmatpush1.msra.mxu0 %v1844
    %2828 = vmatprep.subr.mxu0 %v1847
    %2829 = vmatpush1.msra.mxu0 %v1846
    %2830 = vmatprep.subr.mxu0 %v1849
    %2831 = vmatpush1.msra.mxu0 %v1848
    %2832 = vmatprep.subr.mxu0 %v1851
    %2833 = vmatpush1.msra.mxu0 %v1850
    %2834 = vmatprep.subr.mxu0 %v1853
    %2835 = vmatpush1.msra.mxu0 %v1852
    %2836 = vmatprep.subr.mxu0 %v1855
    %2837 = vmatpush1.msra.mxu0 %v1854
    %2838 = vmatprep.subr.mxu0 %v1857
    %2839 = vmatpush1.msra.mxu0 %v1856
    %2840 = vmatprep.subr.mxu0 0.0
    %2841 = vmatpush1.msra.mxu0 0.0
    %2842 = vmatprep.subr.mxu0 0.0
    %2843 = vmatpush1.msra.mxu0 0.0
    %2844 = vmatprep.subr.mxu0 0.0
    %2845 = vmatpush1.msra.mxu0 0.0
    %2846 = vmatprep.subr.mxu0 0.0
    %2847 = vmatpush1.msra.mxu0 0.0
    %2848 = vmatprep.subr.mxu0 0.0
    %2849 = vmatpush1.msra.mxu0 0.0
    %2850 = vmatprep.subr.mxu0 0.0
    %2851 = vmatpush1.msra.mxu0 0.0
    %2852 = vmatprep.subr.mxu0 0.0
    %2853 = vmatpush1.msra.mxu0 0.0
    %2854 = vmatprep.subr.mxu0 0.0
    %2855 = vmatpush1.msra.mxu0 0.0
    %2856 = vmatprep.subr.mxu0 0.0
    %2857 = vmatpush1.msra.mxu0 0.0
    %2858 = vmatprep.subr.mxu0 0.0
    %2859 = vmatpush1.msra.mxu0 0.0
    %2860 = vmatprep.subr.mxu0 0.0
    %2861 = vmatpush1.msra.mxu0 0.0
    %2862 = vmatprep.subr.mxu0 0.0
    %2863 = vmatpush1.msra.mxu0 0.0
    %2864 = vmatprep.subr.mxu0 0.0
    %2865 = vmatpush1.msra.mxu0 0.0
    %2866 = vmatprep.subr.mxu0 0.0
    %2867 = vmatpush1.msra.mxu0 0.0
    %2868 = vmatprep.subr.mxu0 0.0
    %2869 = vmatpush1.msra.mxu0 0.0
    %2870 = vmatprep.subr.mxu0 0.0
    %2871 = vmatpush1.msra.mxu0 0.0
    %2872 = vmatprep.subr.mxu0 0.0
    %2873 = vmatpush1.msra.mxu0 0.0
    %2874 = vmatprep.subr.mxu0 0.0
    %2875 = vmatpush1.msra.mxu0 0.0
    %2876 = vmatprep.subr.mxu0 0.0
    %2877 = vmatpush1.msra.mxu0 0.0
    %2878 = vmatprep.subr.mxu0 0.0
    %2879 = vmatpush1.msra.mxu0 0.0
    %2880 = vmatprep.subr.mxu0 0.0
    %2881 = vmatpush1.msra.mxu0 0.0
    %2882 = vmatprep.subr.mxu0 0.0
    %2883 = vmatpush1.msra.mxu0 0.0
    %2884 = vmatprep.subr.mxu0 0.0
    %2885 = vmatpush1.msra.mxu0 0.0
    %2886 = vmatprep.subr.mxu0 0.0
    %2887 = vmatpush1.msra.mxu0 0.0
    %2888 = vmatprep.mubr.f32.mxu0 0.0
    %2889 = vmatmul.mubr.f32.gmra.mrb[0].mxu0 %v2822
    %v2890 = vpop.f32.mrb[0].mxu0
    %v2891 = vadd.f32 0.0, %v2890
    %v2892 = vpop.f32.mrb[0].mxu0
    %v2893 = vadd.f32 0.0, %v2892
    %2894 = vdwg.mxu0
    %v2895 = vadd.f32 %v2819, %v2891
    %v2896 = vadd.f32 %v2820, %v2893
    %v2897 = vxor.u32 %v2895, 2147483648
    %v2898 = vmul.f32 %v2897, 1.442695
    %v2899 = vpow.pop %v2898
    %v2900 = vadd.f32 %v2899, 1.0
    %v2901 = vrcp.pop %v2900
    %v2902 = vmul.f32 1.0, %v2901
    %v2903 = vxor.u32 %v2896, 2147483648
    %v2904 = vmul.f32 %v2903, 1.442695
    %v2905 = vpow.pop %v2904
    %v2906 = vadd.f32 %v2905, 1.0
    %v2907 = vrcp.pop %v2906
    %v2908 = vmul.f32 1.0, %v2907
    %v2909 = vtanh.pop %v2896
    %v2910 = vmul.f32 %v2902, %v2810
    %v2911 = vmul.f32 %v2902, %v2909
    %2913 = vrot.lane.b32.xlu0 %v2911, 64
    %v2914 = vpop.permute.xlu0 %2913
    %v2916 = vadd.f32 %v2910, %v2914
    %v2917 = vtanh.pop %v2916
    %v2918 = vmul.f32 %v2908, %v2917
    %2919 = vst.msk [vmem:[#allocation2 + $0x48] sm:$0xff] %vm1963, %v2918
    %2920 = vst.msk [vmem:[#allocation2 + $0x30] sm:$0xff] %vm1965, %v2918
    %v2921 = vld [vmem:[#allocation3 + $0xa0] sm:$0xff]
    %v2922 = vld [vmem:[#allocation3 + $0xa8] sm:$0xff]
    %v2923 = vld [vmem:[#allocation3 + $0x50] sm:$0xff]
    %v2924 = vld [vmem:[#allocation3 + $0x58] sm:$0xff]
    %v2925 = vsel %vm1840, %v2921, %v2923
    %v2926 = vsel %vm1841, %v2922, %v2924
    %v2928 = vsel %vm1864, %v2918, 0
    %2930 = vmatprep.subr.mxu0 %v1843
    %2931 = vmatpush1.msra.mxu0 %v1842
    %2932 = vmatprep.subr.mxu0 %v1845
    %2933 = vmatpush1.msra.mxu0 %v1844
    %2934 = vmatprep.subr.mxu0 %v1847
    %2935 = vmatpush1.msra.mxu0 %v1846
    %2936 = vmatprep.subr.mxu0 %v1849
    %2937 = vmatpush1.msra.mxu0 %v1848
    %2938 = vmatprep.subr.mxu0 %v1851
    %2939 = vmatpush1.msra.mxu0 %v1850
    %2940 = vmatprep.subr.mxu0 %v1853
    %2941 = vmatpush1.msra.mxu0 %v1852
    %2942 = vmatprep.subr.mxu0 %v1855
    %2943 = vmatpush1.msra.mxu0 %v1854
    %2944 = vmatprep.subr.mxu0 %v1857
    %2945 = vmatpush1.msra.mxu0 %v1856
    %2946 = vmatprep.subr.mxu0 0.0
    %2947 = vmatpush1.msra.mxu0 0.0
    %2948 = vmatprep.subr.mxu0 0.0
    %2949 = vmatpush1.msra.mxu0 0.0
    %2950 = vmatprep.subr.mxu0 0.0
    %2951 = vmatpush1.msra.mxu0 0.0
    %2952 = vmatprep.subr.mxu0 0.0
    %2953 = vmatpush1.msra.mxu0 0.0
    %2954 = vmatprep.subr.mxu0 0.0
    %2955 = vmatpush1.msra.mxu0 0.0
    %2956 = vmatprep.subr.mxu0 0.0
    %2957 = vmatpush1.msra.mxu0 0.0
    %2958 = vmatprep.subr.mxu0 0.0
    %2959 = vmatpush1.msra.mxu0 0.0
    %2960 = vmatprep.subr.mxu0 0.0
    %2961 = vmatpush1.msra.mxu0 0.0
    %2962 = vmatprep.subr.mxu0 0.0
    %2963 = vmatpush1.msra.mxu0 0.0
    %2964 = vmatprep.subr.mxu0 0.0
    %2965 = vmatpush1.msra.mxu0 0.0
    %2966 = vmatprep.subr.mxu0 0.0
    %2967 = vmatpush1.msra.mxu0 0.0
    %2968 = vmatprep.subr.mxu0 0.0
    %2969 = vmatpush1.msra.mxu0 0.0
    %2970 = vmatprep.subr.mxu0 0.0
    %2971 = vmatpush1.msra.mxu0 0.0
    %2972 = vmatprep.subr.mxu0 0.0
    %2973 = vmatpush1.msra.mxu0 0.0
    %2974 = vmatprep.subr.mxu0 0.0
    %2975 = vmatpush1.msra.mxu0 0.0
    %2976 = vmatprep.subr.mxu0 0.0
    %2977 = vmatpush1.msra.mxu0 0.0
    %2978 = vmatprep.subr.mxu0 0.0
    %2979 = vmatpush1.msra.mxu0 0.0
    %2980 = vmatprep.subr.mxu0 0.0
    %2981 = vmatpush1.msra.mxu0 0.0
    %2982 = vmatprep.subr.mxu0 0.0
    %2983 = vmatpush1.msra.mxu0 0.0
    %2984 = vmatprep.subr.mxu0 0.0
    %2985 = vmatpush1.msra.mxu0 0.0
    %2986 = vmatprep.subr.mxu0 0.0
    %2987 = vmatpush1.msra.mxu0 0.0
    %2988 = vmatprep.subr.mxu0 0.0
    %2989 = vmatpush1.msra.mxu0 0.0
    %2990 = vmatprep.subr.mxu0 0.0
    %2991 = vmatpush1.msra.mxu0 0.0
    %2992 = vmatprep.subr.mxu0 0.0
    %2993 = vmatpush1.msra.mxu0 0.0
    %2994 = vmatprep.mubr.f32.mxu0 0.0
    %2995 = vmatmul.mubr.f32.gmra.mrb[0].mxu0 %v2928
    %v2996 = vpop.f32.mrb[0].mxu0
    %v2997 = vadd.f32 0.0, %v2996
    %v2998 = vpop.f32.mrb[0].mxu0
    %v2999 = vadd.f32 0.0, %v2998
    %3000 = vdwg.mxu0
    %v3001 = vadd.f32 %v2925, %v2997
    %v3002 = vadd.f32 %v2926, %v2999
    %v3003 = vxor.u32 %v3001, 2147483648
    %v3004 = vmul.f32 %v3003, 1.442695
    %v3005 = vpow.pop %v3004
    %v3006 = vadd.f32 %v3005, 1.0
    %v3007 = vrcp.pop %v3006
    %v3008 = vmul.f32 1.0, %v3007
    %v3009 = vxor.u32 %v3002, 2147483648
    %v3010 = vmul.f32 %v3009, 1.442695
    %v3011 = vpow.pop %v3010
    %v3012 = vadd.f32 %v3011, 1.0
    %v3013 = vrcp.pop %v3012
    %v3014 = vmul.f32 1.0, %v3013
    %v3015 = vtanh.pop %v3002
    %v3016 = vmul.f32 %v3008, %v2916
    %v3017 = vmul.f32 %v3008, %v3015
    %3019 = vrot.lane.b32.xlu0 %v3017, 64
    %v3020 = vpop.permute.xlu0 %3019
    %v3022 = vadd.f32 %v3016, %v3020
    %v3023 = vtanh.pop %v3022
    %v3024 = vmul.f32 %v3014, %v3023
    %3025 = vst.msk [vmem:[#allocation2 + $0x50] sm:$0xff] %vm1963, %v3024
    %3026 = vst.msk [vmem:[#allocation2 + $0x28] sm:$0xff] %vm1965, %v3024
    %v3027 = vld [vmem:[#allocation3 + $0xb0] sm:$0xff]
    %v3028 = vld [vmem:[#allocation3 + $0xb8] sm:$0xff]
    %v3029 = vld [vmem:[#allocation3 + $0x40] sm:$0xff]
    %v3030 = vld [vmem:[#allocation3 + $0x48] sm:$0xff]
    %v3031 = vsel %vm1840, %v3027, %v3029
    %v3032 = vsel %vm1841, %v3028, %v3030
    %v3034 = vsel %vm1864, %v3024, 0
    %3036 = vmatprep.subr.mxu0 %v1843
    %3037 = vmatpush1.msra.mxu0 %v1842
    %3038 = vmatprep.subr.mxu0 %v1845
    %3039 = vmatpush1.msra.mxu0 %v1844
    %3040 = vmatprep.subr.mxu0 %v1847
    %3041 = vmatpush1.msra.mxu0 %v1846
    %3042 = vmatprep.subr.mxu0 %v1849
    %3043 = vmatpush1.msra.mxu0 %v1848
    %3044 = vmatprep.subr.mxu0 %v1851
    %3045 = vmatpush1.msra.mxu0 %v1850
    %3046 = vmatprep.subr.mxu0 %v1853
    %3047 = vmatpush1.msra.mxu0 %v1852
    %3048 = vmatprep.subr.mxu0 %v1855
    %3049 = vmatpush1.msra.mxu0 %v1854
    %3050 = vmatprep.subr.mxu0 %v1857
    %3051 = vmatpush1.msra.mxu0 %v1856
    %3052 = vmatprep.subr.mxu0 0.0
    %3053 = vmatpush1.msra.mxu0 0.0
    %3054 = vmatprep.subr.mxu0 0.0
    %3055 = vmatpush1.msra.mxu0 0.0
    %3056 = vmatprep.subr.mxu0 0.0
    %3057 = vmatpush1.msra.mxu0 0.0
    %3058 = vmatprep.subr.mxu0 0.0
    %3059 = vmatpush1.msra.mxu0 0.0
    %3060 = vmatprep.subr.mxu0 0.0
    %3061 = vmatpush1.msra.mxu0 0.0
    %3062 = vmatprep.subr.mxu0 0.0
    %3063 = vmatpush1.msra.mxu0 0.0
    %3064 = vmatprep.subr.mxu0 0.0
    %3065 = vmatpush1.msra.mxu0 0.0
    %3066 = vmatprep.subr.mxu0 0.0
    %3067 = vmatpush1.msra.mxu0 0.0
    %3068 = vmatprep.subr.mxu0 0.0
    %3069 = vmatpush1.msra.mxu0 0.0
    %3070 = vmatprep.subr.mxu0 0.0
    %3071 = vmatpush1.msra.mxu0 0.0
    %3072 = vmatprep.subr.mxu0 0.0
    %3073 = vmatpush1.msra.mxu0 0.0
    %3074 = vmatprep.subr.mxu0 0.0
    %3075 = vmatpush1.msra.mxu0 0.0
    %3076 = vmatprep.subr.mxu0 0.0
    %3077 = vmatpush1.msra.mxu0 0.0
    %3078 = vmatprep.subr.mxu0 0.0
    %3079 = vmatpush1.msra.mxu0 0.0
    %3080 = vmatprep.subr.mxu0 0.0
    %3081 = vmatpush1.msra.mxu0 0.0
    %3082 = vmatprep.subr.mxu0 0.0
    %3083 = vmatpush1.msra.mxu0 0.0
    %3084 = vmatprep.subr.mxu0 0.0
    %3085 = vmatpush1.msra.mxu0 0.0
    %3086 = vmatprep.subr.mxu0 0.0
    %3087 = vmatpush1.msra.mxu0 0.0
    %3088 = vmatprep.subr.mxu0 0.0
    %3089 = vmatpush1.msra.mxu0 0.0
    %3090 = vmatprep.subr.mxu0 0.0
    %3091 = vmatpush1.msra.mxu0 0.0
    %3092 = vmatprep.subr.mxu0 0.0
    %3093 = vmatpush1.msra.mxu0 0.0
    %3094 = vmatprep.subr.mxu0 0.0
    %3095 = vmatpush1.msra.mxu0 0.0
    %3096 = vmatprep.subr.mxu0 0.0
    %3097 = vmatpush1.msra.mxu0 0.0
    %3098 = vmatprep.subr.mxu0 0.0
    %3099 = vmatpush1.msra.mxu0 0.0
    %3100 = vmatprep.mubr.f32.mxu0 0.0
    %3101 = vmatmul.mubr.f32.gmra.mrb[0].mxu0 %v3034
    %v3102 = vpop.f32.mrb[0].mxu0
    %v3103 = vadd.f32 0.0, %v3102
    %v3104 = vpop.f32.mrb[0].mxu0
    %v3105 = vadd.f32 0.0, %v3104
    %3106 = vdwg.mxu0
    %v3107 = vadd.f32 %v3031, %v3103
    %v3108 = vadd.f32 %v3032, %v3105
    %v3109 = vxor.u32 %v3107, 2147483648
    %v3110 = vmul.f32 %v3109, 1.442695
    %v3111 = vpow.pop %v3110
    %v3112 = vadd.f32 %v3111, 1.0
    %v3113 = vrcp.pop %v3112
    %v3114 = vmul.f32 1.0, %v3113
    %v3115 = vxor.u32 %v3108, 2147483648
    %v3116 = vmul.f32 %v3115, 1.442695
    %v3117 = vpow.pop %v3116
    %v3118 = vadd.f32 %v3117, 1.0
    %v3119 = vrcp.pop %v3118
    %v3120 = vmul.f32 1.0, %v3119
    %v3121 = vtanh.pop %v3108
    %v3122 = vmul.f32 %v3114, %v3022
    %v3123 = vmul.f32 %v3114, %v3121
    %3125 = vrot.lane.b32.xlu0 %v3123, 64
    %v3126 = vpop.permute.xlu0 %3125
    %v3128 = vadd.f32 %v3122, %v3126
    %v3129 = vtanh.pop %v3128
    %v3130 = vmul.f32 %v3120, %v3129
    %3131 = vst.msk [vmem:[#allocation2 + $0x58] sm:$0xff] %vm1963, %v3130
    %3132 = vst.msk [vmem:[#allocation2 + $0x20] sm:$0xff] %vm1965, %v3130
    %v3133 = vld [vmem:[#allocation3 + $0xc0] sm:$0xff]
    %v3134 = vld [vmem:[#allocation3 + $0xc8] sm:$0xff]
    %v3135 = vld [vmem:[#allocation3 + $0x30] sm:$0xff]
    %v3136 = vld [vmem:[#allocation3 + $0x38] sm:$0xff]
    %v3137 = vsel %vm1840, %v3133, %v3135
    %v3138 = vsel %vm1841, %v3134, %v3136
    %v3140 = vsel %vm1864, %v3130, 0
    %3142 = vmatprep.subr.mxu0 %v1843
    %3143 = vmatpush1.msra.mxu0 %v1842
    %3144 = vmatprep.subr.mxu0 %v1845
    %3145 = vmatpush1.msra.mxu0 %v1844
    %3146 = vmatprep.subr.mxu0 %v1847
    %3147 = vmatpush1.msra.mxu0 %v1846
    %3148 = vmatprep.subr.mxu0 %v1849
    %3149 = vmatpush1.msra.mxu0 %v1848
    %3150 = vmatprep.subr.mxu0 %v1851
    %3151 = vmatpush1.msra.mxu0 %v1850
    %3152 = vmatprep.subr.mxu0 %v1853
    %3153 = vmatpush1.msra.mxu0 %v1852
    %3154 = vmatprep.subr.mxu0 %v1855
    %3155 = vmatpush1.msra.mxu0 %v1854
    %3156 = vmatprep.subr.mxu0 %v1857
    %3157 = vmatpush1.msra.mxu0 %v1856
    %3158 = vmatprep.subr.mxu0 0.0
    %3159 = vmatpush1.msra.mxu0 0.0
    %3160 = vmatprep.subr.mxu0 0.0
    %3161 = vmatpush1.msra.mxu0 0.0
    %3162 = vmatprep.subr.mxu0 0.0
    %3163 = vmatpush1.msra.mxu0 0.0
    %3164 = vmatprep.subr.mxu0 0.0
    %3165 = vmatpush1.msra.mxu0 0.0
    %3166 = vmatprep.subr.mxu0 0.0
    %3167 = vmatpush1.msra.mxu0 0.0
    %3168 = vmatprep.subr.mxu0 0.0
    %3169 = vmatpush1.msra.mxu0 0.0
    %3170 = vmatprep.subr.mxu0 0.0
    %3171 = vmatpush1.msra.mxu0 0.0
    %3172 = vmatprep.subr.mxu0 0.0
    %3173 = vmatpush1.msra.mxu0 0.0
    %3174 = vmatprep.subr.mxu0 0.0
    %3175 = vmatpush1.msra.mxu0 0.0
    %3176 = vmatprep.subr.mxu0 0.0
    %3177 = vmatpush1.msra.mxu0 0.0
    %3178 = vmatprep.subr.mxu0 0.0
    %3179 = vmatpush1.msra.mxu0 0.0
    %3180 = vmatprep.subr.mxu0 0.0
    %3181 = vmatpush1.msra.mxu0 0.0
    %3182 = vmatprep.subr.mxu0 0.0
    %3183 = vmatpush1.msra.mxu0 0.0
    %3184 = vmatprep.subr.mxu0 0.0
    %3185 = vmatpush1.msra.mxu0 0.0
    %3186 = vmatprep.subr.mxu0 0.0
    %3187 = vmatpush1.msra.mxu0 0.0
    %3188 = vmatprep.subr.mxu0 0.0
    %3189 = vmatpush1.msra.mxu0 0.0
    %3190 = vmatprep.subr.mxu0 0.0
    %3191 = vmatpush1.msra.mxu0 0.0
    %3192 = vmatprep.subr.mxu0 0.0
    %3193 = vmatpush1.msra.mxu0 0.0
    %3194 = vmatprep.subr.mxu0 0.0
    %3195 = vmatpush1.msra.mxu0 0.0
    %3196 = vmatprep.subr.mxu0 0.0
    %3197 = vmatpush1.msra.mxu0 0.0
    %3198 = vmatprep.subr.mxu0 0.0
    %3199 = vmatpush1.msra.mxu0 0.0
    %3200 = vmatprep.subr.mxu0 0.0
    %3201 = vmatpush1.msra.mxu0 0.0
    %3202 = vmatprep.subr.mxu0 0.0
    %3203 = vmatpush1.msra.mxu0 0.0
    %3204 = vmatprep.subr.mxu0 0.0
    %3205 = vmatpush1.msra.mxu0 0.0
    %3206 = vmatprep.mubr.f32.mxu0 0.0
    %3207 = vmatmul.mubr.f32.gmra.mrb[0].mxu0 %v3140
    %v3208 = vpop.f32.mrb[0].mxu0
    %v3209 = vadd.f32 0.0, %v3208
    %v3210 = vpop.f32.mrb[0].mxu0
    %v3211 = vadd.f32 0.0, %v3210
    %3212 = vdwg.mxu0
    %v3213 = vadd.f32 %v3137, %v3209
    %v3214 = vadd.f32 %v3138, %v3211
    %v3215 = vxor.u32 %v3213, 2147483648
    %v3216 = vmul.f32 %v3215, 1.442695
    %v3217 = vpow.pop %v3216
    %v3218 = vadd.f32 %v3217, 1.0
    %v3219 = vrcp.pop %v3218
    %v3220 = vmul.f32 1.0, %v3219
    %v3221 = vxor.u32 %v3214, 2147483648
    %v3222 = vmul.f32 %v3221, 1.442695
    %v3223 = vpow.pop %v3222
    %v3224 = vadd.f32 %v3223, 1.0
    %v3225 = vrcp.pop %v3224
    %v3226 = vmul.f32 1.0, %v3225
    %v3227 = vtanh.pop %v3214
    %v3228 = vmul.f32 %v3220, %v3128
    %v3229 = vmul.f32 %v3220, %v3227
    %3231 = vrot.lane.b32.xlu0 %v3229, 64
    %v3232 = vpop.permute.xlu0 %3231
    %v3234 = vadd.f32 %v3228, %v3232
    %v3235 = vtanh.pop %v3234
    %v3236 = vmul.f32 %v3226, %v3235
    %3237 = vst.msk [vmem:[#allocation2 + $0x60] sm:$0xff] %vm1963, %v3236
    %3238 = vst.msk [vmem:[#allocation2 + $0x18] sm:$0xff] %vm1965, %v3236
    %v3239 = vld [vmem:[#allocation3 + $0xd0] sm:$0xff]
    %v3240 = vld [vmem:[#allocation3 + $0xd8] sm:$0xff]
    %v3241 = vld [vmem:[#allocation3 + $0x20] sm:$0xff]
    %v3242 = vld [vmem:[#allocation3 + $0x28] sm:$0xff]
    %v3243 = vsel %vm1840, %v3239, %v3241
    %v3244 = vsel %vm1841, %v3240, %v3242
    %v3246 = vsel %vm1864, %v3236, 0
    %3248 = vmatprep.subr.mxu0 %v1843
    %3249 = vmatpush1.msra.mxu0 %v1842
    %3250 = vmatprep.subr.mxu0 %v1845
    %3251 = vmatpush1.msra.mxu0 %v1844
    %3252 = vmatprep.subr.mxu0 %v1847
    %3253 = vmatpush1.msra.mxu0 %v1846
    %3254 = vmatprep.subr.mxu0 %v1849
    %3255 = vmatpush1.msra.mxu0 %v1848
    %3256 = vmatprep.subr.mxu0 %v1851
    %3257 = vmatpush1.msra.mxu0 %v1850
    %3258 = vmatprep.subr.mxu0 %v1853
    %3259 = vmatpush1.msra.mxu0 %v1852
    %3260 = vmatprep.subr.mxu0 %v1855
    %3261 = vmatpush1.msra.mxu0 %v1854
    %3262 = vmatprep.subr.mxu0 %v1857
    %3263 = vmatpush1.msra.mxu0 %v1856
    %3264 = vmatprep.subr.mxu0 0.0
    %3265 = vmatpush1.msra.mxu0 0.0
    %3266 = vmatprep.subr.mxu0 0.0
    %3267 = vmatpush1.msra.mxu0 0.0
    %3268 = vmatprep.subr.mxu0 0.0
    %3269 = vmatpush1.msra.mxu0 0.0
    %3270 = vmatprep.subr.mxu0 0.0
    %3271 = vmatpush1.msra.mxu0 0.0
    %3272 = vmatprep.subr.mxu0 0.0
    %3273 = vmatpush1.msra.mxu0 0.0
    %3274 = vmatprep.subr.mxu0 0.0
    %3275 = vmatpush1.msra.mxu0 0.0
    %3276 = vmatprep.subr.mxu0 0.0
    %3277 = vmatpush1.msra.mxu0 0.0
    %3278 = vmatprep.subr.mxu0 0.0
    %3279 = vmatpush1.msra.mxu0 0.0
    %3280 = vmatprep.subr.mxu0 0.0
    %3281 = vmatpush1.msra.mxu0 0.0
    %3282 = vmatprep.subr.mxu0 0.0
    %3283 = vmatpush1.msra.mxu0 0.0
    %3284 = vmatprep.subr.mxu0 0.0
    %3285 = vmatpush1.msra.mxu0 0.0
    %3286 = vmatprep.subr.mxu0 0.0
    %3287 = vmatpush1.msra.mxu0 0.0
    %3288 = vmatprep.subr.mxu0 0.0
    %3289 = vmatpush1.msra.mxu0 0.0
    %3290 = vmatprep.subr.mxu0 0.0
    %3291 = vmatpush1.msra.mxu0 0.0
    %3292 = vmatprep.subr.mxu0 0.0
    %3293 = vmatpush1.msra.mxu0 0.0
    %3294 = vmatprep.subr.mxu0 0.0
    %3295 = vmatpush1.msra.mxu0 0.0
    %3296 = vmatprep.subr.mxu0 0.0
    %3297 = vmatpush1.msra.mxu0 0.0
    %3298 = vmatprep.subr.mxu0 0.0
    %3299 = vmatpush1.msra.mxu0 0.0
    %3300 = vmatprep.subr.mxu0 0.0
    %3301 = vmatpush1.msra.mxu0 0.0
    %3302 = vmatprep.subr.mxu0 0.0
    %3303 = vmatpush1.msra.mxu0 0.0
    %3304 = vmatprep.subr.mxu0 0.0
    %3305 = vmatpush1.msra.mxu0 0.0
    %3306 = vmatprep.subr.mxu0 0.0
    %3307 = vmatpush1.msra.mxu0 0.0
    %3308 = vmatprep.subr.mxu0 0.0
    %3309 = vmatpush1.msra.mxu0 0.0
    %3310 = vmatprep.subr.mxu0 0.0
    %3311 = vmatpush1.msra.mxu0 0.0
    %3312 = vmatprep.mubr.f32.mxu0 0.0
    %3313 = vmatmul.mubr.f32.gmra.mrb[0].mxu0 %v3246
    %v3314 = vpop.f32.mrb[0].mxu0
    %v3315 = vadd.f32 0.0, %v3314
    %v3316 = vpop.f32.mrb[0].mxu0
    %v3317 = vadd.f32 0.0, %v3316
    %3318 = vdwg.mxu0
    %v3319 = vadd.f32 %v3243, %v3315
    %v3320 = vadd.f32 %v3244, %v3317
    %v3321 = vxor.u32 %v3319, 2147483648
    %v3322 = vmul.f32 %v3321, 1.442695
    %v3323 = vpow.pop %v3322
    %v3324 = vadd.f32 %v3323, 1.0
    %v3325 = vrcp.pop %v3324
    %v3326 = vmul.f32 1.0, %v3325
    %v3327 = vxor.u32 %v3320, 2147483648
    %v3328 = vmul.f32 %v3327, 1.442695
    %v3329 = vpow.pop %v3328
    %v3330 = vadd.f32 %v3329, 1.0
    %v3331 = vrcp.pop %v3330
    %v3332 = vmul.f32 1.0, %v3331
    %v3333 = vtanh.pop %v3320
    %v3334 = vmul.f32 %v3326, %v3234
    %v3335 = vmul.f32 %v3326, %v3333
    %3337 = vrot.lane.b32.xlu0 %v3335, 64
    %v3338 = vpop.permute.xlu0 %3337
    %v3340 = vadd.f32 %v3334, %v3338
    %v3341 = vtanh.pop %v3340
    %v3342 = vmul.f32 %v3332, %v3341
    %3343 = vst.msk [vmem:[#allocation2 + $0x68] sm:$0xff] %vm1963, %v3342
    %3344 = vst.msk [vmem:[#allocation2 + $0x10] sm:$0xff] %vm1965, %v3342
    %v3345 = vld [vmem:[#allocation3 + $0xe0] sm:$0xff]
    %v3346 = vld [vmem:[#allocation3 + $0xe8] sm:$0xff]
    %v3347 = vld [vmem:[#allocation3 + $0x10] sm:$0xff]
    %v3348 = vld [vmem:[#allocation3 + $0x18] sm:$0xff]
    %v3349 = vsel %vm1840, %v3345, %v3347
    %v3350 = vsel %vm1841, %v3346, %v3348
    %v3352 = vsel %vm1864, %v3342, 0
    %3354 = vmatprep.subr.mxu0 %v1843
    %3355 = vmatpush1.msra.mxu0 %v1842
    %3356 = vmatprep.subr.mxu0 %v1845
    %3357 = vmatpush1.msra.mxu0 %v1844
    %3358 = vmatprep.subr.mxu0 %v1847
    %3359 = vmatpush1.msra.mxu0 %v1846
    %3360 = vmatprep.subr.mxu0 %v1849
    %3361 = vmatpush1.msra.mxu0 %v1848
    %3362 = vmatprep.subr.mxu0 %v1851
    %3363 = vmatpush1.msra.mxu0 %v1850
    %3364 = vmatprep.subr.mxu0 %v1853
    %3365 = vmatpush1.msra.mxu0 %v1852
    %3366 = vmatprep.subr.mxu0 %v1855
    %3367 = vmatpush1.msra.mxu0 %v1854
    %3368 = vmatprep.subr.mxu0 %v1857
    %3369 = vmatpush1.msra.mxu0 %v1856
    %3370 = vmatprep.subr.mxu0 0.0
    %3371 = vmatpush1.msra.mxu0 0.0
    %3372 = vmatprep.subr.mxu0 0.0
    %3373 = vmatpush1.msra.mxu0 0.0
    %3374 = vmatprep.subr.mxu0 0.0
    %3375 = vmatpush1.msra.mxu0 0.0
    %3376 = vmatprep.subr.mxu0 0.0
    %3377 = vmatpush1.msra.mxu0 0.0
    %3378 = vmatprep.subr.mxu0 0.0
    %3379 = vmatpush1.msra.mxu0 0.0
    %3380 = vmatprep.subr.mxu0 0.0
    %3381 = vmatpush1.msra.mxu0 0.0
    %3382 = vmatprep.subr.mxu0 0.0
    %3383 = vmatpush1.msra.mxu0 0.0
    %3384 = vmatprep.subr.mxu0 0.0
    %3385 = vmatpush1.msra.mxu0 0.0
    %3386 = vmatprep.subr.mxu0 0.0
    %3387 = vmatpush1.msra.mxu0 0.0
    %3388 = vmatprep.subr.mxu0 0.0
    %3389 = vmatpush1.msra.mxu0 0.0
    %3390 = vmatprep.subr.mxu0 0.0
    %3391 = vmatpush1.msra.mxu0 0.0
    %3392 = vmatprep.subr.mxu0 0.0
    %3393 = vmatpush1.msra.mxu0 0.0
    %3394 = vmatprep.subr.mxu0 0.0
    %3395 = vmatpush1.msra.mxu0 0.0
    %3396 = vmatprep.subr.mxu0 0.0
    %3397 = vmatpush1.msra.mxu0 0.0
    %3398 = vmatprep.subr.mxu0 0.0
    %3399 = vmatpush1.msra.mxu0 0.0
    %3400 = vmatprep.subr.mxu0 0.0
    %3401 = vmatpush1.msra.mxu0 0.0
    %3402 = vmatprep.subr.mxu0 0.0
    %3403 = vmatpush1.msra.mxu0 0.0
    %3404 = vmatprep.subr.mxu0 0.0
    %3405 = vmatpush1.msra.mxu0 0.0
    %3406 = vmatprep.subr.mxu0 0.0
    %3407 = vmatpush1.msra.mxu0 0.0
    %3408 = vmatprep.subr.mxu0 0.0
    %3409 = vmatpush1.msra.mxu0 0.0
    %3410 = vmatprep.subr.mxu0 0.0
    %3411 = vmatpush1.msra.mxu0 0.0
    %3412 = vmatprep.subr.mxu0 0.0
    %3413 = vmatpush1.msra.mxu0 0.0
    %3414 = vmatprep.subr.mxu0 0.0
    %3415 = vmatpush1.msra.mxu0 0.0
    %3416 = vmatprep.subr.mxu0 0.0
    %3417 = vmatpush1.msra.mxu0 0.0
    %3418 = vmatprep.mubr.f32.mxu0 0.0
    %3419 = vmatmul.mubr.f32.gmra.mrb[0].mxu0 %v3352
    %v3420 = vpop.f32.mrb[0].mxu0
    %v3421 = vadd.f32 0.0, %v3420
    %v3422 = vpop.f32.mrb[0].mxu0
    %v3423 = vadd.f32 0.0, %v3422
    %3424 = vdwg.mxu0
    %v3425 = vadd.f32 %v3349, %v3421
    %v3426 = vadd.f32 %v3350, %v3423
    %v3427 = vxor.u32 %v3425, 2147483648
    %v3428 = vmul.f32 %v3427, 1.442695
    %v3429 = vpow.pop %v3428
    %v3430 = vadd.f32 %v3429, 1.0
    %v3431 = vrcp.pop %v3430
    %v3432 = vmul.f32 1.0, %v3431
    %v3433 = vxor.u32 %v3426, 2147483648
    %v3434 = vmul.f32 %v3433, 1.442695
    %v3435 = vpow.pop %v3434
    %v3436 = vadd.f32 %v3435, 1.0
    %v3437 = vrcp.pop %v3436
    %v3438 = vmul.f32 1.0, %v3437
    %v3439 = vtanh.pop %v3426
    %v3440 = vmul.f32 %v3432, %v3340
    %v3441 = vmul.f32 %v3432, %v3439
    %3443 = vrot.lane.b32.xlu0 %v3441, 64
    %v3444 = vpop.permute.xlu0 %3443
    %v3446 = vadd.f32 %v3440, %v3444
    %v3447 = vtanh.pop %v3446
    %v3448 = vmul.f32 %v3438, %v3447
    %3449 = vst.msk [vmem:[#allocation2 + $0x70] sm:$0xff] %vm1963, %v3448
    %3450 = vst.msk [vmem:[#allocation2 + $0x8] sm:$0xff] %vm1965, %v3448
    %v3451 = vld [vmem:[#allocation3 + $0xf0] sm:$0xff]
    %v3452 = vld [vmem:[#allocation3 + $0xf8] sm:$0xff]
    %v3453 = vld [vmem:[#allocation3] sm:$0xff]
    %v3454 = vld [vmem:[#allocation3 + $0x8] sm:$0xff]
    %v3455 = vsel %vm1840, %v3451, %v3453
    %v3456 = vsel %vm1841, %v3452, %v3454
    %v3458 = vsel %vm1864, %v3448, 0
    %3460 = vmatprep.subr.mxu0 %v1843
    %3461 = vmatpush1.msra.mxu0 %v1842
    %3462 = vmatprep.subr.mxu0 %v1845
    %3463 = vmatpush1.msra.mxu0 %v1844
    %3464 = vmatprep.subr.mxu0 %v1847
    %3465 = vmatpush1.msra.mxu0 %v1846
    %3466 = vmatprep.subr.mxu0 %v1849
    %3467 = vmatpush1.msra.mxu0 %v1848
    %3468 = vmatprep.subr.mxu0 %v1851
    %3469 = vmatpush1.msra.mxu0 %v1850
    %3470 = vmatprep.subr.mxu0 %v1853
    %3471 = vmatpush1.msra.mxu0 %v1852
    %3472 = vmatprep.subr.mxu0 %v1855
    %3473 = vmatpush1.msra.mxu0 %v1854
    %3474 = vmatprep.subr.mxu0 %v1857
    %3475 = vmatpush1.msra.mxu0 %v1856
    %3476 = vmatprep.subr.mxu0 0.0
    %3477 = vmatpush1.msra.mxu0 0.0
    %3478 = vmatprep.subr.mxu0 0.0
    %3479 = vmatpush1.msra.mxu0 0.0
    %3480 = vmatprep.subr.mxu0 0.0
    %3481 = vmatpush1.msra.mxu0 0.0
    %3482 = vmatprep.subr.mxu0 0.0
    %3483 = vmatpush1.msra.mxu0 0.0
    %3484 = vmatprep.subr.mxu0 0.0
    %3485 = vmatpush1.msra.mxu0 0.0
    %3486 = vmatprep.subr.mxu0 0.0
    %3487 = vmatpush1.msra.mxu0 0.0
    %3488 = vmatprep.subr.mxu0 0.0
    %3489 = vmatpush1.msra.mxu0 0.0
    %3490 = vmatprep.subr.mxu0 0.0
    %3491 = vmatpush1.msra.mxu0 0.0
    %3492 = vmatprep.subr.mxu0 0.0
    %3493 = vmatpush1.msra.mxu0 0.0
    %3494 = vmatprep.subr.mxu0 0.0
    %3495 = vmatpush1.msra.mxu0 0.0
    %3496 = vmatprep.subr.mxu0 0.0
    %3497 = vmatpush1.msra.mxu0 0.0
    %3498 = vmatprep.subr.mxu0 0.0
    %3499 = vmatpush1.msra.mxu0 0.0
    %3500 = vmatprep.subr.mxu0 0.0
    %3501 = vmatpush1.msra.mxu0 0.0
    %3502 = vmatprep.subr.mxu0 0.0
    %3503 = vmatpush1.msra.mxu0 0.0
    %3504 = vmatprep.subr.mxu0 0.0
    %3505 = vmatpush1.msra.mxu0 0.0
    %3506 = vmatprep.subr.mxu0 0.0
    %3507 = vmatpush1.msra.mxu0 0.0
    %3508 = vmatprep.subr.mxu0 0.0
    %3509 = vmatpush1.msra.mxu0 0.0
    %3510 = vmatprep.subr.mxu0 0.0
    %3511 = vmatpush1.msra.mxu0 0.0
    %3512 = vmatprep.subr.mxu0 0.0
    %3513 = vmatpush1.msra.mxu0 0.0
    %3514 = vmatprep.subr.mxu0 0.0
    %3515 = vmatpush1.msra.mxu0 0.0
    %3516 = vmatprep.subr.mxu0 0.0
    %3517 = vmatpush1.msra.mxu0 0.0
    %3518 = vmatprep.subr.mxu0 0.0
    %3519 = vmatpush1.msra.mxu0 0.0
    %3520 = vmatprep.subr.mxu0 0.0
    %3521 = vmatpush1.msra.mxu0 0.0
    %3522 = vmatprep.subr.mxu0 0.0
    %3523 = vmatpush1.msra.mxu0 0.0
    %3524 = vmatprep.mubr.f32.mxu0 0.0
    %3525 = vmatmul.mubr.f32.gmra.mrb[0].mxu0 %v3458
    %v3526 = vpop.f32.mrb[0].mxu0
    %v3527 = vadd.f32 0.0, %v3526
    %v3528 = vpop.f32.mrb[0].mxu0
    %v3529 = vadd.f32 0.0, %v3528
    %3530 = vdwg.mxu0
    %v3531 = vadd.f32 %v3455, %v3527
    %v3532 = vadd.f32 %v3456, %v3529
    %v3533 = vxor.u32 %v3531, 2147483648
    %v3534 = vmul.f32 %v3533, 1.442695
    %v3535 = vpow.pop %v3534
    %v3536 = vadd.f32 %v3535, 1.0
    %v3537 = vrcp.pop %v3536
    %v3538 = vmul.f32 1.0, %v3537
    %v3539 = vxor.u32 %v3532, 2147483648
    %v3540 = vmul.f32 %v3539, 1.442695
    %v3541 = vpow.pop %v3540
    %v3542 = vadd.f32 %v3541, 1.0
    %v3543 = vrcp.pop %v3542
    %v3544 = vmul.f32 1.0, %v3543
    %v3545 = vtanh.pop %v3532
    %v3546 = vmul.f32 %v3538, %v3446
    %v3547 = vmul.f32 %v3538, %v3545
    %3549 = vrot.lane.b32.xlu0 %v3547, 64
    %v3550 = vpop.permute.xlu0 %3549
    %v3552 = vadd.f32 %v3546, %v3550
    %v3553 = vtanh.pop %v3552
    %v3554 = vmul.f32 %v3544, %v3553
    %3555 = vst.msk [vmem:[#allocation2 + $0x78] sm:$0xff] %vm1963, %v3554
    %3556 = vst.msk [vmem:[#allocation2] sm:$0xff] %vm1965, %v3554
    %v3557 = vld [vmem:[#allocation2] sm:$0xff]
    %v3558 = vld [vmem:[#allocation2 + $0x8] sm:$0xff]
    %v3559 = vld [vmem:[#allocation2 + $0x10] sm:$0xff]
    %v3560 = vld [vmem:[#allocation2 + $0x18] sm:$0xff]
    %v3561 = vld [vmem:[#allocation2 + $0x20] sm:$0xff]
    %v3562 = vld [vmem:[#allocation2 + $0x28] sm:$0xff]
    %v3563 = vld [vmem:[#allocation2 + $0x30] sm:$0xff]
    %v3564 = vld [vmem:[#allocation2 + $0x38] sm:$0xff]
    %v3565 = vld [vmem:[#allocation2 + $0x40] sm:$0xff]
    %v3566 = vld [vmem:[#allocation2 + $0x48] sm:$0xff]
    %v3567 = vld [vmem:[#allocation2 + $0x50] sm:$0xff]
    %v3568 = vld [vmem:[#allocation2 + $0x58] sm:$0xff]
    %v3569 = vld [vmem:[#allocation2 + $0x60] sm:$0xff]
    %v3570 = vld [vmem:[#allocation2 + $0x68] sm:$0xff]
    %v3571 = vld [vmem:[#allocation2 + $0x70] sm:$0xff]
    %v3572 = vld [vmem:[#allocation2 + $0x78] sm:$0xff]
    %v3573 = vpack.c.bf16 %v3558, %v3557
    %v3574 = vpack.c.bf16 %v3560, %v3559
    %v3575 = vpack.c.bf16 %v3562, %v3561
    %v3576 = vpack.c.bf16 %v3564, %v3563
    %v3577 = vpack.c.bf16 %v3566, %v3565
    %v3578 = vpack.c.bf16 %v3568, %v3567
    %v3579 = vpack.c.bf16 %v3570, %v3569
    %v3580 = vpack.c.bf16 %v3572, %v3571
    %v3581 = vld [vmem:[#allocation7] sm:$0xff]
    %v3582 = vld [vmem:[#allocation7 + $0x8] sm:$0xff]
    %v3583 = vld [vmem:[#allocation7 + $0x10] sm:$0xff]
    %v3584 = vld [vmem:[#allocation7 + $0x18] sm:$0xff]
    %v3585 = vld [vmem:[#allocation7 + $0x20] sm:$0xff]
    %v3586 = vld [vmem:[#allocation7 + $0x28] sm:$0xff]
    %v3587 = vld [vmem:[#allocation7 + $0x30] sm:$0xff]
    %v3588 = vld [vmem:[#allocation7 + $0x38] sm:$0xff]
    %v3589 = vld [vmem:[#allocation9] sm:$0x3]
    %v3591 = vlaneseq
    %v3592 = vshrl.u32 %v3591, 7
    %v3593 = vsub.s32 0, %v3592
    %v3594 = vrot.slane %v3589, %v3593
    %v3595 = vlaneseq
    %v3596 = vshrl.u32 %v3595, 7
    %v3597 = vsub.s32 1, %v3596
    %v3598 = vrot.slane %v3589, %v3597
    %v3609 = vunpack.c.l.b16 %v3581
    %v3610 = vunpack.c.h.b16 %v3581
    %v3611 = vunpack.c.l.b16 %v3582
    %v3612 = vunpack.c.h.b16 %v3582
    %v3613 = vunpack.c.l.b16 %v3583
    %v3614 = vunpack.c.h.b16 %v3583
    %v3615 = vunpack.c.l.b16 %v3584
    %v3616 = vunpack.c.h.b16 %v3584
    %v3617 = vunpack.c.l.b16 %v3585
    %v3618 = vunpack.c.h.b16 %v3585
    %v3619 = vunpack.c.l.b16 %v3586
    %v3620 = vunpack.c.h.b16 %v3586
    %v3621 = vunpack.c.l.b16 %v3587
    %v3622 = vunpack.c.h.b16 %v3587
    %v3623 = vunpack.c.l.b16 %v3588
    %v3624 = vunpack.c.h.b16 %v3588
    %v3625 = vpack.c.b16 %v3611, %v3609
    %v3626 = vpack.c.b16 %v3612, %v3610
    %v3627 = vpack.c.b16 %v3615, %v3613
    %v3628 = vpack.c.b16 %v3616, %v3614
    %v3629 = vpack.c.b16 %v3619, %v3617
    %v3630 = vpack.c.b16 %v3620, %v3618
    %v3631 = vpack.c.b16 %v3623, %v3621
    %v3632 = vpack.c.b16 %v3624, %v3622
    %v3642 = vsel %vm1864, %v3573, 0
    %v3645 = vsel %vm1864, %v3574, 0
    %v3648 = vsel %vm1864, %v3575, 0
    %v3651 = vsel %vm1864, %v3576, 0
    %v3654 = vsel %vm1864, %v3577, 0
    %v3657 = vsel %vm1864, %v3578, 0
    %v3660 = vsel %vm1864, %v3579, 0
    %v3663 = vsel %vm1864, %v3580, 0
    %3665 = vmatprep.subr.bf16.mxu0 %v3626
    %3666 = vmatpush1.bf16.msra.mxu0 %v3625
    %3667 = vmatprep.subr.bf16.mxu0 %v3628
    %3668 = vmatpush1.bf16.msra.mxu0 %v3627
    %3669 = vmatprep.subr.bf16.mxu0 %v3630
    %3670 = vmatpush1.bf16.msra.mxu0 %v3629
    %3671 = vmatprep.subr.bf16.mxu0 %v3632
    %3672 = vmatpush1.bf16.msra.mxu0 %v3631
    %3673 = vmatprep.subr.bf16.mxu0 0
    %3674 = vmatpush1.bf16.msra.mxu0 0
    %3675 = vmatprep.subr.bf16.mxu0 0
    %3676 = vmatpush1.bf16.msra.mxu0 0
    %3677 = vmatprep.subr.bf16.mxu0 0
    %3678 = vmatpush1.bf16.msra.mxu0 0
    %3679 = vmatprep.subr.bf16.mxu0 0
    %3680 = vmatpush1.bf16.msra.mxu0 0
    %3681 = vmatprep.subr.bf16.mxu0 0
    %3682 = vmatpush1.bf16.msra.mxu0 0
    %3683 = vmatprep.subr.bf16.mxu0 0
    %3684 = vmatpush1.bf16.msra.mxu0 0
    %3685 = vmatprep.subr.bf16.mxu0 0
    %3686 = vmatpush1.bf16.msra.mxu0 0
    %3687 = vmatprep.subr.bf16.mxu0 0
    %3688 = vmatpush1.bf16.msra.mxu0 0
    %3689 = vmatprep.subr.bf16.mxu0 0
    %3690 = vmatpush1.bf16.msra.mxu0 0
    %3691 = vmatprep.subr.bf16.mxu0 0
    %3692 = vmatpush1.bf16.msra.mxu0 0
    %3693 = vmatprep.subr.bf16.mxu0 0
    %3694 = vmatpush1.bf16.msra.mxu0 0
    %3695 = vmatprep.subr.bf16.mxu0 0
    %3696 = vmatpush1.bf16.msra.mxu0 0
    %3697 = vmatprep.mubr.bf16.mxu0 0
    %3698 = vmatmul.mubr.bf16.gmra.mrb[0].mxu0 %v3642
    %v3699 = vpop.f32.mrb[0].mxu0
    %v3700 = vadd.f32 %v3594, %v3699
    %v3701 = vpop.f32.mrb[0].mxu0
    %v3702 = vadd.f32 %v3598, %v3701
    %v3703 = vpop.f32.mrb[0].mxu0
    %v3704 = vadd.f32 %v3594, %v3703
    %v3705 = vpop.f32.mrb[0].mxu0
    %v3706 = vadd.f32 %v3598, %v3705
    %3707 = vmatprep.mubr.bf16.mxu0 0
    %3708 = vmatmul.mubr.bf16.gmra.mrb[0].mxu0 %v3645
    %v3709 = vpop.f32.mrb[0].mxu0
    %v3710 = vadd.f32 %v3594, %v3709
    %v3711 = vpop.f32.mrb[0].mxu0
    %v3712 = vadd.f32 %v3598, %v3711
    %v3713 = vpop.f32.mrb[0].mxu0
    %v3714 = vadd.f32 %v3594, %v3713
    %v3715 = vpop.f32.mrb[0].mxu0
    %v3716 = vadd.f32 %v3598, %v3715
    %3717 = vmatprep.mubr.bf16.mxu0 0
    %3718 = vmatmul.mubr.bf16.gmra.mrb[0].mxu0 %v3648
    %v3719 = vpop.f32.mrb[0].mxu0
    %v3720 = vadd.f32 %v3594, %v3719
    %v3721 = vpop.f32.mrb[0].mxu0
    %v3722 = vadd.f32 %v3598, %v3721
    %v3723 = vpop.f32.mrb[0].mxu0
    %v3724 = vadd.f32 %v3594, %v3723
    %v3725 = vpop.f32.mrb[0].mxu0
    %v3726 = vadd.f32 %v3598, %v3725
    %3727 = vmatprep.mubr.bf16.mxu0 0
    %3728 = vmatmul.mubr.bf16.gmra.mrb[0].mxu0 %v3651
    %v3729 = vpop.f32.mrb[0].mxu0
    %v3730 = vadd.f32 %v3594, %v3729
    %v3731 = vpop.f32.mrb[0].mxu0
    %v3732 = vadd.f32 %v3598, %v3731
    %v3733 = vpop.f32.mrb[0].mxu0
    %v3734 = vadd.f32 %v3594, %v3733
    %v3735 = vpop.f32.mrb[0].mxu0
    %v3736 = vadd.f32 %v3598, %v3735
    %3737 = vmatprep.mubr.bf16.mxu0 0
    %3738 = vmatmul.mubr.bf16.gmra.mrb[0].mxu0 %v3654
    %v3739 = vpop.f32.mrb[0].mxu0
    %v3740 = vadd.f32 %v3594, %v3739
    %v3741 = vpop.f32.mrb[0].mxu0
    %v3742 = vadd.f32 %v3598, %v3741
    %v3743 = vpop.f32.mrb[0].mxu0
    %v3744 = vadd.f32 %v3594, %v3743
    %v3745 = vpop.f32.mrb[0].mxu0
    %v3746 = vadd.f32 %v3598, %v3745
    %3747 = vmatprep.mubr.bf16.mxu0 0
    %3748 = vmatmul.mubr.bf16.gmra.mrb[0].mxu0 %v3657
    %v3749 = vpop.f32.mrb[0].mxu0
    %v3750 = vadd.f32 %v3594, %v3749
    %v3751 = vpop.f32.mrb[0].mxu0
    %v3752 = vadd.f32 %v3598, %v3751
    %v3753 = vpop.f32.mrb[0].mxu0
    %v3754 = vadd.f32 %v3594, %v3753
    %v3755 = vpop.f32.mrb[0].mxu0
    %v3756 = vadd.f32 %v3598, %v3755
    %3757 = vmatprep.mubr.bf16.mxu0 0
    %3758 = vmatmul.mubr.bf16.gmra.mrb[0].mxu0 %v3660
    %v3759 = vpop.f32.mrb[0].mxu0
    %v3760 = vadd.f32 %v3594, %v3759
    %v3761 = vpop.f32.mrb[0].mxu0
    %v3762 = vadd.f32 %v3598, %v3761
    %v3763 = vpop.f32.mrb[0].mxu0
    %v3764 = vadd.f32 %v3594, %v3763
    %v3765 = vpop.f32.mrb[0].mxu0
    %v3766 = vadd.f32 %v3598, %v3765
    %3767 = vmatprep.mubr.bf16.mxu0 0
    %3768 = vmatmul.mubr.bf16.gmra.mrb[0].mxu0 %v3663
    %v3769 = vpop.f32.mrb[0].mxu0
    %v3770 = vadd.f32 %v3594, %v3769
    %v3771 = vpop.f32.mrb[0].mxu0
    %v3772 = vadd.f32 %v3598, %v3771
    %v3773 = vpop.f32.mrb[0].mxu0
    %v3774 = vadd.f32 %v3594, %v3773
    %v3775 = vpop.f32.mrb[0].mxu0
    %v3776 = vadd.f32 %v3598, %v3775
    %3777 = vdwg.mxu0
    %3778 = vst [vmem:[#allocation3] sm:$0xff] %v3700
    %3779 = vst [vmem:[#allocation3 + $0x8] sm:$0xff] %v3702
    %3780 = vst [vmem:[#allocation3 + $0x10] sm:$0xff] %v3704
    %3781 = vst [vmem:[#allocation3 + $0x18] sm:$0xff] %v3706
    %3782 = vst [vmem:[#allocation3 + $0x20] sm:$0xff] %v3710
    %3783 = vst [vmem:[#allocation3 + $0x28] sm:$0xff] %v3712
    %3784 = vst [vmem:[#allocation3 + $0x30] sm:$0xff] %v3714
    %3785 = vst [vmem:[#allocation3 + $0x38] sm:$0xff] %v3716
    %3786 = vst [vmem:[#allocation3 + $0x40] sm:$0xff] %v3720
    %3787 = vst [vmem:[#allocation3 + $0x48] sm:$0xff] %v3722
    %3788 = vst [vmem:[#allocation3 + $0x50] sm:$0xff] %v3724
    %3789 = vst [vmem:[#allocation3 + $0x58] sm:$0xff] %v3726
    %3790 = vst [vmem:[#allocation3 + $0x60] sm:$0xff] %v3730
    %3791 = vst [vmem:[#allocation3 + $0x68] sm:$0xff] %v3732
    %3792 = vst [vmem:[#allocation3 + $0x70] sm:$0xff] %v3734
    %3793 = vst [vmem:[#allocation3 + $0x78] sm:$0xff] %v3736
    %3794 = vst [vmem:[#allocation3 + $0x80] sm:$0xff] %v3740
    %3795 = vst [vmem:[#allocation3 + $0x88] sm:$0xff] %v3742
    %3796 = vst [vmem:[#allocation3 + $0x90] sm:$0xff] %v3744
    %3797 = vst [vmem:[#allocation3 + $0x98] sm:$0xff] %v3746
    %3798 = vst [vmem:[#allocation3 + $0xa0] sm:$0xff] %v3750
    %3799 = vst [vmem:[#allocation3 + $0xa8] sm:$0xff] %v3752
    %3800 = vst [vmem:[#allocation3 + $0xb0] sm:$0xff] %v3754
    %3801 = vst [vmem:[#allocation3 + $0xb8] sm:$0xff] %v3756
    %3802 = vst [vmem:[#allocation3 + $0xc0] sm:$0xff] %v3760
    %3803 = vst [vmem:[#allocation3 + $0xc8] sm:$0xff] %v3762
    %3804 = vst [vmem:[#allocation3 + $0xd0] sm:$0xff] %v3764
    %3805 = vst [vmem:[#allocation3 + $0xd8] sm:$0xff] %v3766
    %3806 = vst [vmem:[#allocation3 + $0xe0] sm:$0xff] %v3770
    %3807 = vst [vmem:[#allocation3 + $0xe8] sm:$0xff] %v3772
    %3808 = vst [vmem:[#allocation3 + $0xf0] sm:$0xff] %v3774
    %3809 = vst [vmem:[#allocation3 + $0xf8] sm:$0xff] %v3776
    %v3810 = vld [vmem:[%s6] sm:$0xff]
    %v3811 = vld [vmem:[%s6 + $0x8] sm:$0xff]
    %v3812 = vld [vmem:[%s6 + $0x10] sm:$0xff]
    %v3813 = vld [vmem:[%s6 + $0x18] sm:$0xff]
    %v3814 = vld [vmem:[%s6 + $0x20] sm:$0xff]
    %v3815 = vld [vmem:[%s6 + $0x28] sm:$0xff]
    %v3816 = vld [vmem:[%s6 + $0x30] sm:$0xff]
    %v3817 = vld [vmem:[%s6 + $0x38] sm:$0xff]
    %v3818 = vld [vmem:[%s6 + $0x40] sm:$0xff]
    %v3819 = vld [vmem:[%s6 + $0x48] sm:$0xff]
    %v3820 = vld [vmem:[%s6 + $0x50] sm:$0xff]
    %v3821 = vld [vmem:[%s6 + $0x58] sm:$0xff]
    %v3822 = vld [vmem:[%s6 + $0x60] sm:$0xff]
    %v3823 = vld [vmem:[%s6 + $0x68] sm:$0xff]
    %v3824 = vld [vmem:[%s6 + $0x70] sm:$0xff]
    %v3825 = vld [vmem:[%s6 + $0x78] sm:$0xff]
    %v3826 = vld [vmem:[#allocation3] sm:$0xff]
    %v3827 = vld [vmem:[#allocation3 + $0x8] sm:$0xff]
    %v3828 = vld [vmem:[#allocation3 + $0xf0] sm:$0xff]
    %v3829 = vld [vmem:[#allocation3 + $0xf8] sm:$0xff]
    %v3830 = vsel %vm1840, %v3826, %v3828
    %v3831 = vsel %vm1841, %v3827, %v3829
    %3832 = vmatprep.subr.mxu0 %v3811
    %3833 = vmatpush1.msra.mxu0 %v3810
    %3834 = vmatprep.subr.mxu0 %v3813
    %3835 = vmatpush1.msra.mxu0 %v3812
    %3836 = vmatprep.subr.mxu0 %v3815
    %3837 = vmatpush1.msra.mxu0 %v3814
    %3838 = vmatprep.subr.mxu0 %v3817
    %3839 = vmatpush1.msra.mxu0 %v3816
    %3840 = vmatprep.subr.mxu0 %v3819
    %3841 = vmatpush1.msra.mxu0 %v3818
    %3842 = vmatprep.subr.mxu0 %v3821
    %3843 = vmatpush1.msra.mxu0 %v3820
    %3844 = vmatprep.subr.mxu0 %v3823
    %3845 = vmatpush1.msra.mxu0 %v3822
    %3846 = vmatprep.subr.mxu0 %v3825
    %3847 = vmatpush1.msra.mxu0 %v3824
    %3848 = vmatprep.subr.mxu0 0.0
    %3849 = vmatpush1.msra.mxu0 0.0
    %3850 = vmatprep.subr.mxu0 0.0
    %3851 = vmatpush1.msra.mxu0 0.0
    %3852 = vmatprep.subr.mxu0 0.0
    %3853 = vmatpush1.msra.mxu0 0.0
    %3854 = vmatprep.subr.mxu0 0.0
    %3855 = vmatpush1.msra.mxu0 0.0
    %3856 = vmatprep.subr.mxu0 0.0
    %3857 = vmatpush1.msra.mxu0 0.0
    %3858 = vmatprep.subr.mxu0 0.0
    %3859 = vmatpush1.msra.mxu0 0.0
    %3860 = vmatprep.subr.mxu0 0.0
    %3861 = vmatpush1.msra.mxu0 0.0
    %3862 = vmatprep.subr.mxu0 0.0
    %3863 = vmatpush1.msra.mxu0 0.0
    %3864 = vmatprep.subr.mxu0 0.0
    %3865 = vmatpush1.msra.mxu0 0.0
    %3866 = vmatprep.subr.mxu0 0.0
    %3867 = vmatpush1.msra.mxu0 0.0
    %3868 = vmatprep.subr.mxu0 0.0
    %3869 = vmatpush1.msra.mxu0 0.0
    %3870 = vmatprep.subr.mxu0 0.0
    %3871 = vmatpush1.msra.mxu0 0.0
    %3872 = vmatprep.subr.mxu0 0.0
    %3873 = vmatpush1.msra.mxu0 0.0
    %3874 = vmatprep.subr.mxu0 0.0
    %3875 = vmatpush1.msra.mxu0 0.0
    %3876 = vmatprep.subr.mxu0 0.0
    %3877 = vmatpush1.msra.mxu0 0.0
    %3878 = vmatprep.subr.mxu0 0.0
    %3879 = vmatpush1.msra.mxu0 0.0
    %3880 = vmatprep.subr.mxu0 0.0
    %3881 = vmatpush1.msra.mxu0 0.0
    %3882 = vmatprep.subr.mxu0 0.0
    %3883 = vmatpush1.msra.mxu0 0.0
    %3884 = vmatprep.subr.mxu0 0.0
    %3885 = vmatpush1.msra.mxu0 0.0
    %3886 = vmatprep.subr.mxu0 0.0
    %3887 = vmatpush1.msra.mxu0 0.0
    %3888 = vmatprep.subr.mxu0 0.0
    %3889 = vmatpush1.msra.mxu0 0.0
    %3890 = vmatprep.subr.mxu0 0.0
    %3891 = vmatpush1.msra.mxu0 0.0
    %3892 = vmatprep.subr.mxu0 0.0
    %3893 = vmatpush1.msra.mxu0 0.0
    %3894 = vmatprep.subr.mxu0 0.0
    %3895 = vmatpush1.msra.mxu0 0.0
    %3896 = vmatprep.mubr.f32.mxu0 0.0
    %3897 = vmatmul.mubr.f32.gmra.mrb[0].mxu0 %v1866
    %v3898 = vpop.f32.mrb[0].mxu0
    %v3899 = vadd.f32 0.0, %v3898
    %v3900 = vpop.f32.mrb[0].mxu0
    %v3901 = vadd.f32 0.0, %v3900
    %3902 = vdwg.mxu0
    %v3903 = vadd.f32 %v3830, %v3899
    %v3904 = vadd.f32 %v3831, %v3901
    %v3905 = vxor.u32 %v3903, 2147483648
    %v3906 = vmul.f32 %v3905, 1.442695
    %v3907 = vpow.pop %v3906
    %v3908 = vadd.f32 %v3907, 1.0
    %v3909 = vrcp.pop %v3908
    %v3910 = vmul.f32 1.0, %v3909
    %v3911 = vxor.u32 %v3904, 2147483648
    %v3912 = vmul.f32 %v3911, 1.442695
    %v3913 = vpow.pop %v3912
    %v3914 = vadd.f32 %v3913, 1.0
    %v3915 = vrcp.pop %v3914
    %v3916 = vmul.f32 1.0, %v3915
    %v3917 = vtanh.pop %v3904
    %v3918 = vmul.f32 %v3910, 0.0
    %v3919 = vmul.f32 %v3910, %v3917
    %3921 = vrot.lane.b32.xlu0 %v3919, 64
    %v3922 = vpop.permute.xlu0 %3921
    %v3924 = vadd.f32 %v3918, %v3922
    %v3925 = vtanh.pop %v3924
    %v3926 = vmul.f32 %v3916, %v3925
    %v3927 = vadd.f32 %v3926, 0.0
    %v3928 = vld [vmem:[#allocation3 + $0x10] sm:$0xff]
    %v3929 = vld [vmem:[#allocation3 + $0x18] sm:$0xff]
    %v3930 = vld [vmem:[#allocation3 + $0xe0] sm:$0xff]
    %v3931 = vld [vmem:[#allocation3 + $0xe8] sm:$0xff]
    %v3932 = vsel %vm1840, %v3928, %v3930
    %v3933 = vsel %vm1841, %v3929, %v3931
    %v3935 = vsel %vm1864, %v3926, 0
    %3937 = vmatprep.subr.mxu0 %v3811
    %3938 = vmatpush1.msra.mxu0 %v3810
    %3939 = vmatprep.subr.mxu0 %v3813
    %3940 = vmatpush1.msra.mxu0 %v3812
    %3941 = vmatprep.subr.mxu0 %v3815
    %3942 = vmatpush1.msra.mxu0 %v3814
    %3943 = vmatprep.subr.mxu0 %v3817
    %3944 = vmatpush1.msra.mxu0 %v3816
    %3945 = vmatprep.subr.mxu0 %v3819
    %3946 = vmatpush1.msra.mxu0 %v3818
    %3947 = vmatprep.subr.mxu0 %v3821
    %3948 = vmatpush1.msra.mxu0 %v3820
    %3949 = vmatprep.subr.mxu0 %v3823
    %3950 = vmatpush1.msra.mxu0 %v3822
    %3951 = vmatprep.subr.mxu0 %v3825
    %3952 = vmatpush1.msra.mxu0 %v3824
    %3953 = vmatprep.subr.mxu0 0.0
    %3954 = vmatpush1.msra.mxu0 0.0
    %3955 = vmatprep.subr.mxu0 0.0
    %3956 = vmatpush1.msra.mxu0 0.0
    %3957 = vmatprep.subr.mxu0 0.0
    %3958 = vmatpush1.msra.mxu0 0.0
    %3959 = vmatprep.subr.mxu0 0.0
    %3960 = vmatpush1.msra.mxu0 0.0
    %3961 = vmatprep.subr.mxu0 0.0
    %3962 = vmatpush1.msra.mxu0 0.0
    %3963 = vmatprep.subr.mxu0 0.0
    %3964 = vmatpush1.msra.mxu0 0.0
    %3965 = vmatprep.subr.mxu0 0.0
    %3966 = vmatpush1.msra.mxu0 0.0
    %3967 = vmatprep.subr.mxu0 0.0
    %3968 = vmatpush1.msra.mxu0 0.0
    %3969 = vmatprep.subr.mxu0 0.0
    %3970 = vmatpush1.msra.mxu0 0.0
    %3971 = vmatprep.subr.mxu0 0.0
    %3972 = vmatpush1.msra.mxu0 0.0
    %3973 = vmatprep.subr.mxu0 0.0
    %3974 = vmatpush1.msra.mxu0 0.0
    %3975 = vmatprep.subr.mxu0 0.0
    %3976 = vmatpush1.msra.mxu0 0.0
    %3977 = vmatprep.subr.mxu0 0.0
    %3978 = vmatpush1.msra.mxu0 0.0
    %3979 = vmatprep.subr.mxu0 0.0
    %3980 = vmatpush1.msra.mxu0 0.0
    %3981 = vmatprep.subr.mxu0 0.0
    %3982 = vmatpush1.msra.mxu0 0.0
    %3983 = vmatprep.subr.mxu0 0.0
    %3984 = vmatpush1.msra.mxu0 0.0
    %3985 = vmatprep.subr.mxu0 0.0
    %3986 = vmatpush1.msra.mxu0 0.0
    %3987 = vmatprep.subr.mxu0 0.0
    %3988 = vmatpush1.msra.mxu0 0.0
    %3989 = vmatprep.subr.mxu0 0.0
    %3990 = vmatpush1.msra.mxu0 0.0
    %3991 = vmatprep.subr.mxu0 0.0
    %3992 = vmatpush1.msra.mxu0 0.0
    %3993 = vmatprep.subr.mxu0 0.0
    %3994 = vmatpush1.msra.mxu0 0.0
    %3995 = vmatprep.subr.mxu0 0.0
    %3996 = vmatpush1.msra.mxu0 0.0
    %3997 = vmatprep.subr.mxu0 0.0
    %3998 = vmatpush1.msra.mxu0 0.0
    %3999 = vmatprep.subr.mxu0 0.0
    %4000 = vmatpush1.msra.mxu0 0.0
    %4001 = vmatprep.mubr.f32.mxu0 0.0
    %4002 = vmatmul.mubr.f32.gmra.mrb[0].mxu0 %v3935
    %v4003 = vpop.f32.mrb[0].mxu0
    %v4004 = vadd.f32 0.0, %v4003
    %v4005 = vpop.f32.mrb[0].mxu0
    %v4006 = vadd.f32 0.0, %v4005
    %4007 = vdwg.mxu0
    %v4008 = vadd.f32 %v3932, %v4004
    %v4009 = vadd.f32 %v3933, %v4006
    %v4010 = vxor.u32 %v4008, 2147483648
    %v4011 = vmul.f32 %v4010, 1.442695
    %v4012 = vpow.pop %v4011
    %v4013 = vadd.f32 %v4012, 1.0
    %v4014 = vrcp.pop %v4013
    %v4015 = vmul.f32 1.0, %v4014
    %v4016 = vxor.u32 %v4009, 2147483648
    %v4017 = vmul.f32 %v4016, 1.442695
    %v4018 = vpow.pop %v4017
    %v4019 = vadd.f32 %v4018, 1.0
    %v4020 = vrcp.pop %v4019
    %v4021 = vmul.f32 1.0, %v4020
    %v4022 = vtanh.pop %v4009
    %v4023 = vmul.f32 %v4015, %v3924
    %v4024 = vmul.f32 %v4015, %v4022
    %4026 = vrot.lane.b32.xlu0 %v4024, 64
    %v4027 = vpop.permute.xlu0 %4026
    %v4029 = vadd.f32 %v4023, %v4027
    %v4030 = vtanh.pop %v4029
    %v4031 = vmul.f32 %v4021, %v4030
    %v4032 = vadd.f32 %v3927, %v4031
    %v4033 = vld [vmem:[#allocation3 + $0x20] sm:$0xff]
    %v4034 = vld [vmem:[#allocation3 + $0x28] sm:$0xff]
    %v4035 = vld [vmem:[#allocation3 + $0xd0] sm:$0xff]
    %v4036 = vld [vmem:[#allocation3 + $0xd8] sm:$0xff]
    %v4037 = vsel %vm1840, %v4033, %v4035
    %v4038 = vsel %vm1841, %v4034, %v4036
    %v4040 = vsel %vm1864, %v4031, 0
    %4042 = vmatprep.subr.mxu0 %v3811
    %4043 = vmatpush1.msra.mxu0 %v3810
    %4044 = vmatprep.subr.mxu0 %v3813
    %4045 = vmatpush1.msra.mxu0 %v3812
    %4046 = vmatprep.subr.mxu0 %v3815
    %4047 = vmatpush1.msra.mxu0 %v3814
    %4048 = vmatprep.subr.mxu0 %v3817
    %4049 = vmatpush1.msra.mxu0 %v3816
    %4050 = vmatprep.subr.mxu0 %v3819
    %4051 = vmatpush1.msra.mxu0 %v3818
    %4052 = vmatprep.subr.mxu0 %v3821
    %4053 = vmatpush1.msra.mxu0 %v3820
    %4054 = vmatprep.subr.mxu0 %v3823
    %4055 = vmatpush1.msra.mxu0 %v3822
    %4056 = vmatprep.subr.mxu0 %v3825
    %4057 = vmatpush1.msra.mxu0 %v3824
    %4058 = vmatprep.subr.mxu0 0.0
    %4059 = vmatpush1.msra.mxu0 0.0
    %4060 = vmatprep.subr.mxu0 0.0
    %4061 = vmatpush1.msra.mxu0 0.0
    %4062 = vmatprep.subr.mxu0 0.0
    %4063 = vmatpush1.msra.mxu0 0.0
    %4064 = vmatprep.subr.mxu0 0.0
    %4065 = vmatpush1.msra.mxu0 0.0
    %4066 = vmatprep.subr.mxu0 0.0
    %4067 = vmatpush1.msra.mxu0 0.0
    %4068 = vmatprep.subr.mxu0 0.0
    %4069 = vmatpush1.msra.mxu0 0.0
    %4070 = vmatprep.subr.mxu0 0.0
    %4071 = vmatpush1.msra.mxu0 0.0
    %4072 = vmatprep.subr.mxu0 0.0
    %4073 = vmatpush1.msra.mxu0 0.0
    %4074 = vmatprep.subr.mxu0 0.0
    %4075 = vmatpush1.msra.mxu0 0.0
    %4076 = vmatprep.subr.mxu0 0.0
    %4077 = vmatpush1.msra.mxu0 0.0
    %4078 = vmatprep.subr.mxu0 0.0
    %4079 = vmatpush1.msra.mxu0 0.0
    %4080 = vmatprep.subr.mxu0 0.0
    %4081 = vmatpush1.msra.mxu0 0.0
    %4082 = vmatprep.subr.mxu0 0.0
    %4083 = vmatpush1.msra.mxu0 0.0
    %4084 = vmatprep.subr.mxu0 0.0
    %4085 = vmatpush1.msra.mxu0 0.0
    %4086 = vmatprep.subr.mxu0 0.0
    %4087 = vmatpush1.msra.mxu0 0.0
    %4088 = vmatprep.subr.mxu0 0.0
    %4089 = vmatpush1.msra.mxu0 0.0
    %4090 = vmatprep.subr.mxu0 0.0
    %4091 = vmatpush1.msra.mxu0 0.0
    %4092 = vmatprep.subr.mxu0 0.0
    %4093 = vmatpush1.msra.mxu0 0.0
    %4094 = vmatprep.subr.mxu0 0.0
    %4095 = vmatpush1.msra.mxu0 0.0
    %4096 = vmatprep.subr.mxu0 0.0
    %4097 = vmatpush1.msra.mxu0 0.0
    %4098 = vmatprep.subr.mxu0 0.0
    %4099 = vmatpush1.msra.mxu0 0.0
    %4100 = vmatprep.subr.mxu0 0.0
    %4101 = vmatpush1.msra.mxu0 0.0
    %4102 = vmatprep.subr.mxu0 0.0
    %4103 = vmatpush1.msra.mxu0 0.0
    %4104 = vmatprep.subr.mxu0 0.0
    %4105 = vmatpush1.msra.mxu0 0.0
    %4106 = vmatprep.mubr.f32.mxu0 0.0
    %4107 = vmatmul.mubr.f32.gmra.mrb[0].mxu0 %v4040
    %v4108 = vpop.f32.mrb[0].mxu0
    %v4109 = vadd.f32 0.0, %v4108
    %v4110 = vpop.f32.mrb[0].mxu0
    %v4111 = vadd.f32 0.0, %v4110
    %4112 = vdwg.mxu0
    %v4113 = vadd.f32 %v4037, %v4109
    %v4114 = vadd.f32 %v4038, %v4111
    %v4115 = vxor.u32 %v4113, 2147483648
    %v4116 = vmul.f32 %v4115, 1.442695
    %v4117 = vpow.pop %v4116
    %v4118 = vadd.f32 %v4117, 1.0
    %v4119 = vrcp.pop %v4118
    %v4120 = vmul.f32 1.0, %v4119
    %v4121 = vxor.u32 %v4114, 2147483648
    %v4122 = vmul.f32 %v4121, 1.442695
    %v4123 = vpow.pop %v4122
    %v4124 = vadd.f32 %v4123, 1.0
    %v4125 = vrcp.pop %v4124
    %v4126 = vmul.f32 1.0, %v4125
    %v4127 = vtanh.pop %v4114
    %v4128 = vmul.f32 %v4120, %v4029
    %v4129 = vmul.f32 %v4120, %v4127
    %4131 = vrot.lane.b32.xlu0 %v4129, 64
    %v4132 = vpop.permute.xlu0 %4131
    %v4134 = vadd.f32 %v4128, %v4132
    %v4135 = vtanh.pop %v4134
    %v4136 = vmul.f32 %v4126, %v4135
    %v4137 = vadd.f32 %v4032, %v4136
    %v4138 = vld [vmem:[#allocation3 + $0x30] sm:$0xff]
    %v4139 = vld [vmem:[#allocation3 + $0x38] sm:$0xff]
    %v4140 = vld [vmem:[#allocation3 + $0xc0] sm:$0xff]
    %v4141 = vld [vmem:[#allocation3 + $0xc8] sm:$0xff]
    %v4142 = vsel %vm1840, %v4138, %v4140
    %v4143 = vsel %vm1841, %v4139, %v4141
    %v4145 = vsel %vm1864, %v4136, 0
    %4147 = vmatprep.subr.mxu0 %v3811
    %4148 = vmatpush1.msra.mxu0 %v3810
    %4149 = vmatprep.subr.mxu0 %v3813
    %4150 = vmatpush1.msra.mxu0 %v3812
    %4151 = vmatprep.subr.mxu0 %v3815
    %4152 = vmatpush1.msra.mxu0 %v3814
    %4153 = vmatprep.subr.mxu0 %v3817
    %4154 = vmatpush1.msra.mxu0 %v3816
    %4155 = vmatprep.subr.mxu0 %v3819
    %4156 = vmatpush1.msra.mxu0 %v3818
    %4157 = vmatprep.subr.mxu0 %v3821
    %4158 = vmatpush1.msra.mxu0 %v3820
    %4159 = vmatprep.subr.mxu0 %v3823
    %4160 = vmatpush1.msra.mxu0 %v3822
    %4161 = vmatprep.subr.mxu0 %v3825
    %4162 = vmatpush1.msra.mxu0 %v3824
    %4163 = vmatprep.subr.mxu0 0.0
    %4164 = vmatpush1.msra.mxu0 0.0
    %4165 = vmatprep.subr.mxu0 0.0
    %4166 = vmatpush1.msra.mxu0 0.0
    %4167 = vmatprep.subr.mxu0 0.0
    %4168 = vmatpush1.msra.mxu0 0.0
    %4169 = vmatprep.subr.mxu0 0.0
    %4170 = vmatpush1.msra.mxu0 0.0
    %4171 = vmatprep.subr.mxu0 0.0
    %4172 = vmatpush1.msra.mxu0 0.0
    %4173 = vmatprep.subr.mxu0 0.0
    %4174 = vmatpush1.msra.mxu0 0.0
    %4175 = vmatprep.subr.mxu0 0.0
    %4176 = vmatpush1.msra.mxu0 0.0
    %4177 = vmatprep.subr.mxu0 0.0
    %4178 = vmatpush1.msra.mxu0 0.0
    %4179 = vmatprep.subr.mxu0 0.0
    %4180 = vmatpush1.msra.mxu0 0.0
    %4181 = vmatprep.subr.mxu0 0.0
    %4182 = vmatpush1.msra.mxu0 0.0
    %4183 = vmatprep.subr.mxu0 0.0
    %4184 = vmatpush1.msra.mxu0 0.0
    %4185 = vmatprep.subr.mxu0 0.0
    %4186 = vmatpush1.msra.mxu0 0.0
    %4187 = vmatprep.subr.mxu0 0.0
    %4188 = vmatpush1.msra.mxu0 0.0
    %4189 = vmatprep.subr.mxu0 0.0
    %4190 = vmatpush1.msra.mxu0 0.0
    %4191 = vmatprep.subr.mxu0 0.0
    %4192 = vmatpush1.msra.mxu0 0.0
    %4193 = vmatprep.subr.mxu0 0.0
    %4194 = vmatpush1.msra.mxu0 0.0
    %4195 = vmatprep.subr.mxu0 0.0
    %4196 = vmatpush1.msra.mxu0 0.0
    %4197 = vmatprep.subr.mxu0 0.0
    %4198 = vmatpush1.msra.mxu0 0.0
    %4199 = vmatprep.subr.mxu0 0.0
    %4200 = vmatpush1.msra.mxu0 0.0
    %4201 = vmatprep.subr.mxu0 0.0
    %4202 = vmatpush1.msra.mxu0 0.0
    %4203 = vmatprep.subr.mxu0 0.0
    %4204 = vmatpush1.msra.mxu0 0.0
    %4205 = vmatprep.subr.mxu0 0.0
    %4206 = vmatpush1.msra.mxu0 0.0
    %4207 = vmatprep.subr.mxu0 0.0
    %4208 = vmatpush1.msra.mxu0 0.0
    %4209 = vmatprep.subr.mxu0 0.0
    %4210 = vmatpush1.msra.mxu0 0.0
    %4211 = vmatprep.mubr.f32.mxu0 0.0
    %4212 = vmatmul.mubr.f32.gmra.mrb[0].mxu0 %v4145
    %v4213 = vpop.f32.mrb[0].mxu0
    %v4214 = vadd.f32 0.0, %v4213
    %v4215 = vpop.f32.mrb[0].mxu0
    %v4216 = vadd.f32 0.0, %v4215
    %4217 = vdwg.mxu0
    %v4218 = vadd.f32 %v4142, %v4214
    %v4219 = vadd.f32 %v4143, %v4216
    %v4220 = vxor.u32 %v4218, 2147483648
    %v4221 = vmul.f32 %v4220, 1.442695
    %v4222 = vpow.pop %v4221
    %v4223 = vadd.f32 %v4222, 1.0
    %v4224 = vrcp.pop %v4223
    %v4225 = vmul.f32 1.0, %v4224
    %v4226 = vxor.u32 %v4219, 2147483648
    %v4227 = vmul.f32 %v4226, 1.442695
    %v4228 = vpow.pop %v4227
    %v4229 = vadd.f32 %v4228, 1.0
    %v4230 = vrcp.pop %v4229
    %v4231 = vmul.f32 1.0, %v4230
    %v4232 = vtanh.pop %v4219
    %v4233 = vmul.f32 %v4225, %v4134
    %v4234 = vmul.f32 %v4225, %v4232
    %4236 = vrot.lane.b32.xlu0 %v4234, 64
    %v4237 = vpop.permute.xlu0 %4236
    %v4239 = vadd.f32 %v4233, %v4237
    %v4240 = vtanh.pop %v4239
    %v4241 = vmul.f32 %v4231, %v4240
    %v4242 = vadd.f32 %v4137, %v4241
    %v4243 = vld [vmem:[#allocation3 + $0x40] sm:$0xff]
    %v4244 = vld [vmem:[#allocation3 + $0x48] sm:$0xff]
    %v4245 = vld [vmem:[#allocation3 + $0xb0] sm:$0xff]
    %v4246 = vld [vmem:[#allocation3 + $0xb8] sm:$0xff]
    %v4247 = vsel %vm1840, %v4243, %v4245
    %v4248 = vsel %vm1841, %v4244, %v4246
    %v4250 = vsel %vm1864, %v4241, 0
    %4252 = vmatprep.subr.mxu0 %v3811
    %4253 = vmatpush1.msra.mxu0 %v3810
    %4254 = vmatprep.subr.mxu0 %v3813
    %4255 = vmatpush1.msra.mxu0 %v3812
    %4256 = vmatprep.subr.mxu0 %v3815
    %4257 = vmatpush1.msra.mxu0 %v3814
    %4258 = vmatprep.subr.mxu0 %v3817
    %4259 = vmatpush1.msra.mxu0 %v3816
    %4260 = vmatprep.subr.mxu0 %v3819
    %4261 = vmatpush1.msra.mxu0 %v3818
    %4262 = vmatprep.subr.mxu0 %v3821
    %4263 = vmatpush1.msra.mxu0 %v3820
    %4264 = vmatprep.subr.mxu0 %v3823
    %4265 = vmatpush1.msra.mxu0 %v3822
    %4266 = vmatprep.subr.mxu0 %v3825
    %4267 = vmatpush1.msra.mxu0 %v3824
    %4268 = vmatprep.subr.mxu0 0.0
    %4269 = vmatpush1.msra.mxu0 0.0
    %4270 = vmatprep.subr.mxu0 0.0
    %4271 = vmatpush1.msra.mxu0 0.0
    %4272 = vmatprep.subr.mxu0 0.0
    %4273 = vmatpush1.msra.mxu0 0.0
    %4274 = vmatprep.subr.mxu0 0.0
    %4275 = vmatpush1.msra.mxu0 0.0
    %4276 = vmatprep.subr.mxu0 0.0
    %4277 = vmatpush1.msra.mxu0 0.0
    %4278 = vmatprep.subr.mxu0 0.0
    %4279 = vmatpush1.msra.mxu0 0.0
    %4280 = vmatprep.subr.mxu0 0.0
    %4281 = vmatpush1.msra.mxu0 0.0
    %4282 = vmatprep.subr.mxu0 0.0
    %4283 = vmatpush1.msra.mxu0 0.0
    %4284 = vmatprep.subr.mxu0 0.0
    %4285 = vmatpush1.msra.mxu0 0.0
    %4286 = vmatprep.subr.mxu0 0.0
    %4287 = vmatpush1.msra.mxu0 0.0
    %4288 = vmatprep.subr.mxu0 0.0
    %4289 = vmatpush1.msra.mxu0 0.0
    %4290 = vmatprep.subr.mxu0 0.0
    %4291 = vmatpush1.msra.mxu0 0.0
    %4292 = vmatprep.subr.mxu0 0.0
    %4293 = vmatpush1.msra.mxu0 0.0
    %4294 = vmatprep.subr.mxu0 0.0
    %4295 = vmatpush1.msra.mxu0 0.0
    %4296 = vmatprep.subr.mxu0 0.0
    %4297 = vmatpush1.msra.mxu0 0.0
    %4298 = vmatprep.subr.mxu0 0.0
    %4299 = vmatpush1.msra.mxu0 0.0
    %4300 = vmatprep.subr.mxu0 0.0
    %4301 = vmatpush1.msra.mxu0 0.0
    %4302 = vmatprep.subr.mxu0 0.0
    %4303 = vmatpush1.msra.mxu0 0.0
    %4304 = vmatprep.subr.mxu0 0.0
    %4305 = vmatpush1.msra.mxu0 0.0
    %4306 = vmatprep.subr.mxu0 0.0
    %4307 = vmatpush1.msra.mxu0 0.0
    %4308 = vmatprep.subr.mxu0 0.0
    %4309 = vmatpush1.msra.mxu0 0.0
    %4310 = vmatprep.subr.mxu0 0.0
    %4311 = vmatpush1.msra.mxu0 0.0
    %4312 = vmatprep.subr.mxu0 0.0
    %4313 = vmatpush1.msra.mxu0 0.0
    %4314 = vmatprep.subr.mxu0 0.0
    %4315 = vmatpush1.msra.mxu0 0.0
    %4316 = vmatprep.mubr.f32.mxu0 0.0
    %4317 = vmatmul.mubr.f32.gmra.mrb[0].mxu0 %v4250
    %v4318 = vpop.f32.mrb[0].mxu0
    %v4319 = vadd.f32 0.0, %v4318
    %v4320 = vpop.f32.mrb[0].mxu0
    %v4321 = vadd.f32 0.0, %v4320
    %4322 = vdwg.mxu0
    %v4323 = vadd.f32 %v4247, %v4319
    %v4324 = vadd.f32 %v4248, %v4321
    %v4325 = vxor.u32 %v4323, 2147483648
    %v4326 = vmul.f32 %v4325, 1.442695
    %v4327 = vpow.pop %v4326
    %v4328 = vadd.f32 %v4327, 1.0
    %v4329 = vrcp.pop %v4328
    %v4330 = vmul.f32 1.0, %v4329
    %v4331 = vxor.u32 %v4324, 2147483648
    %v4332 = vmul.f32 %v4331, 1.442695
    %v4333 = vpow.pop %v4332
    %v4334 = vadd.f32 %v4333, 1.0
    %v4335 = vrcp.pop %v4334
    %v4336 = vmul.f32 1.0, %v4335
    %v4337 = vtanh.pop %v4324
    %v4338 = vmul.f32 %v4330, %v4239
    %v4339 = vmul.f32 %v4330, %v4337
    %4341 = vrot.lane.b32.xlu0 %v4339, 64
    %v4342 = vpop.permute.xlu0 %4341
    %v4344 = vadd.f32 %v4338, %v4342
    %v4345 = vtanh.pop %v4344
    %v4346 = vmul.f32 %v4336, %v4345
    %v4347 = vadd.f32 %v4242, %v4346
    %v4348 = vld [vmem:[#allocation3 + $0x50] sm:$0xff]
    %v4349 = vld [vmem:[#allocation3 + $0x58] sm:$0xff]
    %v4350 = vld [vmem:[#allocation3 + $0xa0] sm:$0xff]
    %v4351 = vld [vmem:[#allocation3 + $0xa8] sm:$0xff]
    %v4352 = vsel %vm1840, %v4348, %v4350
    %v4353 = vsel %vm1841, %v4349, %v4351
    %v4355 = vsel %vm1864, %v4346, 0
    %4357 = vmatprep.subr.mxu0 %v3811
    %4358 = vmatpush1.msra.mxu0 %v3810
    %4359 = vmatprep.subr.mxu0 %v3813
    %4360 = vmatpush1.msra.mxu0 %v3812
    %4361 = vmatprep.subr.mxu0 %v3815
    %4362 = vmatpush1.msra.mxu0 %v3814
    %4363 = vmatprep.subr.mxu0 %v3817
    %4364 = vmatpush1.msra.mxu0 %v3816
    %4365 = vmatprep.subr.mxu0 %v3819
    %4366 = vmatpush1.msra.mxu0 %v3818
    %4367 = vmatprep.subr.mxu0 %v3821
    %4368 = vmatpush1.msra.mxu0 %v3820
    %4369 = vmatprep.subr.mxu0 %v3823
    %4370 = vmatpush1.msra.mxu0 %v3822
    %4371 = vmatprep.subr.mxu0 %v3825
    %4372 = vmatpush1.msra.mxu0 %v3824
    %4373 = vmatprep.subr.mxu0 0.0
    %4374 = vmatpush1.msra.mxu0 0.0
    %4375 = vmatprep.subr.mxu0 0.0
    %4376 = vmatpush1.msra.mxu0 0.0
    %4377 = vmatprep.subr.mxu0 0.0
    %4378 = vmatpush1.msra.mxu0 0.0
    %4379 = vmatprep.subr.mxu0 0.0
    %4380 = vmatpush1.msra.mxu0 0.0
    %4381 = vmatprep.subr.mxu0 0.0
    %4382 = vmatpush1.msra.mxu0 0.0
    %4383 = vmatprep.subr.mxu0 0.0
    %4384 = vmatpush1.msra.mxu0 0.0
    %4385 = vmatprep.subr.mxu0 0.0
    %4386 = vmatpush1.msra.mxu0 0.0
    %4387 = vmatprep.subr.mxu0 0.0
    %4388 = vmatpush1.msra.mxu0 0.0
    %4389 = vmatprep.subr.mxu0 0.0
    %4390 = vmatpush1.msra.mxu0 0.0
    %4391 = vmatprep.subr.mxu0 0.0
    %4392 = vmatpush1.msra.mxu0 0.0
    %4393 = vmatprep.subr.mxu0 0.0
    %4394 = vmatpush1.msra.mxu0 0.0
    %4395 = vmatprep.subr.mxu0 0.0
    %4396 = vmatpush1.msra.mxu0 0.0
    %4397 = vmatprep.subr.mxu0 0.0
    %4398 = vmatpush1.msra.mxu0 0.0
    %4399 = vmatprep.subr.mxu0 0.0
    %4400 = vmatpush1.msra.mxu0 0.0
    %4401 = vmatprep.subr.mxu0 0.0
    %4402 = vmatpush1.msra.mxu0 0.0
    %4403 = vmatprep.subr.mxu0 0.0
    %4404 = vmatpush1.msra.mxu0 0.0
    %4405 = vmatprep.subr.mxu0 0.0
    %4406 = vmatpush1.msra.mxu0 0.0
    %4407 = vmatprep.subr.mxu0 0.0
    %4408 = vmatpush1.msra.mxu0 0.0
    %4409 = vmatprep.subr.mxu0 0.0
    %4410 = vmatpush1.msra.mxu0 0.0
    %4411 = vmatprep.subr.mxu0 0.0
    %4412 = vmatpush1.msra.mxu0 0.0
    %4413 = vmatprep.subr.mxu0 0.0
    %4414 = vmatpush1.msra.mxu0 0.0
    %4415 = vmatprep.subr.mxu0 0.0
    %4416 = vmatpush1.msra.mxu0 0.0
    %4417 = vmatprep.subr.mxu0 0.0
    %4418 = vmatpush1.msra.mxu0 0.0
    %4419 = vmatprep.subr.mxu0 0.0
    %4420 = vmatpush1.msra.mxu0 0.0
    %4421 = vmatprep.mubr.f32.mxu0 0.0
    %4422 = vmatmul.mubr.f32.gmra.mrb[0].mxu0 %v4355
    %v4423 = vpop.f32.mrb[0].mxu0
    %v4424 = vadd.f32 0.0, %v4423
    %v4425 = vpop.f32.mrb[0].mxu0
    %v4426 = vadd.f32 0.0, %v4425
    %4427 = vdwg.mxu0
    %v4428 = vadd.f32 %v4352, %v4424
    %v4429 = vadd.f32 %v4353, %v4426
    %v4430 = vxor.u32 %v4428, 2147483648
    %v4431 = vmul.f32 %v4430, 1.442695
    %v4432 = vpow.pop %v4431
    %v4433 = vadd.f32 %v4432, 1.0
    %v4434 = vrcp.pop %v4433
    %v4435 = vmul.f32 1.0, %v4434
    %v4436 = vxor.u32 %v4429, 2147483648
    %v4437 = vmul.f32 %v4436, 1.442695
    %v4438 = vpow.pop %v4437
    %v4439 = vadd.f32 %v4438, 1.0
    %v4440 = vrcp.pop %v4439
    %v4441 = vmul.f32 1.0, %v4440
    %v4442 = vtanh.pop %v4429
    %v4443 = vmul.f32 %v4435, %v4344
    %v4444 = vmul.f32 %v4435, %v4442
    %4446 = vrot.lane.b32.xlu0 %v4444, 64
    %v4447 = vpop.permute.xlu0 %4446
    %v4449 = vadd.f32 %v4443, %v4447
    %v4450 = vtanh.pop %v4449
    %v4451 = vmul.f32 %v4441, %v4450
    %v4452 = vadd.f32 %v4347, %v4451
    %v4453 = vld [vmem:[#allocation3 + $0x60] sm:$0xff]
    %v4454 = vld [vmem:[#allocation3 + $0x68] sm:$0xff]
    %v4455 = vld [vmem:[#allocation3 + $0x90] sm:$0xff]
    %v4456 = vld [vmem:[#allocation3 + $0x98] sm:$0xff]
    %v4457 = vsel %vm1840, %v4453, %v4455
    %v4458 = vsel %vm1841, %v4454, %v4456
    %v4460 = vsel %vm1864, %v4451, 0
    %4462 = vmatprep.subr.mxu0 %v3811
    %4463 = vmatpush1.msra.mxu0 %v3810
    %4464 = vmatprep.subr.mxu0 %v3813
    %4465 = vmatpush1.msra.mxu0 %v3812
    %4466 = vmatprep.subr.mxu0 %v3815
    %4467 = vmatpush1.msra.mxu0 %v3814
    %4468 = vmatprep.subr.mxu0 %v3817
    %4469 = vmatpush1.msra.mxu0 %v3816
    %4470 = vmatprep.subr.mxu0 %v3819
    %4471 = vmatpush1.msra.mxu0 %v3818
    %4472 = vmatprep.subr.mxu0 %v3821
    %4473 = vmatpush1.msra.mxu0 %v3820
    %4474 = vmatprep.subr.mxu0 %v3823
    %4475 = vmatpush1.msra.mxu0 %v3822
    %4476 = vmatprep.subr.mxu0 %v3825
    %4477 = vmatpush1.msra.mxu0 %v3824
    %4478 = vmatprep.subr.mxu0 0.0
    %4479 = vmatpush1.msra.mxu0 0.0
    %4480 = vmatprep.subr.mxu0 0.0
    %4481 = vmatpush1.msra.mxu0 0.0
    %4482 = vmatprep.subr.mxu0 0.0
    %4483 = vmatpush1.msra.mxu0 0.0
    %4484 = vmatprep.subr.mxu0 0.0
    %4485 = vmatpush1.msra.mxu0 0.0
    %4486 = vmatprep.subr.mxu0 0.0
    %4487 = vmatpush1.msra.mxu0 0.0
    %4488 = vmatprep.subr.mxu0 0.0
    %4489 = vmatpush1.msra.mxu0 0.0
    %4490 = vmatprep.subr.mxu0 0.0
    %4491 = vmatpush1.msra.mxu0 0.0
    %4492 = vmatprep.subr.mxu0 0.0
    %4493 = vmatpush1.msra.mxu0 0.0
    %4494 = vmatprep.subr.mxu0 0.0
    %4495 = vmatpush1.msra.mxu0 0.0
    %4496 = vmatprep.subr.mxu0 0.0
    %4497 = vmatpush1.msra.mxu0 0.0
    %4498 = vmatprep.subr.mxu0 0.0
    %4499 = vmatpush1.msra.mxu0 0.0
    %4500 = vmatprep.subr.mxu0 0.0
    %4501 = vmatpush1.msra.mxu0 0.0
    %4502 = vmatprep.subr.mxu0 0.0
    %4503 = vmatpush1.msra.mxu0 0.0
    %4504 = vmatprep.subr.mxu0 0.0
    %4505 = vmatpush1.msra.mxu0 0.0
    %4506 = vmatprep.subr.mxu0 0.0
    %4507 = vmatpush1.msra.mxu0 0.0
    %4508 = vmatprep.subr.mxu0 0.0
    %4509 = vmatpush1.msra.mxu0 0.0
    %4510 = vmatprep.subr.mxu0 0.0
    %4511 = vmatpush1.msra.mxu0 0.0
    %4512 = vmatprep.subr.mxu0 0.0
    %4513 = vmatpush1.msra.mxu0 0.0
    %4514 = vmatprep.subr.mxu0 0.0
    %4515 = vmatpush1.msra.mxu0 0.0
    %4516 = vmatprep.subr.mxu0 0.0
    %4517 = vmatpush1.msra.mxu0 0.0
    %4518 = vmatprep.subr.mxu0 0.0
    %4519 = vmatpush1.msra.mxu0 0.0
    %4520 = vmatprep.subr.mxu0 0.0
    %4521 = vmatpush1.msra.mxu0 0.0
    %4522 = vmatprep.subr.mxu0 0.0
    %4523 = vmatpush1.msra.mxu0 0.0
    %4524 = vmatprep.subr.mxu0 0.0
    %4525 = vmatpush1.msra.mxu0 0.0
    %4526 = vmatprep.mubr.f32.mxu0 0.0
    %4527 = vmatmul.mubr.f32.gmra.mrb[0].mxu0 %v4460
    %v4528 = vpop.f32.mrb[0].mxu0
    %v4529 = vadd.f32 0.0, %v4528
    %v4530 = vpop.f32.mrb[0].mxu0
    %v4531 = vadd.f32 0.0, %v4530
    %4532 = vdwg.mxu0
    %v4533 = vadd.f32 %v4457, %v4529
    %v4534 = vadd.f32 %v4458, %v4531
    %v4535 = vxor.u32 %v4533, 2147483648
    %v4536 = vmul.f32 %v4535, 1.442695
    %v4537 = vpow.pop %v4536
    %v4538 = vadd.f32 %v4537, 1.0
    %v4539 = vrcp.pop %v4538
    %v4540 = vmul.f32 1.0, %v4539
    %v4541 = vxor.u32 %v4534, 2147483648
    %v4542 = vmul.f32 %v4541, 1.442695
    %v4543 = vpow.pop %v4542
    %v4544 = vadd.f32 %v4543, 1.0
    %v4545 = vrcp.pop %v4544
    %v4546 = vmul.f32 1.0, %v4545
    %v4547 = vtanh.pop %v4534
    %v4548 = vmul.f32 %v4540, %v4449
    %v4549 = vmul.f32 %v4540, %v4547
    %4551 = vrot.lane.b32.xlu0 %v4549, 64
    %v4552 = vpop.permute.xlu0 %4551
    %v4554 = vadd.f32 %v4548, %v4552
    %v4555 = vtanh.pop %v4554
    %v4556 = vmul.f32 %v4546, %v4555
    %v4557 = vadd.f32 %v4452, %v4556
    %v4558 = vld [vmem:[#allocation3 + $0x70] sm:$0xff]
    %v4559 = vld [vmem:[#allocation3 + $0x78] sm:$0xff]
    %v4560 = vld [vmem:[#allocation3 + $0x80] sm:$0xff]
    %v4561 = vld [vmem:[#allocation3 + $0x88] sm:$0xff]
    %v4562 = vsel %vm1840, %v4558, %v4560
    %v4563 = vsel %vm1841, %v4559, %v4561
    %v4565 = vsel %vm1864, %v4556, 0
    %4567 = vmatprep.subr.mxu0 %v3811
    %4568 = vmatpush1.msra.mxu0 %v3810
    %4569 = vmatprep.subr.mxu0 %v3813
    %4570 = vmatpush1.msra.mxu0 %v3812
    %4571 = vmatprep.subr.mxu0 %v3815
    %4572 = vmatpush1.msra.mxu0 %v3814
    %4573 = vmatprep.subr.mxu0 %v3817
    %4574 = vmatpush1.msra.mxu0 %v3816
    %4575 = vmatprep.subr.mxu0 %v3819
    %4576 = vmatpush1.msra.mxu0 %v3818
    %4577 = vmatprep.subr.mxu0 %v3821
    %4578 = vmatpush1.msra.mxu0 %v3820
    %4579 = vmatprep.subr.mxu0 %v3823
    %4580 = vmatpush1.msra.mxu0 %v3822
    %4581 = vmatprep.subr.mxu0 %v3825
    %4582 = vmatpush1.msra.mxu0 %v3824
    %4583 = vmatprep.subr.mxu0 0.0
    %4584 = vmatpush1.msra.mxu0 0.0
    %4585 = vmatprep.subr.mxu0 0.0
    %4586 = vmatpush1.msra.mxu0 0.0
    %4587 = vmatprep.subr.mxu0 0.0
    %4588 = vmatpush1.msra.mxu0 0.0
    %4589 = vmatprep.subr.mxu0 0.0
    %4590 = vmatpush1.msra.mxu0 0.0
    %4591 = vmatprep.subr.mxu0 0.0
    %4592 = vmatpush1.msra.mxu0 0.0
    %4593 = vmatprep.subr.mxu0 0.0
    %4594 = vmatpush1.msra.mxu0 0.0
    %4595 = vmatprep.subr.mxu0 0.0
    %4596 = vmatpush1.msra.mxu0 0.0
    %4597 = vmatprep.subr.mxu0 0.0
    %4598 = vmatpush1.msra.mxu0 0.0
    %4599 = vmatprep.subr.mxu0 0.0
    %4600 = vmatpush1.msra.mxu0 0.0
    %4601 = vmatprep.subr.mxu0 0.0
    %4602 = vmatpush1.msra.mxu0 0.0
    %4603 = vmatprep.subr.mxu0 0.0
    %4604 = vmatpush1.msra.mxu0 0.0
    %4605 = vmatprep.subr.mxu0 0.0
    %4606 = vmatpush1.msra.mxu0 0.0
    %4607 = vmatprep.subr.mxu0 0.0
    %4608 = vmatpush1.msra.mxu0 0.0
    %4609 = vmatprep.subr.mxu0 0.0
    %4610 = vmatpush1.msra.mxu0 0.0
    %4611 = vmatprep.subr.mxu0 0.0
    %4612 = vmatpush1.msra.mxu0 0.0
    %4613 = vmatprep.subr.mxu0 0.0
    %4614 = vmatpush1.msra.mxu0 0.0
    %4615 = vmatprep.subr.mxu0 0.0
    %4616 = vmatpush1.msra.mxu0 0.0
    %4617 = vmatprep.subr.mxu0 0.0
    %4618 = vmatpush1.msra.mxu0 0.0
    %4619 = vmatprep.subr.mxu0 0.0
    %4620 = vmatpush1.msra.mxu0 0.0
    %4621 = vmatprep.subr.mxu0 0.0
    %4622 = vmatpush1.msra.mxu0 0.0
    %4623 = vmatprep.subr.mxu0 0.0
    %4624 = vmatpush1.msra.mxu0 0.0
    %4625 = vmatprep.subr.mxu0 0.0
    %4626 = vmatpush1.msra.mxu0 0.0
    %4627 = vmatprep.subr.mxu0 0.0
    %4628 = vmatpush1.msra.mxu0 0.0
    %4629 = vmatprep.subr.mxu0 0.0
    %4630 = vmatpush1.msra.mxu0 0.0
    %4631 = vmatprep.mubr.f32.mxu0 0.0
    %4632 = vmatmul.mubr.f32.gmra.mrb[0].mxu0 %v4565
    %v4633 = vpop.f32.mrb[0].mxu0
    %v4634 = vadd.f32 0.0, %v4633
    %v4635 = vpop.f32.mrb[0].mxu0
    %v4636 = vadd.f32 0.0, %v4635
    %4637 = vdwg.mxu0
    %v4638 = vadd.f32 %v4562, %v4634
    %v4639 = vadd.f32 %v4563, %v4636
    %v4640 = vxor.u32 %v4638, 2147483648
    %v4641 = vmul.f32 %v4640, 1.442695
    %v4642 = vpow.pop %v4641
    %v4643 = vadd.f32 %v4642, 1.0
    %v4644 = vrcp.pop %v4643
    %v4645 = vmul.f32 1.0, %v4644
    %v4646 = vxor.u32 %v4639, 2147483648
    %v4647 = vmul.f32 %v4646, 1.442695
    %v4648 = vpow.pop %v4647
    %v4649 = vadd.f32 %v4648, 1.0
    %v4650 = vrcp.pop %v4649
    %v4651 = vmul.f32 1.0, %v4650
    %v4652 = vtanh.pop %v4639
    %v4653 = vmul.f32 %v4645, %v4554
    %v4654 = vmul.f32 %v4645, %v4652
    %4656 = vrot.lane.b32.xlu0 %v4654, 64
    %v4657 = vpop.permute.xlu0 %4656
    %v4659 = vadd.f32 %v4653, %v4657
    %v4660 = vtanh.pop %v4659
    %v4661 = vmul.f32 %v4651, %v4660
    %v4662 = vadd.f32 %v4557, %v4661
    %v4663 = vsel %vm1840, %v4560, %v4558
    %v4664 = vsel %vm1841, %v4561, %v4559
    %v4666 = vsel %vm1864, %v4661, 0
    %4668 = vmatprep.subr.mxu0 %v3811
    %4669 = vmatpush1.msra.mxu0 %v3810
    %4670 = vmatprep.subr.mxu0 %v3813
    %4671 = vmatpush1.msra.mxu0 %v3812
    %4672 = vmatprep.subr.mxu0 %v3815
    %4673 = vmatpush1.msra.mxu0 %v3814
    %4674 = vmatprep.subr.mxu0 %v3817
    %4675 = vmatpush1.msra.mxu0 %v3816
    %4676 = vmatprep.subr.mxu0 %v3819
    %4677 = vmatpush1.msra.mxu0 %v3818
    %4678 = vmatprep.subr.mxu0 %v3821
    %4679 = vmatpush1.msra.mxu0 %v3820
    %4680 = vmatprep.subr.mxu0 %v3823
    %4681 = vmatpush1.msra.mxu0 %v3822
    %4682 = vmatprep.subr.mxu0 %v3825
    %4683 = vmatpush1.msra.mxu0 %v3824
    %4684 = vmatprep.subr.mxu0 0.0
    %4685 = vmatpush1.msra.mxu0 0.0
    %4686 = vmatprep.subr.mxu0 0.0
    %4687 = vmatpush1.msra.mxu0 0.0
    %4688 = vmatprep.subr.mxu0 0.0
    %4689 = vmatpush1.msra.mxu0 0.0
    %4690 = vmatprep.subr.mxu0 0.0
    %4691 = vmatpush1.msra.mxu0 0.0
    %4692 = vmatprep.subr.mxu0 0.0
    %4693 = vmatpush1.msra.mxu0 0.0
    %4694 = vmatprep.subr.mxu0 0.0
    %4695 = vmatpush1.msra.mxu0 0.0
    %4696 = vmatprep.subr.mxu0 0.0
    %4697 = vmatpush1.msra.mxu0 0.0
    %4698 = vmatprep.subr.mxu0 0.0
    %4699 = vmatpush1.msra.mxu0 0.0
    %4700 = vmatprep.subr.mxu0 0.0
    %4701 = vmatpush1.msra.mxu0 0.0
    %4702 = vmatprep.subr.mxu0 0.0
    %4703 = vmatpush1.msra.mxu0 0.0
    %4704 = vmatprep.subr.mxu0 0.0
    %4705 = vmatpush1.msra.mxu0 0.0
    %4706 = vmatprep.subr.mxu0 0.0
    %4707 = vmatpush1.msra.mxu0 0.0
    %4708 = vmatprep.subr.mxu0 0.0
    %4709 = vmatpush1.msra.mxu0 0.0
    %4710 = vmatprep.subr.mxu0 0.0
    %4711 = vmatpush1.msra.mxu0 0.0
    %4712 = vmatprep.subr.mxu0 0.0
    %4713 = vmatpush1.msra.mxu0 0.0
    %4714 = vmatprep.subr.mxu0 0.0
    %4715 = vmatpush1.msra.mxu0 0.0
    %4716 = vmatprep.subr.mxu0 0.0
    %4717 = vmatpush1.msra.mxu0 0.0
    %4718 = vmatprep.subr.mxu0 0.0
    %4719 = vmatpush1.msra.mxu0 0.0
    %4720 = vmatprep.subr.mxu0 0.0
    %4721 = vmatpush1.msra.mxu0 0.0
    %4722 = vmatprep.subr.mxu0 0.0
    %4723 = vmatpush1.msra.mxu0 0.0
    %4724 = vmatprep.subr.mxu0 0.0
    %4725 = vmatpush1.msra.mxu0 0.0
    %4726 = vmatprep.subr.mxu0 0.0
    %4727 = vmatpush1.msra.mxu0 0.0
    %4728 = vmatprep.subr.mxu0 0.0
    %4729 = vmatpush1.msra.mxu0 0.0
    %4730 = vmatprep.subr.mxu0 0.0
    %4731 = vmatpush1.msra.mxu0 0.0
    %4732 = vmatprep.mubr.f32.mxu0 0.0
    %4733 = vmatmul.mubr.f32.gmra.mrb[0].mxu0 %v4666
    %v4734 = vpop.f32.mrb[0].mxu0
    %v4735 = vadd.f32 0.0, %v4734
    %v4736 = vpop.f32.mrb[0].mxu0
    %v4737 = vadd.f32 0.0, %v4736
    %4738 = vdwg.mxu0
    %v4739 = vadd.f32 %v4663, %v4735
    %v4740 = vadd.f32 %v4664, %v4737
    %v4741 = vxor.u32 %v4739, 2147483648
    %v4742 = vmul.f32 %v4741, 1.442695
    %v4743 = vpow.pop %v4742
    %v4744 = vadd.f32 %v4743, 1.0
    %v4745 = vrcp.pop %v4744
    %v4746 = vmul.f32 1.0, %v4745
    %v4747 = vxor.u32 %v4740, 2147483648
    %v4748 = vmul.f32 %v4747, 1.442695
    %v4749 = vpow.pop %v4748
    %v4750 = vadd.f32 %v4749, 1.0
    %v4751 = vrcp.pop %v4750
    %v4752 = vmul.f32 1.0, %v4751
    %v4753 = vtanh.pop %v4740
    %v4754 = vmul.f32 %v4746, %v4659
    %v4755 = vmul.f32 %v4746, %v4753
    %4757 = vrot.lane.b32.xlu0 %v4755, 64
    %v4758 = vpop.permute.xlu0 %4757
    %v4760 = vadd.f32 %v4754, %v4758
    %v4761 = vtanh.pop %v4760
    %v4762 = vmul.f32 %v4752, %v4761
    %v4763 = vadd.f32 %v4662, %v4762
    %v4764 = vsel %vm1840, %v4455, %v4453
    %v4765 = vsel %vm1841, %v4456, %v4454
    %v4767 = vsel %vm1864, %v4762, 0
    %4769 = vmatprep.subr.mxu0 %v3811
    %4770 = vmatpush1.msra.mxu0 %v3810
    %4771 = vmatprep.subr.mxu0 %v3813
    %4772 = vmatpush1.msra.mxu0 %v3812
    %4773 = vmatprep.subr.mxu0 %v3815
    %4774 = vmatpush1.msra.mxu0 %v3814
    %4775 = vmatprep.subr.mxu0 %v3817
    %4776 = vmatpush1.msra.mxu0 %v3816
    %4777 = vmatprep.subr.mxu0 %v3819
    %4778 = vmatpush1.msra.mxu0 %v3818
    %4779 = vmatprep.subr.mxu0 %v3821
    %4780 = vmatpush1.msra.mxu0 %v3820
    %4781 = vmatprep.subr.mxu0 %v3823
    %4782 = vmatpush1.msra.mxu0 %v3822
    %4783 = vmatprep.subr.mxu0 %v3825
    %4784 = vmatpush1.msra.mxu0 %v3824
    %4785 = vmatprep.subr.mxu0 0.0
    %4786 = vmatpush1.msra.mxu0 0.0
    %4787 = vmatprep.subr.mxu0 0.0
    %4788 = vmatpush1.msra.mxu0 0.0
    %4789 = vmatprep.subr.mxu0 0.0
    %4790 = vmatpush1.msra.mxu0 0.0
    %4791 = vmatprep.subr.mxu0 0.0
    %4792 = vmatpush1.msra.mxu0 0.0
    %4793 = vmatprep.subr.mxu0 0.0
    %4794 = vmatpush1.msra.mxu0 0.0
    %4795 = vmatprep.subr.mxu0 0.0
    %4796 = vmatpush1.msra.mxu0 0.0
    %4797 = vmatprep.subr.mxu0 0.0
    %4798 = vmatpush1.msra.mxu0 0.0
    %4799 = vmatprep.subr.mxu0 0.0
    %4800 = vmatpush1.msra.mxu0 0.0
    %4801 = vmatprep.subr.mxu0 0.0
    %4802 = vmatpush1.msra.mxu0 0.0
    %4803 = vmatprep.subr.mxu0 0.0
    %4804 = vmatpush1.msra.mxu0 0.0
    %4805 = vmatprep.subr.mxu0 0.0
    %4806 = vmatpush1.msra.mxu0 0.0
    %4807 = vmatprep.subr.mxu0 0.0
    %4808 = vmatpush1.msra.mxu0 0.0
    %4809 = vmatprep.subr.mxu0 0.0
    %4810 = vmatpush1.msra.mxu0 0.0
    %4811 = vmatprep.subr.mxu0 0.0
    %4812 = vmatpush1.msra.mxu0 0.0
    %4813 = vmatprep.subr.mxu0 0.0
    %4814 = vmatpush1.msra.mxu0 0.0
    %4815 = vmatprep.subr.mxu0 0.0
    %4816 = vmatpush1.msra.mxu0 0.0
    %4817 = vmatprep.subr.mxu0 0.0
    %4818 = vmatpush1.msra.mxu0 0.0
    %4819 = vmatprep.subr.mxu0 0.0
    %4820 = vmatpush1.msra.mxu0 0.0
    %4821 = vmatprep.subr.mxu0 0.0
    %4822 = vmatpush1.msra.mxu0 0.0
    %4823 = vmatprep.subr.mxu0 0.0
    %4824 = vmatpush1.msra.mxu0 0.0
    %4825 = vmatprep.subr.mxu0 0.0
    %4826 = vmatpush1.msra.mxu0 0.0
    %4827 = vmatprep.subr.mxu0 0.0
    %4828 = vmatpush1.msra.mxu0 0.0
    %4829 = vmatprep.subr.mxu0 0.0
    %4830 = vmatpush1.msra.mxu0 0.0
    %4831 = vmatprep.subr.mxu0 0.0
    %4832 = vmatpush1.msra.mxu0 0.0
    %4833 = vmatprep.mubr.f32.mxu0 0.0
    %4834 = vmatmul.mubr.f32.gmra.mrb[0].mxu0 %v4767
    %v4835 = vpop.f32.mrb[0].mxu0
    %v4836 = vadd.f32 0.0, %v4835
    %v4837 = vpop.f32.mrb[0].mxu0
    %v4838 = vadd.f32 0.0, %v4837
    %4839 = vdwg.mxu0
    %v4840 = vadd.f32 %v4764, %v4836
    %v4841 = vadd.f32 %v4765, %v4838
    %v4842 = vxor.u32 %v4840, 2147483648
    %v4843 = vmul.f32 %v4842, 1.442695
    %v4844 = vpow.pop %v4843
    %v4845 = vadd.f32 %v4844, 1.0
    %v4846 = vrcp.pop %v4845
    %v4847 = vmul.f32 1.0, %v4846
    %v4848 = vxor.u32 %v4841, 2147483648
    %v4849 = vmul.f32 %v4848, 1.442695
    %v4850 = vpow.pop %v4849
    %v4851 = vadd.f32 %v4850, 1.0
    %v4852 = vrcp.pop %v4851
    %v4853 = vmul.f32 1.0, %v4852
    %v4854 = vtanh.pop %v4841
    %v4855 = vmul.f32 %v4847, %v4760
    %v4856 = vmul.f32 %v4847, %v4854
    %4858 = vrot.lane.b32.xlu0 %v4856, 64
    %v4859 = vpop.permute.xlu0 %4858
    %v4861 = vadd.f32 %v4855, %v4859
    %v4862 = vtanh.pop %v4861
    %v4863 = vmul.f32 %v4853, %v4862
    %v4864 = vadd.f32 %v4763, %v4863
    %v4865 = vsel %vm1840, %v4350, %v4348
    %v4866 = vsel %vm1841, %v4351, %v4349
    %v4868 = vsel %vm1864, %v4863, 0
    %4870 = vmatprep.subr.mxu0 %v3811
    %4871 = vmatpush1.msra.mxu0 %v3810
    %4872 = vmatprep.subr.mxu0 %v3813
    %4873 = vmatpush1.msra.mxu0 %v3812
    %4874 = vmatprep.subr.mxu0 %v3815
    %4875 = vmatpush1.msra.mxu0 %v3814
    %4876 = vmatprep.subr.mxu0 %v3817
    %4877 = vmatpush1.msra.mxu0 %v3816
    %4878 = vmatprep.subr.mxu0 %v3819
    %4879 = vmatpush1.msra.mxu0 %v3818
    %4880 = vmatprep.subr.mxu0 %v3821
    %4881 = vmatpush1.msra.mxu0 %v3820
    %4882 = vmatprep.subr.mxu0 %v3823
    %4883 = vmatpush1.msra.mxu0 %v3822
    %4884 = vmatprep.subr.mxu0 %v3825
    %4885 = vmatpush1.msra.mxu0 %v3824
    %4886 = vmatprep.subr.mxu0 0.0
    %4887 = vmatpush1.msra.mxu0 0.0
    %4888 = vmatprep.subr.mxu0 0.0
    %4889 = vmatpush1.msra.mxu0 0.0
    %4890 = vmatprep.subr.mxu0 0.0
    %4891 = vmatpush1.msra.mxu0 0.0
    %4892 = vmatprep.subr.mxu0 0.0
    %4893 = vmatpush1.msra.mxu0 0.0
    %4894 = vmatprep.subr.mxu0 0.0
    %4895 = vmatpush1.msra.mxu0 0.0
    %4896 = vmatprep.subr.mxu0 0.0
    %4897 = vmatpush1.msra.mxu0 0.0
    %4898 = vmatprep.subr.mxu0 0.0
    %4899 = vmatpush1.msra.mxu0 0.0
    %4900 = vmatprep.subr.mxu0 0.0
    %4901 = vmatpush1.msra.mxu0 0.0
    %4902 = vmatprep.subr.mxu0 0.0
    %4903 = vmatpush1.msra.mxu0 0.0
    %4904 = vmatprep.subr.mxu0 0.0
    %4905 = vmatpush1.msra.mxu0 0.0
    %4906 = vmatprep.subr.mxu0 0.0
    %4907 = vmatpush1.msra.mxu0 0.0
    %4908 = vmatprep.subr.mxu0 0.0
    %4909 = vmatpush1.msra.mxu0 0.0
    %4910 = vmatprep.subr.mxu0 0.0
    %4911 = vmatpush1.msra.mxu0 0.0
    %4912 = vmatprep.subr.mxu0 0.0
    %4913 = vmatpush1.msra.mxu0 0.0
    %4914 = vmatprep.subr.mxu0 0.0
    %4915 = vmatpush1.msra.mxu0 0.0
    %4916 = vmatprep.subr.mxu0 0.0
    %4917 = vmatpush1.msra.mxu0 0.0
    %4918 = vmatprep.subr.mxu0 0.0
    %4919 = vmatpush1.msra.mxu0 0.0
    %4920 = vmatprep.subr.mxu0 0.0
    %4921 = vmatpush1.msra.mxu0 0.0
    %4922 = vmatprep.subr.mxu0 0.0
    %4923 = vmatpush1.msra.mxu0 0.0
    %4924 = vmatprep.subr.mxu0 0.0
    %4925 = vmatpush1.msra.mxu0 0.0
    %4926 = vmatprep.subr.mxu0 0.0
    %4927 = vmatpush1.msra.mxu0 0.0
    %4928 = vmatprep.subr.mxu0 0.0
    %4929 = vmatpush1.msra.mxu0 0.0
    %4930 = vmatprep.subr.mxu0 0.0
    %4931 = vmatpush1.msra.mxu0 0.0
    %4932 = vmatprep.subr.mxu0 0.0
    %4933 = vmatpush1.msra.mxu0 0.0
    %4934 = vmatprep.mubr.f32.mxu0 0.0
    %4935 = vmatmul.mubr.f32.gmra.mrb[0].mxu0 %v4868
    %v4936 = vpop.f32.mrb[0].mxu0
    %v4937 = vadd.f32 0.0, %v4936
    %v4938 = vpop.f32.mrb[0].mxu0
    %v4939 = vadd.f32 0.0, %v4938
    %4940 = vdwg.mxu0
    %v4941 = vadd.f32 %v4865, %v4937
    %v4942 = vadd.f32 %v4866, %v4939
    %v4943 = vxor.u32 %v4941, 2147483648
    %v4944 = vmul.f32 %v4943, 1.442695
    %v4945 = vpow.pop %v4944
    %v4946 = vadd.f32 %v4945, 1.0
    %v4947 = vrcp.pop %v4946
    %v4948 = vmul.f32 1.0, %v4947
    %v4949 = vxor.u32 %v4942, 2147483648
    %v4950 = vmul.f32 %v4949, 1.442695
    %v4951 = vpow.pop %v4950
    %v4952 = vadd.f32 %v4951, 1.0
    %v4953 = vrcp.pop %v4952
    %v4954 = vmul.f32 1.0, %v4953
    %v4955 = vtanh.pop %v4942
    %v4956 = vmul.f32 %v4948, %v4861
    %v4957 = vmul.f32 %v4948, %v4955
    %4959 = vrot.lane.b32.xlu0 %v4957, 64
    %v4960 = vpop.permute.xlu0 %4959
    %v4962 = vadd.f32 %v4956, %v4960
    %v4963 = vtanh.pop %v4962
    %v4964 = vmul.f32 %v4954, %v4963
    %v4965 = vadd.f32 %v4864, %v4964
    %v4966 = vsel %vm1840, %v4245, %v4243
    %v4967 = vsel %vm1841, %v4246, %v4244
    %v4969 = vsel %vm1864, %v4964, 0
    %4971 = vmatprep.subr.mxu0 %v3811
    %4972 = vmatpush1.msra.mxu0 %v3810
    %4973 = vmatprep.subr.mxu0 %v3813
    %4974 = vmatpush1.msra.mxu0 %v3812
    %4975 = vmatprep.subr.mxu0 %v3815
    %4976 = vmatpush1.msra.mxu0 %v3814
    %4977 = vmatprep.subr.mxu0 %v3817
    %4978 = vmatpush1.msra.mxu0 %v3816
    %4979 = vmatprep.subr.mxu0 %v3819
    %4980 = vmatpush1.msra.mxu0 %v3818
    %4981 = vmatprep.subr.mxu0 %v3821
    %4982 = vmatpush1.msra.mxu0 %v3820
    %4983 = vmatprep.subr.mxu0 %v3823
    %4984 = vmatpush1.msra.mxu0 %v3822
    %4985 = vmatprep.subr.mxu0 %v3825
    %4986 = vmatpush1.msra.mxu0 %v3824
    %4987 = vmatprep.subr.mxu0 0.0
    %4988 = vmatpush1.msra.mxu0 0.0
    %4989 = vmatprep.subr.mxu0 0.0
    %4990 = vmatpush1.msra.mxu0 0.0
    %4991 = vmatprep.subr.mxu0 0.0
    %4992 = vmatpush1.msra.mxu0 0.0
    %4993 = vmatprep.subr.mxu0 0.0
    %4994 = vmatpush1.msra.mxu0 0.0
    %4995 = vmatprep.subr.mxu0 0.0
    %4996 = vmatpush1.msra.mxu0 0.0
    %4997 = vmatprep.subr.mxu0 0.0
    %4998 = vmatpush1.msra.mxu0 0.0
    %4999 = vmatprep.subr.mxu0 0.0
    %5000 = vmatpush1.msra.mxu0 0.0
    %5001 = vmatprep.subr.mxu0 0.0
    %5002 = vmatpush1.msra.mxu0 0.0
    %5003 = vmatprep.subr.mxu0 0.0
    %5004 = vmatpush1.msra.mxu0 0.0
    %5005 = vmatprep.subr.mxu0 0.0
    %5006 = vmatpush1.msra.mxu0 0.0
    %5007 = vmatprep.subr.mxu0 0.0
    %5008 = vmatpush1.msra.mxu0 0.0
    %5009 = vmatprep.subr.mxu0 0.0
    %5010 = vmatpush1.msra.mxu0 0.0
    %5011 = vmatprep.subr.mxu0 0.0
    %5012 = vmatpush1.msra.mxu0 0.0
    %5013 = vmatprep.subr.mxu0 0.0
    %5014 = vmatpush1.msra.mxu0 0.0
    %5015 = vmatprep.subr.mxu0 0.0
    %5016 = vmatpush1.msra.mxu0 0.0
    %5017 = vmatprep.subr.mxu0 0.0
    %5018 = vmatpush1.msra.mxu0 0.0
    %5019 = vmatprep.subr.mxu0 0.0
    %5020 = vmatpush1.msra.mxu0 0.0
    %5021 = vmatprep.subr.mxu0 0.0
    %5022 = vmatpush1.msra.mxu0 0.0
    %5023 = vmatprep.subr.mxu0 0.0
    %5024 = vmatpush1.msra.mxu0 0.0
    %5025 = vmatprep.subr.mxu0 0.0
    %5026 = vmatpush1.msra.mxu0 0.0
    %5027 = vmatprep.subr.mxu0 0.0
    %5028 = vmatpush1.msra.mxu0 0.0
    %5029 = vmatprep.subr.mxu0 0.0
    %5030 = vmatpush1.msra.mxu0 0.0
    %5031 = vmatprep.subr.mxu0 0.0
    %5032 = vmatpush1.msra.mxu0 0.0
    %5033 = vmatprep.subr.mxu0 0.0
    %5034 = vmatpush1.msra.mxu0 0.0
    %5035 = vmatprep.mubr.f32.mxu0 0.0
    %5036 = vmatmul.mubr.f32.gmra.mrb[0].mxu0 %v4969
    %v5037 = vpop.f32.mrb[0].mxu0
    %v5038 = vadd.f32 0.0, %v5037
    %v5039 = vpop.f32.mrb[0].mxu0
    %v5040 = vadd.f32 0.0, %v5039
    %5041 = vdwg.mxu0
    %v5042 = vadd.f32 %v4966, %v5038
    %v5043 = vadd.f32 %v4967, %v5040
    %v5044 = vxor.u32 %v5042, 2147483648
    %v5045 = vmul.f32 %v5044, 1.442695
    %v5046 = vpow.pop %v5045
    %v5047 = vadd.f32 %v5046, 1.0
    %v5048 = vrcp.pop %v5047
    %v5049 = vmul.f32 1.0, %v5048
    %v5050 = vxor.u32 %v5043, 2147483648
    %v5051 = vmul.f32 %v5050, 1.442695
    %v5052 = vpow.pop %v5051
    %v5053 = vadd.f32 %v5052, 1.0
    %v5054 = vrcp.pop %v5053
    %v5055 = vmul.f32 1.0, %v5054
    %v5056 = vtanh.pop %v5043
    %v5057 = vmul.f32 %v5049, %v4962
    %v5058 = vmul.f32 %v5049, %v5056
    %5060 = vrot.lane.b32.xlu0 %v5058, 64
    %v5061 = vpop.permute.xlu0 %5060
    %v5063 = vadd.f32 %v5057, %v5061
    %v5064 = vtanh.pop %v5063
    %v5065 = vmul.f32 %v5055, %v5064
    %v5066 = vadd.f32 %v4965, %v5065
    %v5067 = vsel %vm1840, %v4140, %v4138
    %v5068 = vsel %vm1841, %v4141, %v4139
    %v5070 = vsel %vm1864, %v5065, 0
    %5072 = vmatprep.subr.mxu0 %v3811
    %5073 = vmatpush1.msra.mxu0 %v3810
    %5074 = vmatprep.subr.mxu0 %v3813
    %5075 = vmatpush1.msra.mxu0 %v3812
    %5076 = vmatprep.subr.mxu0 %v3815
    %5077 = vmatpush1.msra.mxu0 %v3814
    %5078 = vmatprep.subr.mxu0 %v3817
    %5079 = vmatpush1.msra.mxu0 %v3816
    %5080 = vmatprep.subr.mxu0 %v3819
    %5081 = vmatpush1.msra.mxu0 %v3818
    %5082 = vmatprep.subr.mxu0 %v3821
    %5083 = vmatpush1.msra.mxu0 %v3820
    %5084 = vmatprep.subr.mxu0 %v3823
    %5085 = vmatpush1.msra.mxu0 %v3822
    %5086 = vmatprep.subr.mxu0 %v3825
    %5087 = vmatpush1.msra.mxu0 %v3824
    %5088 = vmatprep.subr.mxu0 0.0
    %5089 = vmatpush1.msra.mxu0 0.0
    %5090 = vmatprep.subr.mxu0 0.0
    %5091 = vmatpush1.msra.mxu0 0.0
    %5092 = vmatprep.subr.mxu0 0.0
    %5093 = vmatpush1.msra.mxu0 0.0
    %5094 = vmatprep.subr.mxu0 0.0
    %5095 = vmatpush1.msra.mxu0 0.0
    %5096 = vmatprep.subr.mxu0 0.0
    %5097 = vmatpush1.msra.mxu0 0.0
    %5098 = vmatprep.subr.mxu0 0.0
    %5099 = vmatpush1.msra.mxu0 0.0
    %5100 = vmatprep.subr.mxu0 0.0
    %5101 = vmatpush1.msra.mxu0 0.0
    %5102 = vmatprep.subr.mxu0 0.0
    %5103 = vmatpush1.msra.mxu0 0.0
    %5104 = vmatprep.subr.mxu0 0.0
    %5105 = vmatpush1.msra.mxu0 0.0
    %5106 = vmatprep.subr.mxu0 0.0
    %5107 = vmatpush1.msra.mxu0 0.0
    %5108 = vmatprep.subr.mxu0 0.0
    %5109 = vmatpush1.msra.mxu0 0.0
    %5110 = vmatprep.subr.mxu0 0.0
    %5111 = vmatpush1.msra.mxu0 0.0
    %5112 = vmatprep.subr.mxu0 0.0
    %5113 = vmatpush1.msra.mxu0 0.0
    %5114 = vmatprep.subr.mxu0 0.0
    %5115 = vmatpush1.msra.mxu0 0.0
    %5116 = vmatprep.subr.mxu0 0.0
    %5117 = vmatpush1.msra.mxu0 0.0
    %5118 = vmatprep.subr.mxu0 0.0
    %5119 = vmatpush1.msra.mxu0 0.0
    %5120 = vmatprep.subr.mxu0 0.0
    %5121 = vmatpush1.msra.mxu0 0.0
    %5122 = vmatprep.subr.mxu0 0.0
    %5123 = vmatpush1.msra.mxu0 0.0
    %5124 = vmatprep.subr.mxu0 0.0
    %5125 = vmatpush1.msra.mxu0 0.0
    %5126 = vmatprep.subr.mxu0 0.0
    %5127 = vmatpush1.msra.mxu0 0.0
    %5128 = vmatprep.subr.mxu0 0.0
    %5129 = vmatpush1.msra.mxu0 0.0
    %5130 = vmatprep.subr.mxu0 0.0
    %5131 = vmatpush1.msra.mxu0 0.0
    %5132 = vmatprep.subr.mxu0 0.0
    %5133 = vmatpush1.msra.mxu0 0.0
    %5134 = vmatprep.subr.mxu0 0.0
    %5135 = vmatpush1.msra.mxu0 0.0
    %5136 = vmatprep.mubr.f32.mxu0 0.0
    %5137 = vmatmul.mubr.f32.gmra.mrb[0].mxu0 %v5070
    %v5138 = vpop.f32.mrb[0].mxu0
    %v5139 = vadd.f32 0.0, %v5138
    %v5140 = vpop.f32.mrb[0].mxu0
    %v5141 = vadd.f32 0.0, %v5140
    %5142 = vdwg.mxu0
    %v5143 = vadd.f32 %v5067, %v5139
    %v5144 = vadd.f32 %v5068, %v5141
    %v5145 = vxor.u32 %v5143, 2147483648
    %v5146 = vmul.f32 %v5145, 1.442695
    %v5147 = vpow.pop %v5146
    %v5148 = vadd.f32 %v5147, 1.0
    %v5149 = vrcp.pop %v5148
    %v5150 = vmul.f32 1.0, %v5149
    %v5151 = vxor.u32 %v5144, 2147483648
    %v5152 = vmul.f32 %v5151, 1.442695
    %v5153 = vpow.pop %v5152
    %v5154 = vadd.f32 %v5153, 1.0
    %v5155 = vrcp.pop %v5154
    %v5156 = vmul.f32 1.0, %v5155
    %v5157 = vtanh.pop %v5144
    %v5158 = vmul.f32 %v5150, %v5063
    %v5159 = vmul.f32 %v5150, %v5157
    %5161 = vrot.lane.b32.xlu0 %v5159, 64
    %v5162 = vpop.permute.xlu0 %5161
    %v5164 = vadd.f32 %v5158, %v5162
    %v5165 = vtanh.pop %v5164
    %v5166 = vmul.f32 %v5156, %v5165
    %v5167 = vadd.f32 %v5066, %v5166
    %v5168 = vsel %vm1840, %v4035, %v4033
    %v5169 = vsel %vm1841, %v4036, %v4034
    %v5171 = vsel %vm1864, %v5166, 0
    %5173 = vmatprep.subr.mxu0 %v3811
    %5174 = vmatpush1.msra.mxu0 %v3810
    %5175 = vmatprep.subr.mxu0 %v3813
    %5176 = vmatpush1.msra.mxu0 %v3812
    %5177 = vmatprep.subr.mxu0 %v3815
    %5178 = vmatpush1.msra.mxu0 %v3814
    %5179 = vmatprep.subr.mxu0 %v3817
    %5180 = vmatpush1.msra.mxu0 %v3816
    %5181 = vmatprep.subr.mxu0 %v3819
    %5182 = vmatpush1.msra.mxu0 %v3818
    %5183 = vmatprep.subr.mxu0 %v3821
    %5184 = vmatpush1.msra.mxu0 %v3820
    %5185 = vmatprep.subr.mxu0 %v3823
    %5186 = vmatpush1.msra.mxu0 %v3822
    %5187 = vmatprep.subr.mxu0 %v3825
    %5188 = vmatpush1.msra.mxu0 %v3824
    %5189 = vmatprep.subr.mxu0 0.0
    %5190 = vmatpush1.msra.mxu0 0.0
    %5191 = vmatprep.subr.mxu0 0.0
    %5192 = vmatpush1.msra.mxu0 0.0
    %5193 = vmatprep.subr.mxu0 0.0
    %5194 = vmatpush1.msra.mxu0 0.0
    %5195 = vmatprep.subr.mxu0 0.0
    %5196 = vmatpush1.msra.mxu0 0.0
    %5197 = vmatprep.subr.mxu0 0.0
    %5198 = vmatpush1.msra.mxu0 0.0
    %5199 = vmatprep.subr.mxu0 0.0
    %5200 = vmatpush1.msra.mxu0 0.0
    %5201 = vmatprep.subr.mxu0 0.0
    %5202 = vmatpush1.msra.mxu0 0.0
    %5203 = vmatprep.subr.mxu0 0.0
    %5204 = vmatpush1.msra.mxu0 0.0
    %5205 = vmatprep.subr.mxu0 0.0
    %5206 = vmatpush1.msra.mxu0 0.0
    %5207 = vmatprep.subr.mxu0 0.0
    %5208 = vmatpush1.msra.mxu0 0.0
    %5209 = vmatprep.subr.mxu0 0.0
    %5210 = vmatpush1.msra.mxu0 0.0
    %5211 = vmatprep.subr.mxu0 0.0
    %5212 = vmatpush1.msra.mxu0 0.0
    %5213 = vmatprep.subr.mxu0 0.0
    %5214 = vmatpush1.msra.mxu0 0.0
    %5215 = vmatprep.subr.mxu0 0.0
    %5216 = vmatpush1.msra.mxu0 0.0
    %5217 = vmatprep.subr.mxu0 0.0
    %5218 = vmatpush1.msra.mxu0 0.0
    %5219 = vmatprep.subr.mxu0 0.0
    %5220 = vmatpush1.msra.mxu0 0.0
    %5221 = vmatprep.subr.mxu0 0.0
    %5222 = vmatpush1.msra.mxu0 0.0
    %5223 = vmatprep.subr.mxu0 0.0
    %5224 = vmatpush1.msra.mxu0 0.0
    %5225 = vmatprep.subr.mxu0 0.0
    %5226 = vmatpush1.msra.mxu0 0.0
    %5227 = vmatprep.subr.mxu0 0.0
    %5228 = vmatpush1.msra.mxu0 0.0
    %5229 = vmatprep.subr.mxu0 0.0
    %5230 = vmatpush1.msra.mxu0 0.0
    %5231 = vmatprep.subr.mxu0 0.0
    %5232 = vmatpush1.msra.mxu0 0.0
    %5233 = vmatprep.subr.mxu0 0.0
    %5234 = vmatpush1.msra.mxu0 0.0
    %5235 = vmatprep.subr.mxu0 0.0
    %5236 = vmatpush1.msra.mxu0 0.0
    %5237 = vmatprep.mubr.f32.mxu0 0.0
    %5238 = vmatmul.mubr.f32.gmra.mrb[0].mxu0 %v5171
    %v5239 = vpop.f32.mrb[0].mxu0
    %v5240 = vadd.f32 0.0, %v5239
    %v5241 = vpop.f32.mrb[0].mxu0
    %v5242 = vadd.f32 0.0, %v5241
    %5243 = vdwg.mxu0
    %v5244 = vadd.f32 %v5168, %v5240
    %v5245 = vadd.f32 %v5169, %v5242
    %v5246 = vxor.u32 %v5244, 2147483648
    %v5247 = vmul.f32 %v5246, 1.442695
    %v5248 = vpow.pop %v5247
    %v5249 = vadd.f32 %v5248, 1.0
    %v5250 = vrcp.pop %v5249
    %v5251 = vmul.f32 1.0, %v5250
    %v5252 = vxor.u32 %v5245, 2147483648
    %v5253 = vmul.f32 %v5252, 1.442695
    %v5254 = vpow.pop %v5253
    %v5255 = vadd.f32 %v5254, 1.0
    %v5256 = vrcp.pop %v5255
    %v5257 = vmul.f32 1.0, %v5256
    %v5258 = vtanh.pop %v5245
    %v5259 = vmul.f32 %v5251, %v5164
    %v5260 = vmul.f32 %v5251, %v5258
    %5262 = vrot.lane.b32.xlu0 %v5260, 64
    %v5263 = vpop.permute.xlu0 %5262
    %v5265 = vadd.f32 %v5259, %v5263
    %v5266 = vtanh.pop %v5265
    %v5267 = vmul.f32 %v5257, %v5266
    %v5268 = vadd.f32 %v5167, %v5267
    %v5269 = vsel %vm1840, %v3930, %v3928
    %v5270 = vsel %vm1841, %v3931, %v3929
    %v5272 = vsel %vm1864, %v5267, 0
    %5274 = vmatprep.subr.mxu0 %v3811
    %5275 = vmatpush1.msra.mxu0 %v3810
    %5276 = vmatprep.subr.mxu0 %v3813
    %5277 = vmatpush1.msra.mxu0 %v3812
    %5278 = vmatprep.subr.mxu0 %v3815
    %5279 = vmatpush1.msra.mxu0 %v3814
    %5280 = vmatprep.subr.mxu0 %v3817
    %5281 = vmatpush1.msra.mxu0 %v3816
    %5282 = vmatprep.subr.mxu0 %v3819
    %5283 = vmatpush1.msra.mxu0 %v3818
    %5284 = vmatprep.subr.mxu0 %v3821
    %5285 = vmatpush1.msra.mxu0 %v3820
    %5286 = vmatprep.subr.mxu0 %v3823
    %5287 = vmatpush1.msra.mxu0 %v3822
    %5288 = vmatprep.subr.mxu0 %v3825
    %5289 = vmatpush1.msra.mxu0 %v3824
    %5290 = vmatprep.subr.mxu0 0.0
    %5291 = vmatpush1.msra.mxu0 0.0
    %5292 = vmatprep.subr.mxu0 0.0
    %5293 = vmatpush1.msra.mxu0 0.0
    %5294 = vmatprep.subr.mxu0 0.0
    %5295 = vmatpush1.msra.mxu0 0.0
    %5296 = vmatprep.subr.mxu0 0.0
    %5297 = vmatpush1.msra.mxu0 0.0
    %5298 = vmatprep.subr.mxu0 0.0
    %5299 = vmatpush1.msra.mxu0 0.0
    %5300 = vmatprep.subr.mxu0 0.0
    %5301 = vmatpush1.msra.mxu0 0.0
    %5302 = vmatprep.subr.mxu0 0.0
    %5303 = vmatpush1.msra.mxu0 0.0
    %5304 = vmatprep.subr.mxu0 0.0
    %5305 = vmatpush1.msra.mxu0 0.0
    %5306 = vmatprep.subr.mxu0 0.0
    %5307 = vmatpush1.msra.mxu0 0.0
    %5308 = vmatprep.subr.mxu0 0.0
    %5309 = vmatpush1.msra.mxu0 0.0
    %5310 = vmatprep.subr.mxu0 0.0
    %5311 = vmatpush1.msra.mxu0 0.0
    %5312 = vmatprep.subr.mxu0 0.0
    %5313 = vmatpush1.msra.mxu0 0.0
    %5314 = vmatprep.subr.mxu0 0.0
    %5315 = vmatpush1.msra.mxu0 0.0
    %5316 = vmatprep.subr.mxu0 0.0
    %5317 = vmatpush1.msra.mxu0 0.0
    %5318 = vmatprep.subr.mxu0 0.0
    %5319 = vmatpush1.msra.mxu0 0.0
    %5320 = vmatprep.subr.mxu0 0.0
    %5321 = vmatpush1.msra.mxu0 0.0
    %5322 = vmatprep.subr.mxu0 0.0
    %5323 = vmatpush1.msra.mxu0 0.0
    %5324 = vmatprep.subr.mxu0 0.0
    %5325 = vmatpush1.msra.mxu0 0.0
    %5326 = vmatprep.subr.mxu0 0.0
    %5327 = vmatpush1.msra.mxu0 0.0
    %5328 = vmatprep.subr.mxu0 0.0
    %5329 = vmatpush1.msra.mxu0 0.0
    %5330 = vmatprep.subr.mxu0 0.0
    %5331 = vmatpush1.msra.mxu0 0.0
    %5332 = vmatprep.subr.mxu0 0.0
    %5333 = vmatpush1.msra.mxu0 0.0
    %5334 = vmatprep.subr.mxu0 0.0
    %5335 = vmatpush1.msra.mxu0 0.0
    %5336 = vmatprep.subr.mxu0 0.0
    %5337 = vmatpush1.msra.mxu0 0.0
    %5338 = vmatprep.mubr.f32.mxu0 0.0
    %5339 = vmatmul.mubr.f32.gmra.mrb[0].mxu0 %v5272
    %v5340 = vpop.f32.mrb[0].mxu0
    %v5341 = vadd.f32 0.0, %v5340
    %v5342 = vpop.f32.mrb[0].mxu0
    %v5343 = vadd.f32 0.0, %v5342
    %5344 = vdwg.mxu0
    %v5345 = vadd.f32 %v5269, %v5341
    %v5346 = vadd.f32 %v5270, %v5343
    %v5347 = vxor.u32 %v5345, 2147483648
    %v5348 = vmul.f32 %v5347, 1.442695
    %v5349 = vpow.pop %v5348
    %v5350 = vadd.f32 %v5349, 1.0
    %v5351 = vrcp.pop %v5350
    %v5352 = vmul.f32 1.0, %v5351
    %v5353 = vxor.u32 %v5346, 2147483648
    %v5354 = vmul.f32 %v5353, 1.442695
    %v5355 = vpow.pop %v5354
    %v5356 = vadd.f32 %v5355, 1.0
    %v5357 = vrcp.pop %v5356
    %v5358 = vmul.f32 1.0, %v5357
    %v5359 = vtanh.pop %v5346
    %v5360 = vmul.f32 %v5352, %v5265
    %v5361 = vmul.f32 %v5352, %v5359
    %5363 = vrot.lane.b32.xlu0 %v5361, 64
    %v5364 = vpop.permute.xlu0 %5363
    %v5366 = vadd.f32 %v5360, %v5364
    %v5367 = vtanh.pop %v5366
    %v5368 = vmul.f32 %v5358, %v5367
    %v5369 = vadd.f32 %v5268, %v5368
    %v5370 = vsel %vm1840, %v3828, %v3826
    %v5371 = vsel %vm1841, %v3829, %v3827
    %v5373 = vsel %vm1864, %v5368, 0
    %5375 = vmatprep.subr.mxu0 %v3811
    %5376 = vmatpush1.msra.mxu0 %v3810
    %5377 = vmatprep.subr.mxu0 %v3813
    %5378 = vmatpush1.msra.mxu0 %v3812
    %5379 = vmatprep.subr.mxu0 %v3815
    %5380 = vmatpush1.msra.mxu0 %v3814
    %5381 = vmatprep.subr.mxu0 %v3817
    %5382 = vmatpush1.msra.mxu0 %v3816
    %5383 = vmatprep.subr.mxu0 %v3819
    %5384 = vmatpush1.msra.mxu0 %v3818
    %5385 = vmatprep.subr.mxu0 %v3821
    %5386 = vmatpush1.msra.mxu0 %v3820
    %5387 = vmatprep.subr.mxu0 %v3823
    %5388 = vmatpush1.msra.mxu0 %v3822
    %5389 = vmatprep.subr.mxu0 %v3825
    %5390 = vmatpush1.msra.mxu0 %v3824
    %5391 = vmatprep.subr.mxu0 0.0
    %5392 = vmatpush1.msra.mxu0 0.0
    %5393 = vmatprep.subr.mxu0 0.0
    %5394 = vmatpush1.msra.mxu0 0.0
    %5395 = vmatprep.subr.mxu0 0.0
    %5396 = vmatpush1.msra.mxu0 0.0
    %5397 = vmatprep.subr.mxu0 0.0
    %5398 = vmatpush1.msra.mxu0 0.0
    %5399 = vmatprep.subr.mxu0 0.0
    %5400 = vmatpush1.msra.mxu0 0.0
    %5401 = vmatprep.subr.mxu0 0.0
    %5402 = vmatpush1.msra.mxu0 0.0
    %5403 = vmatprep.subr.mxu0 0.0
    %5404 = vmatpush1.msra.mxu0 0.0
    %5405 = vmatprep.subr.mxu0 0.0
    %5406 = vmatpush1.msra.mxu0 0.0
    %5407 = vmatprep.subr.mxu0 0.0
    %5408 = vmatpush1.msra.mxu0 0.0
    %5409 = vmatprep.subr.mxu0 0.0
    %5410 = vmatpush1.msra.mxu0 0.0
    %5411 = vmatprep.subr.mxu0 0.0
    %5412 = vmatpush1.msra.mxu0 0.0
    %5413 = vmatprep.subr.mxu0 0.0
    %5414 = vmatpush1.msra.mxu0 0.0
    %5415 = vmatprep.subr.mxu0 0.0
    %5416 = vmatpush1.msra.mxu0 0.0
    %5417 = vmatprep.subr.mxu0 0.0
    %5418 = vmatpush1.msra.mxu0 0.0
    %5419 = vmatprep.subr.mxu0 0.0
    %5420 = vmatpush1.msra.mxu0 0.0
    %5421 = vmatprep.subr.mxu0 0.0
    %5422 = vmatpush1.msra.mxu0 0.0
    %5423 = vmatprep.subr.mxu0 0.0
    %5424 = vmatpush1.msra.mxu0 0.0
    %5425 = vmatprep.subr.mxu0 0.0
    %5426 = vmatpush1.msra.mxu0 0.0
    %5427 = vmatprep.subr.mxu0 0.0
    %5428 = vmatpush1.msra.mxu0 0.0
    %5429 = vmatprep.subr.mxu0 0.0
    %5430 = vmatpush1.msra.mxu0 0.0
    %5431 = vmatprep.subr.mxu0 0.0
    %5432 = vmatpush1.msra.mxu0 0.0
    %5433 = vmatprep.subr.mxu0 0.0
    %5434 = vmatpush1.msra.mxu0 0.0
    %5435 = vmatprep.subr.mxu0 0.0
    %5436 = vmatpush1.msra.mxu0 0.0
    %5437 = vmatprep.subr.mxu0 0.0
    %5438 = vmatpush1.msra.mxu0 0.0
    %5439 = vmatprep.mubr.f32.mxu0 0.0
    %5440 = vmatmul.mubr.f32.gmra.mrb[0].mxu0 %v5373
    %v5441 = vpop.f32.mrb[0].mxu0
    %v5442 = vadd.f32 0.0, %v5441
    %v5443 = vpop.f32.mrb[0].mxu0
    %v5444 = vadd.f32 0.0, %v5443
    %5445 = vdwg.mxu0
    %v5446 = vadd.f32 %v5370, %v5442
    %v5447 = vadd.f32 %v5371, %v5444
    %v5448 = vxor.u32 %v5446, 2147483648
    %v5449 = vmul.f32 %v5448, 1.442695
    %v5450 = vpow.pop %v5449
    %v5451 = vadd.f32 %v5450, 1.0
    %v5452 = vrcp.pop %v5451
    %v5453 = vmul.f32 1.0, %v5452
    %v5454 = vxor.u32 %v5447, 2147483648
    %v5455 = vmul.f32 %v5454, 1.442695
    %v5456 = vpow.pop %v5455
    %v5457 = vadd.f32 %v5456, 1.0
    %v5458 = vrcp.pop %v5457
    %v5459 = vmul.f32 1.0, %v5458
    %v5460 = vtanh.pop %v5447
    %v5461 = vmul.f32 %v5453, %v5366
    %v5462 = vmul.f32 %v5453, %v5460
    %5464 = vrot.lane.b32.xlu0 %v5462, 64
    %v5465 = vpop.permute.xlu0 %5464
    %v5467 = vadd.f32 %v5461, %v5465
    %v5468 = vtanh.pop %v5467
    %v5469 = vmul.f32 %v5459, %v5468
    %v5470 = vadd.f32 %v5369, %v5469
    %v5471 = vmul.f32 %v5470, 0.0625
    %v5472 = vld [vmem:[#allocation10] sm:$0xff]
    %v5473 = vld [vmem:[#allocation10 + $0x8] sm:$0xff]
    %v5474 = vld [vmem:[#allocation10 + $0x10] sm:$0xff]
    %v5475 = vld [vmem:[#allocation10 + $0x18] sm:$0xff]
    %v5476 = vld [vmem:[#allocation10 + $0x20] sm:$0xff]
    %v5477 = vld [vmem:[#allocation10 + $0x28] sm:$0xff]
    %v5478 = vld [vmem:[#allocation10 + $0x30] sm:$0xff]
    %v5479 = vld [vmem:[#allocation10 + $0x38] sm:$0xff]
    %v5480 = vld [vmem:[%s8] sm:$0x1]
    %v5482 = vlaneseq
    %v5483 = vshrl.u32 %v5482, 7
    %v5484 = vsub.s32 0, %v5483
    %v5485 = vrot.slane %v5480, %v5484
    %v5488 = vsel %vm1864, %v5471, 0
    %5490 = vmatprep.subr.mxu0 0.0
    %5491 = vmatpush1.msra.mxu0 %v5472
    %5492 = vmatprep.subr.mxu0 0.0
    %5493 = vmatpush1.msra.mxu0 %v5473
    %5494 = vmatprep.subr.mxu0 0.0
    %5495 = vmatpush1.msra.mxu0 %v5474
    %5496 = vmatprep.subr.mxu0 0.0
    %5497 = vmatpush1.msra.mxu0 %v5475
    %5498 = vmatprep.subr.mxu0 0.0
    %5499 = vmatpush1.msra.mxu0 %v5476
    %5500 = vmatprep.subr.mxu0 0.0
    %5501 = vmatpush1.msra.mxu0 %v5477
    %5502 = vmatprep.subr.mxu0 0.0
    %5503 = vmatpush1.msra.mxu0 %v5478
    %5504 = vmatprep.subr.mxu0 0.0
    %5505 = vmatpush1.msra.mxu0 %v5479
    %5506 = vmatprep.subr.mxu0 0.0
    %5507 = vmatpush1.msra.mxu0 0.0
    %5508 = vmatprep.subr.mxu0 0.0
    %5509 = vmatpush1.msra.mxu0 0.0
    %5510 = vmatprep.subr.mxu0 0.0
    %5511 = vmatpush1.msra.mxu0 0.0
    %5512 = vmatprep.subr.mxu0 0.0
    %5513 = vmatpush1.msra.mxu0 0.0
    %5514 = vmatprep.subr.mxu0 0.0
    %5515 = vmatpush1.msra.mxu0 0.0
    %5516 = vmatprep.subr.mxu0 0.0
    %5517 = vmatpush1.msra.mxu0 0.0
    %5518 = vmatprep.subr.mxu0 0.0
    %5519 = vmatpush1.msra.mxu0 0.0
    %5520 = vmatprep.subr.mxu0 0.0
    %5521 = vmatpush1.msra.mxu0 0.0
    %5522 = vmatprep.subr.mxu0 0.0
    %5523 = vmatpush1.msra.mxu0 0.0
    %5524 = vmatprep.subr.mxu0 0.0
    %5525 = vmatpush1.msra.mxu0 0.0
    %5526 = vmatprep.subr.mxu0 0.0
    %5527 = vmatpush1.msra.mxu0 0.0
    %5528 = vmatprep.subr.mxu0 0.0
    %5529 = vmatpush1.msra.mxu0 0.0
    %5530 = vmatprep.subr.mxu0 0.0
    %5531 = vmatpush1.msra.mxu0 0.0
    %5532 = vmatprep.subr.mxu0 0.0
    %5533 = vmatpush1.msra.mxu0 0.0
    %5534 = vmatprep.subr.mxu0 0.0
    %5535 = vmatpush1.msra.mxu0 0.0
    %5536 = vmatprep.subr.mxu0 0.0
    %5537 = vmatpush1.msra.mxu0 0.0
    %5538 = vmatprep.subr.mxu0 0.0
    %5539 = vmatpush1.msra.mxu0 0.0
    %5540 = vmatprep.subr.mxu0 0.0
    %5541 = vmatpush1.msra.mxu0 0.0
    %5542 = vmatprep.subr.mxu0 0.0
    %5543 = vmatpush1.msra.mxu0 0.0
    %5544 = vmatprep.subr.mxu0 0.0
    %5545 = vmatpush1.msra.mxu0 0.0
    %5546 = vmatprep.subr.mxu0 0.0
    %5547 = vmatpush1.msra.mxu0 0.0
    %5548 = vmatprep.subr.mxu0 0.0
    %5549 = vmatpush1.msra.mxu0 0.0
    %5550 = vmatprep.subr.mxu0 0.0
    %5551 = vmatpush1.msra.mxu0 0.0
    %5552 = vmatprep.subr.mxu0 0.0
    %5553 = vmatpush1.msra.mxu0 0.0
    %5554 = vmatprep.mubr.f32.mxu0 0.0
    %5555 = vmatmul.mubr.f32.gmra.mrb[0].mxu0 %v5488
    %v5556 = vpop.f32.mrb[0].mxu0
    %v5557 = vadd.f32 %v5485, %v5556
    %v5558 = vpop.f32.mrb[0].mxu0
    %5559 = vdwg.mxu0
    %v5560 = vsel %vm1864, %v5557, 0.0
    %v5561 = vrot.slane %v5560, 4
    %v5562 = vadd.f32 %v5560, %v5561
    %v5563 = vrot.slane %v5562, 2
    %v5564 = vadd.f32 %v5562, %v5563
    %v5565 = vrot.slane %v5564, 1
    %v5566 = vadd.f32 %v5564, %v5565
    %v5567 = vrcp.pop 8.0
    %v5568 = vmul.f32 %v5566, %v5567
    %v5569 = vsub.f32 %v5557, %v5568
    %v5570 = vmul.f32 %v5569, %v5569
    %v5571 = vsel %vm1864, %v5570, 0.0
    %v5572 = vrot.slane %v5571, 4
    %v5573 = vadd.f32 %v5571, %v5572
    %v5574 = vrot.slane %v5573, 2
    %v5575 = vadd.f32 %v5573, %v5574
    %v5576 = vrot.slane %v5575, 1
    %v5577 = vadd.f32 %v5575, %v5576
    %v5578 = vmul.f32 %v5577, %v5567
    %v5579 = vadd.f32 %v5578, 1e-05
    %v5580 = vrsqrt.pop %v5579
    %v5581 = vmul.f32 %v5569, %v5580
    %v5582 = vld [vmem:[%s9] sm:$0x1]
    %v5584 = vlaneseq
    %v5585 = vshrl.u32 %v5584, 7
    %v5586 = vsub.s32 0, %v5585
    %v5587 = vrot.slane %v5582, %v5586
    %v5589 = vmul.f32 %v5581, %v5587
    %v5590 = vld [vmem:[%s10] sm:$0x1]
    %v5592 = vlaneseq
    %v5593 = vshrl.u32 %v5592, 7
    %v5594 = vsub.s32 0, %v5593
    %v5595 = vrot.slane %v5590, %v5594
    %v5597 = vadd.f32 %v5589, %v5595
    %v5598 = vmax.f32 %v5597, 0.0
    %v5599 = vld [vmem:[#allocation12] sm:$0xff]
    %v5600 = vld [vmem:[#allocation12 + $0x8] sm:$0xff]
    %v5601 = vld [vmem:[#allocation12 + $0x10] sm:$0xff]
    %v5602 = vld [vmem:[#allocation12 + $0x18] sm:$0xff]
    %v5603 = vld [vmem:[#allocation12 + $0x20] sm:$0xff]
    %v5604 = vld [vmem:[#allocation12 + $0x28] sm:$0xff]
    %v5605 = vld [vmem:[#allocation12 + $0x30] sm:$0xff]
    %v5606 = vld [vmem:[#allocation12 + $0x38] sm:$0xff]
    %v5607 = vld [vmem:[#allocation13] sm:$0x1]
    %v5609 = vlaneseq
    %v5610 = vshrl.u32 %v5609, 7
    %v5611 = vsub.s32 0, %v5610
    %v5612 = vrot.slane %v5607, %v5611
    %v5615 = vsel %vm1864, %v5598, 0
    %5617 = vmatprep.subr.mxu0 0.0
    %5618 = vmatpush1.msra.mxu0 %v5599
    %5619 = vmatprep.subr.mxu0 0.0
    %5620 = vmatpush1.msra.mxu0 %v5600
    %5621 = vmatprep.subr.mxu0 0.0
    %5622 = vmatpush1.msra.mxu0 %v5601
    %5623 = vmatprep.subr.mxu0 0.0
    %5624 = vmatpush1.msra.mxu0 %v5602
    %5625 = vmatprep.subr.mxu0 0.0
    %5626 = vmatpush1.msra.mxu0 %v5603
    %5627 = vmatprep.subr.mxu0 0.0
    %5628 = vmatpush1.msra.mxu0 %v5604
    %5629 = vmatprep.subr.mxu0 0.0
    %5630 = vmatpush1.msra.mxu0 %v5605
    %5631 = vmatprep.subr.mxu0 0.0
    %5632 = vmatpush1.msra.mxu0 %v5606
    %5633 = vmatprep.subr.mxu0 0.0
    %5634 = vmatpush1.msra.mxu0 0.0
    %5635 = vmatprep.subr.mxu0 0.0
    %5636 = vmatpush1.msra.mxu0 0.0
    %5637 = vmatprep.subr.mxu0 0.0
    %5638 = vmatpush1.msra.mxu0 0.0
    %5639 = vmatprep.subr.mxu0 0.0
    %5640 = vmatpush1.msra.mxu0 0.0
    %5641 = vmatprep.subr.mxu0 0.0
    %5642 = vmatpush1.msra.mxu0 0.0
    %5643 = vmatprep.subr.mxu0 0.0
    %5644 = vmatpush1.msra.mxu0 0.0
    %5645 = vmatprep.subr.mxu0 0.0
    %5646 = vmatpush1.msra.mxu0 0.0
    %5647 = vmatprep.subr.mxu0 0.0
    %5648 = vmatpush1.msra.mxu0 0.0
    %5649 = vmatprep.subr.mxu0 0.0
    %5650 = vmatpush1.msra.mxu0 0.0
    %5651 = vmatprep.subr.mxu0 0.0
    %5652 = vmatpush1.msra.mxu0 0.0
    %5653 = vmatprep.subr.mxu0 0.0
    %5654 = vmatpush1.msra.mxu0 0.0
    %5655 = vmatprep.subr.mxu0 0.0
    %5656 = vmatpush1.msra.mxu0 0.0
    %5657 = vmatprep.subr.mxu0 0.0
    %5658 = vmatpush1.msra.mxu0 0.0
    %5659 = vmatprep.subr.mxu0 0.0
    %5660 = vmatpush1.msra.mxu0 0.0
    %5661 = vmatprep.subr.mxu0 0.0
    %5662 = vmatpush1.msra.mxu0 0.0
    %5663 = vmatprep.subr.mxu0 0.0
    %5664 = vmatpush1.msra.mxu0 0.0
    %5665 = vmatprep.subr.mxu0 0.0
    %5666 = vmatpush1.msra.mxu0 0.0
    %5667 = vmatprep.subr.mxu0 0.0
    %5668 = vmatpush1.msra.mxu0 0.0
    %5669 = vmatprep.subr.mxu0 0.0
    %5670 = vmatpush1.msra.mxu0 0.0
    %5671 = vmatprep.subr.mxu0 0.0
    %5672 = vmatpush1.msra.mxu0 0.0
    %5673 = vmatprep.subr.mxu0 0.0
    %5674 = vmatpush1.msra.mxu0 0.0
    %5675 = vmatprep.subr.mxu0 0.0
    %5676 = vmatpush1.msra.mxu0 0.0
    %5677 = vmatprep.subr.mxu0 0.0
    %5678 = vmatpush1.msra.mxu0 0.0
    %5679 = vmatprep.subr.mxu0 0.0
    %5680 = vmatpush1.msra.mxu0 0.0
    %5681 = vmatprep.mubr.f32.mxu0 0.0
    %5682 = vmatmul.mubr.f32.gmra.mrb[0].mxu0 %v5615
    %v5683 = vpop.f32.mrb[0].mxu0
    %v5684 = vadd.f32 %v5612, %v5683
    %v5685 = vpop.f32.mrb[0].mxu0
    %5686 = vdwg.mxu0
    %v5687 = vsel %vm1864, %v5684, 0.0
    %v5688 = vrot.slane %v5687, 4
    %v5689 = vadd.f32 %v5687, %v5688
    %v5690 = vrot.slane %v5689, 2
    %v5691 = vadd.f32 %v5689, %v5690
    %v5692 = vrot.slane %v5691, 1
    %v5693 = vadd.f32 %v5691, %v5692
    %v5694 = vmul.f32 %v5693, %v5567
    %v5695 = vsub.f32 %v5684, %v5694
    %v5696 = vmul.f32 %v5695, %v5695
    %v5697 = vsel %vm1864, %v5696, 0.0
    %v5698 = vrot.slane %v5697, 4
    %v5699 = vadd.f32 %v5697, %v5698
    %v5700 = vrot.slane %v5699, 2
    %v5701 = vadd.f32 %v5699, %v5700
    %v5702 = vrot.slane %v5701, 1
    %v5703 = vadd.f32 %v5701, %v5702
    %v5704 = vmul.f32 %v5703, %v5567
    %v5705 = vadd.f32 %v5704, 1e-05
    %v5706 = vrsqrt.pop %v5705
    %v5707 = vmul.f32 %v5695, %v5706
    %v5708 = vld [vmem:[#allocation15] sm:$0x1]
    %v5710 = vlaneseq
    %v5711 = vshrl.u32 %v5710, 7
    %v5712 = vsub.s32 0, %v5711
    %v5713 = vrot.slane %v5708, %v5712
    %v5715 = vmul.f32 %v5707, %v5713
    %v5716 = vld [vmem:[#allocation16] sm:$0x1]
    %v5718 = vlaneseq
    %v5719 = vshrl.u32 %v5718, 7
    %v5720 = vsub.s32 0, %v5719
    %v5721 = vrot.slane %v5716, %v5720
    %v5723 = vadd.f32 %v5715, %v5721
    %v5724 = vmax.f32 %v5723, 0.0
    %v5725 = vld [vmem:[%s15] sm:$0xff]
    %v5726 = vld [vmem:[%s15 + $0x8] sm:$0xff]
    %v5727 = vld [vmem:[%s15 + $0x10] sm:$0xff]
    %v5728 = vld [vmem:[%s15 + $0x18] sm:$0xff]
    %v5729 = vld [vmem:[%s15 + $0x20] sm:$0xff]
    %v5730 = vld [vmem:[%s15 + $0x28] sm:$0xff]
    %v5731 = vld [vmem:[%s15 + $0x30] sm:$0xff]
    %v5732 = vld [vmem:[%s15 + $0x38] sm:$0xff]
    %v5733 = vld [vmem:[%s16] sm:$0x1]
    %v5735 = vlaneseq
    %v5736 = vshrl.u32 %v5735, 7
    %v5737 = vsub.s32 0, %v5736
    %v5738 = vrot.slane %v5733, %v5737
    %v5741 = vsel %vm1864, %v5724, 0
    %5743 = vmatprep.subr.mxu0 0.0
    %5744 = vmatpush1.msra.mxu0 %v5725
    %5745 = vmatprep.subr.mxu0 0.0
    %5746 = vmatpush1.msra.mxu0 %v5726
    %5747 = vmatprep.subr.mxu0 0.0
    %5748 = vmatpush1.msra.mxu0 %v5727
    %5749 = vmatprep.subr.mxu0 0.0
    %5750 = vmatpush1.msra.mxu0 %v5728
    %5751 = vmatprep.subr.mxu0 0.0
    %5752 = vmatpush1.msra.mxu0 %v5729
    %5753 = vmatprep.subr.mxu0 0.0
    %5754 = vmatpush1.msra.mxu0 %v5730
    %5755 = vmatprep.subr.mxu0 0.0
    %5756 = vmatpush1.msra.mxu0 %v5731
    %5757 = vmatprep.subr.mxu0 0.0
    %5758 = vmatpush1.msra.mxu0 %v5732
    %5759 = vmatprep.subr.mxu0 0.0
    %5760 = vmatpush1.msra.mxu0 0.0
    %5761 = vmatprep.subr.mxu0 0.0
    %5762 = vmatpush1.msra.mxu0 0.0
    %5763 = vmatprep.subr.mxu0 0.0
    %5764 = vmatpush1.msra.mxu0 0.0
    %5765 = vmatprep.subr.mxu0 0.0
    %5766 = vmatpush1.msra.mxu0 0.0
    %5767 = vmatprep.subr.mxu0 0.0
    %5768 = vmatpush1.msra.mxu0 0.0
    %5769 = vmatprep.subr.mxu0 0.0
    %5770 = vmatpush1.msra.mxu0 0.0
    %5771 = vmatprep.subr.mxu0 0.0
    %5772 = vmatpush1.msra.mxu0 0.0
    %5773 = vmatprep.subr.mxu0 0.0
    %5774 = vmatpush1.msra.mxu0 0.0
    %5775 = vmatprep.subr.mxu0 0.0
    %5776 = vmatpush1.msra.mxu0 0.0
    %5777 = vmatprep.subr.mxu0 0.0
    %5778 = vmatpush1.msra.mxu0 0.0
    %5779 = vmatprep.subr.mxu0 0.0
    %5780 = vmatpush1.msra.mxu0 0.0
    %5781 = vmatprep.subr.mxu0 0.0
    %5782 = vmatpush1.msra.mxu0 0.0
    %5783 = vmatprep.subr.mxu0 0.0
    %5784 = vmatpush1.msra.mxu0 0.0
    %5785 = vmatprep.subr.mxu0 0.0
    %5786 = vmatpush1.msra.mxu0 0.0
    %5787 = vmatprep.subr.mxu0 0.0
    %5788 = vmatpush1.msra.mxu0 0.0
    %5789 = vmatprep.subr.mxu0 0.0
    %5790 = vmatpush1.msra.mxu0 0.0
    %5791 = vmatprep.subr.mxu0 0.0
    %5792 = vmatpush1.msra.mxu0 0.0
    %5793 = vmatprep.subr.mxu0 0.0
    %5794 = vmatpush1.msra.mxu0 0.0
    %5795 = vmatprep.subr.mxu0 0.0
    %5796 = vmatpush1.msra.mxu0 0.0
    %5797 = vmatprep.subr.mxu0 0.0
    %5798 = vmatpush1.msra.mxu0 0.0
    %5799 = vmatprep.subr.mxu0 0.0
    %5800 = vmatpush1.msra.mxu0 0.0
    %5801 = vmatprep.subr.mxu0 0.0
    %5802 = vmatpush1.msra.mxu0 0.0
    %5803 = vmatprep.subr.mxu0 0.0
    %5804 = vmatpush1.msra.mxu0 0.0
    %5805 = vmatprep.subr.mxu0 0.0
    %5806 = vmatpush1.msra.mxu0 0.0
    %5807 = vmatprep.mubr.f32.mxu0 0.0
    %5808 = vmatmul.mubr.f32.gmra.mrb[0].mxu0 %v5741
    %v5809 = vpop.f32.mrb[0].mxu0
    %v5810 = vadd.f32 %v5738, %v5809
    %v5811 = vpop.f32.mrb[0].mxu0
    %5812 = vdwg.mxu0
    %vm5813 = vcmask 171008
    %v5814 = vsel %vm5813, %v5810, -inf
    %5815 = vmax.xlane.f32.xlu0 %v5814
    %v5816 = vpop.xlane.xlu0 %5815
    %v5817 = vsub.f32 %v5810, %v5816
    %v5818 = vmul.f32 %v5817, 1.442695
    %v5819 = vpow.pop %v5818
    %v5820 = vsel %vm5813, %v5819, 0.0
    %5821 = vadd.xlane.f32.xlu0 %v5820
    %v5822 = vpop.xlane.xlu0 %5821
    %v5823 = vrcp.pop %v5822
    %v5824 = vmul.f32 %v5819, %v5823
    %5825 = vst.msk [vmem:[#allocation18] sm:$0xff] %vm5813, %v5824
    // Predicated region
    $region102: #{sequence_model_forward.1} parent=1 // pred_check
      _
    $region103: #{sequence_model_forward.1} parent=1 // pred_check_branch
      %5827 = sbr.rel (0) target = $region105
    $region104: #{sequence_model_forward.1} parent=1 // pred_region
      %s5829 = ssub.s32 128, 128
      %5830 = vsyncadd [#allocation6], %s5829
      %s5832 = sshll.u32 [#allocation18], 4
      %s5833 = int_to_ptr.vmem [resolvable:$true] %s5832
      %5835 = dma.vmem_to_hbm [thread:$0]  %s5833, 128, %s17, [#allocation6]
    $region105: #{sequence_model_forward.1} parent=1 // pred_fallthru
      _
    // Predicated region
    $region106: #{sequence_model_forward.1} parent=1 // pred_check
      _
    $region107: #{sequence_model_forward.1} parent=1 // pred_check_branch
      %5837 = sbr.rel (0) target = $region109
    $region108: #{sequence_model_forward.1} parent=1 // pred_region
      %5838 = dma.done [#allocation6], 128
    $region109: #{sequence_model_forward.1} parent=1 // pred_fallthru
      _
    %5839 = vsyncpa [#allocation5], 1
    %5840 = vsyncpa [#allocation8], 1
    %5841 = vsyncpa [#allocation11], 1
    %5842 = vsyncpa [#allocation14], 1
    %5843 = vsyncpa [#allocation17], 1
    %5844 = vsyncpa [#allocation6], 1

</llo_original>
